<compile_context>
chip_gen: v6e
topology: v6e:2x2x1
jax: 0.10.0
libtpu: 0.0.40
codegen_flags: <defaults>
</compile_context>

<pallas_src>
import math

import numpy as np
import jax
import jax.numpy as jnp
from jax.experimental import pallas as pl
from jax.experimental.pallas import tpu as pltpu

# ---------------------------------------------------------------------------
# "settings" (argparse surrogate) -- small shapes consistent with the module
# ---------------------------------------------------------------------------
IMG_SHAPE = 16
NUM_HIDDEN = 2
DIM_LATENT = 4
NUM_LABELS = 3
KERNEL_SIZE = 3   # implementation specialized to k=3, stride=2, pad=1
PADDING = 1
BATCH = 2
EPS = 1e-5        # PyTorch BatchNorm default eps

S0 = int(math.ceil(IMG_SHAPE / 2 ** NUM_HIDDEN))                   # 4 (latent spatial)
FC_OUT = int(DIM_LATENT / 2 * 2 ** (NUM_HIDDEN - 1) * S0 ** 2)     # 64 (fc out features)
C0 = FC_OUT // (S0 ** 2)                                           # 4 (channels after view)
C1 = 2 * DIM_LATENT                                                # 8 (deconv1 out channels)
C2 = DIM_LATENT                                                    # 4 (deconv2 out channels)
S1 = 2 * S0                                                        # 8
S2 = 2 * S1                                                        # 16 (== IMG_SHAPE)
HW = S2 * S2                                                       # 256 lanes per channel

# 9 stencil taps as flat lane offsets on the 16x16 grid (source = out + tap)
TAPS = tuple(S2 * dh + dw for dh in (-1, 0, 1) for dw in (-1, 0, 1))
PAD = 128         # lane padding of the activation scratch (>= max|tap|, 128-aligned)


# ---------------------------------------------------------------------------
# The single fused Pallas kernel
# ---------------------------------------------------------------------------
def _decoder_fused_kernel(x_ref, wfc_ref, gfc_ref, bfc_ref, m1d_ref, lat_ref,
                          r2_ref, r3_ref, brow_ref,
                          g1_ref, b1_ref, g2_ref, b2_ref,
                          o_ref, buf2_ref, buf3_ref):
    f32 = jnp.float32
    b = x_ref.shape[0]

    # --- decoder_fc: Linear(7 -> 64, bias=False) + BatchNorm1d (batch stats,
    #     biased variance) + ReLU -------------------------------------------
    h = jnp.dot(x_ref[...], wfc_ref[...], preferred_element_type=f32)        # (B, 64)
    mu = jnp.mean(h, axis=0, keepdims=True)
    ctr = h - mu
    var = jnp.mean(ctr * ctr, axis=0, keepdims=True)
    h = jnp.maximum(ctr * (gfc_ref[...] * jax.lax.rsqrt(var + EPS))
                    + bfc_ref[...], 0.0)                                      # (B, 64)

    # --- deconv1: small dense operator straight onto the zero-dilated 16x16
    #     stride-2 lattice (dilation for the next stride-2 stage is folded in).
    y1 = jnp.dot(h, m1d_ref[...], preferred_element_type=f32)                 # (B, 8*256)

    # --- BatchNorm2d(8) + ReLU (+ lattice re-mask) on the dilated rep; each
    #     processed channel chunk is written into a zero-padded VMEM scratch
    #     so the 9 tap reads below are plain static lane-offset slices. ------
    buf2_ref[...] = jnp.zeros(buf2_ref.shape, f32)
    lat = lat_ref[...]                                                        # (1, 256)
    inv1 = 1.0 / float(b * S1 * S1)                                           # B*8*8 real positions
    for ci in range(C1):
        ch = y1[:, ci * HW:(ci + 1) * HW]                                     # (B, 256)
        mu_c = jnp.sum(ch) * inv1
        var_c = jnp.sum(ch * ch) * inv1 - mu_c * mu_c
        sc = g1_ref[ci] * jax.lax.rsqrt(var_c + EPS)
        ch = jnp.maximum((ch - mu_c) * sc + b1_ref[ci], 0.0) * lat
        buf2_ref[:, PAD + ci * HW: PAD + (ci + 1) * HW] = ch

    # --- deconv2 as 9 shifted-tap VPU FMAs (per-(tap, out-channel) multiplier
    #     rows r2 carry both the weights and the boundary masks) -------------
    accs = [jnp.zeros((b, HW), f32) for _ in range(C2)]
    for ti, s in enumerate(TAPS):
        xs = buf2_ref[:, PAD + s: PAD + s + C1 * HW]                          # (B, 2048)
        for co in range(C2):
            prod = xs * r2_ref[ti * C2 + co: ti * C2 + co + 1, :]
            for ci in range(C1):
                accs[co] = accs[co] + prod[:, ci * HW:(ci + 1) * HW]

    # --- BatchNorm2d(4) + ReLU, written into the second padded scratch ------
    buf3_ref[...] = jnp.zeros(buf3_ref.shape, f32)
    inv2 = 1.0 / float(b * S2 * S2)
    for co in range(C2):
        a = accs[co]
        mu_c = jnp.sum(a) * inv2
        var_c = jnp.sum(a * a) * inv2 - mu_c * mu_c
        sc = g2_ref[co] * jax.lax.rsqrt(var_c + EPS)
        buf3_ref[:, PAD + co * HW: PAD + (co + 1) * HW] = \
            jnp.maximum((a - mu_c) * sc + b2_ref[co], 0.0)

    # --- final Conv2d(4 -> 1, k=3, p=1) + bias, lane-dense (B, 256) output ---
    out = jnp.zeros((b, HW), f32)
    for ti, s in enumerate(TAPS):
        xs = buf3_ref[:, PAD + s: PAD + s + C2 * HW]                          # (B, 1024)
        prod = xs * r3_ref[ti: ti + 1, :]
        for ci in range(C2):
            out = out + prod[:, ci * HW:(ci + 1) * HW]
    o_ref[...] = out + brow_ref[...]


_VMEM = pl.BlockSpec(memory_space=pltpu.MemorySpace.VMEM)
_SMEM = pl.BlockSpec(memory_space=pltpu.MemorySpace.SMEM)


def _decoder_forward(z, y_target, c):
    b = z.shape[0]
    x = jnp.concatenate([z, y_target], axis=1)                                # (B, 7)
    flops = int(2 * b * 7 * FC_OUT + 2 * b * FC_OUT * C1 * HW
                + 2 * b * len(TAPS) * C2 * C1 * HW + 2 * b * len(TAPS) * C2 * HW
                + 20 * b * (C1 + C2) * HW)
    nbytes = int(4 * (b * 7 + 7 * FC_OUT + 2 * FC_OUT + FC_OUT * C1 * HW + HW
                      + len(TAPS) * C2 * C1 * HW + len(TAPS) * C2 * HW + HW
                      + 2 * C1 + 2 * C2 + b * HW))
    out = pl.pallas_call(
        _decoder_fused_kernel,
        out_shape=jax.ShapeDtypeStruct((b, HW), jnp.float32),
        in_specs=[_VMEM] * 9 + [_SMEM] * 4,
        out_specs=_VMEM,
        scratch_shapes=[pltpu.VMEM((b, 2 * PAD + C1 * HW), jnp.float32),
                        pltpu.VMEM((b, 2 * PAD + C2 * HW), jnp.float32)],
        cost_estimate=pl.CostEstimate(flops=flops, transcendentals=FC_OUT + C1 + C2,
                                      bytes_accessed=nbytes),
    )(x, c["w_fc"], c["g_fc"], c["b_fc"], c["m1d"], c["lat2"], c["r2"], c["r3"],
      c["bias_row"], c["g1"], c["b1"], c["g2"], c["b2"])
    # metadata-only reshape to torch NCHW (B, 1, H, W)
    return out.reshape(b, 1, S2, S2)


decoder_forward = jax.jit(_decoder_forward)


# ---------------------------------------------------------------------------
# One-time (param-build time) weight re-layout.  The dense conv operators are
# only built here (numpy) to extract the small structured pieces the kernel
# actually loads; they never reach HBM/VMEM at run time.
# ---------------------------------------------------------------------------
def _deconv_operator(w_t, h_in, w_in):
    """ConvTranspose2d(k=3, s=2, p=1, output_padding=1, bias=False) as a dense
    matrix mapping (Cin*h*w,) -> (Cout*2h*2w,) in NCHW flattening."""
    w = np.asarray(w_t, np.float32)                 # torch layout (Cin, Cout, 3, 3)
    cin, cout, kh_n, kw_n = w.shape
    h_out, w_out = 2 * h_in, 2 * w_in
    m = np.zeros((cin * h_in * w_in, cout * h_out * w_out), np.float32)
    co_idx = np.arange(cout)
    for ci in range(cin):
        for ih in range(h_in):
            for iw in range(w_in):
                row = (ci * h_in + ih) * w_in + iw
                for kh in range(kh_n):
                    oh = 2 * ih - 1 + kh            # oh = ih*stride - pad + kh
                    if oh < 0 or oh >= h_out:
                        continue
                    for kw in range(kw_n):
                        ow = 2 * iw - 1 + kw
                        if ow < 0 or ow >= w_out:
                            continue
                        m[row, (co_idx * h_out + oh) * w_out + ow] = w[ci, :, kh, kw]
    return m


def _conv_operator(w_c, h_in, w_in):
    """Conv2d(k=3, p=1, cross-correlation) as a dense matrix, NCHW flattening."""
    w = np.asarray(w_c, np.float32)                 # torch layout (Cout, Cin, 3, 3)
    cout, cin, kh_n, kw_n = w.shape
    m = np.zeros((cin * h_in * w_in, cout * h_in * w_in), np.float32)
    co_idx = np.arange(cout)
    for ci in range(cin):
        for ih in range(h_in):
            for iw in range(w_in):
                row = (ci * h_in + ih) * w_in + iw
                for kh in range(kh_n):
                    oh = ih + 1 - kh                # ih = oh + kh - 1 (pad 1)
                    if oh < 0 or oh >= h_in:
                        continue
                    for kw in range(kw_n):
                        ow = iw + 1 - kw
                        if ow < 0 or ow >= w_in:
                            continue
                        m[row, (co_idx * h_in + oh) * w_in + ow] = w[:, ci, kh, kw]
    return m


def _dilation_matrix(c, h_in, w_in):
    """0/1 matrix embedding an NCHW-flat (c, h, w) map into the even (stride-2)
    lattice of the NCHW-flat (c, 2h, 2w) map (ConvTranspose2d zero-insertion)."""
    h_out, w_out = 2 * h_in, 2 * w_in
    d = np.zeros((c * h_in * w_in, c * h_out * w_out), np.float32)
    for ci in range(c):
        for ih in range(h_in):
            for iw in range(w_in):
                d[(ci * h_in + ih) * w_in + iw,
                  (ci * h_out + 2 * ih) * w_out + 2 * iw] = 1.0
    return d


def _tap_rows(m, cin, cout, hw):
    """Extract the 9 shift-diagonals of a (cin*hw, cout*hw) 3x3-stencil conv
    operator into per-(tap, out-channel) multiplier rows of length cin*hw.
    Boundary validity is inherited from the zeros of the dense operator."""
    m = np.asarray(m, np.float32)
    assert m.shape == (cin * hw, cout * hw)
    rows = np.zeros((len(TAPS), cout, cin * hw), np.float32)
    for t, s in enumerate(TAPS):
        p_lo, p_hi = max(0, -s), min(hw, hw - s)    # p range with 0 <= p+s < hw
        idx = np.arange(p_lo, p_hi)
        for ci in range(cin):
            for co in range(cout):
                blk = m[ci * hw:(ci + 1) * hw, co * hw:(co + 1) * hw]
                rows[t, co, ci * hw + p_lo: ci * hw + p_hi] = blk[idx + s, idx]
    # completeness self-check: the 9 diagonals must exactly reconstruct m
    rec = np.zeros_like(m)
    for t, s in enumerate(TAPS):
        p_lo, p_hi = max(0, -s), min(hw, hw - s)
        idx = np.arange(p_lo, p_hi)
        for ci in range(cin):
            for co in range(cout):
                rec[ci * hw + idx + s, co * hw + idx] = \
                    rows[t, co, ci * hw + p_lo: ci * hw + p_hi]
    assert np.array_equal(rec, m), "3x3 tap decomposition did not cover the operator"
    return rows.reshape(len(TAPS) * cout, cin * hw)


def prepare_decoder_constants(p):
    """Precompute all kernel-ready constants once (~0.85 MiB f32 total)."""
    fc_w = np.asarray(p["fc_w"], np.float32)                          # (7, 64)

    # deconv1 folded with the zero-insertion needed by the next stride-2 stage
    m1 = _deconv_operator(p["ct1_w"], S0, S0)                         # (64, 512)
    dil1 = _dilation_matrix(C1, S1, S1)                               # (512, 2048)
    m1d = np.ascontiguousarray(m1 @ dil1)                             # (64, 2048)

    # deconv2 == 3x3 conv (flipped kernel, swapped channel axes) on the dilated
    # input; cross-checked against the verified transposed-conv operator.
    w2 = np.asarray(p["ct2_w"], np.float32)
    w2c = np.ascontiguousarray(np.transpose(w2, (1, 0, 2, 3))[:, :, ::-1, ::-1])
    m2d = _conv_operator(w2c, S2, S2)                                 # (2048, 1024)
    assert np.allclose(dil1 @ m2d, _deconv_operator(p["ct2_w"], S1, S1),
                       rtol=0.0, atol=1e-6), "deconv2 dilated-conv factorization mismatch"
    r2 = _tap_rows(m2d, C1, C2, HW)                                   # (36, 2048)

    m3 = _conv_operator(p["conv_w"], S2, S2)                          # (1024, 256)
    r3 = _tap_rows(m3, C2, 1, HW)                                     # (9, 1024)

    lat2 = np.zeros((1, HW), np.float32)                              # stride-2 lattice mask
    for hh in range(0, S2, 2):
        for ww in range(0, S2, 2):
            lat2[0, hh * S2 + ww] = 1.0

    bias_row = np.full((1, HW), float(np.asarray(p["conv_b"], np.float32)[0]),
                       np.float32)

    consts = {
        "w_fc": fc_w,
        "g_fc": np.asarray(p["bn_fc_g"], np.float32).reshape(1, -1),
        "b_fc": np.asarray(p["bn_fc_b"], np.float32).reshape(1, -1),
        "m1d": m1d,
        "lat2": lat2,
        "r2": r2,
        "r3": r3,
        "bias_row": bias_row,
        "g1": np.asarray(p["bn1_g"], np.float32).reshape(-1),
        "b1": np.asarray(p["bn1_b"], np.float32).reshape(-1),
        "g2": np.asarray(p["bn2_g"], np.float32).reshape(-1),
        "b2": np.asarray(p["bn2_b"], np.float32).reshape(-1),
    }
    # TODO(synk): BatchNorm running-stat (momentum) buffer updates are a
    # training-time side effect and are not reproduced (they do not affect the
    # returned value).
    return {k: jnp.asarray(v) for k, v in consts.items()}


# ---------------------------------------------------------------------------
# Pure-JAX (XLA) reference mirroring the PyTorch ops, for verification
# ---------------------------------------------------------------------------
def _bn_train(x, gamma, beta, axes):
    mean = jnp.mean(x, axis=axes, keepdims=True)
    var = jnp.mean(jnp.square(x - mean), axis=axes, keepdims=True)
    shp = [1] * x.ndim
    shp[1] = gamma.shape[0]
    return (x - mean) / jnp.sqrt(var + EPS) * gamma.reshape(shp) + beta.reshape(shp)


def decoder_reference(z, y_target, p):
    hi = jax.lax.Precision.HIGHEST
    x = jnp.concatenate([z, y_target], axis=1)
    h = jnp.dot(x, p["fc_w"], precision=hi)
    h = jnp.maximum(_bn_train(h, p["bn_fc_g"], p["bn_fc_b"], (0,)), 0.0)
    h = h.reshape(z.shape[0], C0, S0, S0)
    for wt, g, bta in ((p["ct1_w"], p["bn1_g"], p["bn1_b"]),
                       (p["ct2_w"], p["bn2_g"], p["bn2_b"])):
        h = jax.lax.conv_general_dilated(
            h, jnp.flip(wt, (2, 3)), window_strides=(1, 1),
            padding=[(1, 2), (1, 2)], lhs_dilation=(2, 2),
            dimension_numbers=("NCHW", "IOHW", "NCHW"), precision=hi)
        h = jnp.maximum(_bn_train(h, g, bta, (0, 2, 3)), 0.0)
    h = jax.lax.conv_general_dilated(
        h, p["conv_w"], (1, 1), [(1, 1), (1, 1)],
        dimension_numbers=("NCHW", "OIHW", "NCHW"), precision=hi)
    return h + p["conv_b"].reshape(1, -1, 1, 1)


# ---------------------------------------------------------------------------
def make_params(key):
    ks = jax.random.split(key, 12)
    return {
        # Linear(dl+nl -> FC_OUT, bias=False); stored transposed (in, out)
        "fc_w": 0.3 * jax.random.normal(ks[0], (DIM_LATENT + NUM_LABELS, FC_OUT), jnp.float32),
        "bn_fc_g": 1.0 + 0.1 * jax.random.normal(ks[1], (FC_OUT,), jnp.float32),
        "bn_fc_b": 0.1 * jax.random.normal(ks[2], (FC_OUT,), jnp.float32),
        # ConvTranspose2d weights in torch layout (Cin, Cout, 3, 3)
        "ct1_w": 0.2 * jax.random.normal(ks[3], (C0, C1, 3, 3), jnp.float32),
        "bn1_g": 1.0 + 0.1 * jax.random.normal(ks[4], (C1,), jnp.float32),
        "bn1_b": 0.1 * jax.random.normal(ks[5], (C1,), jnp.float32),
        "ct2_w": 0.2 * jax.random.normal(ks[6], (C1, C2, 3, 3), jnp.float32),
        "bn2_g": 1.0 + 0.1 * jax.random.normal(ks[7], (C2,), jnp.float32),
        "bn2_b": 0.1 * jax.random.normal(ks[8], (C2,), jnp.float32),
        # Conv2d(C2 -> 1, k=3, p=1) in torch layout (Cout, Cin, 3, 3) + bias
        "conv_w": 0.2 * jax.random.normal(ks[9], (1, C2, 3, 3), jnp.float32),
        "conv_b": 0.1 * jax.random.normal(ks[10], (1,), jnp.float32),
    }


if __name__ == "__main__":
    key = jax.random.PRNGKey(0)
    kz, ky, kp = jax.random.split(key, 3)
    z = jax.random.normal(kz, (BATCH, DIM_LATENT), jnp.float32)
    y_target = jax.random.normal(ky, (BATCH, NUM_LABELS), jnp.float32)
    params = make_params(kp)
    consts = prepare_decoder_constants(params)      # one-time weight re-layout

    out = jax.block_until_ready(decoder_forward(z, y_target, consts))
    assert out.shape == (BATCH, 1, IMG_SHAPE, IMG_SHAPE), out.shape

    ref = jax.block_until_ready(decoder_reference(z, y_target, params))
    err = float(jnp.max(jnp.abs(out - ref)))
    # All-f32 path (structured weights instead of bf16), so the tolerance is
    # tightened 10x vs. the previous version per the review.
    assert err < 1e-3, f"mismatch vs reference: max abs err = {err}"
    print("KERNEL_OK")
</pallas_src>

<mosaic_0001>
module attributes {stable_mosaic.version = 11 : i64} {
  func.func @_decoder_fused_kernel(%arg0: memref<2x7xf32, #tpu.memory_space<vmem>>, %arg1: memref<7x64xf32, #tpu.memory_space<vmem>>, %arg2: memref<1x64xf32, #tpu.memory_space<vmem>>, %arg3: memref<1x64xf32, #tpu.memory_space<vmem>>, %arg4: memref<64x2048xf32, #tpu.memory_space<vmem>>, %arg5: memref<1x256xf32, #tpu.memory_space<vmem>>, %arg6: memref<36x2048xf32, #tpu.memory_space<vmem>>, %arg7: memref<9x1024xf32, #tpu.memory_space<vmem>>, %arg8: memref<1x256xf32, #tpu.memory_space<vmem>>, %arg9: memref<8xf32, #tpu.memory_space<smem>>, %arg10: memref<8xf32, #tpu.memory_space<smem>>, %arg11: memref<4xf32, #tpu.memory_space<smem>>, %arg12: memref<4xf32, #tpu.memory_space<smem>>, %arg13: memref<2x256xf32, #tpu.memory_space<vmem>>, %arg14: memref<2x2304xf32, #tpu.memory_space<vmem>>, %arg15: memref<2x1280xf32, #tpu.memory_space<vmem>>) attributes {dimension_semantics = [], scalar_prefetch = 0 : i64, scratch_operands = 2 : i64, tpu.core_type = #tpu.core_type<tc>} {
    %c0 = arith.constant 0 : index
    %c0_0 = arith.constant 0 : index
    %0 = vector.load %arg0[%c0, %c0_0] : memref<2x7xf32, #tpu.memory_space<vmem>>, vector<2x7xf32>
    %c0_1 = arith.constant 0 : index
    %c0_2 = arith.constant 0 : index
    %1 = vector.load %arg1[%c0_1, %c0_2] : memref<7x64xf32, #tpu.memory_space<vmem>>, vector<7x64xf32>
    %cst = arith.constant dense<0.000000e+00> : vector<2x64xf32>
    %2 = tpu.matmul %0, %1, %cst {dimension_numbers = #tpu.dot_dimension_numbers<[1], [0], [0], [1], [0, 0, 1, 1], [], []>} : vector<2x7xf32>, vector<7x64xf32>, vector<2x64xf32> -> vector<2x64xf32>
    %cst_3 = arith.constant dense<0.000000e+00> : vector<64xf32>
    %3 = vector.multi_reduction <add>, %2, %cst_3 [0] : vector<2x64xf32> to vector<64xf32>
    %4 = vector.shape_cast %3 : vector<64xf32> to vector<1x64xf32>
    %cst_4 = arith.constant 2.000000e+00 : f32
    %5 = vector.broadcast %cst_4 : f32 to vector<1x64xf32>
    %6 = arith.divf %4, %5 : vector<1x64xf32>
    %7 = vector.broadcast %6 : vector<1x64xf32> to vector<2x64xf32>
    %8 = arith.subf %2, %7 : vector<2x64xf32>
    %9 = arith.mulf %8, %8 : vector<2x64xf32>
    %cst_5 = arith.constant dense<0.000000e+00> : vector<64xf32>
    %10 = vector.multi_reduction <add>, %9, %cst_5 [0] : vector<2x64xf32> to vector<64xf32>
    %11 = vector.shape_cast %10 : vector<64xf32> to vector<1x64xf32>
    %cst_6 = arith.constant 2.000000e+00 : f32
    %12 = vector.broadcast %cst_6 : f32 to vector<1x64xf32>
    %13 = arith.divf %11, %12 : vector<1x64xf32>
    %c0_7 = arith.constant 0 : index
    %c0_8 = arith.constant 0 : index
    %14 = vector.load %arg2[%c0_7, %c0_8] : memref<1x64xf32, #tpu.memory_space<vmem>>, vector<1x64xf32>
    %cst_9 = arith.constant 9.99999974E-6 : f32
    %15 = vector.broadcast %cst_9 : f32 to vector<1x64xf32>
    %16 = arith.addf %13, %15 : vector<1x64xf32>
    %17 = math.rsqrt %16 : vector<1x64xf32>
    %18 = arith.mulf %14, %17 : vector<1x64xf32>
    %19 = vector.broadcast %18 : vector<1x64xf32> to vector<2x64xf32>
    %20 = arith.mulf %8, %19 : vector<2x64xf32>
    %c0_10 = arith.constant 0 : index
    %c0_11 = arith.constant 0 : index
    %21 = vector.load %arg3[%c0_10, %c0_11] : memref<1x64xf32, #tpu.memory_space<vmem>>, vector<1x64xf32>
    %22 = vector.broadcast %21 : vector<1x64xf32> to vector<2x64xf32>
    %23 = arith.addf %20, %22 : vector<2x64xf32>
    %cst_12 = arith.constant 0.000000e+00 : f32
    %24 = vector.broadcast %cst_12 : f32 to vector<2x64xf32>
    %25 = arith.maximumf %23, %24 : vector<2x64xf32>
    %c0_13 = arith.constant 0 : index
    %c0_14 = arith.constant 0 : index
    %26 = vector.load %arg4[%c0_13, %c0_14] : memref<64x2048xf32, #tpu.memory_space<vmem>>, vector<64x2048xf32>
    %cst_15 = arith.constant dense<0.000000e+00> : vector<2x2048xf32>
    %27 = tpu.matmul %25, %26, %cst_15 {dimension_numbers = #tpu.dot_dimension_numbers<[1], [0], [0], [1], [0, 0, 1, 1], [], []>} : vector<2x64xf32>, vector<64x2048xf32>, vector<2x2048xf32> -> vector<2x2048xf32>
    %cst_16 = arith.constant 0.000000e+00 : f32
    %28 = vector.broadcast %cst_16 : f32 to vector<2x2304xf32>
    %c0_17 = arith.constant 0 : index
    %c0_18 = arith.constant 0 : index
    %29 = vector.load %arg14[%c0_17, %c0_18] : memref<2x2304xf32, #tpu.memory_space<vmem>>, vector<2x2304xf32>
    tpu.vector_store %arg14[%c0_17, %c0_18], %28 {strides = array<i32>} : memref<2x2304xf32, #tpu.memory_space<vmem>>, vector<2x2304xf32>,
    %c0_19 = arith.constant 0 : index
    %c0_20 = arith.constant 0 : index
    %30 = vector.load %arg5[%c0_19, %c0_20] : memref<1x256xf32, #tpu.memory_space<vmem>>, vector<1x256xf32>
    %31 = vector.extract_strided_slice %27 {offsets = [0, 0], sizes = [2, 256], strides = [1, 1]} : vector<2x2048xf32> to vector<2x256xf32>
    %32 = vector.shape_cast %31 : vector<2x256xf32> to vector<1x2x256xf32>
    %cst_21 = arith.constant dense<0.000000e+00> : vector<1xf32>
    %33 = vector.multi_reduction <add>, %32, %cst_21 [1, 2] : vector<1x2x256xf32> to vector<1xf32>
    %34 = vector.shape_cast %33 : vector<1xf32> to vector<1x1x1xf32>
    %35 = vector.extract %34[0, 0, 0] : f32 from vector<1x1x1xf32>
    %cst_22 = arith.constant 7.812500e-03 : f32
    %36 = arith.mulf %35, %cst_22 : f32
    %37 = arith.mulf %31, %31 : vector<2x256xf32>
    %38 = vector.shape_cast %37 : vector<2x256xf32> to vector<1x2x256xf32>
    %cst_23 = arith.constant dense<0.000000e+00> : vector<1xf32>
    %39 = vector.multi_reduction <add>, %38, %cst_23 [1, 2] : vector<1x2x256xf32> to vector<1xf32>
    %40 = vector.shape_cast %39 : vector<1xf32> to vector<1x1x1xf32>
    %41 = vector.extract %40[0, 0, 0] : f32 from vector<1x1x1xf32>
    %cst_24 = arith.constant 7.812500e-03 : f32
    %42 = arith.mulf %41, %cst_24 : f32
    %43 = arith.mulf %36, %36 : f32
    %44 = arith.subf %42, %43 : f32
    %c0_25 = arith.constant 0 : index
    %45 = memref.load %arg9[%c0_25] : memref<8xf32, #tpu.memory_space<smem>>
    %cst_26 = arith.constant 9.99999974E-6 : f32
    %46 = arith.addf %44, %cst_26 : f32
    %47 = math.rsqrt %46 : f32
    %48 = arith.mulf %45, %47 : f32
    %49 = vector.broadcast %36 : f32 to vector<2x256xf32>
    %50 = arith.subf %31, %49 : vector<2x256xf32>
    %51 = vector.broadcast %48 : f32 to vector<2x256xf32>
    %52 = arith.mulf %50, %51 : vector<2x256xf32>
    %c0_27 = arith.constant 0 : index
    %53 = memref.load %arg10[%c0_27] : memref<8xf32, #tpu.memory_space<smem>>
    %54 = vector.broadcast %53 : f32 to vector<2x256xf32>
    %55 = arith.addf %52, %54 : vector<2x256xf32>
    %cst_28 = arith.constant 0.000000e+00 : f32
    %56 = vector.broadcast %cst_28 : f32 to vector<2x256xf32>
    %57 = arith.maximumf %55, %56 : vector<2x256xf32>
    %58 = vector.broadcast %30 : vector<1x256xf32> to vector<2x256xf32>
    %59 = arith.mulf %57, %58 : vector<2x256xf32>
    %c0_29 = arith.constant 0 : index
    %c128 = arith.constant 128 : index
    %60 = vector.load %arg14[%c0_29, %c128] : memref<2x2304xf32, #tpu.memory_space<vmem>>, vector<2x256xf32>
    tpu.vector_store %arg14[%c0_29, %c128], %59 {strides = array<i32>} : memref<2x2304xf32, #tpu.memory_space<vmem>>, vector<2x256xf32>,
    %61 = vector.extract_strided_slice %27 {offsets = [0, 256], sizes = [2, 256], strides = [1, 1]} : vector<2x2048xf32> to vector<2x256xf32>
    %62 = vector.shape_cast %61 : vector<2x256xf32> to vector<1x2x256xf32>
    %cst_30 = arith.constant dense<0.000000e+00> : vector<1xf32>
    %63 = vector.multi_reduction <add>, %62, %cst_30 [1, 2] : vector<1x2x256xf32> to vector<1xf32>
    %64 = vector.shape_cast %63 : vector<1xf32> to vector<1x1x1xf32>
    %65 = vector.extract %64[0, 0, 0] : f32 from vector<1x1x1xf32>
    %cst_31 = arith.constant 7.812500e-03 : f32
    %66 = arith.mulf %65, %cst_31 : f32
    %67 = arith.mulf %61, %61 : vector<2x256xf32>
    %68 = vector.shape_cast %67 : vector<2x256xf32> to vector<1x2x256xf32>
    %cst_32 = arith.constant dense<0.000000e+00> : vector<1xf32>
    %69 = vector.multi_reduction <add>, %68, %cst_32 [1, 2] : vector<1x2x256xf32> to vector<1xf32>
    %70 = vector.shape_cast %69 : vector<1xf32> to vector<1x1x1xf32>
    %71 = vector.extract %70[0, 0, 0] : f32 from vector<1x1x1xf32>
    %cst_33 = arith.constant 7.812500e-03 : f32
    %72 = arith.mulf %71, %cst_33 : f32
    %73 = arith.mulf %66, %66 : f32
    %74 = arith.subf %72, %73 : f32
    %c1 = arith.constant 1 : index
    %75 = memref.load %arg9[%c1] : memref<8xf32, #tpu.memory_space<smem>>
    %cst_34 = arith.constant 9.99999974E-6 : f32
    %76 = arith.addf %74, %cst_34 : f32
    %77 = math.rsqrt %76 : f32
    %78 = arith.mulf %75, %77 : f32
    %79 = vector.broadcast %66 : f32 to vector<2x256xf32>
    %80 = arith.subf %61, %79 : vector<2x256xf32>
    %81 = vector.broadcast %78 : f32 to vector<2x256xf32>
    %82 = arith.mulf %80, %81 : vector<2x256xf32>
    %c1_35 = arith.constant 1 : index
    %83 = memref.load %arg10[%c1_35] : memref<8xf32, #tpu.memory_space<smem>>
    %84 = vector.broadcast %83 : f32 to vector<2x256xf32>
    %85 = arith.addf %82, %84 : vector<2x256xf32>
    %cst_36 = arith.constant 0.000000e+00 : f32
    %86 = vector.broadcast %cst_36 : f32 to vector<2x256xf32>
    %87 = arith.maximumf %85, %86 : vector<2x256xf32>
    %88 = vector.broadcast %30 : vector<1x256xf32> to vector<2x256xf32>
    %89 = arith.mulf %87, %88 : vector<2x256xf32>
    %c0_37 = arith.constant 0 : index
    %c384 = arith.constant 384 : index
    %90 = vector.load %arg14[%c0_37, %c384] : memref<2x2304xf32, #tpu.memory_space<vmem>>, vector<2x256xf32>
    tpu.vector_store %arg14[%c0_37, %c384], %89 {strides = array<i32>} : memref<2x2304xf32, #tpu.memory_space<vmem>>, vector<2x256xf32>,
    %91 = vector.extract_strided_slice %27 {offsets = [0, 512], sizes = [2, 256], strides = [1, 1]} : vector<2x2048xf32> to vector<2x256xf32>
    %92 = vector.shape_cast %91 : vector<2x256xf32> to vector<1x2x256xf32>
    %cst_38 = arith.constant dense<0.000000e+00> : vector<1xf32>
    %93 = vector.multi_reduction <add>, %92, %cst_38 [1, 2] : vector<1x2x256xf32> to vector<1xf32>
    %94 = vector.shape_cast %93 : vector<1xf32> to vector<1x1x1xf32>
    %95 = vector.extract %94[0, 0, 0] : f32 from vector<1x1x1xf32>
    %cst_39 = arith.constant 7.812500e-03 : f32
    %96 = arith.mulf %95, %cst_39 : f32
    %97 = arith.mulf %91, %91 : vector<2x256xf32>
    %98 = vector.shape_cast %97 : vector<2x256xf32> to vector<1x2x256xf32>
    %cst_40 = arith.constant dense<0.000000e+00> : vector<1xf32>
    %99 = vector.multi_reduction <add>, %98, %cst_40 [1, 2] : vector<1x2x256xf32> to vector<1xf32>
    %100 = vector.shape_cast %99 : vector<1xf32> to vector<1x1x1xf32>
    %101 = vector.extract %100[0, 0, 0] : f32 from vector<1x1x1xf32>
    %cst_41 = arith.constant 7.812500e-03 : f32
    %102 = arith.mulf %101, %cst_41 : f32
    %103 = arith.mulf %96, %96 : f32
    %104 = arith.subf %102, %103 : f32
    %c2 = arith.constant 2 : index
    %105 = memref.load %arg9[%c2] : memref<8xf32, #tpu.memory_space<smem>>
    %cst_42 = arith.constant 9.99999974E-6 : f32
    %106 = arith.addf %104, %cst_42 : f32
    %107 = math.rsqrt %106 : f32
    %108 = arith.mulf %105, %107 : f32
    %109 = vector.broadcast %96 : f32 to vector<2x256xf32>
    %110 = arith.subf %91, %109 : vector<2x256xf32>
    %111 = vector.broadcast %108 : f32 to vector<2x256xf32>
    %112 = arith.mulf %110, %111 : vector<2x256xf32>
    %c2_43 = arith.constant 2 : index
    %113 = memref.load %arg10[%c2_43] : memref<8xf32, #tpu.memory_space<smem>>
    %114 = vector.broadcast %113 : f32 to vector<2x256xf32>
    %115 = arith.addf %112, %114 : vector<2x256xf32>
    %cst_44 = arith.constant 0.000000e+00 : f32
    %116 = vector.broadcast %cst_44 : f32 to vector<2x256xf32>
    %117 = arith.maximumf %115, %116 : vector<2x256xf32>
    %118 = vector.broadcast %30 : vector<1x256xf32> to vector<2x256xf32>
    %119 = arith.mulf %117, %118 : vector<2x256xf32>
    %c0_45 = arith.constant 0 : index
    %c640 = arith.constant 640 : index
    %120 = vector.load %arg14[%c0_45, %c640] : memref<2x2304xf32, #tpu.memory_space<vmem>>, vector<2x256xf32>
    tpu.vector_store %arg14[%c0_45, %c640], %119 {strides = array<i32>} : memref<2x2304xf32, #tpu.memory_space<vmem>>, vector<2x256xf32>,
    %121 = vector.extract_strided_slice %27 {offsets = [0, 768], sizes = [2, 256], strides = [1, 1]} : vector<2x2048xf32> to vector<2x256xf32>
    %122 = vector.shape_cast %121 : vector<2x256xf32> to vector<1x2x256xf32>
    %cst_46 = arith.constant dense<0.000000e+00> : vector<1xf32>
    %123 = vector.multi_reduction <add>, %122, %cst_46 [1, 2] : vector<1x2x256xf32> to vector<1xf32>
    %124 = vector.shape_cast %123 : vector<1xf32> to vector<1x1x1xf32>
    %125 = vector.extract %124[0, 0, 0] : f32 from vector<1x1x1xf32>
    %cst_47 = arith.constant 7.812500e-03 : f32
    %126 = arith.mulf %125, %cst_47 : f32
    %127 = arith.mulf %121, %121 : vector<2x256xf32>
    %128 = vector.shape_cast %127 : vector<2x256xf32> to vector<1x2x256xf32>
    %cst_48 = arith.constant dense<0.000000e+00> : vector<1xf32>
    %129 = vector.multi_reduction <add>, %128, %cst_48 [1, 2] : vector<1x2x256xf32> to vector<1xf32>
    %130 = vector.shape_cast %129 : vector<1xf32> to vector<1x1x1xf32>
    %131 = vector.extract %130[0, 0, 0] : f32 from vector<1x1x1xf32>
    %cst_49 = arith.constant 7.812500e-03 : f32
    %132 = arith.mulf %131, %cst_49 : f32
    %133 = arith.mulf %126, %126 : f32
    %134 = arith.subf %132, %133 : f32
    %c3 = arith.constant 3 : index
    %135 = memref.load %arg9[%c3] : memref<8xf32, #tpu.memory_space<smem>>
    %cst_50 = arith.constant 9.99999974E-6 : f32
    %136 = arith.addf %134, %cst_50 : f32
    %137 = math.rsqrt %136 : f32
    %138 = arith.mulf %135, %137 : f32
    %139 = vector.broadcast %126 : f32 to vector<2x256xf32>
    %140 = arith.subf %121, %139 : vector<2x256xf32>
    %141 = vector.broadcast %138 : f32 to vector<2x256xf32>
    %142 = arith.mulf %140, %141 : vector<2x256xf32>
    %c3_51 = arith.constant 3 : index
    %143 = memref.load %arg10[%c3_51] : memref<8xf32, #tpu.memory_space<smem>>
    %144 = vector.broadcast %143 : f32 to vector<2x256xf32>
    %145 = arith.addf %142, %144 : vector<2x256xf32>
    %cst_52 = arith.constant 0.000000e+00 : f32
    %146 = vector.broadcast %cst_52 : f32 to vector<2x256xf32>
    %147 = arith.maximumf %145, %146 : vector<2x256xf32>
    %148 = vector.broadcast %30 : vector<1x256xf32> to vector<2x256xf32>
    %149 = arith.mulf %147, %148 : vector<2x256xf32>
    %c0_53 = arith.constant 0 : index
    %c896 = arith.constant 896 : index
    %150 = vector.load %arg14[%c0_53, %c896] : memref<2x2304xf32, #tpu.memory_space<vmem>>, vector<2x256xf32>
    tpu.vector_store %arg14[%c0_53, %c896], %149 {strides = array<i32>} : memref<2x2304xf32, #tpu.memory_space<vmem>>, vector<2x256xf32>,
    %151 = vector.extract_strided_slice %27 {offsets = [0, 1024], sizes = [2, 256], strides = [1, 1]} : vector<2x2048xf32> to vector<2x256xf32>
    %152 = vector.shape_cast %151 : vector<2x256xf32> to vector<1x2x256xf32>
    %cst_54 = arith.constant dense<0.000000e+00> : vector<1xf32>
    %153 = vector.multi_reduction <add>, %152, %cst_54 [1, 2] : vector<1x2x256xf32> to vector<1xf32>
    %154 = vector.shape_cast %153 : vector<1xf32> to vector<1x1x1xf32>
    %155 = vector.extract %154[0, 0, 0] : f32 from vector<1x1x1xf32>
    %cst_55 = arith.constant 7.812500e-03 : f32
    %156 = arith.mulf %155, %cst_55 : f32
    %157 = arith.mulf %151, %151 : vector<2x256xf32>
    %158 = vector.shape_cast %157 : vector<2x256xf32> to vector<1x2x256xf32>
    %cst_56 = arith.constant dense<0.000000e+00> : vector<1xf32>
    %159 = vector.multi_reduction <add>, %158, %cst_56 [1, 2] : vector<1x2x256xf32> to vector<1xf32>
    %160 = vector.shape_cast %159 : vector<1xf32> to vector<1x1x1xf32>
    %161 = vector.extract %160[0, 0, 0] : f32 from vector<1x1x1xf32>
    %cst_57 = arith.constant 7.812500e-03 : f32
    %162 = arith.mulf %161, %cst_57 : f32
    %163 = arith.mulf %156, %156 : f32
    %164 = arith.subf %162, %163 : f32
    %c4 = arith.constant 4 : index
    %165 = memref.load %arg9[%c4] : memref<8xf32, #tpu.memory_space<smem>>
    %cst_58 = arith.constant 9.99999974E-6 : f32
    %166 = arith.addf %164, %cst_58 : f32
    %167 = math.rsqrt %166 : f32
    %168 = arith.mulf %165, %167 : f32
    %169 = vector.broadcast %156 : f32 to vector<2x256xf32>
    %170 = arith.subf %151, %169 : vector<2x256xf32>
    %171 = vector.broadcast %168 : f32 to vector<2x256xf32>
    %172 = arith.mulf %170, %171 : vector<2x256xf32>
    %c4_59 = arith.constant 4 : index
    %173 = memref.load %arg10[%c4_59] : memref<8xf32, #tpu.memory_space<smem>>
    %174 = vector.broadcast %173 : f32 to vector<2x256xf32>
    %175 = arith.addf %172, %174 : vector<2x256xf32>
    %cst_60 = arith.constant 0.000000e+00 : f32
    %176 = vector.broadcast %cst_60 : f32 to vector<2x256xf32>
    %177 = arith.maximumf %175, %176 : vector<2x256xf32>
    %178 = vector.broadcast %30 : vector<1x256xf32> to vector<2x256xf32>
    %179 = arith.mulf %177, %178 : vector<2x256xf32>
    %c0_61 = arith.constant 0 : index
    %c1152 = arith.constant 1152 : index
    %180 = vector.load %arg14[%c0_61, %c1152] : memref<2x2304xf32, #tpu.memory_space<vmem>>, vector<2x256xf32>
    tpu.vector_store %arg14[%c0_61, %c1152], %179 {strides = array<i32>} : memref<2x2304xf32, #tpu.memory_space<vmem>>, vector<2x256xf32>,
    %181 = vector.extract_strided_slice %27 {offsets = [0, 1280], sizes = [2, 256], strides = [1, 1]} : vector<2x2048xf32> to vector<2x256xf32>
    %182 = vector.shape_cast %181 : vector<2x256xf32> to vector<1x2x256xf32>
    %cst_62 = arith.constant dense<0.000000e+00> : vector<1xf32>
    %183 = vector.multi_reduction <add>, %182, %cst_62 [1, 2] : vector<1x2x256xf32> to vector<1xf32>
    %184 = vector.shape_cast %183 : vector<1xf32> to vector<1x1x1xf32>
    %185 = vector.extract %184[0, 0, 0] : f32 from vector<1x1x1xf32>
    %cst_63 = arith.constant 7.812500e-03 : f32
    %186 = arith.mulf %185, %cst_63 : f32
    %187 = arith.mulf %181, %181 : vector<2x256xf32>
    %188 = vector.shape_cast %187 : vector<2x256xf32> to vector<1x2x256xf32>
    %cst_64 = arith.constant dense<0.000000e+00> : vector<1xf32>
    %189 = vector.multi_reduction <add>, %188, %cst_64 [1, 2] : vector<1x2x256xf32> to vector<1xf32>
    %190 = vector.shape_cast %189 : vector<1xf32> to vector<1x1x1xf32>
    %191 = vector.extract %190[0, 0, 0] : f32 from vector<1x1x1xf32>
    %cst_65 = arith.constant 7.812500e-03 : f32
    %192 = arith.mulf %191, %cst_65 : f32
    %193 = arith.mulf %186, %186 : f32
    %194 = arith.subf %192, %193 : f32
    %c5 = arith.constant 5 : index
    %195 = memref.load %arg9[%c5] : memref<8xf32, #tpu.memory_space<smem>>
    %cst_66 = arith.constant 9.99999974E-6 : f32
    %196 = arith.addf %194, %cst_66 : f32
    %197 = math.rsqrt %196 : f32
    %198 = arith.mulf %195, %197 : f32
    %199 = vector.broadcast %186 : f32 to vector<2x256xf32>
    %200 = arith.subf %181, %199 : vector<2x256xf32>
    %201 = vector.broadcast %198 : f32 to vector<2x256xf32>
    %202 = arith.mulf %200, %201 : vector<2x256xf32>
    %c5_67 = arith.constant 5 : index
    %203 = memref.load %arg10[%c5_67] : memref<8xf32, #tpu.memory_space<smem>>
    %204 = vector.broadcast %203 : f32 to vector<2x256xf32>
    %205 = arith.addf %202, %204 : vector<2x256xf32>
    %cst_68 = arith.constant 0.000000e+00 : f32
    %206 = vector.broadcast %cst_68 : f32 to vector<2x256xf32>
    %207 = arith.maximumf %205, %206 : vector<2x256xf32>
    %208 = vector.broadcast %30 : vector<1x256xf32> to vector<2x256xf32>
    %209 = arith.mulf %207, %208 : vector<2x256xf32>
    %c0_69 = arith.constant 0 : index
    %c1408 = arith.constant 1408 : index
    %210 = vector.load %arg14[%c0_69, %c1408] : memref<2x2304xf32, #tpu.memory_space<vmem>>, vector<2x256xf32>
    tpu.vector_store %arg14[%c0_69, %c1408], %209 {strides = array<i32>} : memref<2x2304xf32, #tpu.memory_space<vmem>>, vector<2x256xf32>,
    %211 = vector.extract_strided_slice %27 {offsets = [0, 1536], sizes = [2, 256], strides = [1, 1]} : vector<2x2048xf32> to vector<2x256xf32>
    %212 = vector.shape_cast %211 : vector<2x256xf32> to vector<1x2x256xf32>
    %cst_70 = arith.constant dense<0.000000e+00> : vector<1xf32>
    %213 = vector.multi_reduction <add>, %212, %cst_70 [1, 2] : vector<1x2x256xf32> to vector<1xf32>
    %214 = vector.shape_cast %213 : vector<1xf32> to vector<1x1x1xf32>
    %215 = vector.extract %214[0, 0, 0] : f32 from vector<1x1x1xf32>
    %cst_71 = arith.constant 7.812500e-03 : f32
    %216 = arith.mulf %215, %cst_71 : f32
    %217 = arith.mulf %211, %211 : vector<2x256xf32>
    %218 = vector.shape_cast %217 : vector<2x256xf32> to vector<1x2x256xf32>
    %cst_72 = arith.constant dense<0.000000e+00> : vector<1xf32>
    %219 = vector.multi_reduction <add>, %218, %cst_72 [1, 2] : vector<1x2x256xf32> to vector<1xf32>
    %220 = vector.shape_cast %219 : vector<1xf32> to vector<1x1x1xf32>
    %221 = vector.extract %220[0, 0, 0] : f32 from vector<1x1x1xf32>
    %cst_73 = arith.constant 7.812500e-03 : f32
    %222 = arith.mulf %221, %cst_73 : f32
    %223 = arith.mulf %216, %216 : f32
    %224 = arith.subf %222, %223 : f32
    %c6 = arith.constant 6 : index
    %225 = memref.load %arg9[%c6] : memref<8xf32, #tpu.memory_space<smem>>
    %cst_74 = arith.constant 9.99999974E-6 : f32
    %226 = arith.addf %224, %cst_74 : f32
    %227 = math.rsqrt %226 : f32
    %228 = arith.mulf %225, %227 : f32
    %229 = vector.broadcast %216 : f32 to vector<2x256xf32>
    %230 = arith.subf %211, %229 : vector<2x256xf32>
    %231 = vector.broadcast %228 : f32 to vector<2x256xf32>
    %232 = arith.mulf %230, %231 : vector<2x256xf32>
    %c6_75 = arith.constant 6 : index
    %233 = memref.load %arg10[%c6_75] : memref<8xf32, #tpu.memory_space<smem>>
    %234 = vector.broadcast %233 : f32 to vector<2x256xf32>
    %235 = arith.addf %232, %234 : vector<2x256xf32>
    %cst_76 = arith.constant 0.000000e+00 : f32
    %236 = vector.broadcast %cst_76 : f32 to vector<2x256xf32>
    %237 = arith.maximumf %235, %236 : vector<2x256xf32>
    %238 = vector.broadcast %30 : vector<1x256xf32> to vector<2x256xf32>
    %239 = arith.mulf %237, %238 : vector<2x256xf32>
    %c0_77 = arith.constant 0 : index
    %c1664 = arith.constant 1664 : index
    %240 = vector.load %arg14[%c0_77, %c1664] : memref<2x2304xf32, #tpu.memory_space<vmem>>, vector<2x256xf32>
    tpu.vector_store %arg14[%c0_77, %c1664], %239 {strides = array<i32>} : memref<2x2304xf32, #tpu.memory_space<vmem>>, vector<2x256xf32>,
    %241 = vector.extract_strided_slice %27 {offsets = [0, 1792], sizes = [2, 256], strides = [1, 1]} : vector<2x2048xf32> to vector<2x256xf32>
    %242 = vector.shape_cast %241 : vector<2x256xf32> to vector<1x2x256xf32>
    %cst_78 = arith.constant dense<0.000000e+00> : vector<1xf32>
    %243 = vector.multi_reduction <add>, %242, %cst_78 [1, 2] : vector<1x2x256xf32> to vector<1xf32>
    %244 = vector.shape_cast %243 : vector<1xf32> to vector<1x1x1xf32>
    %245 = vector.extract %244[0, 0, 0] : f32 from vector<1x1x1xf32>
    %cst_79 = arith.constant 7.812500e-03 : f32
    %246 = arith.mulf %245, %cst_79 : f32
    %247 = arith.mulf %241, %241 : vector<2x256xf32>
    %248 = vector.shape_cast %247 : vector<2x256xf32> to vector<1x2x256xf32>
    %cst_80 = arith.constant dense<0.000000e+00> : vector<1xf32>
    %249 = vector.multi_reduction <add>, %248, %cst_80 [1, 2] : vector<1x2x256xf32> to vector<1xf32>
    %250 = vector.shape_cast %249 : vector<1xf32> to vector<1x1x1xf32>
    %251 = vector.extract %250[0, 0, 0] : f32 from vector<1x1x1xf32>
    %cst_81 = arith.constant 7.812500e-03 : f32
    %252 = arith.mulf %251, %cst_81 : f32
    %253 = arith.mulf %246, %246 : f32
    %254 = arith.subf %252, %253 : f32
    %c7 = arith.constant 7 : index
    %255 = memref.load %arg9[%c7] : memref<8xf32, #tpu.memory_space<smem>>
    %cst_82 = arith.constant 9.99999974E-6 : f32
    %256 = arith.addf %254, %cst_82 : f32
    %257 = math.rsqrt %256 : f32
    %258 = arith.mulf %255, %257 : f32
    %259 = vector.broadcast %246 : f32 to vector<2x256xf32>
    %260 = arith.subf %241, %259 : vector<2x256xf32>
    %261 = vector.broadcast %258 : f32 to vector<2x256xf32>
    %262 = arith.mulf %260, %261 : vector<2x256xf32>
    %c7_83 = arith.constant 7 : index
    %263 = memref.load %arg10[%c7_83] : memref<8xf32, #tpu.memory_space<smem>>
    %264 = vector.broadcast %263 : f32 to vector<2x256xf32>
    %265 = arith.addf %262, %264 : vector<2x256xf32>
    %cst_84 = arith.constant 0.000000e+00 : f32
    %266 = vector.broadcast %cst_84 : f32 to vector<2x256xf32>
    %267 = arith.maximumf %265, %266 : vector<2x256xf32>
    %268 = vector.broadcast %30 : vector<1x256xf32> to vector<2x256xf32>
    %269 = arith.mulf %267, %268 : vector<2x256xf32>
    %c0_85 = arith.constant 0 : index
    %c1920 = arith.constant 1920 : index
    %270 = vector.load %arg14[%c0_85, %c1920] : memref<2x2304xf32, #tpu.memory_space<vmem>>, vector<2x256xf32>
    tpu.vector_store %arg14[%c0_85, %c1920], %269 {strides = array<i32>} : memref<2x2304xf32, #tpu.memory_space<vmem>>, vector<2x256xf32>,
    %cst_86 = arith.constant 0.000000e+00 : f32
    %271 = vector.broadcast %cst_86 : f32 to vector<2x256xf32>
    %cst_87 = arith.constant 0.000000e+00 : f32
    %272 = vector.broadcast %cst_87 : f32 to vector<2x256xf32>
    %cst_88 = arith.constant 0.000000e+00 : f32
    %273 = vector.broadcast %cst_88 : f32 to vector<2x256xf32>
    %cst_89 = arith.constant 0.000000e+00 : f32
    %274 = vector.broadcast %cst_89 : f32 to vector<2x256xf32>
    %c0_90 = arith.constant 0 : index
    %c111 = arith.constant 111 : index
    %275 = vector.load %arg14[%c0_90, %c111] : memref<2x2304xf32, #tpu.memory_space<vmem>>, vector<2x2048xf32>
    %c0_91 = arith.constant 0 : index
    %c0_92 = arith.constant 0 : index
    %276 = vector.load %arg6[%c0_91, %c0_92] : memref<36x2048xf32, #tpu.memory_space<vmem>>, vector<1x2048xf32>
    %277 = vector.broadcast %276 : vector<1x2048xf32> to vector<2x2048xf32>
    %278 = arith.mulf %275, %277 : vector<2x2048xf32>
    %279 = vector.extract_strided_slice %278 {offsets = [0, 0], sizes = [2, 256], strides = [1, 1]} : vector<2x2048xf32> to vector<2x256xf32>
    %280 = arith.addf %271, %279 : vector<2x256xf32>
    %281 = vector.extract_strided_slice %278 {offsets = [0, 256], sizes = [2, 256], strides = [1, 1]} : vector<2x2048xf32> to vector<2x256xf32>
    %282 = arith.addf %280, %281 : vector<2x256xf32>
    %283 = vector.extract_strided_slice %278 {offsets = [0, 512], sizes = [2, 256], strides = [1, 1]} : vector<2x2048xf32> to vector<2x256xf32>
    %284 = arith.addf %282, %283 : vector<2x256xf32>
    %285 = vector.extract_strided_slice %278 {offsets = [0, 768], sizes = [2, 256], strides = [1, 1]} : vector<2x2048xf32> to vector<2x256xf32>
    %286 = arith.addf %284, %285 : vector<2x256xf32>
    %287 = vector.extract_strided_slice %278 {offsets = [0, 1024], sizes = [2, 256], strides = [1, 1]} : vector<2x2048xf32> to vector<2x256xf32>
    %288 = arith.addf %286, %287 : vector<2x256xf32>
    %289 = vector.extract_strided_slice %278 {offsets = [0, 1280], sizes = [2, 256], strides = [1, 1]} : vector<2x2048xf32> to vector<2x256xf32>
    %290 = arith.addf %288, %289 : vector<2x256xf32>
    %291 = vector.extract_strided_slice %278 {offsets = [0, 1536], sizes = [2, 256], strides = [1, 1]} : vector<2x2048xf32> to vector<2x256xf32>
    %292 = arith.addf %290, %291 : vector<2x256xf32>
    %293 = vector.extract_strided_slice %278 {offsets = [0, 1792], sizes = [2, 256], strides = [1, 1]} : vector<2x2048xf32> to vector<2x256xf32>
    %294 = arith.addf %292, %293 : vector<2x256xf32>
    %c1_93 = arith.constant 1 : index
    %c0_94 = arith.constant 0 : index
    %295 = vector.load %arg6[%c1_93, %c0_94] : memref<36x2048xf32, #tpu.memory_space<vmem>>, vector<1x2048xf32>
    %296 = vector.broadcast %295 : vector<1x2048xf32> to vector<2x2048xf32>
    %297 = arith.mulf %275, %296 : vector<2x2048xf32>
    %298 = vector.extract_strided_slice %297 {offsets = [0, 0], sizes = [2, 256], strides = [1, 1]} : vector<2x2048xf32> to vector<2x256xf32>
    %299 = arith.addf %272, %298 : vector<2x256xf32>
    %300 = vector.extract_strided_slice %297 {offsets = [0, 256], sizes = [2, 256], strides = [1, 1]} : vector<2x2048xf32> to vector<2x256xf32>
    %301 = arith.addf %299, %300 : vector<2x256xf32>
    %302 = vector.extract_strided_slice %297 {offsets = [0, 512], sizes = [2, 256], strides = [1, 1]} : vector<2x2048xf32> to vector<2x256xf32>
    %303 = arith.addf %301, %302 : vector<2x256xf32>
    %304 = vector.extract_strided_slice %297 {offsets = [0, 768], sizes = [2, 256], strides = [1, 1]} : vector<2x2048xf32> to vector<2x256xf32>
    %305 = arith.addf %303, %304 : vector<2x256xf32>
    %306 = vector.extract_strided_slice %297 {offsets = [0, 1024], sizes = [2, 256], strides = [1, 1]} : vector<2x2048xf32> to vector<2x256xf32>
    %307 = arith.addf %305, %306 : vector<2x256xf32>
    %308 = vector.extract_strided_slice %297 {offsets = [0, 1280], sizes = [2, 256], strides = [1, 1]} : vector<2x2048xf32> to vector<2x256xf32>
    %309 = arith.addf %307, %308 : vector<2x256xf32>
    %310 = vector.extract_strided_slice %297 {offsets = [0, 1536], sizes = [2, 256], strides = [1, 1]} : vector<2x2048xf32> to vector<2x256xf32>
    %311 = arith.addf %309, %310 : vector<2x256xf32>
    %312 = vector.extract_strided_slice %297 {offsets = [0, 1792], sizes = [2, 256], strides = [1, 1]} : vector<2x2048xf32> to vector<2x256xf32>
    %313 = arith.addf %311, %312 : vector<2x256xf32>
    %c2_95 = arith.constant 2 : index
    %c0_96 = arith.constant 0 : index
    %314 = vector.load %arg6[%c2_95, %c0_96] : memref<36x2048xf32, #tpu.memory_space<vmem>>, vector<1x2048xf32>
    %315 = vector.broadcast %314 : vector<1x2048xf32> to vector<2x2048xf32>
    %316 = arith.mulf %275, %315 : vector<2x2048xf32>
    %317 = vector.extract_strided_slice %316 {offsets = [0, 0], sizes = [2, 256], strides = [1, 1]} : vector<2x2048xf32> to vector<2x256xf32>
    %318 = arith.addf %273, %317 : vector<2x256xf32>
    %319 = vector.extract_strided_slice %316 {offsets = [0, 256], sizes = [2, 256], strides = [1, 1]} : vector<2x2048xf32> to vector<2x256xf32>
    %320 = arith.addf %318, %319 : vector<2x256xf32>
    %321 = vector.extract_strided_slice %316 {offsets = [0, 512], sizes = [2, 256], strides = [1, 1]} : vector<2x2048xf32> to vector<2x256xf32>
    %322 = arith.addf %320, %321 : vector<2x256xf32>
    %323 = vector.extract_strided_slice %316 {offsets = [0, 768], sizes = [2, 256], strides = [1, 1]} : vector<2x2048xf32> to vector<2x256xf32>
    %324 = arith.addf %322, %323 : vector<2x256xf32>
    %325 = vector.extract_strided_slice %316 {offsets = [0, 1024], sizes = [2, 256], strides = [1, 1]} : vector<2x2048xf32> to vector<2x256xf32>
    %326 = arith.addf %324, %325 : vector<2x256xf32>
    %327 = vector.extract_strided_slice %316 {offsets = [0, 1280], sizes = [2, 256], strides = [1, 1]} : vector<2x2048xf32> to vector<2x256xf32>
    %328 = arith.addf %326, %327 : vector<2x256xf32>
    %329 = vector.extract_strided_slice %316 {offsets = [0, 1536], sizes = [2, 256], strides = [1, 1]} : vector<2x2048xf32> to vector<2x256xf32>
    %330 = arith.addf %328, %329 : vector<2x256xf32>
    %331 = vector.extract_strided_slice %316 {offsets = [0, 1792], sizes = [2, 256], strides = [1, 1]} : vector<2x2048xf32> to vector<2x256xf32>
    %332 = arith.addf %330, %331 : vector<2x256xf32>
    %c3_97 = arith.constant 3 : index
    %c0_98 = arith.constant 0 : index
    %333 = vector.load %arg6[%c3_97, %c0_98] : memref<36x2048xf32, #tpu.memory_space<vmem>>, vector<1x2048xf32>
    %334 = vector.broadcast %333 : vector<1x2048xf32> to vector<2x2048xf32>
    %335 = arith.mulf %275, %334 : vector<2x2048xf32>
    %336 = vector.extract_strided_slice %335 {offsets = [0, 0], sizes = [2, 256], strides = [1, 1]} : vector<2x2048xf32> to vector<2x256xf32>
    %337 = arith.addf %274, %336 : vector<2x256xf32>
    %338 = vector.extract_strided_slice %335 {offsets = [0, 256], sizes = [2, 256], strides = [1, 1]} : vector<2x2048xf32> to vector<2x256xf32>
    %339 = arith.addf %337, %338 : vector<2x256xf32>
    %340 = vector.extract_strided_slice %335 {offsets = [0, 512], sizes = [2, 256], strides = [1, 1]} : vector<2x2048xf32> to vector<2x256xf32>
    %341 = arith.addf %339, %340 : vector<2x256xf32>
    %342 = vector.extract_strided_slice %335 {offsets = [0, 768], sizes = [2, 256], strides = [1, 1]} : vector<2x2048xf32> to vector<2x256xf32>
    %343 = arith.addf %341, %342 : vector<2x256xf32>
    %344 = vector.extract_strided_slice %335 {offsets = [0, 1024], sizes = [2, 256], strides = [1, 1]} : vector<2x2048xf32> to vector<2x256xf32>
    %345 = arith.addf %343, %344 : vector<2x256xf32>
    %346 = vector.extract_strided_slice %335 {offsets = [0, 1280], sizes = [2, 256], strides = [1, 1]} : vector<2x2048xf32> to vector<2x256xf32>
    %347 = arith.addf %345, %346 : vector<2x256xf32>
    %348 = vector.extract_strided_slice %335 {offsets = [0, 1536], sizes = [2, 256], strides = [1, 1]} : vector<2x2048xf32> to vector<2x256xf32>
    %349 = arith.addf %347, %348 : vector<2x256xf32>
    %350 = vector.extract_strided_slice %335 {offsets = [0, 1792], sizes = [2, 256], strides = [1, 1]} : vector<2x2048xf32> to vector<2x256xf32>
    %351 = arith.addf %349, %350 : vector<2x256xf32>
    %c0_99 = arith.constant 0 : index
    %c112 = arith.constant 112 : index
    %352 = vector.load %arg14[%c0_99, %c112] : memref<2x2304xf32, #tpu.memory_space<vmem>>, vector<2x2048xf32>
    %c4_100 = arith.constant 4 : index
    %c0_101 = arith.constant 0 : index
    %353 = vector.load %arg6[%c4_100, %c0_101] : memref<36x2048xf32, #tpu.memory_space<vmem>>, vector<1x2048xf32>
    %354 = vector.broadcast %353 : vector<1x2048xf32> to vector<2x2048xf32>
    %355 = arith.mulf %352, %354 : vector<2x2048xf32>
    %356 = vector.extract_strided_slice %355 {offsets = [0, 0], sizes = [2, 256], strides = [1, 1]} : vector<2x2048xf32> to vector<2x256xf32>
    %357 = arith.addf %294, %356 : vector<2x256xf32>
    %358 = vector.extract_strided_slice %355 {offsets = [0, 256], sizes = [2, 256], strides = [1, 1]} : vector<2x2048xf32> to vector<2x256xf32>
    %359 = arith.addf %357, %358 : vector<2x256xf32>
    %360 = vector.extract_strided_slice %355 {offsets = [0, 512], sizes = [2, 256], strides = [1, 1]} : vector<2x2048xf32> to vector<2x256xf32>
    %361 = arith.addf %359, %360 : vector<2x256xf32>
    %362 = vector.extract_strided_slice %355 {offsets = [0, 768], sizes = [2, 256], strides = [1, 1]} : vector<2x2048xf32> to vector<2x256xf32>
    %363 = arith.addf %361, %362 : vector<2x256xf32>
    %364 = vector.extract_strided_slice %355 {offsets = [0, 1024], sizes = [2, 256], strides = [1, 1]} : vector<2x2048xf32> to vector<2x256xf32>
    %365 = arith.addf %363, %364 : vector<2x256xf32>
    %366 = vector.extract_strided_slice %355 {offsets = [0, 1280], sizes = [2, 256], strides = [1, 1]} : vector<2x2048xf32> to vector<2x256xf32>
    %367 = arith.addf %365, %366 : vector<2x256xf32>
    %368 = vector.extract_strided_slice %355 {offsets = [0, 1536], sizes = [2, 256], strides = [1, 1]} : vector<2x2048xf32> to vector<2x256xf32>
    %369 = arith.addf %367, %368 : vector<2x256xf32>
    %370 = vector.extract_strided_slice %355 {offsets = [0, 1792], sizes = [2, 256], strides = [1, 1]} : vector<2x2048xf32> to vector<2x256xf32>
    %371 = arith.addf %369, %370 : vector<2x256xf32>
    %c5_102 = arith.constant 5 : index
    %c0_103 = arith.constant 0 : index
    %372 = vector.load %arg6[%c5_102, %c0_103] : memref<36x2048xf32, #tpu.memory_space<vmem>>, vector<1x2048xf32>
    %373 = vector.broadcast %372 : vector<1x2048xf32> to vector<2x2048xf32>
    %374 = arith.mulf %352, %373 : vector<2x2048xf32>
    %375 = vector.extract_strided_slice %374 {offsets = [0, 0], sizes = [2, 256], strides = [1, 1]} : vector<2x2048xf32> to vector<2x256xf32>
    %376 = arith.addf %313, %375 : vector<2x256xf32>
    %377 = vector.extract_strided_slice %374 {offsets = [0, 256], sizes = [2, 256], strides = [1, 1]} : vector<2x2048xf32> to vector<2x256xf32>
    %378 = arith.addf %376, %377 : vector<2x256xf32>
    %379 = vector.extract_strided_slice %374 {offsets = [0, 512], sizes = [2, 256], strides = [1, 1]} : vector<2x2048xf32> to vector<2x256xf32>
    %380 = arith.addf %378, %379 : vector<2x256xf32>
    %381 = vector.extract_strided_slice %374 {offsets = [0, 768], sizes = [2, 256], strides = [1, 1]} : vector<2x2048xf32> to vector<2x256xf32>
    %382 = arith.addf %380, %381 : vector<2x256xf32>
    %383 = vector.extract_strided_slice %374 {offsets = [0, 1024], sizes = [2, 256], strides = [1, 1]} : vector<2x2048xf32> to vector<2x256xf32>
    %384 = arith.addf %382, %383 : vector<2x256xf32>
    %385 = vector.extract_strided_slice %374 {offsets = [0, 1280], sizes = [2, 256], strides = [1, 1]} : vector<2x2048xf32> to vector<2x256xf32>
    %386 = arith.addf %384, %385 : vector<2x256xf32>
    %387 = vector.extract_strided_slice %374 {offsets = [0, 1536], sizes = [2, 256], strides = [1, 1]} : vector<2x2048xf32> to vector<2x256xf32>
    %388 = arith.addf %386, %387 : vector<2x256xf32>
    %389 = vector.extract_strided_slice %374 {offsets = [0, 1792], sizes = [2, 256], strides = [1, 1]} : vector<2x2048xf32> to vector<2x256xf32>
    %390 = arith.addf %388, %389 : vector<2x256xf32>
    %c6_104 = arith.constant 6 : index
    %c0_105 = arith.constant 0 : index
    %391 = vector.load %arg6[%c6_104, %c0_105] : memref<36x2048xf32, #tpu.memory_space<vmem>>, vector<1x2048xf32>
    %392 = vector.broadcast %391 : vector<1x2048xf32> to vector<2x2048xf32>
    %393 = arith.mulf %352, %392 : vector<2x2048xf32>
    %394 = vector.extract_strided_slice %393 {offsets = [0, 0], sizes = [2, 256], strides = [1, 1]} : vector<2x2048xf32> to vector<2x256xf32>
    %395 = arith.addf %332, %394 : vector<2x256xf32>
    %396 = vector.extract_strided_slice %393 {offsets = [0, 256], sizes = [2, 256], strides = [1, 1]} : vector<2x2048xf32> to vector<2x256xf32>
    %397 = arith.addf %395, %396 : vector<2x256xf32>
    %398 = vector.extract_strided_slice %393 {offsets = [0, 512], sizes = [2, 256], strides = [1, 1]} : vector<2x2048xf32> to vector<2x256xf32>
    %399 = arith.addf %397, %398 : vector<2x256xf32>
    %400 = vector.extract_strided_slice %393 {offsets = [0, 768], sizes = [2, 256], strides = [1, 1]} : vector<2x2048xf32> to vector<2x256xf32>
    %401 = arith.addf %399, %400 : vector<2x256xf32>
    %402 = vector.extract_strided_slice %393 {offsets = [0, 1024], sizes = [2, 256], strides = [1, 1]} : vector<2x2048xf32> to vector<2x256xf32>
    %403 = arith.addf %401, %402 : vector<2x256xf32>
    %404 = vector.extract_strided_slice %393 {offsets = [0, 1280], sizes = [2, 256], strides = [1, 1]} : vector<2x2048xf32> to vector<2x256xf32>
    %405 = arith.addf %403, %404 : vector<2x256xf32>
    %406 = vector.extract_strided_slice %393 {offsets = [0, 1536], sizes = [2, 256], strides = [1, 1]} : vector<2x2048xf32> to vector<2x256xf32>
    %407 = arith.addf %405, %406 : vector<2x256xf32>
    %408 = vector.extract_strided_slice %393 {offsets = [0, 1792], sizes = [2, 256], strides = [1, 1]} : vector<2x2048xf32> to vector<2x256xf32>
    %409 = arith.addf %407, %408 : vector<2x256xf32>
    %c7_106 = arith.constant 7 : index
    %c0_107 = arith.constant 0 : index
    %410 = vector.load %arg6[%c7_106, %c0_107] : memref<36x2048xf32, #tpu.memory_space<vmem>>, vector<1x2048xf32>
    %411 = vector.broadcast %410 : vector<1x2048xf32> to vector<2x2048xf32>
    %412 = arith.mulf %352, %411 : vector<2x2048xf32>
    %413 = vector.extract_strided_slice %412 {offsets = [0, 0], sizes = [2, 256], strides = [1, 1]} : vector<2x2048xf32> to vector<2x256xf32>
    %414 = arith.addf %351, %413 : vector<2x256xf32>
    %415 = vector.extract_strided_slice %412 {offsets = [0, 256], sizes = [2, 256], strides = [1, 1]} : vector<2x2048xf32> to vector<2x256xf32>
    %416 = arith.addf %414, %415 : vector<2x256xf32>
    %417 = vector.extract_strided_slice %412 {offsets = [0, 512], sizes = [2, 256], strides = [1, 1]} : vector<2x2048xf32> to vector<2x256xf32>
    %418 = arith.addf %416, %417 : vector<2x256xf32>
    %419 = vector.extract_strided_slice %412 {offsets = [0, 768], sizes = [2, 256], strides = [1, 1]} : vector<2x2048xf32> to vector<2x256xf32>
    %420 = arith.addf %418, %419 : vector<2x256xf32>
    %421 = vector.extract_strided_slice %412 {offsets = [0, 1024], sizes = [2, 256], strides = [1, 1]} : vector<2x2048xf32> to vector<2x256xf32>
    %422 = arith.addf %420, %421 : vector<2x256xf32>
    %423 = vector.extract_strided_slice %412 {offsets = [0, 1280], sizes = [2, 256], strides = [1, 1]} : vector<2x2048xf32> to vector<2x256xf32>
    %424 = arith.addf %422, %423 : vector<2x256xf32>
    %425 = vector.extract_strided_slice %412 {offsets = [0, 1536], sizes = [2, 256], strides = [1, 1]} : vector<2x2048xf32> to vector<2x256xf32>
    %426 = arith.addf %424, %425 : vector<2x256xf32>
    %427 = vector.extract_strided_slice %412 {offsets = [0, 1792], sizes = [2, 256], strides = [1, 1]} : vector<2x2048xf32> to vector<2x256xf32>
    %428 = arith.addf %426, %427 : vector<2x256xf32>
    %c0_108 = arith.constant 0 : index
    %c113 = arith.constant 113 : index
    %429 = vector.load %arg14[%c0_108, %c113] : memref<2x2304xf32, #tpu.memory_space<vmem>>, vector<2x2048xf32>
    %c8 = arith.constant 8 : index
    %c0_109 = arith.constant 0 : index
    %430 = vector.load %arg6[%c8, %c0_109] : memref<36x2048xf32, #tpu.memory_space<vmem>>, vector<1x2048xf32>
    %431 = vector.broadcast %430 : vector<1x2048xf32> to vector<2x2048xf32>
    %432 = arith.mulf %429, %431 : vector<2x2048xf32>
    %433 = vector.extract_strided_slice %432 {offsets = [0, 0], sizes = [2, 256], strides = [1, 1]} : vector<2x2048xf32> to vector<2x256xf32>
    %434 = arith.addf %371, %433 : vector<2x256xf32>
    %435 = vector.extract_strided_slice %432 {offsets = [0, 256], sizes = [2, 256], strides = [1, 1]} : vector<2x2048xf32> to vector<2x256xf32>
    %436 = arith.addf %434, %435 : vector<2x256xf32>
    %437 = vector.extract_strided_slice %432 {offsets = [0, 512], sizes = [2, 256], strides = [1, 1]} : vector<2x2048xf32> to vector<2x256xf32>
    %438 = arith.addf %436, %437 : vector<2x256xf32>
    %439 = vector.extract_strided_slice %432 {offsets = [0, 768], sizes = [2, 256], strides = [1, 1]} : vector<2x2048xf32> to vector<2x256xf32>
    %440 = arith.addf %438, %439 : vector<2x256xf32>
    %441 = vector.extract_strided_slice %432 {offsets = [0, 1024], sizes = [2, 256], strides = [1, 1]} : vector<2x2048xf32> to vector<2x256xf32>
    %442 = arith.addf %440, %441 : vector<2x256xf32>
    %443 = vector.extract_strided_slice %432 {offsets = [0, 1280], sizes = [2, 256], strides = [1, 1]} : vector<2x2048xf32> to vector<2x256xf32>
    %444 = arith.addf %442, %443 : vector<2x256xf32>
    %445 = vector.extract_strided_slice %432 {offsets = [0, 1536], sizes = [2, 256], strides = [1, 1]} : vector<2x2048xf32> to vector<2x256xf32>
    %446 = arith.addf %444, %445 : vector<2x256xf32>
    %447 = vector.extract_strided_slice %432 {offsets = [0, 1792], sizes = [2, 256], strides = [1, 1]} : vector<2x2048xf32> to vector<2x256xf32>
    %448 = arith.addf %446, %447 : vector<2x256xf32>
    %c9 = arith.constant 9 : index
    %c0_110 = arith.constant 0 : index
    %449 = vector.load %arg6[%c9, %c0_110] : memref<36x2048xf32, #tpu.memory_space<vmem>>, vector<1x2048xf32>
    %450 = vector.broadcast %449 : vector<1x2048xf32> to vector<2x2048xf32>
    %451 = arith.mulf %429, %450 : vector<2x2048xf32>
    %452 = vector.extract_strided_slice %451 {offsets = [0, 0], sizes = [2, 256], strides = [1, 1]} : vector<2x2048xf32> to vector<2x256xf32>
    %453 = arith.addf %390, %452 : vector<2x256xf32>
    %454 = vector.extract_strided_slice %451 {offsets = [0, 256], sizes = [2, 256], strides = [1, 1]} : vector<2x2048xf32> to vector<2x256xf32>
    %455 = arith.addf %453, %454 : vector<2x256xf32>
    %456 = vector.extract_strided_slice %451 {offsets = [0, 512], sizes = [2, 256], strides = [1, 1]} : vector<2x2048xf32> to vector<2x256xf32>
    %457 = arith.addf %455, %456 : vector<2x256xf32>
    %458 = vector.extract_strided_slice %451 {offsets = [0, 768], sizes = [2, 256], strides = [1, 1]} : vector<2x2048xf32> to vector<2x256xf32>
    %459 = arith.addf %457, %458 : vector<2x256xf32>
    %460 = vector.extract_strided_slice %451 {offsets = [0, 1024], sizes = [2, 256], strides = [1, 1]} : vector<2x2048xf32> to vector<2x256xf32>
    %461 = arith.addf %459, %460 : vector<2x256xf32>
    %462 = vector.extract_strided_slice %451 {offsets = [0, 1280], sizes = [2, 256], strides = [1, 1]} : vector<2x2048xf32> to vector<2x256xf32>
    %463 = arith.addf %461, %462 : vector<2x256xf32>
    %464 = vector.extract_strided_slice %451 {offsets = [0, 1536], sizes = [2, 256], strides = [1, 1]} : vector<2x2048xf32> to vector<2x256xf32>
    %465 = arith.addf %463, %464 : vector<2x256xf32>
    %466 = vector.extract_strided_slice %451 {offsets = [0, 1792], sizes = [2, 256], strides = [1, 1]} : vector<2x2048xf32> to vector<2x256xf32>
    %467 = arith.addf %465, %466 : vector<2x256xf32>
    %c10 = arith.constant 10 : index
    %c0_111 = arith.constant 0 : index
    %468 = vector.load %arg6[%c10, %c0_111] : memref<36x2048xf32, #tpu.memory_space<vmem>>, vector<1x2048xf32>
    %469 = vector.broadcast %468 : vector<1x2048xf32> to vector<2x2048xf32>
    %470 = arith.mulf %429, %469 : vector<2x2048xf32>
    %471 = vector.extract_strided_slice %470 {offsets = [0, 0], sizes = [2, 256], strides = [1, 1]} : vector<2x2048xf32> to vector<2x256xf32>
    %472 = arith.addf %409, %471 : vector<2x256xf32>
    %473 = vector.extract_strided_slice %470 {offsets = [0, 256], sizes = [2, 256], strides = [1, 1]} : vector<2x2048xf32> to vector<2x256xf32>
    %474 = arith.addf %472, %473 : vector<2x256xf32>
    %475 = vector.extract_strided_slice %470 {offsets = [0, 512], sizes = [2, 256], strides = [1, 1]} : vector<2x2048xf32> to vector<2x256xf32>
    %476 = arith.addf %474, %475 : vector<2x256xf32>
    %477 = vector.extract_strided_slice %470 {offsets = [0, 768], sizes = [2, 256], strides = [1, 1]} : vector<2x2048xf32> to vector<2x256xf32>
    %478 = arith.addf %476, %477 : vector<2x256xf32>
    %479 = vector.extract_strided_slice %470 {offsets = [0, 1024], sizes = [2, 256], strides = [1, 1]} : vector<2x2048xf32> to vector<2x256xf32>
    %480 = arith.addf %478, %479 : vector<2x256xf32>
    %481 = vector.extract_strided_slice %470 {offsets = [0, 1280], sizes = [2, 256], strides = [1, 1]} : vector<2x2048xf32> to vector<2x256xf32>
    %482 = arith.addf %480, %481 : vector<2x256xf32>
    %483 = vector.extract_strided_slice %470 {offsets = [0, 1536], sizes = [2, 256], strides = [1, 1]} : vector<2x2048xf32> to vector<2x256xf32>
    %484 = arith.addf %482, %483 : vector<2x256xf32>
    %485 = vector.extract_strided_slice %470 {offsets = [0, 1792], sizes = [2, 256], strides = [1, 1]} : vector<2x2048xf32> to vector<2x256xf32>
    %486 = arith.addf %484, %485 : vector<2x256xf32>
    %c11 = arith.constant 11 : index
    %c0_112 = arith.constant 0 : index
    %487 = vector.load %arg6[%c11, %c0_112] : memref<36x2048xf32, #tpu.memory_space<vmem>>, vector<1x2048xf32>
    %488 = vector.broadcast %487 : vector<1x2048xf32> to vector<2x2048xf32>
    %489 = arith.mulf %429, %488 : vector<2x2048xf32>
    %490 = vector.extract_strided_slice %489 {offsets = [0, 0], sizes = [2, 256], strides = [1, 1]} : vector<2x2048xf32> to vector<2x256xf32>
    %491 = arith.addf %428, %490 : vector<2x256xf32>
    %492 = vector.extract_strided_slice %489 {offsets = [0, 256], sizes = [2, 256], strides = [1, 1]} : vector<2x2048xf32> to vector<2x256xf32>
    %493 = arith.addf %491, %492 : vector<2x256xf32>
    %494 = vector.extract_strided_slice %489 {offsets = [0, 512], sizes = [2, 256], strides = [1, 1]} : vector<2x2048xf32> to vector<2x256xf32>
    %495 = arith.addf %493, %494 : vector<2x256xf32>
    %496 = vector.extract_strided_slice %489 {offsets = [0, 768], sizes = [2, 256], strides = [1, 1]} : vector<2x2048xf32> to vector<2x256xf32>
    %497 = arith.addf %495, %496 : vector<2x256xf32>
    %498 = vector.extract_strided_slice %489 {offsets = [0, 1024], sizes = [2, 256], strides = [1, 1]} : vector<2x2048xf32> to vector<2x256xf32>
    %499 = arith.addf %497, %498 : vector<2x256xf32>
    %500 = vector.extract_strided_slice %489 {offsets = [0, 1280], sizes = [2, 256], strides = [1, 1]} : vector<2x2048xf32> to vector<2x256xf32>
    %501 = arith.addf %499, %500 : vector<2x256xf32>
    %502 = vector.extract_strided_slice %489 {offsets = [0, 1536], sizes = [2, 256], strides = [1, 1]} : vector<2x2048xf32> to vector<2x256xf32>
    %503 = arith.addf %501, %502 : vector<2x256xf32>
    %504 = vector.extract_strided_slice %489 {offsets = [0, 1792], sizes = [2, 256], strides = [1, 1]} : vector<2x2048xf32> to vector<2x256xf32>
    %505 = arith.addf %503, %504 : vector<2x256xf32>
    %c0_113 = arith.constant 0 : index
    %c127 = arith.constant 127 : index
    %506 = vector.load %arg14[%c0_113, %c127] : memref<2x2304xf32, #tpu.memory_space<vmem>>, vector<2x2048xf32>
    %c12 = arith.constant 12 : index
    %c0_114 = arith.constant 0 : index
    %507 = vector.load %arg6[%c12, %c0_114] : memref<36x2048xf32, #tpu.memory_space<vmem>>, vector<1x2048xf32>
    %508 = vector.broadcast %507 : vector<1x2048xf32> to vector<2x2048xf32>
    %509 = arith.mulf %506, %508 : vector<2x2048xf32>
    %510 = vector.extract_strided_slice %509 {offsets = [0, 0], sizes = [2, 256], strides = [1, 1]} : vector<2x2048xf32> to vector<2x256xf32>
    %511 = arith.addf %448, %510 : vector<2x256xf32>
    %512 = vector.extract_strided_slice %509 {offsets = [0, 256], sizes = [2, 256], strides = [1, 1]} : vector<2x2048xf32> to vector<2x256xf32>
    %513 = arith.addf %511, %512 : vector<2x256xf32>
    %514 = vector.extract_strided_slice %509 {offsets = [0, 512], sizes = [2, 256], strides = [1, 1]} : vector<2x2048xf32> to vector<2x256xf32>
    %515 = arith.addf %513, %514 : vector<2x256xf32>
    %516 = vector.extract_strided_slice %509 {offsets = [0, 768], sizes = [2, 256], strides = [1, 1]} : vector<2x2048xf32> to vector<2x256xf32>
    %517 = arith.addf %515, %516 : vector<2x256xf32>
    %518 = vector.extract_strided_slice %509 {offsets = [0, 1024], sizes = [2, 256], strides = [1, 1]} : vector<2x2048xf32> to vector<2x256xf32>
    %519 = arith.addf %517, %518 : vector<2x256xf32>
    %520 = vector.extract_strided_slice %509 {offsets = [0, 1280], sizes = [2, 256], strides = [1, 1]} : vector<2x2048xf32> to vector<2x256xf32>
    %521 = arith.addf %519, %520 : vector<2x256xf32>
    %522 = vector.extract_strided_slice %509 {offsets = [0, 1536], sizes = [2, 256], strides = [1, 1]} : vector<2x2048xf32> to vector<2x256xf32>
    %523 = arith.addf %521, %522 : vector<2x256xf32>
    %524 = vector.extract_strided_slice %509 {offsets = [0, 1792], sizes = [2, 256], strides = [1, 1]} : vector<2x2048xf32> to vector<2x256xf32>
    %525 = arith.addf %523, %524 : vector<2x256xf32>
    %c13 = arith.constant 13 : index
    %c0_115 = arith.constant 0 : index
    %526 = vector.load %arg6[%c13, %c0_115] : memref<36x2048xf32, #tpu.memory_space<vmem>>, vector<1x2048xf32>
    %527 = vector.broadcast %526 : vector<1x2048xf32> to vector<2x2048xf32>
    %528 = arith.mulf %506, %527 : vector<2x2048xf32>
    %529 = vector.extract_strided_slice %528 {offsets = [0, 0], sizes = [2, 256], strides = [1, 1]} : vector<2x2048xf32> to vector<2x256xf32>
    %530 = arith.addf %467, %529 : vector<2x256xf32>
    %531 = vector.extract_strided_slice %528 {offsets = [0, 256], sizes = [2, 256], strides = [1, 1]} : vector<2x2048xf32> to vector<2x256xf32>
    %532 = arith.addf %530, %531 : vector<2x256xf32>
    %533 = vector.extract_strided_slice %528 {offsets = [0, 512], sizes = [2, 256], strides = [1, 1]} : vector<2x2048xf32> to vector<2x256xf32>
    %534 = arith.addf %532, %533 : vector<2x256xf32>
    %535 = vector.extract_strided_slice %528 {offsets = [0, 768], sizes = [2, 256], strides = [1, 1]} : vector<2x2048xf32> to vector<2x256xf32>
    %536 = arith.addf %534, %535 : vector<2x256xf32>
    %537 = vector.extract_strided_slice %528 {offsets = [0, 1024], sizes = [2, 256], strides = [1, 1]} : vector<2x2048xf32> to vector<2x256xf32>
    %538 = arith.addf %536, %537 : vector<2x256xf32>
    %539 = vector.extract_strided_slice %528 {offsets = [0, 1280], sizes = [2, 256], strides = [1, 1]} : vector<2x2048xf32> to vector<2x256xf32>
    %540 = arith.addf %538, %539 : vector<2x256xf32>
    %541 = vector.extract_strided_slice %528 {offsets = [0, 1536], sizes = [2, 256], strides = [1, 1]} : vector<2x2048xf32> to vector<2x256xf32>
    %542 = arith.addf %540, %541 : vector<2x256xf32>
    %543 = vector.extract_strided_slice %528 {offsets = [0, 1792], sizes = [2, 256], strides = [1, 1]} : vector<2x2048xf32> to vector<2x256xf32>
    %544 = arith.addf %542, %543 : vector<2x256xf32>
    %c14 = arith.constant 14 : index
    %c0_116 = arith.constant 0 : index
    %545 = vector.load %arg6[%c14, %c0_116] : memref<36x2048xf32, #tpu.memory_space<vmem>>, vector<1x2048xf32>
    %546 = vector.broadcast %545 : vector<1x2048xf32> to vector<2x2048xf32>
    %547 = arith.mulf %506, %546 : vector<2x2048xf32>
    %548 = vector.extract_strided_slice %547 {offsets = [0, 0], sizes = [2, 256], strides = [1, 1]} : vector<2x2048xf32> to vector<2x256xf32>
    %549 = arith.addf %486, %548 : vector<2x256xf32>
    %550 = vector.extract_strided_slice %547 {offsets = [0, 256], sizes = [2, 256], strides = [1, 1]} : vector<2x2048xf32> to vector<2x256xf32>
    %551 = arith.addf %549, %550 : vector<2x256xf32>
    %552 = vector.extract_strided_slice %547 {offsets = [0, 512], sizes = [2, 256], strides = [1, 1]} : vector<2x2048xf32> to vector<2x256xf32>
    %553 = arith.addf %551, %552 : vector<2x256xf32>
    %554 = vector.extract_strided_slice %547 {offsets = [0, 768], sizes = [2, 256], strides = [1, 1]} : vector<2x2048xf32> to vector<2x256xf32>
    %555 = arith.addf %553, %554 : vector<2x256xf32>
    %556 = vector.extract_strided_slice %547 {offsets = [0, 1024], sizes = [2, 256], strides = [1, 1]} : vector<2x2048xf32> to vector<2x256xf32>
    %557 = arith.addf %555, %556 : vector<2x256xf32>
    %558 = vector.extract_strided_slice %547 {offsets = [0, 1280], sizes = [2, 256], strides = [1, 1]} : vector<2x2048xf32> to vector<2x256xf32>
    %559 = arith.addf %557, %558 : vector<2x256xf32>
    %560 = vector.extract_strided_slice %547 {offsets = [0, 1536], sizes = [2, 256], strides = [1, 1]} : vector<2x2048xf32> to vector<2x256xf32>
    %561 = arith.addf %559, %560 : vector<2x256xf32>
    %562 = vector.extract_strided_slice %547 {offsets = [0, 1792], sizes = [2, 256], strides = [1, 1]} : vector<2x2048xf32> to vector<2x256xf32>
    %563 = arith.addf %561, %562 : vector<2x256xf32>
    %c15 = arith.constant 15 : index
    %c0_117 = arith.constant 0 : index
    %564 = vector.load %arg6[%c15, %c0_117] : memref<36x2048xf32, #tpu.memory_space<vmem>>, vector<1x2048xf32>
    %565 = vector.broadcast %564 : vector<1x2048xf32> to vector<2x2048xf32>
    %566 = arith.mulf %506, %565 : vector<2x2048xf32>
    %567 = vector.extract_strided_slice %566 {offsets = [0, 0], sizes = [2, 256], strides = [1, 1]} : vector<2x2048xf32> to vector<2x256xf32>
    %568 = arith.addf %505, %567 : vector<2x256xf32>
    %569 = vector.extract_strided_slice %566 {offsets = [0, 256], sizes = [2, 256], strides = [1, 1]} : vector<2x2048xf32> to vector<2x256xf32>
    %570 = arith.addf %568, %569 : vector<2x256xf32>
    %571 = vector.extract_strided_slice %566 {offsets = [0, 512], sizes = [2, 256], strides = [1, 1]} : vector<2x2048xf32> to vector<2x256xf32>
    %572 = arith.addf %570, %571 : vector<2x256xf32>
    %573 = vector.extract_strided_slice %566 {offsets = [0, 768], sizes = [2, 256], strides = [1, 1]} : vector<2x2048xf32> to vector<2x256xf32>
    %574 = arith.addf %572, %573 : vector<2x256xf32>
    %575 = vector.extract_strided_slice %566 {offsets = [0, 1024], sizes = [2, 256], strides = [1, 1]} : vector<2x2048xf32> to vector<2x256xf32>
    %576 = arith.addf %574, %575 : vector<2x256xf32>
    %577 = vector.extract_strided_slice %566 {offsets = [0, 1280], sizes = [2, 256], strides = [1, 1]} : vector<2x2048xf32> to vector<2x256xf32>
    %578 = arith.addf %576, %577 : vector<2x256xf32>
    %579 = vector.extract_strided_slice %566 {offsets = [0, 1536], sizes = [2, 256], strides = [1, 1]} : vector<2x2048xf32> to vector<2x256xf32>
    %580 = arith.addf %578, %579 : vector<2x256xf32>
    %581 = vector.extract_strided_slice %566 {offsets = [0, 1792], sizes = [2, 256], strides = [1, 1]} : vector<2x2048xf32> to vector<2x256xf32>
    %582 = arith.addf %580, %581 : vector<2x256xf32>
    %c0_118 = arith.constant 0 : index
    %c128_119 = arith.constant 128 : index
    %583 = vector.load %arg14[%c0_118, %c128_119] : memref<2x2304xf32, #tpu.memory_space<vmem>>, vector<2x2048xf32>
    %c16 = arith.constant 16 : index
    %c0_120 = arith.constant 0 : index
    %584 = vector.load %arg6[%c16, %c0_120] : memref<36x2048xf32, #tpu.memory_space<vmem>>, vector<1x2048xf32>
    %585 = vector.broadcast %584 : vector<1x2048xf32> to vector<2x2048xf32>
    %586 = arith.mulf %583, %585 : vector<2x2048xf32>
    %587 = vector.extract_strided_slice %586 {offsets = [0, 0], sizes = [2, 256], strides = [1, 1]} : vector<2x2048xf32> to vector<2x256xf32>
    %588 = arith.addf %525, %587 : vector<2x256xf32>
    %589 = vector.extract_strided_slice %586 {offsets = [0, 256], sizes = [2, 256], strides = [1, 1]} : vector<2x2048xf32> to vector<2x256xf32>
    %590 = arith.addf %588, %589 : vector<2x256xf32>
    %591 = vector.extract_strided_slice %586 {offsets = [0, 512], sizes = [2, 256], strides = [1, 1]} : vector<2x2048xf32> to vector<2x256xf32>
    %592 = arith.addf %590, %591 : vector<2x256xf32>
    %593 = vector.extract_strided_slice %586 {offsets = [0, 768], sizes = [2, 256], strides = [1, 1]} : vector<2x2048xf32> to vector<2x256xf32>
    %594 = arith.addf %592, %593 : vector<2x256xf32>
    %595 = vector.extract_strided_slice %586 {offsets = [0, 1024], sizes = [2, 256], strides = [1, 1]} : vector<2x2048xf32> to vector<2x256xf32>
    %596 = arith.addf %594, %595 : vector<2x256xf32>
    %597 = vector.extract_strided_slice %586 {offsets = [0, 1280], sizes = [2, 256], strides = [1, 1]} : vector<2x2048xf32> to vector<2x256xf32>
    %598 = arith.addf %596, %597 : vector<2x256xf32>
    %599 = vector.extract_strided_slice %586 {offsets = [0, 1536], sizes = [2, 256], strides = [1, 1]} : vector<2x2048xf32> to vector<2x256xf32>
    %600 = arith.addf %598, %599 : vector<2x256xf32>
    %601 = vector.extract_strided_slice %586 {offsets = [0, 1792], sizes = [2, 256], strides = [1, 1]} : vector<2x2048xf32> to vector<2x256xf32>
    %602 = arith.addf %600, %601 : vector<2x256xf32>
    %c17 = arith.constant 17 : index
    %c0_121 = arith.constant 0 : index
    %603 = vector.load %arg6[%c17, %c0_121] : memref<36x2048xf32, #tpu.memory_space<vmem>>, vector<1x2048xf32>
    %604 = vector.broadcast %603 : vector<1x2048xf32> to vector<2x2048xf32>
    %605 = arith.mulf %583, %604 : vector<2x2048xf32>
    %606 = vector.extract_strided_slice %605 {offsets = [0, 0], sizes = [2, 256], strides = [1, 1]} : vector<2x2048xf32> to vector<2x256xf32>
    %607 = arith.addf %544, %606 : vector<2x256xf32>
    %608 = vector.extract_strided_slice %605 {offsets = [0, 256], sizes = [2, 256], strides = [1, 1]} : vector<2x2048xf32> to vector<2x256xf32>
    %609 = arith.addf %607, %608 : vector<2x256xf32>
    %610 = vector.extract_strided_slice %605 {offsets = [0, 512], sizes = [2, 256], strides = [1, 1]} : vector<2x2048xf32> to vector<2x256xf32>
    %611 = arith.addf %609, %610 : vector<2x256xf32>
    %612 = vector.extract_strided_slice %605 {offsets = [0, 768], sizes = [2, 256], strides = [1, 1]} : vector<2x2048xf32> to vector<2x256xf32>
    %613 = arith.addf %611, %612 : vector<2x256xf32>
    %614 = vector.extract_strided_slice %605 {offsets = [0, 1024], sizes = [2, 256], strides = [1, 1]} : vector<2x2048xf32> to vector<2x256xf32>
    %615 = arith.addf %613, %614 : vector<2x256xf32>
    %616 = vector.extract_strided_slice %605 {offsets = [0, 1280], sizes = [2, 256], strides = [1, 1]} : vector<2x2048xf32> to vector<2x256xf32>
    %617 = arith.addf %615, %616 : vector<2x256xf32>
    %618 = vector.extract_strided_slice %605 {offsets = [0, 1536], sizes = [2, 256], strides = [1, 1]} : vector<2x2048xf32> to vector<2x256xf32>
    %619 = arith.addf %617, %618 : vector<2x256xf32>
    %620 = vector.extract_strided_slice %605 {offsets = [0, 1792], sizes = [2, 256], strides = [1, 1]} : vector<2x2048xf32> to vector<2x256xf32>
    %621 = arith.addf %619, %620 : vector<2x256xf32>
    %c18 = arith.constant 18 : index
    %c0_122 = arith.constant 0 : index
    %622 = vector.load %arg6[%c18, %c0_122] : memref<36x2048xf32, #tpu.memory_space<vmem>>, vector<1x2048xf32>
    %623 = vector.broadcast %622 : vector<1x2048xf32> to vector<2x2048xf32>
    %624 = arith.mulf %583, %623 : vector<2x2048xf32>
    %625 = vector.extract_strided_slice %624 {offsets = [0, 0], sizes = [2, 256], strides = [1, 1]} : vector<2x2048xf32> to vector<2x256xf32>
    %626 = arith.addf %563, %625 : vector<2x256xf32>
    %627 = vector.extract_strided_slice %624 {offsets = [0, 256], sizes = [2, 256], strides = [1, 1]} : vector<2x2048xf32> to vector<2x256xf32>
    %628 = arith.addf %626, %627 : vector<2x256xf32>
    %629 = vector.extract_strided_slice %624 {offsets = [0, 512], sizes = [2, 256], strides = [1, 1]} : vector<2x2048xf32> to vector<2x256xf32>
    %630 = arith.addf %628, %629 : vector<2x256xf32>
    %631 = vector.extract_strided_slice %624 {offsets = [0, 768], sizes = [2, 256], strides = [1, 1]} : vector<2x2048xf32> to vector<2x256xf32>
    %632 = arith.addf %630, %631 : vector<2x256xf32>
    %633 = vector.extract_strided_slice %624 {offsets = [0, 1024], sizes = [2, 256], strides = [1, 1]} : vector<2x2048xf32> to vector<2x256xf32>
    %634 = arith.addf %632, %633 : vector<2x256xf32>
    %635 = vector.extract_strided_slice %624 {offsets = [0, 1280], sizes = [2, 256], strides = [1, 1]} : vector<2x2048xf32> to vector<2x256xf32>
    %636 = arith.addf %634, %635 : vector<2x256xf32>
    %637 = vector.extract_strided_slice %624 {offsets = [0, 1536], sizes = [2, 256], strides = [1, 1]} : vector<2x2048xf32> to vector<2x256xf32>
    %638 = arith.addf %636, %637 : vector<2x256xf32>
    %639 = vector.extract_strided_slice %624 {offsets = [0, 1792], sizes = [2, 256], strides = [1, 1]} : vector<2x2048xf32> to vector<2x256xf32>
    %640 = arith.addf %638, %639 : vector<2x256xf32>
    %c19 = arith.constant 19 : index
    %c0_123 = arith.constant 0 : index
    %641 = vector.load %arg6[%c19, %c0_123] : memref<36x2048xf32, #tpu.memory_space<vmem>>, vector<1x2048xf32>
    %642 = vector.broadcast %641 : vector<1x2048xf32> to vector<2x2048xf32>
    %643 = arith.mulf %583, %642 : vector<2x2048xf32>
    %644 = vector.extract_strided_slice %643 {offsets = [0, 0], sizes = [2, 256], strides = [1, 1]} : vector<2x2048xf32> to vector<2x256xf32>
    %645 = arith.addf %582, %644 : vector<2x256xf32>
    %646 = vector.extract_strided_slice %643 {offsets = [0, 256], sizes = [2, 256], strides = [1, 1]} : vector<2x2048xf32> to vector<2x256xf32>
    %647 = arith.addf %645, %646 : vector<2x256xf32>
    %648 = vector.extract_strided_slice %643 {offsets = [0, 512], sizes = [2, 256], strides = [1, 1]} : vector<2x2048xf32> to vector<2x256xf32>
    %649 = arith.addf %647, %648 : vector<2x256xf32>
    %650 = vector.extract_strided_slice %643 {offsets = [0, 768], sizes = [2, 256], strides = [1, 1]} : vector<2x2048xf32> to vector<2x256xf32>
    %651 = arith.addf %649, %650 : vector<2x256xf32>
    %652 = vector.extract_strided_slice %643 {offsets = [0, 1024], sizes = [2, 256], strides = [1, 1]} : vector<2x2048xf32> to vector<2x256xf32>
    %653 = arith.addf %651, %652 : vector<2x256xf32>
    %654 = vector.extract_strided_slice %643 {offsets = [0, 1280], sizes = [2, 256], strides = [1, 1]} : vector<2x2048xf32> to vector<2x256xf32>
    %655 = arith.addf %653, %654 : vector<2x256xf32>
    %656 = vector.extract_strided_slice %643 {offsets = [0, 1536], sizes = [2, 256], strides = [1, 1]} : vector<2x2048xf32> to vector<2x256xf32>
    %657 = arith.addf %655, %656 : vector<2x256xf32>
    %658 = vector.extract_strided_slice %643 {offsets = [0, 1792], sizes = [2, 256], strides = [1, 1]} : vector<2x2048xf32> to vector<2x256xf32>
    %659 = arith.addf %657, %658 : vector<2x256xf32>
    %c0_124 = arith.constant 0 : index
    %c129 = arith.constant 129 : index
    %660 = vector.load %arg14[%c0_124, %c129] : memref<2x2304xf32, #tpu.memory_space<vmem>>, vector<2x2048xf32>
    %c20 = arith.constant 20 : index
    %c0_125 = arith.constant 0 : index
    %661 = vector.load %arg6[%c20, %c0_125] : memref<36x2048xf32, #tpu.memory_space<vmem>>, vector<1x2048xf32>
    %662 = vector.broadcast %661 : vector<1x2048xf32> to vector<2x2048xf32>
    %663 = arith.mulf %660, %662 : vector<2x2048xf32>
    %664 = vector.extract_strided_slice %663 {offsets = [0, 0], sizes = [2, 256], strides = [1, 1]} : vector<2x2048xf32> to vector<2x256xf32>
    %665 = arith.addf %602, %664 : vector<2x256xf32>
    %666 = vector.extract_strided_slice %663 {offsets = [0, 256], sizes = [2, 256], strides = [1, 1]} : vector<2x2048xf32> to vector<2x256xf32>
    %667 = arith.addf %665, %666 : vector<2x256xf32>
    %668 = vector.extract_strided_slice %663 {offsets = [0, 512], sizes = [2, 256], strides = [1, 1]} : vector<2x2048xf32> to vector<2x256xf32>
    %669 = arith.addf %667, %668 : vector<2x256xf32>
    %670 = vector.extract_strided_slice %663 {offsets = [0, 768], sizes = [2, 256], strides = [1, 1]} : vector<2x2048xf32> to vector<2x256xf32>
    %671 = arith.addf %669, %670 : vector<2x256xf32>
    %672 = vector.extract_strided_slice %663 {offsets = [0, 1024], sizes = [2, 256], strides = [1, 1]} : vector<2x2048xf32> to vector<2x256xf32>
    %673 = arith.addf %671, %672 : vector<2x256xf32>
    %674 = vector.extract_strided_slice %663 {offsets = [0, 1280], sizes = [2, 256], strides = [1, 1]} : vector<2x2048xf32> to vector<2x256xf32>
    %675 = arith.addf %673, %674 : vector<2x256xf32>
    %676 = vector.extract_strided_slice %663 {offsets = [0, 1536], sizes = [2, 256], strides = [1, 1]} : vector<2x2048xf32> to vector<2x256xf32>
    %677 = arith.addf %675, %676 : vector<2x256xf32>
    %678 = vector.extract_strided_slice %663 {offsets = [0, 1792], sizes = [2, 256], strides = [1, 1]} : vector<2x2048xf32> to vector<2x256xf32>
    %679 = arith.addf %677, %678 : vector<2x256xf32>
    %c21 = arith.constant 21 : index
    %c0_126 = arith.constant 0 : index
    %680 = vector.load %arg6[%c21, %c0_126] : memref<36x2048xf32, #tpu.memory_space<vmem>>, vector<1x2048xf32>
    %681 = vector.broadcast %680 : vector<1x2048xf32> to vector<2x2048xf32>
    %682 = arith.mulf %660, %681 : vector<2x2048xf32>
    %683 = vector.extract_strided_slice %682 {offsets = [0, 0], sizes = [2, 256], strides = [1, 1]} : vector<2x2048xf32> to vector<2x256xf32>
    %684 = arith.addf %621, %683 : vector<2x256xf32>
    %685 = vector.extract_strided_slice %682 {offsets = [0, 256], sizes = [2, 256], strides = [1, 1]} : vector<2x2048xf32> to vector<2x256xf32>
    %686 = arith.addf %684, %685 : vector<2x256xf32>
    %687 = vector.extract_strided_slice %682 {offsets = [0, 512], sizes = [2, 256], strides = [1, 1]} : vector<2x2048xf32> to vector<2x256xf32>
    %688 = arith.addf %686, %687 : vector<2x256xf32>
    %689 = vector.extract_strided_slice %682 {offsets = [0, 768], sizes = [2, 256], strides = [1, 1]} : vector<2x2048xf32> to vector<2x256xf32>
    %690 = arith.addf %688, %689 : vector<2x256xf32>
    %691 = vector.extract_strided_slice %682 {offsets = [0, 1024], sizes = [2, 256], strides = [1, 1]} : vector<2x2048xf32> to vector<2x256xf32>
    %692 = arith.addf %690, %691 : vector<2x256xf32>
    %693 = vector.extract_strided_slice %682 {offsets = [0, 1280], sizes = [2, 256], strides = [1, 1]} : vector<2x2048xf32> to vector<2x256xf32>
    %694 = arith.addf %692, %693 : vector<2x256xf32>
    %695 = vector.extract_strided_slice %682 {offsets = [0, 1536], sizes = [2, 256], strides = [1, 1]} : vector<2x2048xf32> to vector<2x256xf32>
    %696 = arith.addf %694, %695 : vector<2x256xf32>
    %697 = vector.extract_strided_slice %682 {offsets = [0, 1792], sizes = [2, 256], strides = [1, 1]} : vector<2x2048xf32> to vector<2x256xf32>
    %698 = arith.addf %696, %697 : vector<2x256xf32>
    %c22 = arith.constant 22 : index
    %c0_127 = arith.constant 0 : index
    %699 = vector.load %arg6[%c22, %c0_127] : memref<36x2048xf32, #tpu.memory_space<vmem>>, vector<1x2048xf32>
    %700 = vector.broadcast %699 : vector<1x2048xf32> to vector<2x2048xf32>
    %701 = arith.mulf %660, %700 : vector<2x2048xf32>
    %702 = vector.extract_strided_slice %701 {offsets = [0, 0], sizes = [2, 256], strides = [1, 1]} : vector<2x2048xf32> to vector<2x256xf32>
    %703 = arith.addf %640, %702 : vector<2x256xf32>
    %704 = vector.extract_strided_slice %701 {offsets = [0, 256], sizes = [2, 256], strides = [1, 1]} : vector<2x2048xf32> to vector<2x256xf32>
    %705 = arith.addf %703, %704 : vector<2x256xf32>
    %706 = vector.extract_strided_slice %701 {offsets = [0, 512], sizes = [2, 256], strides = [1, 1]} : vector<2x2048xf32> to vector<2x256xf32>
    %707 = arith.addf %705, %706 : vector<2x256xf32>
    %708 = vector.extract_strided_slice %701 {offsets = [0, 768], sizes = [2, 256], strides = [1, 1]} : vector<2x2048xf32> to vector<2x256xf32>
    %709 = arith.addf %707, %708 : vector<2x256xf32>
    %710 = vector.extract_strided_slice %701 {offsets = [0, 1024], sizes = [2, 256], strides = [1, 1]} : vector<2x2048xf32> to vector<2x256xf32>
    %711 = arith.addf %709, %710 : vector<2x256xf32>
    %712 = vector.extract_strided_slice %701 {offsets = [0, 1280], sizes = [2, 256], strides = [1, 1]} : vector<2x2048xf32> to vector<2x256xf32>
    %713 = arith.addf %711, %712 : vector<2x256xf32>
    %714 = vector.extract_strided_slice %701 {offsets = [0, 1536], sizes = [2, 256], strides = [1, 1]} : vector<2x2048xf32> to vector<2x256xf32>
    %715 = arith.addf %713, %714 : vector<2x256xf32>
    %716 = vector.extract_strided_slice %701 {offsets = [0, 1792], sizes = [2, 256], strides = [1, 1]} : vector<2x2048xf32> to vector<2x256xf32>
    %717 = arith.addf %715, %716 : vector<2x256xf32>
    %c23 = arith.constant 23 : index
    %c0_128 = arith.constant 0 : index
    %718 = vector.load %arg6[%c23, %c0_128] : memref<36x2048xf32, #tpu.memory_space<vmem>>, vector<1x2048xf32>
    %719 = vector.broadcast %718 : vector<1x2048xf32> to vector<2x2048xf32>
    %720 = arith.mulf %660, %719 : vector<2x2048xf32>
    %721 = vector.extract_strided_slice %720 {offsets = [0, 0], sizes = [2, 256], strides = [1, 1]} : vector<2x2048xf32> to vector<2x256xf32>
    %722 = arith.addf %659, %721 : vector<2x256xf32>
    %723 = vector.extract_strided_slice %720 {offsets = [0, 256], sizes = [2, 256], strides = [1, 1]} : vector<2x2048xf32> to vector<2x256xf32>
    %724 = arith.addf %722, %723 : vector<2x256xf32>
    %725 = vector.extract_strided_slice %720 {offsets = [0, 512], sizes = [2, 256], strides = [1, 1]} : vector<2x2048xf32> to vector<2x256xf32>
    %726 = arith.addf %724, %725 : vector<2x256xf32>
    %727 = vector.extract_strided_slice %720 {offsets = [0, 768], sizes = [2, 256], strides = [1, 1]} : vector<2x2048xf32> to vector<2x256xf32>
    %728 = arith.addf %726, %727 : vector<2x256xf32>
    %729 = vector.extract_strided_slice %720 {offsets = [0, 1024], sizes = [2, 256], strides = [1, 1]} : vector<2x2048xf32> to vector<2x256xf32>
    %730 = arith.addf %728, %729 : vector<2x256xf32>
    %731 = vector.extract_strided_slice %720 {offsets = [0, 1280], sizes = [2, 256], strides = [1, 1]} : vector<2x2048xf32> to vector<2x256xf32>
    %732 = arith.addf %730, %731 : vector<2x256xf32>
    %733 = vector.extract_strided_slice %720 {offsets = [0, 1536], sizes = [2, 256], strides = [1, 1]} : vector<2x2048xf32> to vector<2x256xf32>
    %734 = arith.addf %732, %733 : vector<2x256xf32>
    %735 = vector.extract_strided_slice %720 {offsets = [0, 1792], sizes = [2, 256], strides = [1, 1]} : vector<2x2048xf32> to vector<2x256xf32>
    %736 = arith.addf %734, %735 : vector<2x256xf32>
    %c0_129 = arith.constant 0 : index
    %c143 = arith.constant 143 : index
    %737 = vector.load %arg14[%c0_129, %c143] : memref<2x2304xf32, #tpu.memory_space<vmem>>, vector<2x2048xf32>
    %c24 = arith.constant 24 : index
    %c0_130 = arith.constant 0 : index
    %738 = vector.load %arg6[%c24, %c0_130] : memref<36x2048xf32, #tpu.memory_space<vmem>>, vector<1x2048xf32>
    %739 = vector.broadcast %738 : vector<1x2048xf32> to vector<2x2048xf32>
    %740 = arith.mulf %737, %739 : vector<2x2048xf32>
    %741 = vector.extract_strided_slice %740 {offsets = [0, 0], sizes = [2, 256], strides = [1, 1]} : vector<2x2048xf32> to vector<2x256xf32>
    %742 = arith.addf %679, %741 : vector<2x256xf32>
    %743 = vector.extract_strided_slice %740 {offsets = [0, 256], sizes = [2, 256], strides = [1, 1]} : vector<2x2048xf32> to vector<2x256xf32>
    %744 = arith.addf %742, %743 : vector<2x256xf32>
    %745 = vector.extract_strided_slice %740 {offsets = [0, 512], sizes = [2, 256], strides = [1, 1]} : vector<2x2048xf32> to vector<2x256xf32>
    %746 = arith.addf %744, %745 : vector<2x256xf32>
    %747 = vector.extract_strided_slice %740 {offsets = [0, 768], sizes = [2, 256], strides = [1, 1]} : vector<2x2048xf32> to vector<2x256xf32>
    %748 = arith.addf %746, %747 : vector<2x256xf32>
    %749 = vector.extract_strided_slice %740 {offsets = [0, 1024], sizes = [2, 256], strides = [1, 1]} : vector<2x2048xf32> to vector<2x256xf32>
    %750 = arith.addf %748, %749 : vector<2x256xf32>
    %751 = vector.extract_strided_slice %740 {offsets = [0, 1280], sizes = [2, 256], strides = [1, 1]} : vector<2x2048xf32> to vector<2x256xf32>
    %752 = arith.addf %750, %751 : vector<2x256xf32>
    %753 = vector.extract_strided_slice %740 {offsets = [0, 1536], sizes = [2, 256], strides = [1, 1]} : vector<2x2048xf32> to vector<2x256xf32>
    %754 = arith.addf %752, %753 : vector<2x256xf32>
    %755 = vector.extract_strided_slice %740 {offsets = [0, 1792], sizes = [2, 256], strides = [1, 1]} : vector<2x2048xf32> to vector<2x256xf32>
    %756 = arith.addf %754, %755 : vector<2x256xf32>
    %c25 = arith.constant 25 : index
    %c0_131 = arith.constant 0 : index
    %757 = vector.load %arg6[%c25, %c0_131] : memref<36x2048xf32, #tpu.memory_space<vmem>>, vector<1x2048xf32>
    %758 = vector.broadcast %757 : vector<1x2048xf32> to vector<2x2048xf32>
    %759 = arith.mulf %737, %758 : vector<2x2048xf32>
    %760 = vector.extract_strided_slice %759 {offsets = [0, 0], sizes = [2, 256], strides = [1, 1]} : vector<2x2048xf32> to vector<2x256xf32>
    %761 = arith.addf %698, %760 : vector<2x256xf32>
    %762 = vector.extract_strided_slice %759 {offsets = [0, 256], sizes = [2, 256], strides = [1, 1]} : vector<2x2048xf32> to vector<2x256xf32>
    %763 = arith.addf %761, %762 : vector<2x256xf32>
    %764 = vector.extract_strided_slice %759 {offsets = [0, 512], sizes = [2, 256], strides = [1, 1]} : vector<2x2048xf32> to vector<2x256xf32>
    %765 = arith.addf %763, %764 : vector<2x256xf32>
    %766 = vector.extract_strided_slice %759 {offsets = [0, 768], sizes = [2, 256], strides = [1, 1]} : vector<2x2048xf32> to vector<2x256xf32>
    %767 = arith.addf %765, %766 : vector<2x256xf32>
    %768 = vector.extract_strided_slice %759 {offsets = [0, 1024], sizes = [2, 256], strides = [1, 1]} : vector<2x2048xf32> to vector<2x256xf32>
    %769 = arith.addf %767, %768 : vector<2x256xf32>
    %770 = vector.extract_strided_slice %759 {offsets = [0, 1280], sizes = [2, 256], strides = [1, 1]} : vector<2x2048xf32> to vector<2x256xf32>
    %771 = arith.addf %769, %770 : vector<2x256xf32>
    %772 = vector.extract_strided_slice %759 {offsets = [0, 1536], sizes = [2, 256], strides = [1, 1]} : vector<2x2048xf32> to vector<2x256xf32>
    %773 = arith.addf %771, %772 : vector<2x256xf32>
    %774 = vector.extract_strided_slice %759 {offsets = [0, 1792], sizes = [2, 256], strides = [1, 1]} : vector<2x2048xf32> to vector<2x256xf32>
    %775 = arith.addf %773, %774 : vector<2x256xf32>
    %c26 = arith.constant 26 : index
    %c0_132 = arith.constant 0 : index
    %776 = vector.load %arg6[%c26, %c0_132] : memref<36x2048xf32, #tpu.memory_space<vmem>>, vector<1x2048xf32>
    %777 = vector.broadcast %776 : vector<1x2048xf32> to vector<2x2048xf32>
    %778 = arith.mulf %737, %777 : vector<2x2048xf32>
    %779 = vector.extract_strided_slice %778 {offsets = [0, 0], sizes = [2, 256], strides = [1, 1]} : vector<2x2048xf32> to vector<2x256xf32>
    %780 = arith.addf %717, %779 : vector<2x256xf32>
    %781 = vector.extract_strided_slice %778 {offsets = [0, 256], sizes = [2, 256], strides = [1, 1]} : vector<2x2048xf32> to vector<2x256xf32>
    %782 = arith.addf %780, %781 : vector<2x256xf32>
    %783 = vector.extract_strided_slice %778 {offsets = [0, 512], sizes = [2, 256], strides = [1, 1]} : vector<2x2048xf32> to vector<2x256xf32>
    %784 = arith.addf %782, %783 : vector<2x256xf32>
    %785 = vector.extract_strided_slice %778 {offsets = [0, 768], sizes = [2, 256], strides = [1, 1]} : vector<2x2048xf32> to vector<2x256xf32>
    %786 = arith.addf %784, %785 : vector<2x256xf32>
    %787 = vector.extract_strided_slice %778 {offsets = [0, 1024], sizes = [2, 256], strides = [1, 1]} : vector<2x2048xf32> to vector<2x256xf32>
    %788 = arith.addf %786, %787 : vector<2x256xf32>
    %789 = vector.extract_strided_slice %778 {offsets = [0, 1280], sizes = [2, 256], strides = [1, 1]} : vector<2x2048xf32> to vector<2x256xf32>
    %790 = arith.addf %788, %789 : vector<2x256xf32>
    %791 = vector.extract_strided_slice %778 {offsets = [0, 1536], sizes = [2, 256], strides = [1, 1]} : vector<2x2048xf32> to vector<2x256xf32>
    %792 = arith.addf %790, %791 : vector<2x256xf32>
    %793 = vector.extract_strided_slice %778 {offsets = [0, 1792], sizes = [2, 256], strides = [1, 1]} : vector<2x2048xf32> to vector<2x256xf32>
    %794 = arith.addf %792, %793 : vector<2x256xf32>
    %c27 = arith.constant 27 : index
    %c0_133 = arith.constant 0 : index
    %795 = vector.load %arg6[%c27, %c0_133] : memref<36x2048xf32, #tpu.memory_space<vmem>>, vector<1x2048xf32>
    %796 = vector.broadcast %795 : vector<1x2048xf32> to vector<2x2048xf32>
    %797 = arith.mulf %737, %796 : vector<2x2048xf32>
    %798 = vector.extract_strided_slice %797 {offsets = [0, 0], sizes = [2, 256], strides = [1, 1]} : vector<2x2048xf32> to vector<2x256xf32>
    %799 = arith.addf %736, %798 : vector<2x256xf32>
    %800 = vector.extract_strided_slice %797 {offsets = [0, 256], sizes = [2, 256], strides = [1, 1]} : vector<2x2048xf32> to vector<2x256xf32>
    %801 = arith.addf %799, %800 : vector<2x256xf32>
    %802 = vector.extract_strided_slice %797 {offsets = [0, 512], sizes = [2, 256], strides = [1, 1]} : vector<2x2048xf32> to vector<2x256xf32>
    %803 = arith.addf %801, %802 : vector<2x256xf32>
    %804 = vector.extract_strided_slice %797 {offsets = [0, 768], sizes = [2, 256], strides = [1, 1]} : vector<2x2048xf32> to vector<2x256xf32>
    %805 = arith.addf %803, %804 : vector<2x256xf32>
    %806 = vector.extract_strided_slice %797 {offsets = [0, 1024], sizes = [2, 256], strides = [1, 1]} : vector<2x2048xf32> to vector<2x256xf32>
    %807 = arith.addf %805, %806 : vector<2x256xf32>
    %808 = vector.extract_strided_slice %797 {offsets = [0, 1280], sizes = [2, 256], strides = [1, 1]} : vector<2x2048xf32> to vector<2x256xf32>
    %809 = arith.addf %807, %808 : vector<2x256xf32>
    %810 = vector.extract_strided_slice %797 {offsets = [0, 1536], sizes = [2, 256], strides = [1, 1]} : vector<2x2048xf32> to vector<2x256xf32>
    %811 = arith.addf %809, %810 : vector<2x256xf32>
    %812 = vector.extract_strided_slice %797 {offsets = [0, 1792], sizes = [2, 256], strides = [1, 1]} : vector<2x2048xf32> to vector<2x256xf32>
    %813 = arith.addf %811, %812 : vector<2x256xf32>
    %c0_134 = arith.constant 0 : index
    %c144 = arith.constant 144 : index
    %814 = vector.load %arg14[%c0_134, %c144] : memref<2x2304xf32, #tpu.memory_space<vmem>>, vector<2x2048xf32>
    %c28 = arith.constant 28 : index
    %c0_135 = arith.constant 0 : index
    %815 = vector.load %arg6[%c28, %c0_135] : memref<36x2048xf32, #tpu.memory_space<vmem>>, vector<1x2048xf32>
    %816 = vector.broadcast %815 : vector<1x2048xf32> to vector<2x2048xf32>
    %817 = arith.mulf %814, %816 : vector<2x2048xf32>
    %818 = vector.extract_strided_slice %817 {offsets = [0, 0], sizes = [2, 256], strides = [1, 1]} : vector<2x2048xf32> to vector<2x256xf32>
    %819 = arith.addf %756, %818 : vector<2x256xf32>
    %820 = vector.extract_strided_slice %817 {offsets = [0, 256], sizes = [2, 256], strides = [1, 1]} : vector<2x2048xf32> to vector<2x256xf32>
    %821 = arith.addf %819, %820 : vector<2x256xf32>
    %822 = vector.extract_strided_slice %817 {offsets = [0, 512], sizes = [2, 256], strides = [1, 1]} : vector<2x2048xf32> to vector<2x256xf32>
    %823 = arith.addf %821, %822 : vector<2x256xf32>
    %824 = vector.extract_strided_slice %817 {offsets = [0, 768], sizes = [2, 256], strides = [1, 1]} : vector<2x2048xf32> to vector<2x256xf32>
    %825 = arith.addf %823, %824 : vector<2x256xf32>
    %826 = vector.extract_strided_slice %817 {offsets = [0, 1024], sizes = [2, 256], strides = [1, 1]} : vector<2x2048xf32> to vector<2x256xf32>
    %827 = arith.addf %825, %826 : vector<2x256xf32>
    %828 = vector.extract_strided_slice %817 {offsets = [0, 1280], sizes = [2, 256], strides = [1, 1]} : vector<2x2048xf32> to vector<2x256xf32>
    %829 = arith.addf %827, %828 : vector<2x256xf32>
    %830 = vector.extract_strided_slice %817 {offsets = [0, 1536], sizes = [2, 256], strides = [1, 1]} : vector<2x2048xf32> to vector<2x256xf32>
    %831 = arith.addf %829, %830 : vector<2x256xf32>
    %832 = vector.extract_strided_slice %817 {offsets = [0, 1792], sizes = [2, 256], strides = [1, 1]} : vector<2x2048xf32> to vector<2x256xf32>
    %833 = arith.addf %831, %832 : vector<2x256xf32>
    %c29 = arith.constant 29 : index
    %c0_136 = arith.constant 0 : index
    %834 = vector.load %arg6[%c29, %c0_136] : memref<36x2048xf32, #tpu.memory_space<vmem>>, vector<1x2048xf32>
    %835 = vector.broadcast %834 : vector<1x2048xf32> to vector<2x2048xf32>
    %836 = arith.mulf %814, %835 : vector<2x2048xf32>
    %837 = vector.extract_strided_slice %836 {offsets = [0, 0], sizes = [2, 256], strides = [1, 1]} : vector<2x2048xf32> to vector<2x256xf32>
    %838 = arith.addf %775, %837 : vector<2x256xf32>
    %839 = vector.extract_strided_slice %836 {offsets = [0, 256], sizes = [2, 256], strides = [1, 1]} : vector<2x2048xf32> to vector<2x256xf32>
    %840 = arith.addf %838, %839 : vector<2x256xf32>
    %841 = vector.extract_strided_slice %836 {offsets = [0, 512], sizes = [2, 256], strides = [1, 1]} : vector<2x2048xf32> to vector<2x256xf32>
    %842 = arith.addf %840, %841 : vector<2x256xf32>
    %843 = vector.extract_strided_slice %836 {offsets = [0, 768], sizes = [2, 256], strides = [1, 1]} : vector<2x2048xf32> to vector<2x256xf32>
    %844 = arith.addf %842, %843 : vector<2x256xf32>
    %845 = vector.extract_strided_slice %836 {offsets = [0, 1024], sizes = [2, 256], strides = [1, 1]} : vector<2x2048xf32> to vector<2x256xf32>
    %846 = arith.addf %844, %845 : vector<2x256xf32>
    %847 = vector.extract_strided_slice %836 {offsets = [0, 1280], sizes = [2, 256], strides = [1, 1]} : vector<2x2048xf32> to vector<2x256xf32>
    %848 = arith.addf %846, %847 : vector<2x256xf32>
    %849 = vector.extract_strided_slice %836 {offsets = [0, 1536], sizes = [2, 256], strides = [1, 1]} : vector<2x2048xf32> to vector<2x256xf32>
    %850 = arith.addf %848, %849 : vector<2x256xf32>
    %851 = vector.extract_strided_slice %836 {offsets = [0, 1792], sizes = [2, 256], strides = [1, 1]} : vector<2x2048xf32> to vector<2x256xf32>
    %852 = arith.addf %850, %851 : vector<2x256xf32>
    %c30 = arith.constant 30 : index
    %c0_137 = arith.constant 0 : index
    %853 = vector.load %arg6[%c30, %c0_137] : memref<36x2048xf32, #tpu.memory_space<vmem>>, vector<1x2048xf32>
    %854 = vector.broadcast %853 : vector<1x2048xf32> to vector<2x2048xf32>
    %855 = arith.mulf %814, %854 : vector<2x2048xf32>
    %856 = vector.extract_strided_slice %855 {offsets = [0, 0], sizes = [2, 256], strides = [1, 1]} : vector<2x2048xf32> to vector<2x256xf32>
    %857 = arith.addf %794, %856 : vector<2x256xf32>
    %858 = vector.extract_strided_slice %855 {offsets = [0, 256], sizes = [2, 256], strides = [1, 1]} : vector<2x2048xf32> to vector<2x256xf32>
    %859 = arith.addf %857, %858 : vector<2x256xf32>
    %860 = vector.extract_strided_slice %855 {offsets = [0, 512], sizes = [2, 256], strides = [1, 1]} : vector<2x2048xf32> to vector<2x256xf32>
    %861 = arith.addf %859, %860 : vector<2x256xf32>
    %862 = vector.extract_strided_slice %855 {offsets = [0, 768], sizes = [2, 256], strides = [1, 1]} : vector<2x2048xf32> to vector<2x256xf32>
    %863 = arith.addf %861, %862 : vector<2x256xf32>
    %864 = vector.extract_strided_slice %855 {offsets = [0, 1024], sizes = [2, 256], strides = [1, 1]} : vector<2x2048xf32> to vector<2x256xf32>
    %865 = arith.addf %863, %864 : vector<2x256xf32>
    %866 = vector.extract_strided_slice %855 {offsets = [0, 1280], sizes = [2, 256], strides = [1, 1]} : vector<2x2048xf32> to vector<2x256xf32>
    %867 = arith.addf %865, %866 : vector<2x256xf32>
    %868 = vector.extract_strided_slice %855 {offsets = [0, 1536], sizes = [2, 256], strides = [1, 1]} : vector<2x2048xf32> to vector<2x256xf32>
    %869 = arith.addf %867, %868 : vector<2x256xf32>
    %870 = vector.extract_strided_slice %855 {offsets = [0, 1792], sizes = [2, 256], strides = [1, 1]} : vector<2x2048xf32> to vector<2x256xf32>
    %871 = arith.addf %869, %870 : vector<2x256xf32>
    %c31 = arith.constant 31 : index
    %c0_138 = arith.constant 0 : index
    %872 = vector.load %arg6[%c31, %c0_138] : memref<36x2048xf32, #tpu.memory_space<vmem>>, vector<1x2048xf32>
    %873 = vector.broadcast %872 : vector<1x2048xf32> to vector<2x2048xf32>
    %874 = arith.mulf %814, %873 : vector<2x2048xf32>
    %875 = vector.extract_strided_slice %874 {offsets = [0, 0], sizes = [2, 256], strides = [1, 1]} : vector<2x2048xf32> to vector<2x256xf32>
    %876 = arith.addf %813, %875 : vector<2x256xf32>
    %877 = vector.extract_strided_slice %874 {offsets = [0, 256], sizes = [2, 256], strides = [1, 1]} : vector<2x2048xf32> to vector<2x256xf32>
    %878 = arith.addf %876, %877 : vector<2x256xf32>
    %879 = vector.extract_strided_slice %874 {offsets = [0, 512], sizes = [2, 256], strides = [1, 1]} : vector<2x2048xf32> to vector<2x256xf32>
    %880 = arith.addf %878, %879 : vector<2x256xf32>
    %881 = vector.extract_strided_slice %874 {offsets = [0, 768], sizes = [2, 256], strides = [1, 1]} : vector<2x2048xf32> to vector<2x256xf32>
    %882 = arith.addf %880, %881 : vector<2x256xf32>
    %883 = vector.extract_strided_slice %874 {offsets = [0, 1024], sizes = [2, 256], strides = [1, 1]} : vector<2x2048xf32> to vector<2x256xf32>
    %884 = arith.addf %882, %883 : vector<2x256xf32>
    %885 = vector.extract_strided_slice %874 {offsets = [0, 1280], sizes = [2, 256], strides = [1, 1]} : vector<2x2048xf32> to vector<2x256xf32>
    %886 = arith.addf %884, %885 : vector<2x256xf32>
    %887 = vector.extract_strided_slice %874 {offsets = [0, 1536], sizes = [2, 256], strides = [1, 1]} : vector<2x2048xf32> to vector<2x256xf32>
    %888 = arith.addf %886, %887 : vector<2x256xf32>
    %889 = vector.extract_strided_slice %874 {offsets = [0, 1792], sizes = [2, 256], strides = [1, 1]} : vector<2x2048xf32> to vector<2x256xf32>
    %890 = arith.addf %888, %889 : vector<2x256xf32>
    %c0_139 = arith.constant 0 : index
    %c145 = arith.constant 145 : index
    %891 = vector.load %arg14[%c0_139, %c145] : memref<2x2304xf32, #tpu.memory_space<vmem>>, vector<2x2048xf32>
    %c32 = arith.constant 32 : index
    %c0_140 = arith.constant 0 : index
    %892 = vector.load %arg6[%c32, %c0_140] : memref<36x2048xf32, #tpu.memory_space<vmem>>, vector<1x2048xf32>
    %893 = vector.broadcast %892 : vector<1x2048xf32> to vector<2x2048xf32>
    %894 = arith.mulf %891, %893 : vector<2x2048xf32>
    %895 = vector.extract_strided_slice %894 {offsets = [0, 0], sizes = [2, 256], strides = [1, 1]} : vector<2x2048xf32> to vector<2x256xf32>
    %896 = arith.addf %833, %895 : vector<2x256xf32>
    %897 = vector.extract_strided_slice %894 {offsets = [0, 256], sizes = [2, 256], strides = [1, 1]} : vector<2x2048xf32> to vector<2x256xf32>
    %898 = arith.addf %896, %897 : vector<2x256xf32>
    %899 = vector.extract_strided_slice %894 {offsets = [0, 512], sizes = [2, 256], strides = [1, 1]} : vector<2x2048xf32> to vector<2x256xf32>
    %900 = arith.addf %898, %899 : vector<2x256xf32>
    %901 = vector.extract_strided_slice %894 {offsets = [0, 768], sizes = [2, 256], strides = [1, 1]} : vector<2x2048xf32> to vector<2x256xf32>
    %902 = arith.addf %900, %901 : vector<2x256xf32>
    %903 = vector.extract_strided_slice %894 {offsets = [0, 1024], sizes = [2, 256], strides = [1, 1]} : vector<2x2048xf32> to vector<2x256xf32>
    %904 = arith.addf %902, %903 : vector<2x256xf32>
    %905 = vector.extract_strided_slice %894 {offsets = [0, 1280], sizes = [2, 256], strides = [1, 1]} : vector<2x2048xf32> to vector<2x256xf32>
    %906 = arith.addf %904, %905 : vector<2x256xf32>
    %907 = vector.extract_strided_slice %894 {offsets = [0, 1536], sizes = [2, 256], strides = [1, 1]} : vector<2x2048xf32> to vector<2x256xf32>
    %908 = arith.addf %906, %907 : vector<2x256xf32>
    %909 = vector.extract_strided_slice %894 {offsets = [0, 1792], sizes = [2, 256], strides = [1, 1]} : vector<2x2048xf32> to vector<2x256xf32>
    %910 = arith.addf %908, %909 : vector<2x256xf32>
    %c33 = arith.constant 33 : index
    %c0_141 = arith.constant 0 : index
    %911 = vector.load %arg6[%c33, %c0_141] : memref<36x2048xf32, #tpu.memory_space<vmem>>, vector<1x2048xf32>
    %912 = vector.broadcast %911 : vector<1x2048xf32> to vector<2x2048xf32>
    %913 = arith.mulf %891, %912 : vector<2x2048xf32>
    %914 = vector.extract_strided_slice %913 {offsets = [0, 0], sizes = [2, 256], strides = [1, 1]} : vector<2x2048xf32> to vector<2x256xf32>
    %915 = arith.addf %852, %914 : vector<2x256xf32>
    %916 = vector.extract_strided_slice %913 {offsets = [0, 256], sizes = [2, 256], strides = [1, 1]} : vector<2x2048xf32> to vector<2x256xf32>
    %917 = arith.addf %915, %916 : vector<2x256xf32>
    %918 = vector.extract_strided_slice %913 {offsets = [0, 512], sizes = [2, 256], strides = [1, 1]} : vector<2x2048xf32> to vector<2x256xf32>
    %919 = arith.addf %917, %918 : vector<2x256xf32>
    %920 = vector.extract_strided_slice %913 {offsets = [0, 768], sizes = [2, 256], strides = [1, 1]} : vector<2x2048xf32> to vector<2x256xf32>
    %921 = arith.addf %919, %920 : vector<2x256xf32>
    %922 = vector.extract_strided_slice %913 {offsets = [0, 1024], sizes = [2, 256], strides = [1, 1]} : vector<2x2048xf32> to vector<2x256xf32>
    %923 = arith.addf %921, %922 : vector<2x256xf32>
    %924 = vector.extract_strided_slice %913 {offsets = [0, 1280], sizes = [2, 256], strides = [1, 1]} : vector<2x2048xf32> to vector<2x256xf32>
    %925 = arith.addf %923, %924 : vector<2x256xf32>
    %926 = vector.extract_strided_slice %913 {offsets = [0, 1536], sizes = [2, 256], strides = [1, 1]} : vector<2x2048xf32> to vector<2x256xf32>
    %927 = arith.addf %925, %926 : vector<2x256xf32>
    %928 = vector.extract_strided_slice %913 {offsets = [0, 1792], sizes = [2, 256], strides = [1, 1]} : vector<2x2048xf32> to vector<2x256xf32>
    %929 = arith.addf %927, %928 : vector<2x256xf32>
    %c34 = arith.constant 34 : index
    %c0_142 = arith.constant 0 : index
    %930 = vector.load %arg6[%c34, %c0_142] : memref<36x2048xf32, #tpu.memory_space<vmem>>, vector<1x2048xf32>
    %931 = vector.broadcast %930 : vector<1x2048xf32> to vector<2x2048xf32>
    %932 = arith.mulf %891, %931 : vector<2x2048xf32>
    %933 = vector.extract_strided_slice %932 {offsets = [0, 0], sizes = [2, 256], strides = [1, 1]} : vector<2x2048xf32> to vector<2x256xf32>
    %934 = arith.addf %871, %933 : vector<2x256xf32>
    %935 = vector.extract_strided_slice %932 {offsets = [0, 256], sizes = [2, 256], strides = [1, 1]} : vector<2x2048xf32> to vector<2x256xf32>
    %936 = arith.addf %934, %935 : vector<2x256xf32>
    %937 = vector.extract_strided_slice %932 {offsets = [0, 512], sizes = [2, 256], strides = [1, 1]} : vector<2x2048xf32> to vector<2x256xf32>
    %938 = arith.addf %936, %937 : vector<2x256xf32>
    %939 = vector.extract_strided_slice %932 {offsets = [0, 768], sizes = [2, 256], strides = [1, 1]} : vector<2x2048xf32> to vector<2x256xf32>
    %940 = arith.addf %938, %939 : vector<2x256xf32>
    %941 = vector.extract_strided_slice %932 {offsets = [0, 1024], sizes = [2, 256], strides = [1, 1]} : vector<2x2048xf32> to vector<2x256xf32>
    %942 = arith.addf %940, %941 : vector<2x256xf32>
    %943 = vector.extract_strided_slice %932 {offsets = [0, 1280], sizes = [2, 256], strides = [1, 1]} : vector<2x2048xf32> to vector<2x256xf32>
    %944 = arith.addf %942, %943 : vector<2x256xf32>
    %945 = vector.extract_strided_slice %932 {offsets = [0, 1536], sizes = [2, 256], strides = [1, 1]} : vector<2x2048xf32> to vector<2x256xf32>
    %946 = arith.addf %944, %945 : vector<2x256xf32>
    %947 = vector.extract_strided_slice %932 {offsets = [0, 1792], sizes = [2, 256], strides = [1, 1]} : vector<2x2048xf32> to vector<2x256xf32>
    %948 = arith.addf %946, %947 : vector<2x256xf32>
    %c35 = arith.constant 35 : index
    %c0_143 = arith.constant 0 : index
    %949 = vector.load %arg6[%c35, %c0_143] : memref<36x2048xf32, #tpu.memory_space<vmem>>, vector<1x2048xf32>
    %950 = vector.broadcast %949 : vector<1x2048xf32> to vector<2x2048xf32>
    %951 = arith.mulf %891, %950 : vector<2x2048xf32>
    %952 = vector.extract_strided_slice %951 {offsets = [0, 0], sizes = [2, 256], strides = [1, 1]} : vector<2x2048xf32> to vector<2x256xf32>
    %953 = arith.addf %890, %952 : vector<2x256xf32>
    %954 = vector.extract_strided_slice %951 {offsets = [0, 256], sizes = [2, 256], strides = [1, 1]} : vector<2x2048xf32> to vector<2x256xf32>
    %955 = arith.addf %953, %954 : vector<2x256xf32>
    %956 = vector.extract_strided_slice %951 {offsets = [0, 512], sizes = [2, 256], strides = [1, 1]} : vector<2x2048xf32> to vector<2x256xf32>
    %957 = arith.addf %955, %956 : vector<2x256xf32>
    %958 = vector.extract_strided_slice %951 {offsets = [0, 768], sizes = [2, 256], strides = [1, 1]} : vector<2x2048xf32> to vector<2x256xf32>
    %959 = arith.addf %957, %958 : vector<2x256xf32>
    %960 = vector.extract_strided_slice %951 {offsets = [0, 1024], sizes = [2, 256], strides = [1, 1]} : vector<2x2048xf32> to vector<2x256xf32>
    %961 = arith.addf %959, %960 : vector<2x256xf32>
    %962 = vector.extract_strided_slice %951 {offsets = [0, 1280], sizes = [2, 256], strides = [1, 1]} : vector<2x2048xf32> to vector<2x256xf32>
    %963 = arith.addf %961, %962 : vector<2x256xf32>
    %964 = vector.extract_strided_slice %951 {offsets = [0, 1536], sizes = [2, 256], strides = [1, 1]} : vector<2x2048xf32> to vector<2x256xf32>
    %965 = arith.addf %963, %964 : vector<2x256xf32>
    %966 = vector.extract_strided_slice %951 {offsets = [0, 1792], sizes = [2, 256], strides = [1, 1]} : vector<2x2048xf32> to vector<2x256xf32>
    %967 = arith.addf %965, %966 : vector<2x256xf32>
    %cst_144 = arith.constant 0.000000e+00 : f32
    %968 = vector.broadcast %cst_144 : f32 to vector<2x1280xf32>
    %c0_145 = arith.constant 0 : index
    %c0_146 = arith.constant 0 : index
    %969 = vector.load %arg15[%c0_145, %c0_146] : memref<2x1280xf32, #tpu.memory_space<vmem>>, vector<2x1280xf32>
    tpu.vector_store %arg15[%c0_145, %c0_146], %968 {strides = array<i32>} : memref<2x1280xf32, #tpu.memory_space<vmem>>, vector<2x1280xf32>,
    %970 = vector.shape_cast %910 : vector<2x256xf32> to vector<1x2x256xf32>
    %cst_147 = arith.constant dense<0.000000e+00> : vector<1xf32>
    %971 = vector.multi_reduction <add>, %970, %cst_147 [1, 2] : vector<1x2x256xf32> to vector<1xf32>
    %972 = vector.shape_cast %971 : vector<1xf32> to vector<1x1x1xf32>
    %973 = vector.extract %972[0, 0, 0] : f32 from vector<1x1x1xf32>
    %cst_148 = arith.constant 0.001953125 : f32
    %974 = arith.mulf %973, %cst_148 : f32
    %975 = arith.mulf %910, %910 : vector<2x256xf32>
    %976 = vector.shape_cast %975 : vector<2x256xf32> to vector<1x2x256xf32>
    %cst_149 = arith.constant dense<0.000000e+00> : vector<1xf32>
    %977 = vector.multi_reduction <add>, %976, %cst_149 [1, 2] : vector<1x2x256xf32> to vector<1xf32>
    %978 = vector.shape_cast %977 : vector<1xf32> to vector<1x1x1xf32>
    %979 = vector.extract %978[0, 0, 0] : f32 from vector<1x1x1xf32>
    %cst_150 = arith.constant 0.001953125 : f32
    %980 = arith.mulf %979, %cst_150 : f32
    %981 = arith.mulf %974, %974 : f32
    %982 = arith.subf %980, %981 : f32
    %c0_151 = arith.constant 0 : index
    %983 = memref.load %arg11[%c0_151] : memref<4xf32, #tpu.memory_space<smem>>
    %cst_152 = arith.constant 9.99999974E-6 : f32
    %984 = arith.addf %982, %cst_152 : f32
    %985 = math.rsqrt %984 : f32
    %986 = arith.mulf %983, %985 : f32
    %987 = vector.broadcast %974 : f32 to vector<2x256xf32>
    %988 = arith.subf %910, %987 : vector<2x256xf32>
    %989 = vector.broadcast %986 : f32 to vector<2x256xf32>
    %990 = arith.mulf %988, %989 : vector<2x256xf32>
    %c0_153 = arith.constant 0 : index
    %991 = memref.load %arg12[%c0_153] : memref<4xf32, #tpu.memory_space<smem>>
    %992 = vector.broadcast %991 : f32 to vector<2x256xf32>
    %993 = arith.addf %990, %992 : vector<2x256xf32>
    %cst_154 = arith.constant 0.000000e+00 : f32
    %994 = vector.broadcast %cst_154 : f32 to vector<2x256xf32>
    %995 = arith.maximumf %993, %994 : vector<2x256xf32>
    %c0_155 = arith.constant 0 : index
    %c128_156 = arith.constant 128 : index
    %996 = vector.load %arg15[%c0_155, %c128_156] : memref<2x1280xf32, #tpu.memory_space<vmem>>, vector<2x256xf32>
    tpu.vector_store %arg15[%c0_155, %c128_156], %995 {strides = array<i32>} : memref<2x1280xf32, #tpu.memory_space<vmem>>, vector<2x256xf32>,
    %997 = vector.shape_cast %929 : vector<2x256xf32> to vector<1x2x256xf32>
    %cst_157 = arith.constant dense<0.000000e+00> : vector<1xf32>
    %998 = vector.multi_reduction <add>, %997, %cst_157 [1, 2] : vector<1x2x256xf32> to vector<1xf32>
    %999 = vector.shape_cast %998 : vector<1xf32> to vector<1x1x1xf32>
    %1000 = vector.extract %999[0, 0, 0] : f32 from vector<1x1x1xf32>
    %cst_158 = arith.constant 0.001953125 : f32
    %1001 = arith.mulf %1000, %cst_158 : f32
    %1002 = arith.mulf %929, %929 : vector<2x256xf32>
    %1003 = vector.shape_cast %1002 : vector<2x256xf32> to vector<1x2x256xf32>
    %cst_159 = arith.constant dense<0.000000e+00> : vector<1xf32>
    %1004 = vector.multi_reduction <add>, %1003, %cst_159 [1, 2] : vector<1x2x256xf32> to vector<1xf32>
    %1005 = vector.shape_cast %1004 : vector<1xf32> to vector<1x1x1xf32>
    %1006 = vector.extract %1005[0, 0, 0] : f32 from vector<1x1x1xf32>
    %cst_160 = arith.constant 0.001953125 : f32
    %1007 = arith.mulf %1006, %cst_160 : f32
    %1008 = arith.mulf %1001, %1001 : f32
    %1009 = arith.subf %1007, %1008 : f32
    %c1_161 = arith.constant 1 : index
    %1010 = memref.load %arg11[%c1_161] : memref<4xf32, #tpu.memory_space<smem>>
    %cst_162 = arith.constant 9.99999974E-6 : f32
    %1011 = arith.addf %1009, %cst_162 : f32
    %1012 = math.rsqrt %1011 : f32
    %1013 = arith.mulf %1010, %1012 : f32
    %1014 = vector.broadcast %1001 : f32 to vector<2x256xf32>
    %1015 = arith.subf %929, %1014 : vector<2x256xf32>
    %1016 = vector.broadcast %1013 : f32 to vector<2x256xf32>
    %1017 = arith.mulf %1015, %1016 : vector<2x256xf32>
    %c1_163 = arith.constant 1 : index
    %1018 = memref.load %arg12[%c1_163] : memref<4xf32, #tpu.memory_space<smem>>
    %1019 = vector.broadcast %1018 : f32 to vector<2x256xf32>
    %1020 = arith.addf %1017, %1019 : vector<2x256xf32>
    %cst_164 = arith.constant 0.000000e+00 : f32
    %1021 = vector.broadcast %cst_164 : f32 to vector<2x256xf32>
    %1022 = arith.maximumf %1020, %1021 : vector<2x256xf32>
    %c0_165 = arith.constant 0 : index
    %c384_166 = arith.constant 384 : index
    %1023 = vector.load %arg15[%c0_165, %c384_166] : memref<2x1280xf32, #tpu.memory_space<vmem>>, vector<2x256xf32>
    tpu.vector_store %arg15[%c0_165, %c384_166], %1022 {strides = array<i32>} : memref<2x1280xf32, #tpu.memory_space<vmem>>, vector<2x256xf32>,
    %1024 = vector.shape_cast %948 : vector<2x256xf32> to vector<1x2x256xf32>
    %cst_167 = arith.constant dense<0.000000e+00> : vector<1xf32>
    %1025 = vector.multi_reduction <add>, %1024, %cst_167 [1, 2] : vector<1x2x256xf32> to vector<1xf32>
    %1026 = vector.shape_cast %1025 : vector<1xf32> to vector<1x1x1xf32>
    %1027 = vector.extract %1026[0, 0, 0] : f32 from vector<1x1x1xf32>
    %cst_168 = arith.constant 0.001953125 : f32
    %1028 = arith.mulf %1027, %cst_168 : f32
    %1029 = arith.mulf %948, %948 : vector<2x256xf32>
    %1030 = vector.shape_cast %1029 : vector<2x256xf32> to vector<1x2x256xf32>
    %cst_169 = arith.constant dense<0.000000e+00> : vector<1xf32>
    %1031 = vector.multi_reduction <add>, %1030, %cst_169 [1, 2] : vector<1x2x256xf32> to vector<1xf32>
    %1032 = vector.shape_cast %1031 : vector<1xf32> to vector<1x1x1xf32>
    %1033 = vector.extract %1032[0, 0, 0] : f32 from vector<1x1x1xf32>
    %cst_170 = arith.constant 0.001953125 : f32
    %1034 = arith.mulf %1033, %cst_170 : f32
    %1035 = arith.mulf %1028, %1028 : f32
    %1036 = arith.subf %1034, %1035 : f32
    %c2_171 = arith.constant 2 : index
    %1037 = memref.load %arg11[%c2_171] : memref<4xf32, #tpu.memory_space<smem>>
    %cst_172 = arith.constant 9.99999974E-6 : f32
    %1038 = arith.addf %1036, %cst_172 : f32
    %1039 = math.rsqrt %1038 : f32
    %1040 = arith.mulf %1037, %1039 : f32
    %1041 = vector.broadcast %1028 : f32 to vector<2x256xf32>
    %1042 = arith.subf %948, %1041 : vector<2x256xf32>
    %1043 = vector.broadcast %1040 : f32 to vector<2x256xf32>
    %1044 = arith.mulf %1042, %1043 : vector<2x256xf32>
    %c2_173 = arith.constant 2 : index
    %1045 = memref.load %arg12[%c2_173] : memref<4xf32, #tpu.memory_space<smem>>
    %1046 = vector.broadcast %1045 : f32 to vector<2x256xf32>
    %1047 = arith.addf %1044, %1046 : vector<2x256xf32>
    %cst_174 = arith.constant 0.000000e+00 : f32
    %1048 = vector.broadcast %cst_174 : f32 to vector<2x256xf32>
    %1049 = arith.maximumf %1047, %1048 : vector<2x256xf32>
    %c0_175 = arith.constant 0 : index
    %c640_176 = arith.constant 640 : index
    %1050 = vector.load %arg15[%c0_175, %c640_176] : memref<2x1280xf32, #tpu.memory_space<vmem>>, vector<2x256xf32>
    tpu.vector_store %arg15[%c0_175, %c640_176], %1049 {strides = array<i32>} : memref<2x1280xf32, #tpu.memory_space<vmem>>, vector<2x256xf32>,
    %1051 = vector.shape_cast %967 : vector<2x256xf32> to vector<1x2x256xf32>
    %cst_177 = arith.constant dense<0.000000e+00> : vector<1xf32>
    %1052 = vector.multi_reduction <add>, %1051, %cst_177 [1, 2] : vector<1x2x256xf32> to vector<1xf32>
    %1053 = vector.shape_cast %1052 : vector<1xf32> to vector<1x1x1xf32>
    %1054 = vector.extract %1053[0, 0, 0] : f32 from vector<1x1x1xf32>
    %cst_178 = arith.constant 0.001953125 : f32
    %1055 = arith.mulf %1054, %cst_178 : f32
    %1056 = arith.mulf %967, %967 : vector<2x256xf32>
    %1057 = vector.shape_cast %1056 : vector<2x256xf32> to vector<1x2x256xf32>
    %cst_179 = arith.constant dense<0.000000e+00> : vector<1xf32>
    %1058 = vector.multi_reduction <add>, %1057, %cst_179 [1, 2] : vector<1x2x256xf32> to vector<1xf32>
    %1059 = vector.shape_cast %1058 : vector<1xf32> to vector<1x1x1xf32>
    %1060 = vector.extract %1059[0, 0, 0] : f32 from vector<1x1x1xf32>
    %cst_180 = arith.constant 0.001953125 : f32
    %1061 = arith.mulf %1060, %cst_180 : f32
    %1062 = arith.mulf %1055, %1055 : f32
    %1063 = arith.subf %1061, %1062 : f32
    %c3_181 = arith.constant 3 : index
    %1064 = memref.load %arg11[%c3_181] : memref<4xf32, #tpu.memory_space<smem>>
    %cst_182 = arith.constant 9.99999974E-6 : f32
    %1065 = arith.addf %1063, %cst_182 : f32
    %1066 = math.rsqrt %1065 : f32
    %1067 = arith.mulf %1064, %1066 : f32
    %1068 = vector.broadcast %1055 : f32 to vector<2x256xf32>
    %1069 = arith.subf %967, %1068 : vector<2x256xf32>
    %1070 = vector.broadcast %1067 : f32 to vector<2x256xf32>
    %1071 = arith.mulf %1069, %1070 : vector<2x256xf32>
    %c3_183 = arith.constant 3 : index
    %1072 = memref.load %arg12[%c3_183] : memref<4xf32, #tpu.memory_space<smem>>
    %1073 = vector.broadcast %1072 : f32 to vector<2x256xf32>
    %1074 = arith.addf %1071, %1073 : vector<2x256xf32>
    %cst_184 = arith.constant 0.000000e+00 : f32
    %1075 = vector.broadcast %cst_184 : f32 to vector<2x256xf32>
    %1076 = arith.maximumf %1074, %1075 : vector<2x256xf32>
    %c0_185 = arith.constant 0 : index
    %c896_186 = arith.constant 896 : index
    %1077 = vector.load %arg15[%c0_185, %c896_186] : memref<2x1280xf32, #tpu.memory_space<vmem>>, vector<2x256xf32>
    tpu.vector_store %arg15[%c0_185, %c896_186], %1076 {strides = array<i32>} : memref<2x1280xf32, #tpu.memory_space<vmem>>, vector<2x256xf32>,
    %cst_187 = arith.constant 0.000000e+00 : f32
    %1078 = vector.broadcast %cst_187 : f32 to vector<2x256xf32>
    %c0_188 = arith.constant 0 : index
    %c111_189 = arith.constant 111 : index
    %1079 = vector.load %arg15[%c0_188, %c111_189] : memref<2x1280xf32, #tpu.memory_space<vmem>>, vector<2x1024xf32>
    %c0_190 = arith.constant 0 : index
    %c0_191 = arith.constant 0 : index
    %1080 = vector.load %arg7[%c0_190, %c0_191] : memref<9x1024xf32, #tpu.memory_space<vmem>>, vector<1x1024xf32>
    %1081 = vector.broadcast %1080 : vector<1x1024xf32> to vector<2x1024xf32>
    %1082 = arith.mulf %1079, %1081 : vector<2x1024xf32>
    %1083 = vector.extract_strided_slice %1082 {offsets = [0, 0], sizes = [2, 256], strides = [1, 1]} : vector<2x1024xf32> to vector<2x256xf32>
    %1084 = arith.addf %1078, %1083 : vector<2x256xf32>
    %1085 = vector.extract_strided_slice %1082 {offsets = [0, 256], sizes = [2, 256], strides = [1, 1]} : vector<2x1024xf32> to vector<2x256xf32>
    %1086 = arith.addf %1084, %1085 : vector<2x256xf32>
    %1087 = vector.extract_strided_slice %1082 {offsets = [0, 512], sizes = [2, 256], strides = [1, 1]} : vector<2x1024xf32> to vector<2x256xf32>
    %1088 = arith.addf %1086, %1087 : vector<2x256xf32>
    %1089 = vector.extract_strided_slice %1082 {offsets = [0, 768], sizes = [2, 256], strides = [1, 1]} : vector<2x1024xf32> to vector<2x256xf32>
    %1090 = arith.addf %1088, %1089 : vector<2x256xf32>
    %c0_192 = arith.constant 0 : index
    %c112_193 = arith.constant 112 : index
    %1091 = vector.load %arg15[%c0_192, %c112_193] : memref<2x1280xf32, #tpu.memory_space<vmem>>, vector<2x1024xf32>
    %c1_194 = arith.constant 1 : index
    %c0_195 = arith.constant 0 : index
    %1092 = vector.load %arg7[%c1_194, %c0_195] : memref<9x1024xf32, #tpu.memory_space<vmem>>, vector<1x1024xf32>
    %1093 = vector.broadcast %1092 : vector<1x1024xf32> to vector<2x1024xf32>
    %1094 = arith.mulf %1091, %1093 : vector<2x1024xf32>
    %1095 = vector.extract_strided_slice %1094 {offsets = [0, 0], sizes = [2, 256], strides = [1, 1]} : vector<2x1024xf32> to vector<2x256xf32>
    %1096 = arith.addf %1090, %1095 : vector<2x256xf32>
    %1097 = vector.extract_strided_slice %1094 {offsets = [0, 256], sizes = [2, 256], strides = [1, 1]} : vector<2x1024xf32> to vector<2x256xf32>
    %1098 = arith.addf %1096, %1097 : vector<2x256xf32>
    %1099 = vector.extract_strided_slice %1094 {offsets = [0, 512], sizes = [2, 256], strides = [1, 1]} : vector<2x1024xf32> to vector<2x256xf32>
    %1100 = arith.addf %1098, %1099 : vector<2x256xf32>
    %1101 = vector.extract_strided_slice %1094 {offsets = [0, 768], sizes = [2, 256], strides = [1, 1]} : vector<2x1024xf32> to vector<2x256xf32>
    %1102 = arith.addf %1100, %1101 : vector<2x256xf32>
    %c0_196 = arith.constant 0 : index
    %c113_197 = arith.constant 113 : index
    %1103 = vector.load %arg15[%c0_196, %c113_197] : memref<2x1280xf32, #tpu.memory_space<vmem>>, vector<2x1024xf32>
    %c2_198 = arith.constant 2 : index
    %c0_199 = arith.constant 0 : index
    %1104 = vector.load %arg7[%c2_198, %c0_199] : memref<9x1024xf32, #tpu.memory_space<vmem>>, vector<1x1024xf32>
    %1105 = vector.broadcast %1104 : vector<1x1024xf32> to vector<2x1024xf32>
    %1106 = arith.mulf %1103, %1105 : vector<2x1024xf32>
    %1107 = vector.extract_strided_slice %1106 {offsets = [0, 0], sizes = [2, 256], strides = [1, 1]} : vector<2x1024xf32> to vector<2x256xf32>
    %1108 = arith.addf %1102, %1107 : vector<2x256xf32>
    %1109 = vector.extract_strided_slice %1106 {offsets = [0, 256], sizes = [2, 256], strides = [1, 1]} : vector<2x1024xf32> to vector<2x256xf32>
    %1110 = arith.addf %1108, %1109 : vector<2x256xf32>
    %1111 = vector.extract_strided_slice %1106 {offsets = [0, 512], sizes = [2, 256], strides = [1, 1]} : vector<2x1024xf32> to vector<2x256xf32>
    %1112 = arith.addf %1110, %1111 : vector<2x256xf32>
    %1113 = vector.extract_strided_slice %1106 {offsets = [0, 768], sizes = [2, 256], strides = [1, 1]} : vector<2x1024xf32> to vector<2x256xf32>
    %1114 = arith.addf %1112, %1113 : vector<2x256xf32>
    %c0_200 = arith.constant 0 : index
    %c127_201 = arith.constant 127 : index
    %1115 = vector.load %arg15[%c0_200, %c127_201] : memref<2x1280xf32, #tpu.memory_space<vmem>>, vector<2x1024xf32>
    %c3_202 = arith.constant 3 : index
    %c0_203 = arith.constant 0 : index
    %1116 = vector.load %arg7[%c3_202, %c0_203] : memref<9x1024xf32, #tpu.memory_space<vmem>>, vector<1x1024xf32>
    %1117 = vector.broadcast %1116 : vector<1x1024xf32> to vector<2x1024xf32>
    %1118 = arith.mulf %1115, %1117 : vector<2x1024xf32>
    %1119 = vector.extract_strided_slice %1118 {offsets = [0, 0], sizes = [2, 256], strides = [1, 1]} : vector<2x1024xf32> to vector<2x256xf32>
    %1120 = arith.addf %1114, %1119 : vector<2x256xf32>
    %1121 = vector.extract_strided_slice %1118 {offsets = [0, 256], sizes = [2, 256], strides = [1, 1]} : vector<2x1024xf32> to vector<2x256xf32>
    %1122 = arith.addf %1120, %1121 : vector<2x256xf32>
    %1123 = vector.extract_strided_slice %1118 {offsets = [0, 512], sizes = [2, 256], strides = [1, 1]} : vector<2x1024xf32> to vector<2x256xf32>
    %1124 = arith.addf %1122, %1123 : vector<2x256xf32>
    %1125 = vector.extract_strided_slice %1118 {offsets = [0, 768], sizes = [2, 256], strides = [1, 1]} : vector<2x1024xf32> to vector<2x256xf32>
    %1126 = arith.addf %1124, %1125 : vector<2x256xf32>
    %c0_204 = arith.constant 0 : index
    %c128_205 = arith.constant 128 : index
    %1127 = vector.load %arg15[%c0_204, %c128_205] : memref<2x1280xf32, #tpu.memory_space<vmem>>, vector<2x1024xf32>
    %c4_206 = arith.constant 4 : index
    %c0_207 = arith.constant 0 : index
    %1128 = vector.load %arg7[%c4_206, %c0_207] : memref<9x1024xf32, #tpu.memory_space<vmem>>, vector<1x1024xf32>
    %1129 = vector.broadcast %1128 : vector<1x1024xf32> to vector<2x1024xf32>
    %1130 = arith.mulf %1127, %1129 : vector<2x1024xf32>
    %1131 = vector.extract_strided_slice %1130 {offsets = [0, 0], sizes = [2, 256], strides = [1, 1]} : vector<2x1024xf32> to vector<2x256xf32>
    %1132 = arith.addf %1126, %1131 : vector<2x256xf32>
    %1133 = vector.extract_strided_slice %1130 {offsets = [0, 256], sizes = [2, 256], strides = [1, 1]} : vector<2x1024xf32> to vector<2x256xf32>
    %1134 = arith.addf %1132, %1133 : vector<2x256xf32>
    %1135 = vector.extract_strided_slice %1130 {offsets = [0, 512], sizes = [2, 256], strides = [1, 1]} : vector<2x1024xf32> to vector<2x256xf32>
    %1136 = arith.addf %1134, %1135 : vector<2x256xf32>
    %1137 = vector.extract_strided_slice %1130 {offsets = [0, 768], sizes = [2, 256], strides = [1, 1]} : vector<2x1024xf32> to vector<2x256xf32>
    %1138 = arith.addf %1136, %1137 : vector<2x256xf32>
    %c0_208 = arith.constant 0 : index
    %c129_209 = arith.constant 129 : index
    %1139 = vector.load %arg15[%c0_208, %c129_209] : memref<2x1280xf32, #tpu.memory_space<vmem>>, vector<2x1024xf32>
    %c5_210 = arith.constant 5 : index
    %c0_211 = arith.constant 0 : index
    %1140 = vector.load %arg7[%c5_210, %c0_211] : memref<9x1024xf32, #tpu.memory_space<vmem>>, vector<1x1024xf32>
    %1141 = vector.broadcast %1140 : vector<1x1024xf32> to vector<2x1024xf32>
    %1142 = arith.mulf %1139, %1141 : vector<2x1024xf32>
    %1143 = vector.extract_strided_slice %1142 {offsets = [0, 0], sizes = [2, 256], strides = [1, 1]} : vector<2x1024xf32> to vector<2x256xf32>
    %1144 = arith.addf %1138, %1143 : vector<2x256xf32>
    %1145 = vector.extract_strided_slice %1142 {offsets = [0, 256], sizes = [2, 256], strides = [1, 1]} : vector<2x1024xf32> to vector<2x256xf32>
    %1146 = arith.addf %1144, %1145 : vector<2x256xf32>
    %1147 = vector.extract_strided_slice %1142 {offsets = [0, 512], sizes = [2, 256], strides = [1, 1]} : vector<2x1024xf32> to vector<2x256xf32>
    %1148 = arith.addf %1146, %1147 : vector<2x256xf32>
    %1149 = vector.extract_strided_slice %1142 {offsets = [0, 768], sizes = [2, 256], strides = [1, 1]} : vector<2x1024xf32> to vector<2x256xf32>
    %1150 = arith.addf %1148, %1149 : vector<2x256xf32>
    %c0_212 = arith.constant 0 : index
    %c143_213 = arith.constant 143 : index
    %1151 = vector.load %arg15[%c0_212, %c143_213] : memref<2x1280xf32, #tpu.memory_space<vmem>>, vector<2x1024xf32>
    %c6_214 = arith.constant 6 : index
    %c0_215 = arith.constant 0 : index
    %1152 = vector.load %arg7[%c6_214, %c0_215] : memref<9x1024xf32, #tpu.memory_space<vmem>>, vector<1x1024xf32>
    %1153 = vector.broadcast %1152 : vector<1x1024xf32> to vector<2x1024xf32>
    %1154 = arith.mulf %1151, %1153 : vector<2x1024xf32>
    %1155 = vector.extract_strided_slice %1154 {offsets = [0, 0], sizes = [2, 256], strides = [1, 1]} : vector<2x1024xf32> to vector<2x256xf32>
    %1156 = arith.addf %1150, %1155 : vector<2x256xf32>
    %1157 = vector.extract_strided_slice %1154 {offsets = [0, 256], sizes = [2, 256], strides = [1, 1]} : vector<2x1024xf32> to vector<2x256xf32>
    %1158 = arith.addf %1156, %1157 : vector<2x256xf32>
    %1159 = vector.extract_strided_slice %1154 {offsets = [0, 512], sizes = [2, 256], strides = [1, 1]} : vector<2x1024xf32> to vector<2x256xf32>
    %1160 = arith.addf %1158, %1159 : vector<2x256xf32>
    %1161 = vector.extract_strided_slice %1154 {offsets = [0, 768], sizes = [2, 256], strides = [1, 1]} : vector<2x1024xf32> to vector<2x256xf32>
    %1162 = arith.addf %1160, %1161 : vector<2x256xf32>
    %c0_216 = arith.constant 0 : index
    %c144_217 = arith.constant 144 : index
    %1163 = vector.load %arg15[%c0_216, %c144_217] : memref<2x1280xf32, #tpu.memory_space<vmem>>, vector<2x1024xf32>
    %c7_218 = arith.constant 7 : index
    %c0_219 = arith.constant 0 : index
    %1164 = vector.load %arg7[%c7_218, %c0_219] : memref<9x1024xf32, #tpu.memory_space<vmem>>, vector<1x1024xf32>
    %1165 = vector.broadcast %1164 : vector<1x1024xf32> to vector<2x1024xf32>
    %1166 = arith.mulf %1163, %1165 : vector<2x1024xf32>
    %1167 = vector.extract_strided_slice %1166 {offsets = [0, 0], sizes = [2, 256], strides = [1, 1]} : vector<2x1024xf32> to vector<2x256xf32>
    %1168 = arith.addf %1162, %1167 : vector<2x256xf32>
    %1169 = vector.extract_strided_slice %1166 {offsets = [0, 256], sizes = [2, 256], strides = [1, 1]} : vector<2x1024xf32> to vector<2x256xf32>
    %1170 = arith.addf %1168, %1169 : vector<2x256xf32>
    %1171 = vector.extract_strided_slice %1166 {offsets = [0, 512], sizes = [2, 256], strides = [1, 1]} : vector<2x1024xf32> to vector<2x256xf32>
    %1172 = arith.addf %1170, %1171 : vector<2x256xf32>
    %1173 = vector.extract_strided_slice %1166 {offsets = [0, 768], sizes = [2, 256], strides = [1, 1]} : vector<2x1024xf32> to vector<2x256xf32>
    %1174 = arith.addf %1172, %1173 : vector<2x256xf32>
    %c0_220 = arith.constant 0 : index
    %c145_221 = arith.constant 145 : index
    %1175 = vector.load %arg15[%c0_220, %c145_221] : memref<2x1280xf32, #tpu.memory_space<vmem>>, vector<2x1024xf32>
    %c8_222 = arith.constant 8 : index
    %c0_223 = arith.constant 0 : index
    %1176 = vector.load %arg7[%c8_222, %c0_223] : memref<9x1024xf32, #tpu.memory_space<vmem>>, vector<1x1024xf32>
    %1177 = vector.broadcast %1176 : vector<1x1024xf32> to vector<2x1024xf32>
    %1178 = arith.mulf %1175, %1177 : vector<2x1024xf32>
    %1179 = vector.extract_strided_slice %1178 {offsets = [0, 0], sizes = [2, 256], strides = [1, 1]} : vector<2x1024xf32> to vector<2x256xf32>
    %1180 = arith.addf %1174, %1179 : vector<2x256xf32>
    %1181 = vector.extract_strided_slice %1178 {offsets = [0, 256], sizes = [2, 256], strides = [1, 1]} : vector<2x1024xf32> to vector<2x256xf32>
    %1182 = arith.addf %1180, %1181 : vector<2x256xf32>
    %1183 = vector.extract_strided_slice %1178 {offsets = [0, 512], sizes = [2, 256], strides = [1, 1]} : vector<2x1024xf32> to vector<2x256xf32>
    %1184 = arith.addf %1182, %1183 : vector<2x256xf32>
    %1185 = vector.extract_strided_slice %1178 {offsets = [0, 768], sizes = [2, 256], strides = [1, 1]} : vector<2x1024xf32> to vector<2x256xf32>
    %1186 = arith.addf %1184, %1185 : vector<2x256xf32>
    %c0_224 = arith.constant 0 : index
    %c0_225 = arith.constant 0 : index
    %1187 = vector.load %arg8[%c0_224, %c0_225] : memref<1x256xf32, #tpu.memory_space<vmem>>, vector<1x256xf32>
    %1188 = vector.broadcast %1187 : vector<1x256xf32> to vector<2x256xf32>
    %1189 = arith.addf %1186, %1188 : vector<2x256xf32>
    %c0_226 = arith.constant 0 : index
    %c0_227 = arith.constant 0 : index
    %1190 = vector.load %arg13[%c0_226, %c0_227] : memref<2x256xf32, #tpu.memory_space<vmem>>, vector<2x256xf32>
    tpu.vector_store %arg13[%c0_226, %c0_227], %1189 {strides = array<i32>} : memref<2x256xf32, #tpu.memory_space<vmem>>, vector<2x256xf32>,
    return
  }
}

</mosaic_0001>

<llo_original>
// kernel: _decoder_forward.1
$region0: #{_decoder_forward.1}
  #allocation0 [shape = 'u32[]', space=smem, size = 0x4, offset = 0x4, fixed_abs, tag = 'smem constant byte address 0x4 - core index']
  #allocation1 [shape = 'u32[144,128]{1,0:T(1,128)}', space=vmem, size = 0x12000, scoped, tag = 'internal scratch']
  #allocation2 [shape = 'f32[2,2304]{1,0:T(2,128)}', space=vmem, size = 0x4800, scoped, tag = 'scratch operand']
  #allocation3 [shape = 'f32[2,1280]{1,0:T(2,128)}', space=vmem, size = 0x2800, scoped, tag = 'scratch operand']
  %s0 = inlined_call_operand.vmem [shape: f32[2,7], index: 0, kind: input, shape index: {}]
  %s1 = inlined_call_operand.vmem [shape: f32[7,64], index: 1, kind: input, shape index: {}]
  %s2 = inlined_call_operand.vmem [shape: f32[1,64], index: 2, kind: input, shape index: {}]
  %s3 = inlined_call_operand.vmem [shape: f32[1,64], index: 3, kind: input, shape index: {}]
  %s4 = inlined_call_operand.hbm [shape: f32[64,2048], index: 4, kind: input, shape index: {}]
  %s5 = inlined_call_operand.vmem [shape: f32[1,256], index: 5, kind: input, shape index: {}]
  %s6 = inlined_call_operand.hbm [shape: f32[36,2048], index: 6, kind: input, shape index: {}]
  %s7 = inlined_call_operand.hbm [shape: f32[9,1024], index: 7, kind: input, shape index: {}]
  %s8 = inlined_call_operand.vmem [shape: f32[1,256], index: 8, kind: input, shape index: {}]
  %s9 = inlined_call_operand.vmem [shape: f32[8], index: 9, kind: input, shape index: {}]
  %s10 = inlined_call_operand.hbm [shape: f32[8], index: 10, kind: input, shape index: {}]
  %s11 = inlined_call_operand.vmem [shape: f32[4], index: 11, kind: input, shape index: {}]
  %s12 = inlined_call_operand.hbm [shape: f32[4], index: 12, kind: input, shape index: {}]
  %s13 = inlined_call_operand.vmem [shape: f32[2,256], index: 13, kind: output, shape index: {}]
  %s14 = sld [smem:[#allocation0]]
  $region90: #{_decoder_forward.1} parent=0
    _
  %s16 = ssub.s32 1, %s14
  %s17 = scalar_select 0, %s16, %s14
  $region1: #{_decoder_forward.1} parent=0
    #allocation4 [shape = 'u8[524288]{0}', space=vmem, size = 0x80000, scoped, tag = 'input window, operand 4, single buffered']
    #allocation5 [shape = 's32[1]{0}', space=sflag, size = 0x4, scoped, tag = 'scoped memory for _decoder_forward.1']
    #allocation6 [shape = 's32[1]{0}', space=sflag, size = 0x4, scoped, tag = 'scoped memory for _decoder_forward.1']
    #allocation7 [shape = 's32[1]{0}', space=sflag, size = 0x4, scoped, tag = 'scoped memory for _decoder_forward.1']
    #allocation8 [shape = 'u8[327680]{0}', space=vmem, size = 0x50000, scoped, tag = 'input window, operand 6, single buffered']
    #allocation9 [shape = 's32[1]{0}', space=sflag, size = 0x4, scoped, tag = 'scoped memory for _decoder_forward.1']
    #allocation10 [shape = 'u8[65536]{0}', space=vmem, size = 0x10000, scoped, tag = 'input window, operand 7, single buffered']
    #allocation11 [shape = 'u8[512]{0}', space=smem, size = 0x200, scoped, tag = 'input window, operand 9, single buffered']
    #allocation12 [shape = 'u8[512]{0}', space=smem, size = 0x200, scoped, tag = 'input window, operand 10, single buffered']
    #allocation13 [shape = 'u8[512]{0}', space=smem, size = 0x200, scoped, tag = 'input window, operand 11, single buffered']
    #allocation14 [shape = 's32[1]{0}', space=sflag, size = 0x4, scoped, tag = 'scoped memory for _decoder_forward.1']
    #allocation15 [shape = 'u8[512]{0}', space=smem, size = 0x200, scoped, tag = 'input window, operand 12, single buffered']
    #allocation16 [shape = 's32[1]{0}', space=sflag, size = 0x4, scoped, tag = 'scoped memory for _decoder_forward.1']
    %18 = vsyncpa [#allocation5], 0
    %19 = vsyncpa [#allocation9], 0
    %20 = vsyncpa [#allocation7], 0
    %21 = vsyncpa [#allocation6], 0
    %22 = vsyncpa [#allocation14], 0
    %23 = vsyncpa [#allocation16], 0
    // Predicated region
    $region2: #{_decoder_forward.1} parent=1 // pred_check
      _
    $region3: #{_decoder_forward.1} parent=1 // pred_check_branch
      %25 = sbr.rel (0) target = $region5
    $region4: #{_decoder_forward.1} parent=1 // pred_region
      _
    $region5: #{_decoder_forward.1} parent=1 // pred_fallthru
      _
    // Predicated region
    $region6: #{_decoder_forward.1} parent=1 // pred_check
      _
    $region7: #{_decoder_forward.1} parent=1 // pred_check_branch
      %27 = sbr.rel (0) target = $region9
    $region8: #{_decoder_forward.1} parent=1 // pred_region
      _
    $region9: #{_decoder_forward.1} parent=1 // pred_fallthru
      _
    // Predicated region
    $region10: #{_decoder_forward.1} parent=1 // pred_check
      _
    $region11: #{_decoder_forward.1} parent=1 // pred_check_branch
      %29 = sbr.rel (0) target = $region13
    $region12: #{_decoder_forward.1} parent=1 // pred_region
      _
    $region13: #{_decoder_forward.1} parent=1 // pred_fallthru
      _
    // Predicated region
    $region14: #{_decoder_forward.1} parent=1 // pred_check
      _
    $region15: #{_decoder_forward.1} parent=1 // pred_check_branch
      %31 = sbr.rel (0) target = $region17
    $region16: #{_decoder_forward.1} parent=1 // pred_region
      _
    $region17: #{_decoder_forward.1} parent=1 // pred_fallthru
      _
    // Predicated region
    $region18: #{_decoder_forward.1} parent=1 // pred_check
      _
    $region19: #{_decoder_forward.1} parent=1 // pred_check_branch
      %33 = sbr.rel (0) target = $region21
    $region20: #{_decoder_forward.1} parent=1 // pred_region
      %s35 = ssub.s32 16384, 16384
      %36 = vsyncadd [#allocation5], %s35
      %s37 = sshll.u32 [#allocation4], 4
      %s38 = int_to_ptr.vmem [resolvable:$true] %s37
      %43 = dma.hbm_to_vmem [thread:$0]  %s4, 16384, %s38, [#allocation5], 2048, 2048, 128
    $region21: #{_decoder_forward.1} parent=1 // pred_fallthru
      _
    // Predicated region
    $region22: #{_decoder_forward.1} parent=1 // pred_check
      _
    $region23: #{_decoder_forward.1} parent=1 // pred_check_branch
      %45 = sbr.rel (0) target = $region25
    $region24: #{_decoder_forward.1} parent=1 // pred_region
      _
    $region25: #{_decoder_forward.1} parent=1 // pred_fallthru
      _
    // Predicated region
    $region26: #{_decoder_forward.1} parent=1 // pred_check
      _
    $region27: #{_decoder_forward.1} parent=1 // pred_check_branch
      %47 = sbr.rel (0) target = $region29
    $region28: #{_decoder_forward.1} parent=1 // pred_region
      %s49 = ssub.s32 10240, 10240
      %50 = vsyncadd [#allocation9], %s49
      %s51 = sshll.u32 [#allocation8], 4
      %s52 = int_to_ptr.vmem [resolvable:$true] %s51
      %57 = dma.hbm_to_vmem [thread:$0]  %s6, 10240, %s52, [#allocation9], 2048, 2048, 128
    $region29: #{_decoder_forward.1} parent=1 // pred_fallthru
      _
    // Predicated region
    $region30: #{_decoder_forward.1} parent=1 // pred_check
      _
    $region31: #{_decoder_forward.1} parent=1 // pred_check_branch
      %59 = sbr.rel (0) target = $region33
    $region32: #{_decoder_forward.1} parent=1 // pred_region
      %s61 = ssub.s32 2048, 2048
      %62 = vsyncadd [#allocation9], %s61
      %s63 = sshll.u32 [#allocation10], 4
      %s64 = int_to_ptr.vmem [resolvable:$true] %s63
      %69 = dma.hbm_to_vmem [thread:$0]  %s7, 2048, %s64, [#allocation9], 1024, 1024, 64
    $region33: #{_decoder_forward.1} parent=1 // pred_fallthru
      _
    // Predicated region
    $region34: #{_decoder_forward.1} parent=1 // pred_check
      _
    $region35: #{_decoder_forward.1} parent=1 // pred_check_branch
      %71 = sbr.rel (0) target = $region37
    $region36: #{_decoder_forward.1} parent=1 // pred_region
      _
    $region37: #{_decoder_forward.1} parent=1 // pred_fallthru
      _
    // Predicated region
    $region38: #{_decoder_forward.1} parent=1 // pred_check
      _
    $region39: #{_decoder_forward.1} parent=1 // pred_check_branch
      %73 = sbr.rel (0) target = $region41
    $region40: #{_decoder_forward.1} parent=1 // pred_region
      %s75 = ssub.s32 16, 16
      %76 = vsyncadd [#allocation7], %s75
      %s78 = sshll.u32 %s9, 4
      %s79 = int_to_ptr.vmem [resolvable:$true] %s78
      %81 = dma.vmem_to_smem %s79, 16, [#allocation11], [#allocation7]
    $region41: #{_decoder_forward.1} parent=1 // pred_fallthru
      _
    // Predicated region
    $region42: #{_decoder_forward.1} parent=1 // pred_check
      _
    $region43: #{_decoder_forward.1} parent=1 // pred_check_branch
      %83 = sbr.rel (0) target = $region45
    $region44: #{_decoder_forward.1} parent=1 // pred_region
      %s85 = ssub.s32 16, 16
      %86 = vsyncadd [#allocation6], %s85
      %89 = dma.hbm_to_smem %s10, 16, [#allocation12], [#allocation6]
    $region45: #{_decoder_forward.1} parent=1 // pred_fallthru
      _
    // Predicated region
    $region46: #{_decoder_forward.1} parent=1 // pred_check
      _
    $region47: #{_decoder_forward.1} parent=1 // pred_check_branch
      %91 = sbr.rel (0) target = $region49
    $region48: #{_decoder_forward.1} parent=1 // pred_region
      %s93 = ssub.s32 16, 16
      %94 = vsyncadd [#allocation14], %s93
      %s96 = sshll.u32 %s11, 4
      %s97 = int_to_ptr.vmem [resolvable:$true] %s96
      %99 = dma.vmem_to_smem %s97, 16, [#allocation13], [#allocation14]
    $region49: #{_decoder_forward.1} parent=1 // pred_fallthru
      _
    // Predicated region
    $region50: #{_decoder_forward.1} parent=1 // pred_check
      _
    $region51: #{_decoder_forward.1} parent=1 // pred_check_branch
      %101 = sbr.rel (0) target = $region53
    $region52: #{_decoder_forward.1} parent=1 // pred_region
      %s103 = ssub.s32 16, 16
      %104 = vsyncadd [#allocation16], %s103
      %107 = dma.hbm_to_smem %s12, 16, [#allocation15], [#allocation16]
    $region53: #{_decoder_forward.1} parent=1 // pred_fallthru
      _
    // Predicated region
    $region54: #{_decoder_forward.1} parent=1 // pred_check
      _
    $region55: #{_decoder_forward.1} parent=1 // pred_check_branch
      %109 = sbr.rel (0) target = $region57
    $region56: #{_decoder_forward.1} parent=1 // pred_region
      %110 = dma.done [#allocation5], 16384
    $region57: #{_decoder_forward.1} parent=1 // pred_fallthru
      _
    // Predicated region
    $region58: #{_decoder_forward.1} parent=1 // pred_check
      _
    $region59: #{_decoder_forward.1} parent=1 // pred_check_branch
      %112 = sbr.rel (0) target = $region61
    $region60: #{_decoder_forward.1} parent=1 // pred_region
      %113 = dma.done [#allocation9], 10240
    $region61: #{_decoder_forward.1} parent=1 // pred_fallthru
      _
    // Predicated region
    $region62: #{_decoder_forward.1} parent=1 // pred_check
      _
    $region63: #{_decoder_forward.1} parent=1 // pred_check_branch
      %115 = sbr.rel (0) target = $region65
    $region64: #{_decoder_forward.1} parent=1 // pred_region
      %116 = dma.done [#allocation9], 2048
    $region65: #{_decoder_forward.1} parent=1 // pred_fallthru
      _
    // Predicated region
    $region66: #{_decoder_forward.1} parent=1 // pred_check
      _
    $region67: #{_decoder_forward.1} parent=1 // pred_check_branch
      %118 = sbr.rel (0) target = $region69
    $region68: #{_decoder_forward.1} parent=1 // pred_region
      %119 = dma.done [#allocation7], 16
    $region69: #{_decoder_forward.1} parent=1 // pred_fallthru
      _
    // Predicated region
    $region70: #{_decoder_forward.1} parent=1 // pred_check
      _
    $region71: #{_decoder_forward.1} parent=1 // pred_check_branch
      %121 = sbr.rel (0) target = $region73
    $region72: #{_decoder_forward.1} parent=1 // pred_region
      %122 = dma.done [#allocation6], 16
    $region73: #{_decoder_forward.1} parent=1 // pred_fallthru
      _
    // Predicated region
    $region74: #{_decoder_forward.1} parent=1 // pred_check
      _
    $region75: #{_decoder_forward.1} parent=1 // pred_check_branch
      %124 = sbr.rel (0) target = $region77
    $region76: #{_decoder_forward.1} parent=1 // pred_region
      %125 = dma.done [#allocation14], 16
    $region77: #{_decoder_forward.1} parent=1 // pred_fallthru
      _
    // Predicated region
    $region78: #{_decoder_forward.1} parent=1 // pred_check
      _
    $region79: #{_decoder_forward.1} parent=1 // pred_check_branch
      %127 = sbr.rel (0) target = $region81
    $region80: #{_decoder_forward.1} parent=1 // pred_region
      %128 = dma.done [#allocation16], 16
    $region81: #{_decoder_forward.1} parent=1 // pred_fallthru
      _
    %129 = sfence
    %v130 = vld [vmem:[%s0] sm:$0x3]
    %v131 = vld [vmem:[%s1] sm:$0x7f]
    %vm132 = vcmask 56320
    %v134 = vsel %vm132, %v130, 0
    %vm136 = vcmask 1046528
    %v138 = vsel %vm136, %v131, 0
    %140 = vmatprep.subr.mxu0 0.0
    %141 = vmatpush1.msra.mxu0 0.0
    %142 = vmatprep.subr.mxu0 0.0
    %143 = vmatpush1.msra.mxu0 0.0
    %144 = vmatprep.subr.mxu0 0.0
    %145 = vmatpush1.msra.mxu0 0.0
    %146 = vmatprep.subr.mxu0 0.0
    %147 = vmatpush1.msra.mxu0 0.0
    %148 = vmatprep.subr.mxu0 0.0
    %149 = vmatpush1.msra.mxu0 0.0
    %150 = vmatprep.subr.mxu0 0.0
    %151 = vmatpush1.msra.mxu0 0.0
    %152 = vmatprep.subr.mxu0 0.0
    %153 = vmatpush1.msra.mxu0 0.0
    %154 = vmatprep.subr.mxu0 0.0
    %155 = vmatpush1.msra.mxu0 0.0
    %156 = vmatprep.subr.mxu0 0.0
    %157 = vmatpush1.msra.mxu0 0.0
    %158 = vmatprep.subr.mxu0 0.0
    %159 = vmatpush1.msra.mxu0 0.0
    %160 = vmatprep.subr.mxu0 0.0
    %161 = vmatpush1.msra.mxu0 0.0
    %162 = vmatprep.subr.mxu0 0.0
    %163 = vmatpush1.msra.mxu0 0.0
    %164 = vmatprep.subr.mxu0 0.0
    %165 = vmatpush1.msra.mxu0 0.0
    %166 = vmatprep.subr.mxu0 0.0
    %167 = vmatpush1.msra.mxu0 0.0
    %168 = vmatprep.subr.mxu0 0.0
    %169 = vmatpush1.msra.mxu0 0.0
    %170 = vmatprep.subr.mxu0 0.0
    %171 = vmatpush1.msra.mxu0 %v138
    %172 = vmatprep.subr.mxu0 0.0
    %173 = vmatpush2.msra.mxu0 0.0
    %174 = vmatprep.subr.mxu0 0.0
    %175 = vmatpush2.msra.mxu0 0.0
    %176 = vmatprep.subr.mxu0 0.0
    %177 = vmatpush2.msra.mxu0 0.0
    %178 = vmatprep.subr.mxu0 0.0
    %179 = vmatpush2.msra.mxu0 0.0
    %180 = vmatprep.subr.mxu0 0.0
    %181 = vmatpush2.msra.mxu0 0.0
    %182 = vmatprep.subr.mxu0 0.0
    %183 = vmatpush2.msra.mxu0 0.0
    %184 = vmatprep.subr.mxu0 0.0
    %185 = vmatpush2.msra.mxu0 0.0
    %186 = vmatprep.subr.mxu0 0.0
    %187 = vmatpush2.msra.mxu0 0.0
    %188 = vmatprep.subr.mxu0 0.0
    %189 = vmatpush2.msra.mxu0 0.0
    %190 = vmatprep.subr.mxu0 0.0
    %191 = vmatpush2.msra.mxu0 0.0
    %192 = vmatprep.subr.mxu0 0.0
    %193 = vmatpush2.msra.mxu0 0.0
    %194 = vmatprep.subr.mxu0 0.0
    %195 = vmatpush2.msra.mxu0 0.0
    %196 = vmatprep.subr.mxu0 0.0
    %197 = vmatpush2.msra.mxu0 0.0
    %198 = vmatprep.subr.mxu0 0.0
    %199 = vmatpush2.msra.mxu0 0.0
    %200 = vmatprep.subr.mxu0 0.0
    %201 = vmatpush2.msra.mxu0 0.0
    %202 = vmatprep.subr.mxu0 0.0
    %203 = vmatpush2.msra.mxu0 0.0
    %204 = vmatprep.mubr.f32.mxu0 0.0
    %205 = vmatmul.mubr.f32.gmra.mxu0 %v134
    %v206 = vpop.f32.mrf.mxu0
    %v207 = vadd.f32 0.0, %v206
    %v208 = vpop.f32.mrf.mxu0
    %209 = vdwg.mxu0
    %vm210 = vcmask 517120
    %v211 = vsel %vm210, %v207, 0.0
    %v212 = vrot.slane %v211, 4
    %v213 = vadd.f32 %v211, %v212
    %v214 = vrot.slane %v213, 2
    %v215 = vadd.f32 %v213, %v214
    %v216 = vrot.slane %v215, 1
    %v217 = vadd.f32 %v215, %v216
    %v218 = vrcp.pop 2.0
    %v219 = vmul.f32 %v217, %v218
    %v220 = vsub.f32 %v207, %v219
    %v221 = vmul.f32 %v220, %v220
    %v222 = vsel %vm210, %v221, 0.0
    %v223 = vrot.slane %v222, 4
    %v224 = vadd.f32 %v222, %v223
    %v225 = vrot.slane %v224, 2
    %v226 = vadd.f32 %v224, %v225
    %v227 = vrot.slane %v226, 1
    %v228 = vadd.f32 %v226, %v227
    %v229 = vmul.f32 %v228, %v218
    %v230 = vld [vmem:[%s2] sm:$0x1]
    %v231 = vadd.f32 %v229, 1e-05
    %v232 = vrsqrt.pop %v231
    %v233 = vmul.f32 %v230, %v232
    %v235 = vlaneseq
    %v236 = vshrl.u32 %v235, 7
    %v237 = vsub.s32 0, %v236
    %v238 = vrot.slane %v233, %v237
    %v240 = vmul.f32 %v220, %v238
    %v241 = vld [vmem:[%s3] sm:$0x1]
    %v243 = vlaneseq
    %v244 = vshrl.u32 %v243, 7
    %v245 = vsub.s32 0, %v244
    %v246 = vrot.slane %v241, %v245
    %v248 = vadd.f32 %v240, %v246
    %v249 = vmax.f32 %v248, 0.0
    %v250 = vld [vmem:[#allocation4] sm:$0xff]
    %v251 = vld [vmem:[#allocation4 + $0x8] sm:$0xff]
    %v252 = vld [vmem:[#allocation4 + $0x10] sm:$0xff]
    %v253 = vld [vmem:[#allocation4 + $0x18] sm:$0xff]
    %v254 = vld [vmem:[#allocation4 + $0x20] sm:$0xff]
    %v255 = vld [vmem:[#allocation4 + $0x28] sm:$0xff]
    %v256 = vld [vmem:[#allocation4 + $0x30] sm:$0xff]
    %v257 = vld [vmem:[#allocation4 + $0x38] sm:$0xff]
    %v258 = vld [vmem:[#allocation4 + $0x40] sm:$0xff]
    %v259 = vld [vmem:[#allocation4 + $0x48] sm:$0xff]
    %v260 = vld [vmem:[#allocation4 + $0x50] sm:$0xff]
    %v261 = vld [vmem:[#allocation4 + $0x58] sm:$0xff]
    %v262 = vld [vmem:[#allocation4 + $0x60] sm:$0xff]
    %v263 = vld [vmem:[#allocation4 + $0x68] sm:$0xff]
    %v264 = vld [vmem:[#allocation4 + $0x70] sm:$0xff]
    %v265 = vld [vmem:[#allocation4 + $0x78] sm:$0xff]
    %v266 = vld [vmem:[#allocation4 + $0x80] sm:$0xff]
    %v267 = vld [vmem:[#allocation4 + $0x88] sm:$0xff]
    %v268 = vld [vmem:[#allocation4 + $0x90] sm:$0xff]
    %v269 = vld [vmem:[#allocation4 + $0x98] sm:$0xff]
    %v270 = vld [vmem:[#allocation4 + $0xa0] sm:$0xff]
    %v271 = vld [vmem:[#allocation4 + $0xa8] sm:$0xff]
    %v272 = vld [vmem:[#allocation4 + $0xb0] sm:$0xff]
    %v273 = vld [vmem:[#allocation4 + $0xb8] sm:$0xff]
    %v274 = vld [vmem:[#allocation4 + $0xc0] sm:$0xff]
    %v275 = vld [vmem:[#allocation4 + $0xc8] sm:$0xff]
    %v276 = vld [vmem:[#allocation4 + $0xd0] sm:$0xff]
    %v277 = vld [vmem:[#allocation4 + $0xd8] sm:$0xff]
    %v278 = vld [vmem:[#allocation4 + $0xe0] sm:$0xff]
    %v279 = vld [vmem:[#allocation4 + $0xe8] sm:$0xff]
    %v280 = vld [vmem:[#allocation4 + $0xf0] sm:$0xff]
    %v281 = vld [vmem:[#allocation4 + $0xf8] sm:$0xff]
    %v282 = vld [vmem:[#allocation4 + $0x100] sm:$0xff]
    %v283 = vld [vmem:[#allocation4 + $0x108] sm:$0xff]
    %v284 = vld [vmem:[#allocation4 + $0x110] sm:$0xff]
    %v285 = vld [vmem:[#allocation4 + $0x118] sm:$0xff]
    %v286 = vld [vmem:[#allocation4 + $0x120] sm:$0xff]
    %v287 = vld [vmem:[#allocation4 + $0x128] sm:$0xff]
    %v288 = vld [vmem:[#allocation4 + $0x130] sm:$0xff]
    %v289 = vld [vmem:[#allocation4 + $0x138] sm:$0xff]
    %v290 = vld [vmem:[#allocation4 + $0x140] sm:$0xff]
    %v291 = vld [vmem:[#allocation4 + $0x148] sm:$0xff]
    %v292 = vld [vmem:[#allocation4 + $0x150] sm:$0xff]
    %v293 = vld [vmem:[#allocation4 + $0x158] sm:$0xff]
    %v294 = vld [vmem:[#allocation4 + $0x160] sm:$0xff]
    %v295 = vld [vmem:[#allocation4 + $0x168] sm:$0xff]
    %v296 = vld [vmem:[#allocation4 + $0x170] sm:$0xff]
    %v297 = vld [vmem:[#allocation4 + $0x178] sm:$0xff]
    %v298 = vld [vmem:[#allocation4 + $0x180] sm:$0xff]
    %v299 = vld [vmem:[#allocation4 + $0x188] sm:$0xff]
    %v300 = vld [vmem:[#allocation4 + $0x190] sm:$0xff]
    %v301 = vld [vmem:[#allocation4 + $0x198] sm:$0xff]
    %v302 = vld [vmem:[#allocation4 + $0x1a0] sm:$0xff]
    %v303 = vld [vmem:[#allocation4 + $0x1a8] sm:$0xff]
    %v304 = vld [vmem:[#allocation4 + $0x1b0] sm:$0xff]
    %v305 = vld [vmem:[#allocation4 + $0x1b8] sm:$0xff]
    %v306 = vld [vmem:[#allocation4 + $0x1c0] sm:$0xff]
    %v307 = vld [vmem:[#allocation4 + $0x1c8] sm:$0xff]
    %v308 = vld [vmem:[#allocation4 + $0x1d0] sm:$0xff]
    %v309 = vld [vmem:[#allocation4 + $0x1d8] sm:$0xff]
    %v310 = vld [vmem:[#allocation4 + $0x1e0] sm:$0xff]
    %v311 = vld [vmem:[#allocation4 + $0x1e8] sm:$0xff]
    %v312 = vld [vmem:[#allocation4 + $0x1f0] sm:$0xff]
    %v313 = vld [vmem:[#allocation4 + $0x1f8] sm:$0xff]
    %v314 = vld [vmem:[#allocation4 + $0x200] sm:$0xff]
    %v315 = vld [vmem:[#allocation4 + $0x208] sm:$0xff]
    %v316 = vld [vmem:[#allocation4 + $0x210] sm:$0xff]
    %v317 = vld [vmem:[#allocation4 + $0x218] sm:$0xff]
    %v318 = vld [vmem:[#allocation4 + $0x220] sm:$0xff]
    %v319 = vld [vmem:[#allocation4 + $0x228] sm:$0xff]
    %v320 = vld [vmem:[#allocation4 + $0x230] sm:$0xff]
    %v321 = vld [vmem:[#allocation4 + $0x238] sm:$0xff]
    %v322 = vld [vmem:[#allocation4 + $0x240] sm:$0xff]
    %v323 = vld [vmem:[#allocation4 + $0x248] sm:$0xff]
    %v324 = vld [vmem:[#allocation4 + $0x250] sm:$0xff]
    %v325 = vld [vmem:[#allocation4 + $0x258] sm:$0xff]
    %v326 = vld [vmem:[#allocation4 + $0x260] sm:$0xff]
    %v327 = vld [vmem:[#allocation4 + $0x268] sm:$0xff]
    %v328 = vld [vmem:[#allocation4 + $0x270] sm:$0xff]
    %v329 = vld [vmem:[#allocation4 + $0x278] sm:$0xff]
    %v330 = vld [vmem:[#allocation4 + $0x280] sm:$0xff]
    %v331 = vld [vmem:[#allocation4 + $0x288] sm:$0xff]
    %v332 = vld [vmem:[#allocation4 + $0x290] sm:$0xff]
    %v333 = vld [vmem:[#allocation4 + $0x298] sm:$0xff]
    %v334 = vld [vmem:[#allocation4 + $0x2a0] sm:$0xff]
    %v335 = vld [vmem:[#allocation4 + $0x2a8] sm:$0xff]
    %v336 = vld [vmem:[#allocation4 + $0x2b0] sm:$0xff]
    %v337 = vld [vmem:[#allocation4 + $0x2b8] sm:$0xff]
    %v338 = vld [vmem:[#allocation4 + $0x2c0] sm:$0xff]
    %v339 = vld [vmem:[#allocation4 + $0x2c8] sm:$0xff]
    %v340 = vld [vmem:[#allocation4 + $0x2d0] sm:$0xff]
    %v341 = vld [vmem:[#allocation4 + $0x2d8] sm:$0xff]
    %v342 = vld [vmem:[#allocation4 + $0x2e0] sm:$0xff]
    %v343 = vld [vmem:[#allocation4 + $0x2e8] sm:$0xff]
    %v344 = vld [vmem:[#allocation4 + $0x2f0] sm:$0xff]
    %v345 = vld [vmem:[#allocation4 + $0x2f8] sm:$0xff]
    %v346 = vld [vmem:[#allocation4 + $0x300] sm:$0xff]
    %v347 = vld [vmem:[#allocation4 + $0x308] sm:$0xff]
    %v348 = vld [vmem:[#allocation4 + $0x310] sm:$0xff]
    %v349 = vld [vmem:[#allocation4 + $0x318] sm:$0xff]
    %v350 = vld [vmem:[#allocation4 + $0x320] sm:$0xff]
    %v351 = vld [vmem:[#allocation4 + $0x328] sm:$0xff]
    %v352 = vld [vmem:[#allocation4 + $0x330] sm:$0xff]
    %v353 = vld [vmem:[#allocation4 + $0x338] sm:$0xff]
    %v354 = vld [vmem:[#allocation4 + $0x340] sm:$0xff]
    %v355 = vld [vmem:[#allocation4 + $0x348] sm:$0xff]
    %v356 = vld [vmem:[#allocation4 + $0x350] sm:$0xff]
    %v357 = vld [vmem:[#allocation4 + $0x358] sm:$0xff]
    %v358 = vld [vmem:[#allocation4 + $0x360] sm:$0xff]
    %v359 = vld [vmem:[#allocation4 + $0x368] sm:$0xff]
    %v360 = vld [vmem:[#allocation4 + $0x370] sm:$0xff]
    %v361 = vld [vmem:[#allocation4 + $0x378] sm:$0xff]
    %v362 = vld [vmem:[#allocation4 + $0x380] sm:$0xff]
    %v363 = vld [vmem:[#allocation4 + $0x388] sm:$0xff]
    %v364 = vld [vmem:[#allocation4 + $0x390] sm:$0xff]
    %v365 = vld [vmem:[#allocation4 + $0x398] sm:$0xff]
    %v366 = vld [vmem:[#allocation4 + $0x3a0] sm:$0xff]
    %v367 = vld [vmem:[#allocation4 + $0x3a8] sm:$0xff]
    %v368 = vld [vmem:[#allocation4 + $0x3b0] sm:$0xff]
    %v369 = vld [vmem:[#allocation4 + $0x3b8] sm:$0xff]
    %v370 = vld [vmem:[#allocation4 + $0x3c0] sm:$0xff]
    %v371 = vld [vmem:[#allocation4 + $0x3c8] sm:$0xff]
    %v372 = vld [vmem:[#allocation4 + $0x3d0] sm:$0xff]
    %v373 = vld [vmem:[#allocation4 + $0x3d8] sm:$0xff]
    %v374 = vld [vmem:[#allocation4 + $0x3e0] sm:$0xff]
    %v375 = vld [vmem:[#allocation4 + $0x3e8] sm:$0xff]
    %v376 = vld [vmem:[#allocation4 + $0x3f0] sm:$0xff]
    %v377 = vld [vmem:[#allocation4 + $0x3f8] sm:$0xff]
    %vm378 = vcmask 523264
    %v380 = vsel %vm378, %v249, 0
    %382 = vmatprep.subr.mxu0 0.0
    %383 = vmatpush1.msra.mxu0 0.0
    %384 = vmatprep.subr.mxu0 0.0
    %385 = vmatpush1.msra.mxu0 0.0
    %386 = vmatprep.subr.mxu0 0.0
    %387 = vmatpush1.msra.mxu0 0.0
    %388 = vmatprep.subr.mxu0 0.0
    %389 = vmatpush1.msra.mxu0 0.0
    %390 = vmatprep.subr.mxu0 0.0
    %391 = vmatpush1.msra.mxu0 0.0
    %392 = vmatprep.subr.mxu0 0.0
    %393 = vmatpush1.msra.mxu0 0.0
    %394 = vmatprep.subr.mxu0 0.0
    %395 = vmatpush1.msra.mxu0 0.0
    %396 = vmatprep.subr.mxu0 0.0
    %397 = vmatpush1.msra.mxu0 0.0
    %398 = vmatprep.subr.mxu0 %v363
    %399 = vmatpush1.msra.mxu0 %v362
    %400 = vmatprep.subr.mxu0 %v347
    %401 = vmatpush1.msra.mxu0 %v346
    %402 = vmatprep.subr.mxu0 %v331
    %403 = vmatpush1.msra.mxu0 %v330
    %404 = vmatprep.subr.mxu0 %v315
    %405 = vmatpush1.msra.mxu0 %v314
    %406 = vmatprep.subr.mxu0 %v299
    %407 = vmatpush1.msra.mxu0 %v298
    %408 = vmatprep.subr.mxu0 %v283
    %409 = vmatpush1.msra.mxu0 %v282
    %410 = vmatprep.subr.mxu0 %v267
    %411 = vmatpush1.msra.mxu0 %v266
    %412 = vmatprep.subr.mxu0 %v251
    %413 = vmatpush1.msra.mxu0 %v250
    %414 = vmatprep.subr.mxu0 0.0
    %415 = vmatpush2.msra.mxu0 0.0
    %416 = vmatprep.subr.mxu0 0.0
    %417 = vmatpush2.msra.mxu0 0.0
    %418 = vmatprep.subr.mxu0 0.0
    %419 = vmatpush2.msra.mxu0 0.0
    %420 = vmatprep.subr.mxu0 0.0
    %421 = vmatpush2.msra.mxu0 0.0
    %422 = vmatprep.subr.mxu0 0.0
    %423 = vmatpush2.msra.mxu0 0.0
    %424 = vmatprep.subr.mxu0 0.0
    %425 = vmatpush2.msra.mxu0 0.0
    %426 = vmatprep.subr.mxu0 0.0
    %427 = vmatpush2.msra.mxu0 0.0
    %428 = vmatprep.subr.mxu0 0.0
    %429 = vmatpush2.msra.mxu0 0.0
    %430 = vmatprep.subr.mxu0 0.0
    %431 = vmatpush2.msra.mxu0 0.0
    %432 = vmatprep.subr.mxu0 0.0
    %433 = vmatpush2.msra.mxu0 0.0
    %434 = vmatprep.subr.mxu0 0.0
    %435 = vmatpush2.msra.mxu0 0.0
    %436 = vmatprep.subr.mxu0 0.0
    %437 = vmatpush2.msra.mxu0 0.0
    %438 = vmatprep.subr.mxu0 0.0
    %439 = vmatpush2.msra.mxu0 0.0
    %440 = vmatprep.subr.mxu0 0.0
    %441 = vmatpush2.msra.mxu0 0.0
    %442 = vmatprep.subr.mxu0 0.0
    %443 = vmatpush2.msra.mxu0 0.0
    %444 = vmatprep.subr.mxu0 0.0
    %445 = vmatpush2.msra.mxu0 0.0
    %446 = vmatprep.mubr.f32.mxu0 0.0
    %447 = vmatmul.mubr.f32.gmra.mxu0 %v380
    %v448 = vpop.f32.mrf.mxu0
    %v449 = vadd.f32 0.0, %v448
    %v450 = vpop.f32.mrf.mxu0
    %v451 = vadd.f32 0.0, %v450
    %452 = vdwg.mxu0
    %453 = vmatprep.subr.mxu0 0.0
    %454 = vmatpush1.msra.mxu0 0.0
    %455 = vmatprep.subr.mxu0 0.0
    %456 = vmatpush1.msra.mxu0 0.0
    %457 = vmatprep.subr.mxu0 0.0
    %458 = vmatpush1.msra.mxu0 0.0
    %459 = vmatprep.subr.mxu0 0.0
    %460 = vmatpush1.msra.mxu0 0.0
    %461 = vmatprep.subr.mxu0 0.0
    %462 = vmatpush1.msra.mxu0 0.0
    %463 = vmatprep.subr.mxu0 0.0
    %464 = vmatpush1.msra.mxu0 0.0
    %465 = vmatprep.subr.mxu0 0.0
    %466 = vmatpush1.msra.mxu0 0.0
    %467 = vmatprep.subr.mxu0 0.0
    %468 = vmatpush1.msra.mxu0 0.0
    %469 = vmatprep.subr.mxu0 %v365
    %470 = vmatpush1.msra.mxu0 %v364
    %471 = vmatprep.subr.mxu0 %v349
    %472 = vmatpush1.msra.mxu0 %v348
    %473 = vmatprep.subr.mxu0 %v333
    %474 = vmatpush1.msra.mxu0 %v332
    %475 = vmatprep.subr.mxu0 %v317
    %476 = vmatpush1.msra.mxu0 %v316
    %477 = vmatprep.subr.mxu0 %v301
    %478 = vmatpush1.msra.mxu0 %v300
    %479 = vmatprep.subr.mxu0 %v285
    %480 = vmatpush1.msra.mxu0 %v284
    %481 = vmatprep.subr.mxu0 %v269
    %482 = vmatpush1.msra.mxu0 %v268
    %483 = vmatprep.subr.mxu0 %v253
    %484 = vmatpush1.msra.mxu0 %v252
    %485 = vmatprep.subr.mxu0 0.0
    %486 = vmatpush2.msra.mxu0 0.0
    %487 = vmatprep.subr.mxu0 0.0
    %488 = vmatpush2.msra.mxu0 0.0
    %489 = vmatprep.subr.mxu0 0.0
    %490 = vmatpush2.msra.mxu0 0.0
    %491 = vmatprep.subr.mxu0 0.0
    %492 = vmatpush2.msra.mxu0 0.0
    %493 = vmatprep.subr.mxu0 0.0
    %494 = vmatpush2.msra.mxu0 0.0
    %495 = vmatprep.subr.mxu0 0.0
    %496 = vmatpush2.msra.mxu0 0.0
    %497 = vmatprep.subr.mxu0 0.0
    %498 = vmatpush2.msra.mxu0 0.0
    %499 = vmatprep.subr.mxu0 0.0
    %500 = vmatpush2.msra.mxu0 0.0
    %501 = vmatprep.subr.mxu0 0.0
    %502 = vmatpush2.msra.mxu0 0.0
    %503 = vmatprep.subr.mxu0 0.0
    %504 = vmatpush2.msra.mxu0 0.0
    %505 = vmatprep.subr.mxu0 0.0
    %506 = vmatpush2.msra.mxu0 0.0
    %507 = vmatprep.subr.mxu0 0.0
    %508 = vmatpush2.msra.mxu0 0.0
    %509 = vmatprep.subr.mxu0 0.0
    %510 = vmatpush2.msra.mxu0 0.0
    %511 = vmatprep.subr.mxu0 0.0
    %512 = vmatpush2.msra.mxu0 0.0
    %513 = vmatprep.subr.mxu0 0.0
    %514 = vmatpush2.msra.mxu0 0.0
    %515 = vmatprep.subr.mxu0 0.0
    %516 = vmatpush2.msra.mxu0 0.0
    %517 = vmatprep.mubr.f32.mxu0 0.0
    %518 = vmatmul.mubr.f32.gmra.mxu0 %v380
    %v519 = vpop.f32.mrf.mxu0
    %v520 = vadd.f32 0.0, %v519
    %v521 = vpop.f32.mrf.mxu0
    %v522 = vadd.f32 0.0, %v521
    %523 = vdwg.mxu0
    %524 = vmatprep.subr.mxu0 0.0
    %525 = vmatpush1.msra.mxu0 0.0
    %526 = vmatprep.subr.mxu0 0.0
    %527 = vmatpush1.msra.mxu0 0.0
    %528 = vmatprep.subr.mxu0 0.0
    %529 = vmatpush1.msra.mxu0 0.0
    %530 = vmatprep.subr.mxu0 0.0
    %531 = vmatpush1.msra.mxu0 0.0
    %532 = vmatprep.subr.mxu0 0.0
    %533 = vmatpush1.msra.mxu0 0.0
    %534 = vmatprep.subr.mxu0 0.0
    %535 = vmatpush1.msra.mxu0 0.0
    %536 = vmatprep.subr.mxu0 0.0
    %537 = vmatpush1.msra.mxu0 0.0
    %538 = vmatprep.subr.mxu0 0.0
    %539 = vmatpush1.msra.mxu0 0.0
    %540 = vmatprep.subr.mxu0 %v367
    %541 = vmatpush1.msra.mxu0 %v366
    %542 = vmatprep.subr.mxu0 %v351
    %543 = vmatpush1.msra.mxu0 %v350
    %544 = vmatprep.subr.mxu0 %v335
    %545 = vmatpush1.msra.mxu0 %v334
    %546 = vmatprep.subr.mxu0 %v319
    %547 = vmatpush1.msra.mxu0 %v318
    %548 = vmatprep.subr.mxu0 %v303
    %549 = vmatpush1.msra.mxu0 %v302
    %550 = vmatprep.subr.mxu0 %v287
    %551 = vmatpush1.msra.mxu0 %v286
    %552 = vmatprep.subr.mxu0 %v271
    %553 = vmatpush1.msra.mxu0 %v270
    %554 = vmatprep.subr.mxu0 %v255
    %555 = vmatpush1.msra.mxu0 %v254
    %556 = vmatprep.subr.mxu0 0.0
    %557 = vmatpush2.msra.mxu0 0.0
    %558 = vmatprep.subr.mxu0 0.0
    %559 = vmatpush2.msra.mxu0 0.0
    %560 = vmatprep.subr.mxu0 0.0
    %561 = vmatpush2.msra.mxu0 0.0
    %562 = vmatprep.subr.mxu0 0.0
    %563 = vmatpush2.msra.mxu0 0.0
    %564 = vmatprep.subr.mxu0 0.0
    %565 = vmatpush2.msra.mxu0 0.0
    %566 = vmatprep.subr.mxu0 0.0
    %567 = vmatpush2.msra.mxu0 0.0
    %568 = vmatprep.subr.mxu0 0.0
    %569 = vmatpush2.msra.mxu0 0.0
    %570 = vmatprep.subr.mxu0 0.0
    %571 = vmatpush2.msra.mxu0 0.0
    %572 = vmatprep.subr.mxu0 0.0
    %573 = vmatpush2.msra.mxu0 0.0
    %574 = vmatprep.subr.mxu0 0.0
    %575 = vmatpush2.msra.mxu0 0.0
    %576 = vmatprep.subr.mxu0 0.0
    %577 = vmatpush2.msra.mxu0 0.0
    %578 = vmatprep.subr.mxu0 0.0
    %579 = vmatpush2.msra.mxu0 0.0
    %580 = vmatprep.subr.mxu0 0.0
    %581 = vmatpush2.msra.mxu0 0.0
    %582 = vmatprep.subr.mxu0 0.0
    %583 = vmatpush2.msra.mxu0 0.0
    %584 = vmatprep.subr.mxu0 0.0
    %585 = vmatpush2.msra.mxu0 0.0
    %586 = vmatprep.subr.mxu0 0.0
    %587 = vmatpush2.msra.mxu0 0.0
    %588 = vmatprep.mubr.f32.mxu0 0.0
    %589 = vmatmul.mubr.f32.gmra.mxu0 %v380
    %v590 = vpop.f32.mrf.mxu0
    %v591 = vadd.f32 0.0, %v590
    %v592 = vpop.f32.mrf.mxu0
    %v593 = vadd.f32 0.0, %v592
    %594 = vdwg.mxu0
    %595 = vmatprep.subr.mxu0 0.0
    %596 = vmatpush1.msra.mxu0 0.0
    %597 = vmatprep.subr.mxu0 0.0
    %598 = vmatpush1.msra.mxu0 0.0
    %599 = vmatprep.subr.mxu0 0.0
    %600 = vmatpush1.msra.mxu0 0.0
    %601 = vmatprep.subr.mxu0 0.0
    %602 = vmatpush1.msra.mxu0 0.0
    %603 = vmatprep.subr.mxu0 0.0
    %604 = vmatpush1.msra.mxu0 0.0
    %605 = vmatprep.subr.mxu0 0.0
    %606 = vmatpush1.msra.mxu0 0.0
    %607 = vmatprep.subr.mxu0 0.0
    %608 = vmatpush1.msra.mxu0 0.0
    %609 = vmatprep.subr.mxu0 0.0
    %610 = vmatpush1.msra.mxu0 0.0
    %611 = vmatprep.subr.mxu0 %v369
    %612 = vmatpush1.msra.mxu0 %v368
    %613 = vmatprep.subr.mxu0 %v353
    %614 = vmatpush1.msra.mxu0 %v352
    %615 = vmatprep.subr.mxu0 %v337
    %616 = vmatpush1.msra.mxu0 %v336
    %617 = vmatprep.subr.mxu0 %v321
    %618 = vmatpush1.msra.mxu0 %v320
    %619 = vmatprep.subr.mxu0 %v305
    %620 = vmatpush1.msra.mxu0 %v304
    %621 = vmatprep.subr.mxu0 %v289
    %622 = vmatpush1.msra.mxu0 %v288
    %623 = vmatprep.subr.mxu0 %v273
    %624 = vmatpush1.msra.mxu0 %v272
    %625 = vmatprep.subr.mxu0 %v257
    %626 = vmatpush1.msra.mxu0 %v256
    %627 = vmatprep.subr.mxu0 0.0
    %628 = vmatpush2.msra.mxu0 0.0
    %629 = vmatprep.subr.mxu0 0.0
    %630 = vmatpush2.msra.mxu0 0.0
    %631 = vmatprep.subr.mxu0 0.0
    %632 = vmatpush2.msra.mxu0 0.0
    %633 = vmatprep.subr.mxu0 0.0
    %634 = vmatpush2.msra.mxu0 0.0
    %635 = vmatprep.subr.mxu0 0.0
    %636 = vmatpush2.msra.mxu0 0.0
    %637 = vmatprep.subr.mxu0 0.0
    %638 = vmatpush2.msra.mxu0 0.0
    %639 = vmatprep.subr.mxu0 0.0
    %640 = vmatpush2.msra.mxu0 0.0
    %641 = vmatprep.subr.mxu0 0.0
    %642 = vmatpush2.msra.mxu0 0.0
    %643 = vmatprep.subr.mxu0 0.0
    %644 = vmatpush2.msra.mxu0 0.0
    %645 = vmatprep.subr.mxu0 0.0
    %646 = vmatpush2.msra.mxu0 0.0
    %647 = vmatprep.subr.mxu0 0.0
    %648 = vmatpush2.msra.mxu0 0.0
    %649 = vmatprep.subr.mxu0 0.0
    %650 = vmatpush2.msra.mxu0 0.0
    %651 = vmatprep.subr.mxu0 0.0
    %652 = vmatpush2.msra.mxu0 0.0
    %653 = vmatprep.subr.mxu0 0.0
    %654 = vmatpush2.msra.mxu0 0.0
    %655 = vmatprep.subr.mxu0 0.0
    %656 = vmatpush2.msra.mxu0 0.0
    %657 = vmatprep.subr.mxu0 0.0
    %658 = vmatpush2.msra.mxu0 0.0
    %659 = vmatprep.mubr.f32.mxu0 0.0
    %660 = vmatmul.mubr.f32.gmra.mxu0 %v380
    %v661 = vpop.f32.mrf.mxu0
    %v662 = vadd.f32 0.0, %v661
    %v663 = vpop.f32.mrf.mxu0
    %v664 = vadd.f32 0.0, %v663
    %665 = vdwg.mxu0
    %666 = vmatprep.subr.mxu0 0.0
    %667 = vmatpush1.msra.mxu0 0.0
    %668 = vmatprep.subr.mxu0 0.0
    %669 = vmatpush1.msra.mxu0 0.0
    %670 = vmatprep.subr.mxu0 0.0
    %671 = vmatpush1.msra.mxu0 0.0
    %672 = vmatprep.subr.mxu0 0.0
    %673 = vmatpush1.msra.mxu0 0.0
    %674 = vmatprep.subr.mxu0 0.0
    %675 = vmatpush1.msra.mxu0 0.0
    %676 = vmatprep.subr.mxu0 0.0
    %677 = vmatpush1.msra.mxu0 0.0
    %678 = vmatprep.subr.mxu0 0.0
    %679 = vmatpush1.msra.mxu0 0.0
    %680 = vmatprep.subr.mxu0 0.0
    %681 = vmatpush1.msra.mxu0 0.0
    %682 = vmatprep.subr.mxu0 %v371
    %683 = vmatpush1.msra.mxu0 %v370
    %684 = vmatprep.subr.mxu0 %v355
    %685 = vmatpush1.msra.mxu0 %v354
    %686 = vmatprep.subr.mxu0 %v339
    %687 = vmatpush1.msra.mxu0 %v338
    %688 = vmatprep.subr.mxu0 %v323
    %689 = vmatpush1.msra.mxu0 %v322
    %690 = vmatprep.subr.mxu0 %v307
    %691 = vmatpush1.msra.mxu0 %v306
    %692 = vmatprep.subr.mxu0 %v291
    %693 = vmatpush1.msra.mxu0 %v290
    %694 = vmatprep.subr.mxu0 %v275
    %695 = vmatpush1.msra.mxu0 %v274
    %696 = vmatprep.subr.mxu0 %v259
    %697 = vmatpush1.msra.mxu0 %v258
    %698 = vmatprep.subr.mxu0 0.0
    %699 = vmatpush2.msra.mxu0 0.0
    %700 = vmatprep.subr.mxu0 0.0
    %701 = vmatpush2.msra.mxu0 0.0
    %702 = vmatprep.subr.mxu0 0.0
    %703 = vmatpush2.msra.mxu0 0.0
    %704 = vmatprep.subr.mxu0 0.0
    %705 = vmatpush2.msra.mxu0 0.0
    %706 = vmatprep.subr.mxu0 0.0
    %707 = vmatpush2.msra.mxu0 0.0
    %708 = vmatprep.subr.mxu0 0.0
    %709 = vmatpush2.msra.mxu0 0.0
    %710 = vmatprep.subr.mxu0 0.0
    %711 = vmatpush2.msra.mxu0 0.0
    %712 = vmatprep.subr.mxu0 0.0
    %713 = vmatpush2.msra.mxu0 0.0
    %714 = vmatprep.subr.mxu0 0.0
    %715 = vmatpush2.msra.mxu0 0.0
    %716 = vmatprep.subr.mxu0 0.0
    %717 = vmatpush2.msra.mxu0 0.0
    %718 = vmatprep.subr.mxu0 0.0
    %719 = vmatpush2.msra.mxu0 0.0
    %720 = vmatprep.subr.mxu0 0.0
    %721 = vmatpush2.msra.mxu0 0.0
    %722 = vmatprep.subr.mxu0 0.0
    %723 = vmatpush2.msra.mxu0 0.0
    %724 = vmatprep.subr.mxu0 0.0
    %725 = vmatpush2.msra.mxu0 0.0
    %726 = vmatprep.subr.mxu0 0.0
    %727 = vmatpush2.msra.mxu0 0.0
    %728 = vmatprep.subr.mxu0 0.0
    %729 = vmatpush2.msra.mxu0 0.0
    %730 = vmatprep.mubr.f32.mxu0 0.0
    %731 = vmatmul.mubr.f32.gmra.mxu0 %v380
    %v732 = vpop.f32.mrf.mxu0
    %v733 = vadd.f32 0.0, %v732
    %v734 = vpop.f32.mrf.mxu0
    %v735 = vadd.f32 0.0, %v734
    %736 = vdwg.mxu0
    %737 = vmatprep.subr.mxu0 0.0
    %738 = vmatpush1.msra.mxu0 0.0
    %739 = vmatprep.subr.mxu0 0.0
    %740 = vmatpush1.msra.mxu0 0.0
    %741 = vmatprep.subr.mxu0 0.0
    %742 = vmatpush1.msra.mxu0 0.0
    %743 = vmatprep.subr.mxu0 0.0
    %744 = vmatpush1.msra.mxu0 0.0
    %745 = vmatprep.subr.mxu0 0.0
    %746 = vmatpush1.msra.mxu0 0.0
    %747 = vmatprep.subr.mxu0 0.0
    %748 = vmatpush1.msra.mxu0 0.0
    %749 = vmatprep.subr.mxu0 0.0
    %750 = vmatpush1.msra.mxu0 0.0
    %751 = vmatprep.subr.mxu0 0.0
    %752 = vmatpush1.msra.mxu0 0.0
    %753 = vmatprep.subr.mxu0 %v373
    %754 = vmatpush1.msra.mxu0 %v372
    %755 = vmatprep.subr.mxu0 %v357
    %756 = vmatpush1.msra.mxu0 %v356
    %757 = vmatprep.subr.mxu0 %v341
    %758 = vmatpush1.msra.mxu0 %v340
    %759 = vmatprep.subr.mxu0 %v325
    %760 = vmatpush1.msra.mxu0 %v324
    %761 = vmatprep.subr.mxu0 %v309
    %762 = vmatpush1.msra.mxu0 %v308
    %763 = vmatprep.subr.mxu0 %v293
    %764 = vmatpush1.msra.mxu0 %v292
    %765 = vmatprep.subr.mxu0 %v277
    %766 = vmatpush1.msra.mxu0 %v276
    %767 = vmatprep.subr.mxu0 %v261
    %768 = vmatpush1.msra.mxu0 %v260
    %769 = vmatprep.subr.mxu0 0.0
    %770 = vmatpush2.msra.mxu0 0.0
    %771 = vmatprep.subr.mxu0 0.0
    %772 = vmatpush2.msra.mxu0 0.0
    %773 = vmatprep.subr.mxu0 0.0
    %774 = vmatpush2.msra.mxu0 0.0
    %775 = vmatprep.subr.mxu0 0.0
    %776 = vmatpush2.msra.mxu0 0.0
    %777 = vmatprep.subr.mxu0 0.0
    %778 = vmatpush2.msra.mxu0 0.0
    %779 = vmatprep.subr.mxu0 0.0
    %780 = vmatpush2.msra.mxu0 0.0
    %781 = vmatprep.subr.mxu0 0.0
    %782 = vmatpush2.msra.mxu0 0.0
    %783 = vmatprep.subr.mxu0 0.0
    %784 = vmatpush2.msra.mxu0 0.0
    %785 = vmatprep.subr.mxu0 0.0
    %786 = vmatpush2.msra.mxu0 0.0
    %787 = vmatprep.subr.mxu0 0.0
    %788 = vmatpush2.msra.mxu0 0.0
    %789 = vmatprep.subr.mxu0 0.0
    %790 = vmatpush2.msra.mxu0 0.0
    %791 = vmatprep.subr.mxu0 0.0
    %792 = vmatpush2.msra.mxu0 0.0
    %793 = vmatprep.subr.mxu0 0.0
    %794 = vmatpush2.msra.mxu0 0.0
    %795 = vmatprep.subr.mxu0 0.0
    %796 = vmatpush2.msra.mxu0 0.0
    %797 = vmatprep.subr.mxu0 0.0
    %798 = vmatpush2.msra.mxu0 0.0
    %799 = vmatprep.subr.mxu0 0.0
    %800 = vmatpush2.msra.mxu0 0.0
    %801 = vmatprep.mubr.f32.mxu0 0.0
    %802 = vmatmul.mubr.f32.gmra.mxu0 %v380
    %v803 = vpop.f32.mrf.mxu0
    %v804 = vadd.f32 0.0, %v803
    %v805 = vpop.f32.mrf.mxu0
    %v806 = vadd.f32 0.0, %v805
    %807 = vdwg.mxu0
    %808 = vmatprep.subr.mxu0 0.0
    %809 = vmatpush1.msra.mxu0 0.0
    %810 = vmatprep.subr.mxu0 0.0
    %811 = vmatpush1.msra.mxu0 0.0
    %812 = vmatprep.subr.mxu0 0.0
    %813 = vmatpush1.msra.mxu0 0.0
    %814 = vmatprep.subr.mxu0 0.0
    %815 = vmatpush1.msra.mxu0 0.0
    %816 = vmatprep.subr.mxu0 0.0
    %817 = vmatpush1.msra.mxu0 0.0
    %818 = vmatprep.subr.mxu0 0.0
    %819 = vmatpush1.msra.mxu0 0.0
    %820 = vmatprep.subr.mxu0 0.0
    %821 = vmatpush1.msra.mxu0 0.0
    %822 = vmatprep.subr.mxu0 0.0
    %823 = vmatpush1.msra.mxu0 0.0
    %824 = vmatprep.subr.mxu0 %v375
    %825 = vmatpush1.msra.mxu0 %v374
    %826 = vmatprep.subr.mxu0 %v359
    %827 = vmatpush1.msra.mxu0 %v358
    %828 = vmatprep.subr.mxu0 %v343
    %829 = vmatpush1.msra.mxu0 %v342
    %830 = vmatprep.subr.mxu0 %v327
    %831 = vmatpush1.msra.mxu0 %v326
    %832 = vmatprep.subr.mxu0 %v311
    %833 = vmatpush1.msra.mxu0 %v310
    %834 = vmatprep.subr.mxu0 %v295
    %835 = vmatpush1.msra.mxu0 %v294
    %836 = vmatprep.subr.mxu0 %v279
    %837 = vmatpush1.msra.mxu0 %v278
    %838 = vmatprep.subr.mxu0 %v263
    %839 = vmatpush1.msra.mxu0 %v262
    %840 = vmatprep.subr.mxu0 0.0
    %841 = vmatpush2.msra.mxu0 0.0
    %842 = vmatprep.subr.mxu0 0.0
    %843 = vmatpush2.msra.mxu0 0.0
    %844 = vmatprep.subr.mxu0 0.0
    %845 = vmatpush2.msra.mxu0 0.0
    %846 = vmatprep.subr.mxu0 0.0
    %847 = vmatpush2.msra.mxu0 0.0
    %848 = vmatprep.subr.mxu0 0.0
    %849 = vmatpush2.msra.mxu0 0.0
    %850 = vmatprep.subr.mxu0 0.0
    %851 = vmatpush2.msra.mxu0 0.0
    %852 = vmatprep.subr.mxu0 0.0
    %853 = vmatpush2.msra.mxu0 0.0
    %854 = vmatprep.subr.mxu0 0.0
    %855 = vmatpush2.msra.mxu0 0.0
    %856 = vmatprep.subr.mxu0 0.0
    %857 = vmatpush2.msra.mxu0 0.0
    %858 = vmatprep.subr.mxu0 0.0
    %859 = vmatpush2.msra.mxu0 0.0
    %860 = vmatprep.subr.mxu0 0.0
    %861 = vmatpush2.msra.mxu0 0.0
    %862 = vmatprep.subr.mxu0 0.0
    %863 = vmatpush2.msra.mxu0 0.0
    %864 = vmatprep.subr.mxu0 0.0
    %865 = vmatpush2.msra.mxu0 0.0
    %866 = vmatprep.subr.mxu0 0.0
    %867 = vmatpush2.msra.mxu0 0.0
    %868 = vmatprep.subr.mxu0 0.0
    %869 = vmatpush2.msra.mxu0 0.0
    %870 = vmatprep.subr.mxu0 0.0
    %871 = vmatpush2.msra.mxu0 0.0
    %872 = vmatprep.mubr.f32.mxu0 0.0
    %873 = vmatmul.mubr.f32.gmra.mxu0 %v380
    %v874 = vpop.f32.mrf.mxu0
    %v875 = vadd.f32 0.0, %v874
    %v876 = vpop.f32.mrf.mxu0
    %v877 = vadd.f32 0.0, %v876
    %878 = vdwg.mxu0
    %879 = vmatprep.subr.mxu0 0.0
    %880 = vmatpush1.msra.mxu0 0.0
    %881 = vmatprep.subr.mxu0 0.0
    %882 = vmatpush1.msra.mxu0 0.0
    %883 = vmatprep.subr.mxu0 0.0
    %884 = vmatpush1.msra.mxu0 0.0
    %885 = vmatprep.subr.mxu0 0.0
    %886 = vmatpush1.msra.mxu0 0.0
    %887 = vmatprep.subr.mxu0 0.0
    %888 = vmatpush1.msra.mxu0 0.0
    %889 = vmatprep.subr.mxu0 0.0
    %890 = vmatpush1.msra.mxu0 0.0
    %891 = vmatprep.subr.mxu0 0.0
    %892 = vmatpush1.msra.mxu0 0.0
    %893 = vmatprep.subr.mxu0 0.0
    %894 = vmatpush1.msra.mxu0 0.0
    %895 = vmatprep.subr.mxu0 %v377
    %896 = vmatpush1.msra.mxu0 %v376
    %897 = vmatprep.subr.mxu0 %v361
    %898 = vmatpush1.msra.mxu0 %v360
    %899 = vmatprep.subr.mxu0 %v345
    %900 = vmatpush1.msra.mxu0 %v344
    %901 = vmatprep.subr.mxu0 %v329
    %902 = vmatpush1.msra.mxu0 %v328
    %903 = vmatprep.subr.mxu0 %v313
    %904 = vmatpush1.msra.mxu0 %v312
    %905 = vmatprep.subr.mxu0 %v297
    %906 = vmatpush1.msra.mxu0 %v296
    %907 = vmatprep.subr.mxu0 %v281
    %908 = vmatpush1.msra.mxu0 %v280
    %909 = vmatprep.subr.mxu0 %v265
    %910 = vmatpush1.msra.mxu0 %v264
    %911 = vmatprep.subr.mxu0 0.0
    %912 = vmatpush2.msra.mxu0 0.0
    %913 = vmatprep.subr.mxu0 0.0
    %914 = vmatpush2.msra.mxu0 0.0
    %915 = vmatprep.subr.mxu0 0.0
    %916 = vmatpush2.msra.mxu0 0.0
    %917 = vmatprep.subr.mxu0 0.0
    %918 = vmatpush2.msra.mxu0 0.0
    %919 = vmatprep.subr.mxu0 0.0
    %920 = vmatpush2.msra.mxu0 0.0
    %921 = vmatprep.subr.mxu0 0.0
    %922 = vmatpush2.msra.mxu0 0.0
    %923 = vmatprep.subr.mxu0 0.0
    %924 = vmatpush2.msra.mxu0 0.0
    %925 = vmatprep.subr.mxu0 0.0
    %926 = vmatpush2.msra.mxu0 0.0
    %927 = vmatprep.subr.mxu0 0.0
    %928 = vmatpush2.msra.mxu0 0.0
    %929 = vmatprep.subr.mxu0 0.0
    %930 = vmatpush2.msra.mxu0 0.0
    %931 = vmatprep.subr.mxu0 0.0
    %932 = vmatpush2.msra.mxu0 0.0
    %933 = vmatprep.subr.mxu0 0.0
    %934 = vmatpush2.msra.mxu0 0.0
    %935 = vmatprep.subr.mxu0 0.0
    %936 = vmatpush2.msra.mxu0 0.0
    %937 = vmatprep.subr.mxu0 0.0
    %938 = vmatpush2.msra.mxu0 0.0
    %939 = vmatprep.subr.mxu0 0.0
    %940 = vmatpush2.msra.mxu0 0.0
    %941 = vmatprep.subr.mxu0 0.0
    %942 = vmatpush2.msra.mxu0 0.0
    %943 = vmatprep.mubr.f32.mxu0 0.0
    %944 = vmatmul.mubr.f32.gmra.mxu0 %v380
    %v945 = vpop.f32.mrf.mxu0
    %v946 = vadd.f32 0.0, %v945
    %v947 = vpop.f32.mrf.mxu0
    %v948 = vadd.f32 0.0, %v947
    %949 = vdwg.mxu0
    %950 = vst [vmem:[#allocation2] sm:$0xff] 0.0
    %951 = vst [vmem:[#allocation2 + $0x8] sm:$0xff] 0.0
    %952 = vst [vmem:[#allocation2 + $0x10] sm:$0xff] 0.0
    %953 = vst [vmem:[#allocation2 + $0x18] sm:$0xff] 0.0
    %954 = vst [vmem:[#allocation2 + $0x20] sm:$0xf] 0.0
    %v955 = vld [vmem:[%s5] sm:$0x3]
    %vm956 = vcmask 1041408
    %v957 = vsel %vm956, %v449, 0.0
    %v958 = vsel %vm956, %v451, 0.0
    %v959 = vadd.f32 %v957, %v958
    %960 = vadd.xlane.f32.xlu0 %v959
    %v961 = vpop.xlane.xlu0 %960
    %v962 = vrot.slane %v961, 4
    %v963 = vadd.f32 %v961, %v962
    %v964 = vrot.slane %v963, 2
    %v965 = vadd.f32 %v963, %v964
    %v966 = vrot.slane %v965, 1
    %v967 = vadd.f32 %v965, %v966
    %s968 = vtos %v967
    %s969 = smul.f32 %s968, 0.0078125
    %v970 = vmul.f32 %v449, %v449
    %v971 = vmul.f32 %v451, %v451
    %v972 = vsel %vm956, %v970, 0.0
    %v973 = vsel %vm956, %v971, 0.0
    %v974 = vadd.f32 %v972, %v973
    %975 = vadd.xlane.f32.xlu0 %v974
    %v976 = vpop.xlane.xlu0 %975
    %v977 = vrot.slane %v976, 4
    %v978 = vadd.f32 %v976, %v977
    %v979 = vrot.slane %v978, 2
    %v980 = vadd.f32 %v978, %v979
    %v981 = vrot.slane %v980, 1
    %v982 = vadd.f32 %v980, %v981
    %s983 = vtos %v982
    %s984 = smul.f32 %s983, 0.0078125
    %s985 = smul.f32 %s969, %s969
    %s986 = ssub.f32 %s984, %s985
    %s987 = sld [smem:[#allocation11]]
    %s988 = sadd.f32 %s986, 1e-05
    %v989 = vstv %s988
    %v990 = vrsqrt.pop %v989
    %s991 = vtos %v990
    %s992 = smul.f32 %s987, %s991
    %v993 = vstv %s969
    %v994 = vsub.f32 %v449, %v993
    %v995 = vsub.f32 %v451, %v993
    %v996 = vstv %s992
    %v997 = vmul.f32 %v994, %v996
    %v998 = vmul.f32 %v995, %v996
    %s999 = sld [smem:[#allocation12]]
    %v1000 = vstv %s999
    %v1001 = vadd.f32 %v997, %v1000
    %v1002 = vadd.f32 %v998, %v1000
    %v1003 = vmax.f32 %v1001, 0.0
    %v1004 = vmax.f32 %v1002, 0.0
    %v1006 = vlaneseq
    %v1007 = vshrl.u32 %v1006, 7
    %v1008 = vsub.s32 0, %v1007
    %v1009 = vrot.slane %v955, %v1008
    %v1010 = vlaneseq
    %v1011 = vshrl.u32 %v1010, 7
    %v1012 = vsub.s32 1, %v1011
    %v1013 = vrot.slane %v955, %v1012
    %v1016 = vmul.f32 %v1003, %v1009
    %v1017 = vmul.f32 %v1004, %v1013
    %v1020 = vcombine.low %v1016, %v1017
    %v1022 = vunpack.c.l.s4 1983009808
    %v1023 = vunpack.c.0.s8 %v1022
    %v1024 = vlaneseq
    %v1025 = vshrl.u32 %v1024, 7
    %v1026 = vsub.s32 %v1023, %v1025
    %v1027 = vrot.slane %v1020, %v1026
    %1029 = vst [vmem:[#allocation2 + $0x2] sm:$0xf] %v1027
    %v1030 = vsel %vm956, %v520, 0.0
    %v1031 = vsel %vm956, %v522, 0.0
    %v1032 = vadd.f32 %v1030, %v1031
    %1033 = vadd.xlane.f32.xlu0 %v1032
    %v1034 = vpop.xlane.xlu0 %1033
    %v1035 = vrot.slane %v1034, 4
    %v1036 = vadd.f32 %v1034, %v1035
    %v1037 = vrot.slane %v1036, 2
    %v1038 = vadd.f32 %v1036, %v1037
    %v1039 = vrot.slane %v1038, 1
    %v1040 = vadd.f32 %v1038, %v1039
    %s1041 = vtos %v1040
    %s1042 = smul.f32 %s1041, 0.0078125
    %v1043 = vmul.f32 %v520, %v520
    %v1044 = vmul.f32 %v522, %v522
    %v1045 = vsel %vm956, %v1043, 0.0
    %v1046 = vsel %vm956, %v1044, 0.0
    %v1047 = vadd.f32 %v1045, %v1046
    %1048 = vadd.xlane.f32.xlu0 %v1047
    %v1049 = vpop.xlane.xlu0 %1048
    %v1050 = vrot.slane %v1049, 4
    %v1051 = vadd.f32 %v1049, %v1050
    %v1052 = vrot.slane %v1051, 2
    %v1053 = vadd.f32 %v1051, %v1052
    %v1054 = vrot.slane %v1053, 1
    %v1055 = vadd.f32 %v1053, %v1054
    %s1056 = vtos %v1055
    %s1057 = smul.f32 %s1056, 0.0078125
    %s1058 = smul.f32 %s1042, %s1042
    %s1059 = ssub.f32 %s1057, %s1058
    %s1060 = sld [smem:[#allocation11 + $0x1]]
    %s1061 = sadd.f32 %s1059, 1e-05
    %v1062 = vstv %s1061
    %v1063 = vrsqrt.pop %v1062
    %s1064 = vtos %v1063
    %s1065 = smul.f32 %s1060, %s1064
    %v1066 = vstv %s1042
    %v1067 = vsub.f32 %v520, %v1066
    %v1068 = vsub.f32 %v522, %v1066
    %v1069 = vstv %s1065
    %v1070 = vmul.f32 %v1067, %v1069
    %v1071 = vmul.f32 %v1068, %v1069
    %s1072 = sld [smem:[#allocation12 + $0x1]]
    %v1073 = vstv %s1072
    %v1074 = vadd.f32 %v1070, %v1073
    %v1075 = vadd.f32 %v1071, %v1073
    %v1076 = vmax.f32 %v1074, 0.0
    %v1077 = vmax.f32 %v1075, 0.0
    %v1078 = vmul.f32 %v1076, %v1009
    %v1079 = vmul.f32 %v1077, %v1013
    %v1082 = vcombine.low %v1078, %v1079
    %v1084 = vunpack.c.l.s4 1983009808
    %v1085 = vunpack.c.0.s8 %v1084
    %v1086 = vlaneseq
    %v1087 = vshrl.u32 %v1086, 7
    %v1088 = vsub.s32 %v1085, %v1087
    %v1089 = vrot.slane %v1082, %v1088
    %1091 = vst [vmem:[#allocation2 + $0x6] sm:$0xf] %v1089
    %v1092 = vsel %vm956, %v591, 0.0
    %v1093 = vsel %vm956, %v593, 0.0
    %v1094 = vadd.f32 %v1092, %v1093
    %1095 = vadd.xlane.f32.xlu0 %v1094
    %v1096 = vpop.xlane.xlu0 %1095
    %v1097 = vrot.slane %v1096, 4
    %v1098 = vadd.f32 %v1096, %v1097
    %v1099 = vrot.slane %v1098, 2
    %v1100 = vadd.f32 %v1098, %v1099
    %v1101 = vrot.slane %v1100, 1
    %v1102 = vadd.f32 %v1100, %v1101
    %s1103 = vtos %v1102
    %s1104 = smul.f32 %s1103, 0.0078125
    %v1105 = vmul.f32 %v591, %v591
    %v1106 = vmul.f32 %v593, %v593
    %v1107 = vsel %vm956, %v1105, 0.0
    %v1108 = vsel %vm956, %v1106, 0.0
    %v1109 = vadd.f32 %v1107, %v1108
    %1110 = vadd.xlane.f32.xlu0 %v1109
    %v1111 = vpop.xlane.xlu0 %1110
    %v1112 = vrot.slane %v1111, 4
    %v1113 = vadd.f32 %v1111, %v1112
    %v1114 = vrot.slane %v1113, 2
    %v1115 = vadd.f32 %v1113, %v1114
    %v1116 = vrot.slane %v1115, 1
    %v1117 = vadd.f32 %v1115, %v1116
    %s1118 = vtos %v1117
    %s1119 = smul.f32 %s1118, 0.0078125
    %s1120 = smul.f32 %s1104, %s1104
    %s1121 = ssub.f32 %s1119, %s1120
    %s1122 = sld [smem:[#allocation11 + $0x2]]
    %s1123 = sadd.f32 %s1121, 1e-05
    %v1124 = vstv %s1123
    %v1125 = vrsqrt.pop %v1124
    %s1126 = vtos %v1125
    %s1127 = smul.f32 %s1122, %s1126
    %v1128 = vstv %s1104
    %v1129 = vsub.f32 %v591, %v1128
    %v1130 = vsub.f32 %v593, %v1128
    %v1131 = vstv %s1127
    %v1132 = vmul.f32 %v1129, %v1131
    %v1133 = vmul.f32 %v1130, %v1131
    %s1134 = sld [smem:[#allocation12 + $0x2]]
    %v1135 = vstv %s1134
    %v1136 = vadd.f32 %v1132, %v1135
    %v1137 = vadd.f32 %v1133, %v1135
    %v1138 = vmax.f32 %v1136, 0.0
    %v1139 = vmax.f32 %v1137, 0.0
    %v1140 = vmul.f32 %v1138, %v1009
    %v1141 = vmul.f32 %v1139, %v1013
    %v1144 = vcombine.low %v1140, %v1141
    %v1146 = vunpack.c.l.s4 1983009808
    %v1147 = vunpack.c.0.s8 %v1146
    %v1148 = vlaneseq
    %v1149 = vshrl.u32 %v1148, 7
    %v1150 = vsub.s32 %v1147, %v1149
    %v1151 = vrot.slane %v1144, %v1150
    %1153 = vst [vmem:[#allocation2 + $0xa] sm:$0xf] %v1151
    %v1154 = vsel %vm956, %v662, 0.0
    %v1155 = vsel %vm956, %v664, 0.0
    %v1156 = vadd.f32 %v1154, %v1155
    %1157 = vadd.xlane.f32.xlu0 %v1156
    %v1158 = vpop.xlane.xlu0 %1157
    %v1159 = vrot.slane %v1158, 4
    %v1160 = vadd.f32 %v1158, %v1159
    %v1161 = vrot.slane %v1160, 2
    %v1162 = vadd.f32 %v1160, %v1161
    %v1163 = vrot.slane %v1162, 1
    %v1164 = vadd.f32 %v1162, %v1163
    %s1165 = vtos %v1164
    %s1166 = smul.f32 %s1165, 0.0078125
    %v1167 = vmul.f32 %v662, %v662
    %v1168 = vmul.f32 %v664, %v664
    %v1169 = vsel %vm956, %v1167, 0.0
    %v1170 = vsel %vm956, %v1168, 0.0
    %v1171 = vadd.f32 %v1169, %v1170
    %1172 = vadd.xlane.f32.xlu0 %v1171
    %v1173 = vpop.xlane.xlu0 %1172
    %v1174 = vrot.slane %v1173, 4
    %v1175 = vadd.f32 %v1173, %v1174
    %v1176 = vrot.slane %v1175, 2
    %v1177 = vadd.f32 %v1175, %v1176
    %v1178 = vrot.slane %v1177, 1
    %v1179 = vadd.f32 %v1177, %v1178
    %s1180 = vtos %v1179
    %s1181 = smul.f32 %s1180, 0.0078125
    %s1182 = smul.f32 %s1166, %s1166
    %s1183 = ssub.f32 %s1181, %s1182
    %s1184 = sld [smem:[#allocation11 + $0x3]]
    %s1185 = sadd.f32 %s1183, 1e-05
    %v1186 = vstv %s1185
    %v1187 = vrsqrt.pop %v1186
    %s1188 = vtos %v1187
    %s1189 = smul.f32 %s1184, %s1188
    %v1190 = vstv %s1166
    %v1191 = vsub.f32 %v662, %v1190
    %v1192 = vsub.f32 %v664, %v1190
    %v1193 = vstv %s1189
    %v1194 = vmul.f32 %v1191, %v1193
    %v1195 = vmul.f32 %v1192, %v1193
    %s1196 = sld [smem:[#allocation12 + $0x3]]
    %v1197 = vstv %s1196
    %v1198 = vadd.f32 %v1194, %v1197
    %v1199 = vadd.f32 %v1195, %v1197
    %v1200 = vmax.f32 %v1198, 0.0
    %v1201 = vmax.f32 %v1199, 0.0
    %v1202 = vmul.f32 %v1200, %v1009
    %v1203 = vmul.f32 %v1201, %v1013
    %v1206 = vcombine.low %v1202, %v1203
    %v1208 = vunpack.c.l.s4 1983009808
    %v1209 = vunpack.c.0.s8 %v1208
    %v1210 = vlaneseq
    %v1211 = vshrl.u32 %v1210, 7
    %v1212 = vsub.s32 %v1209, %v1211
    %v1213 = vrot.slane %v1206, %v1212
    %1215 = vst [vmem:[#allocation2 + $0xe] sm:$0xf] %v1213
    %v1216 = vsel %vm956, %v733, 0.0
    %v1217 = vsel %vm956, %v735, 0.0
    %v1218 = vadd.f32 %v1216, %v1217
    %1219 = vadd.xlane.f32.xlu0 %v1218
    %v1220 = vpop.xlane.xlu0 %1219
    %v1221 = vrot.slane %v1220, 4
    %v1222 = vadd.f32 %v1220, %v1221
    %v1223 = vrot.slane %v1222, 2
    %v1224 = vadd.f32 %v1222, %v1223
    %v1225 = vrot.slane %v1224, 1
    %v1226 = vadd.f32 %v1224, %v1225
    %s1227 = vtos %v1226
    %s1228 = smul.f32 %s1227, 0.0078125
    %v1229 = vmul.f32 %v733, %v733
    %v1230 = vmul.f32 %v735, %v735
    %v1231 = vsel %vm956, %v1229, 0.0
    %v1232 = vsel %vm956, %v1230, 0.0
    %v1233 = vadd.f32 %v1231, %v1232
    %1234 = vadd.xlane.f32.xlu0 %v1233
    %v1235 = vpop.xlane.xlu0 %1234
    %v1236 = vrot.slane %v1235, 4
    %v1237 = vadd.f32 %v1235, %v1236
    %v1238 = vrot.slane %v1237, 2
    %v1239 = vadd.f32 %v1237, %v1238
    %v1240 = vrot.slane %v1239, 1
    %v1241 = vadd.f32 %v1239, %v1240
    %s1242 = vtos %v1241
    %s1243 = smul.f32 %s1242, 0.0078125
    %s1244 = smul.f32 %s1228, %s1228
    %s1245 = ssub.f32 %s1243, %s1244
    %s1246 = sld [smem:[#allocation11 + $0x4]]
    %s1247 = sadd.f32 %s1245, 1e-05
    %v1248 = vstv %s1247
    %v1249 = vrsqrt.pop %v1248
    %s1250 = vtos %v1249
    %s1251 = smul.f32 %s1246, %s1250
    %v1252 = vstv %s1228
    %v1253 = vsub.f32 %v733, %v1252
    %v1254 = vsub.f32 %v735, %v1252
    %v1255 = vstv %s1251
    %v1256 = vmul.f32 %v1253, %v1255
    %v1257 = vmul.f32 %v1254, %v1255
    %s1258 = sld [smem:[#allocation12 + $0x4]]
    %v1259 = vstv %s1258
    %v1260 = vadd.f32 %v1256, %v1259
    %v1261 = vadd.f32 %v1257, %v1259
    %v1262 = vmax.f32 %v1260, 0.0
    %v1263 = vmax.f32 %v1261, 0.0
    %v1264 = vmul.f32 %v1262, %v1009
    %v1265 = vmul.f32 %v1263, %v1013
    %v1268 = vcombine.low %v1264, %v1265
    %v1270 = vunpack.c.l.s4 1983009808
    %v1271 = vunpack.c.0.s8 %v1270
    %v1272 = vlaneseq
    %v1273 = vshrl.u32 %v1272, 7
    %v1274 = vsub.s32 %v1271, %v1273
    %v1275 = vrot.slane %v1268, %v1274
    %1277 = vst [vmem:[#allocation2 + $0x12] sm:$0xf] %v1275
    %v1278 = vsel %vm956, %v804, 0.0
    %v1279 = vsel %vm956, %v806, 0.0
    %v1280 = vadd.f32 %v1278, %v1279
    %1281 = vadd.xlane.f32.xlu0 %v1280
    %v1282 = vpop.xlane.xlu0 %1281
    %v1283 = vrot.slane %v1282, 4
    %v1284 = vadd.f32 %v1282, %v1283
    %v1285 = vrot.slane %v1284, 2
    %v1286 = vadd.f32 %v1284, %v1285
    %v1287 = vrot.slane %v1286, 1
    %v1288 = vadd.f32 %v1286, %v1287
    %s1289 = vtos %v1288
    %s1290 = smul.f32 %s1289, 0.0078125
    %v1291 = vmul.f32 %v804, %v804
    %v1292 = vmul.f32 %v806, %v806
    %v1293 = vsel %vm956, %v1291, 0.0
    %v1294 = vsel %vm956, %v1292, 0.0
    %v1295 = vadd.f32 %v1293, %v1294
    %1296 = vadd.xlane.f32.xlu0 %v1295
    %v1297 = vpop.xlane.xlu0 %1296
    %v1298 = vrot.slane %v1297, 4
    %v1299 = vadd.f32 %v1297, %v1298
    %v1300 = vrot.slane %v1299, 2
    %v1301 = vadd.f32 %v1299, %v1300
    %v1302 = vrot.slane %v1301, 1
    %v1303 = vadd.f32 %v1301, %v1302
    %s1304 = vtos %v1303
    %s1305 = smul.f32 %s1304, 0.0078125
    %s1306 = smul.f32 %s1290, %s1290
    %s1307 = ssub.f32 %s1305, %s1306
    %s1308 = sld [smem:[#allocation11 + $0x5]]
    %s1309 = sadd.f32 %s1307, 1e-05
    %v1310 = vstv %s1309
    %v1311 = vrsqrt.pop %v1310
    %s1312 = vtos %v1311
    %s1313 = smul.f32 %s1308, %s1312
    %v1314 = vstv %s1290
    %v1315 = vsub.f32 %v804, %v1314
    %v1316 = vsub.f32 %v806, %v1314
    %v1317 = vstv %s1313
    %v1318 = vmul.f32 %v1315, %v1317
    %v1319 = vmul.f32 %v1316, %v1317
    %s1320 = sld [smem:[#allocation12 + $0x5]]
    %v1321 = vstv %s1320
    %v1322 = vadd.f32 %v1318, %v1321
    %v1323 = vadd.f32 %v1319, %v1321
    %v1324 = vmax.f32 %v1322, 0.0
    %v1325 = vmax.f32 %v1323, 0.0
    %v1326 = vmul.f32 %v1324, %v1009
    %v1327 = vmul.f32 %v1325, %v1013
    %v1330 = vcombine.low %v1326, %v1327
    %v1332 = vunpack.c.l.s4 1983009808
    %v1333 = vunpack.c.0.s8 %v1332
    %v1334 = vlaneseq
    %v1335 = vshrl.u32 %v1334, 7
    %v1336 = vsub.s32 %v1333, %v1335
    %v1337 = vrot.slane %v1330, %v1336
    %1339 = vst [vmem:[#allocation2 + $0x16] sm:$0xf] %v1337
    %v1340 = vsel %vm956, %v875, 0.0
    %v1341 = vsel %vm956, %v877, 0.0
    %v1342 = vadd.f32 %v1340, %v1341
    %1343 = vadd.xlane.f32.xlu0 %v1342
    %v1344 = vpop.xlane.xlu0 %1343
    %v1345 = vrot.slane %v1344, 4
    %v1346 = vadd.f32 %v1344, %v1345
    %v1347 = vrot.slane %v1346, 2
    %v1348 = vadd.f32 %v1346, %v1347
    %v1349 = vrot.slane %v1348, 1
    %v1350 = vadd.f32 %v1348, %v1349
    %s1351 = vtos %v1350
    %s1352 = smul.f32 %s1351, 0.0078125
    %v1353 = vmul.f32 %v875, %v875
    %v1354 = vmul.f32 %v877, %v877
    %v1355 = vsel %vm956, %v1353, 0.0
    %v1356 = vsel %vm956, %v1354, 0.0
    %v1357 = vadd.f32 %v1355, %v1356
    %1358 = vadd.xlane.f32.xlu0 %v1357
    %v1359 = vpop.xlane.xlu0 %1358
    %v1360 = vrot.slane %v1359, 4
    %v1361 = vadd.f32 %v1359, %v1360
    %v1362 = vrot.slane %v1361, 2
    %v1363 = vadd.f32 %v1361, %v1362
    %v1364 = vrot.slane %v1363, 1
    %v1365 = vadd.f32 %v1363, %v1364
    %s1366 = vtos %v1365
    %s1367 = smul.f32 %s1366, 0.0078125
    %s1368 = smul.f32 %s1352, %s1352
    %s1369 = ssub.f32 %s1367, %s1368
    %s1370 = sld [smem:[#allocation11 + $0x6]]
    %s1371 = sadd.f32 %s1369, 1e-05
    %v1372 = vstv %s1371
    %v1373 = vrsqrt.pop %v1372
    %s1374 = vtos %v1373
    %s1375 = smul.f32 %s1370, %s1374
    %v1376 = vstv %s1352
    %v1377 = vsub.f32 %v875, %v1376
    %v1378 = vsub.f32 %v877, %v1376
    %v1379 = vstv %s1375
    %v1380 = vmul.f32 %v1377, %v1379
    %v1381 = vmul.f32 %v1378, %v1379
    %s1382 = sld [smem:[#allocation12 + $0x6]]
    %v1383 = vstv %s1382
    %v1384 = vadd.f32 %v1380, %v1383
    %v1385 = vadd.f32 %v1381, %v1383
    %v1386 = vmax.f32 %v1384, 0.0
    %v1387 = vmax.f32 %v1385, 0.0
    %v1388 = vmul.f32 %v1386, %v1009
    %v1389 = vmul.f32 %v1387, %v1013
    %v1392 = vcombine.low %v1388, %v1389
    %v1394 = vunpack.c.l.s4 1983009808
    %v1395 = vunpack.c.0.s8 %v1394
    %v1396 = vlaneseq
    %v1397 = vshrl.u32 %v1396, 7
    %v1398 = vsub.s32 %v1395, %v1397
    %v1399 = vrot.slane %v1392, %v1398
    %1401 = vst [vmem:[#allocation2 + $0x1a] sm:$0xf] %v1399
    %v1402 = vsel %vm956, %v946, 0.0
    %v1403 = vsel %vm956, %v948, 0.0
    %v1404 = vadd.f32 %v1402, %v1403
    %1405 = vadd.xlane.f32.xlu0 %v1404
    %v1406 = vpop.xlane.xlu0 %1405
    %v1407 = vrot.slane %v1406, 4
    %v1408 = vadd.f32 %v1406, %v1407
    %v1409 = vrot.slane %v1408, 2
    %v1410 = vadd.f32 %v1408, %v1409
    %v1411 = vrot.slane %v1410, 1
    %v1412 = vadd.f32 %v1410, %v1411
    %s1413 = vtos %v1412
    %s1414 = smul.f32 %s1413, 0.0078125
    %v1415 = vmul.f32 %v946, %v946
    %v1416 = vmul.f32 %v948, %v948
    %v1417 = vsel %vm956, %v1415, 0.0
    %v1418 = vsel %vm956, %v1416, 0.0
    %v1419 = vadd.f32 %v1417, %v1418
    %1420 = vadd.xlane.f32.xlu0 %v1419
    %v1421 = vpop.xlane.xlu0 %1420
    %v1422 = vrot.slane %v1421, 4
    %v1423 = vadd.f32 %v1421, %v1422
    %v1424 = vrot.slane %v1423, 2
    %v1425 = vadd.f32 %v1423, %v1424
    %v1426 = vrot.slane %v1425, 1
    %v1427 = vadd.f32 %v1425, %v1426
    %s1428 = vtos %v1427
    %s1429 = smul.f32 %s1428, 0.0078125
    %s1430 = smul.f32 %s1414, %s1414
    %s1431 = ssub.f32 %s1429, %s1430
    %s1432 = sld [smem:[#allocation11 + $0x7]]
    %s1433 = sadd.f32 %s1431, 1e-05
    %v1434 = vstv %s1433
    %v1435 = vrsqrt.pop %v1434
    %s1436 = vtos %v1435
    %s1437 = smul.f32 %s1432, %s1436
    %v1438 = vstv %s1414
    %v1439 = vsub.f32 %v946, %v1438
    %v1440 = vsub.f32 %v948, %v1438
    %v1441 = vstv %s1437
    %v1442 = vmul.f32 %v1439, %v1441
    %v1443 = vmul.f32 %v1440, %v1441
    %s1444 = sld [smem:[#allocation12 + $0x7]]
    %v1445 = vstv %s1444
    %v1446 = vadd.f32 %v1442, %v1445
    %v1447 = vadd.f32 %v1443, %v1445
    %v1448 = vmax.f32 %v1446, 0.0
    %v1449 = vmax.f32 %v1447, 0.0
    %v1450 = vmul.f32 %v1448, %v1009
    %v1451 = vmul.f32 %v1449, %v1013
    %v1454 = vcombine.low %v1450, %v1451
    %v1456 = vunpack.c.l.s4 1983009808
    %v1457 = vunpack.c.0.s8 %v1456
    %v1458 = vlaneseq
    %v1459 = vshrl.u32 %v1458, 7
    %v1460 = vsub.s32 %v1457, %v1459
    %v1461 = vrot.slane %v1454, %v1460
    %1463 = vst [vmem:[#allocation2 + $0x1e] sm:$0xf] %v1461
    %v1464 = vld [vmem:[#allocation2] sm:$0xff]
    %v1465 = vld [vmem:[#allocation2 + $0x8] sm:$0xff]
    %v1466 = vld [vmem:[#allocation2 + $0x10] sm:$0xff]
    %v1467 = vld [vmem:[#allocation2 + $0x18] sm:$0xff]
    %v1468 = vld [vmem:[#allocation2 + $0x20] sm:$0x3]
    %v1469 = vld [vmem:[#allocation8] ss:$8 sm:$0xf]
    %v1470 = vld [vmem:[#allocation8] ss:$8 sm:$0xf0]
    %v1471 = vor.u32 %v1469, %v1470
    %s1472 = scalar_lea.vmem [#allocation8], 64
    %v1473 = vld [vmem:[%s1472] ss:$8 sm:$0xf]
    %v1474 = vld [vmem:[%s1472] ss:$8 sm:$0xf0]
    %v1475 = vor.u32 %v1473, %v1474
    %v1478 = vlaneseq
    %v1479 = vshrl.u32 %v1478, 7
    %v1480 = vsub.s32 0, %v1479
    %v1481 = vrot.slane %v1471, %v1480
    %v1482 = vlaneseq
    %v1483 = vshrl.u32 %v1482, 7
    %v1484 = vsub.s32 1, %v1483
    %v1485 = vrot.slane %v1471, %v1484
    %v1486 = vlaneseq
    %v1487 = vshrl.u32 %v1486, 7
    %v1488 = vsub.s32 2, %v1487
    %v1489 = vrot.slane %v1471, %v1488
    %v1490 = vlaneseq
    %v1491 = vshrl.u32 %v1490, 7
    %v1492 = vsub.s32 3, %v1491
    %v1493 = vrot.slane %v1471, %v1492
    %v1494 = vlaneseq
    %v1495 = vshrl.u32 %v1494, 7
    %v1496 = vsub.s32 4, %v1495
    %v1497 = vrot.slane %v1471, %v1496
    %v1498 = vlaneseq
    %v1499 = vshrl.u32 %v1498, 7
    %v1500 = vsub.s32 5, %v1499
    %v1501 = vrot.slane %v1471, %v1500
    %v1502 = vlaneseq
    %v1503 = vshrl.u32 %v1502, 7
    %v1504 = vsub.s32 6, %v1503
    %v1505 = vrot.slane %v1471, %v1504
    %v1506 = vlaneseq
    %v1507 = vshrl.u32 %v1506, 7
    %v1508 = vsub.s32 7, %v1507
    %v1509 = vrot.slane %v1471, %v1508
    %v1510 = vlaneseq
    %v1511 = vshrl.u32 %v1510, 7
    %v1512 = vsub.s32 0, %v1511
    %v1513 = vrot.slane %v1475, %v1512
    %v1514 = vlaneseq
    %v1515 = vshrl.u32 %v1514, 7
    %v1516 = vsub.s32 1, %v1515
    %v1517 = vrot.slane %v1475, %v1516
    %v1518 = vlaneseq
    %v1519 = vshrl.u32 %v1518, 7
    %v1520 = vsub.s32 2, %v1519
    %v1521 = vrot.slane %v1475, %v1520
    %v1522 = vlaneseq
    %v1523 = vshrl.u32 %v1522, 7
    %v1524 = vsub.s32 3, %v1523
    %v1525 = vrot.slane %v1475, %v1524
    %v1526 = vlaneseq
    %v1527 = vshrl.u32 %v1526, 7
    %v1528 = vsub.s32 4, %v1527
    %v1529 = vrot.slane %v1475, %v1528
    %v1530 = vlaneseq
    %v1531 = vshrl.u32 %v1530, 7
    %v1532 = vsub.s32 5, %v1531
    %v1533 = vrot.slane %v1475, %v1532
    %v1534 = vlaneseq
    %v1535 = vshrl.u32 %v1534, 7
    %v1536 = vsub.s32 6, %v1535
    %v1537 = vrot.slane %v1475, %v1536
    %v1538 = vlaneseq
    %v1539 = vshrl.u32 %v1538, 7
    %v1540 = vsub.s32 7, %v1539
    %v1541 = vrot.slane %v1475, %v1540
    %v1542 = vcombine.low %v1481, %v1485
    %v1543 = vcombine.low %v1489, %v1493
    %v1545 = vunpack.c.l.s4 1983009808
    %v1546 = vunpack.c.0.s8 %v1545
    %v1547 = vlaneseq
    %v1548 = vshrl.u32 %v1547, 7
    %v1549 = vsub.s32 %v1546, %v1548
    %v1550 = vrot.slane %v1542, %v1549
    %v1552 = vunpack.c.l.s4 1983009808
    %v1553 = vunpack.c.0.s8 %v1552
    %v1554 = vlaneseq
    %v1555 = vshrl.u32 %v1554, 7
    %v1556 = vsub.s32 %v1553, %v1555
    %v1557 = vrot.slane %v1543, %v1556
    %v1558 = vcombine.low %v1550, %v1557
    %v1559 = vcombine.low %v1497, %v1501
    %v1560 = vcombine.low %v1505, %v1509
    %v1562 = vunpack.c.l.s4 1983009808
    %v1563 = vunpack.c.0.s8 %v1562
    %v1564 = vlaneseq
    %v1565 = vshrl.u32 %v1564, 7
    %v1566 = vsub.s32 %v1563, %v1565
    %v1567 = vrot.slane %v1559, %v1566
    %v1569 = vunpack.c.l.s4 1983009808
    %v1570 = vunpack.c.0.s8 %v1569
    %v1571 = vlaneseq
    %v1572 = vshrl.u32 %v1571, 7
    %v1573 = vsub.s32 %v1570, %v1572
    %v1574 = vrot.slane %v1560, %v1573
    %v1575 = vcombine.low %v1567, %v1574
    %v1576 = vcombine.low %v1513, %v1517
    %v1577 = vcombine.low %v1521, %v1525
    %v1579 = vunpack.c.l.s4 1983009808
    %v1580 = vunpack.c.0.s8 %v1579
    %v1581 = vlaneseq
    %v1582 = vshrl.u32 %v1581, 7
    %v1583 = vsub.s32 %v1580, %v1582
    %v1584 = vrot.slane %v1576, %v1583
    %v1586 = vunpack.c.l.s4 1983009808
    %v1587 = vunpack.c.0.s8 %v1586
    %v1588 = vlaneseq
    %v1589 = vshrl.u32 %v1588, 7
    %v1590 = vsub.s32 %v1587, %v1589
    %v1591 = vrot.slane %v1577, %v1590
    %v1592 = vcombine.low %v1584, %v1591
    %v1593 = vcombine.low %v1529, %v1533
    %v1594 = vcombine.low %v1537, %v1541
    %v1596 = vunpack.c.l.s4 1983009808
    %v1597 = vunpack.c.0.s8 %v1596
    %v1598 = vlaneseq
    %v1599 = vshrl.u32 %v1598, 7
    %v1600 = vsub.s32 %v1597, %v1599
    %v1601 = vrot.slane %v1593, %v1600
    %v1603 = vunpack.c.l.s4 1983009808
    %v1604 = vunpack.c.0.s8 %v1603
    %v1605 = vlaneseq
    %v1606 = vshrl.u32 %v1605, 7
    %v1607 = vsub.s32 %v1604, %v1606
    %v1608 = vrot.slane %v1594, %v1607
    %v1609 = vcombine.low %v1601, %v1608
    %1610 = vrot.lane.b32.xlu0 %v1558, 111
    %v1611 = vpop.permute.xlu0 %1610
    %1612 = vrot.lane.b32.xlu0 %v1575, 111
    %v1613 = vpop.permute.xlu0 %1612
    %1614 = vrot.lane.b32.xlu0 %v1592, 111
    %v1615 = vpop.permute.xlu0 %1614
    %1616 = vrot.lane.b32.xlu0 %v1609, 111
    %v1617 = vpop.permute.xlu0 %1616
    %v1618 = vrot.slane %v1611, 6
    %v1619 = vrot.slane %v1613, 6
    %v1620 = vrot.slane %v1615, 6
    %v1621 = vrot.slane %v1617, 6
    %vm1622 = vcmask 908288
    %v1623 = vsel %vm1622, %v1618, %v1611
    %v1624 = vsel %vm956, %v1618, %v1619
    %v1625 = vsel %vm1622, %v1624, %v1613
    %v1626 = vsel %vm956, %v1619, %v1620
    %v1627 = vsel %vm1622, %v1626, %v1615
    %v1628 = vsel %vm956, %v1620, %v1621
    %v1629 = vsel %vm1622, %v1628, %v1617
    %v1635 = vmul.f32 %v1464, %v1623
    %v1636 = vmul.f32 %v1465, %v1625
    %v1637 = vmul.f32 %v1466, %v1627
    %v1638 = vmul.f32 %v1467, %v1629
    %v1639 = vmul.f32 %v1468, %v1621
    %v1640 = vadd.f32 %v1635, 0.0
    %v1643 = vrot.slane %v1635, 4
    %v1644 = vrot.slane %v1636, 4
    %vm1645 = vcmask 1043456
    %v1646 = vsel %vm1645, %v1643, %v1644
    %v1648 = vadd.f32 %v1640, %v1646
    %v1649 = vadd.f32 %v1648, %v1636
    %v1651 = vrot.slane %v1637, 4
    %v1652 = vsel %vm1645, %v1644, %v1651
    %v1654 = vadd.f32 %v1649, %v1652
    %v1655 = vadd.f32 %v1654, %v1637
    %v1657 = vrot.slane %v1638, 4
    %v1658 = vsel %vm1645, %v1651, %v1657
    %v1660 = vadd.f32 %v1655, %v1658
    %v1661 = vadd.f32 %v1660, %v1638
    %v1663 = vrot.slane %v1639, 4
    %v1664 = vsel %vm1645, %v1657, %v1663
    %v1666 = vadd.f32 %v1661, %v1664
    %s1667 = scalar_lea.vmem [#allocation8], 1
    %v1668 = vld [vmem:[%s1667] ss:$8 sm:$0xf]
    %v1669 = vld [vmem:[%s1667] ss:$8 sm:$0xf0]
    %v1670 = vor.u32 %v1668, %v1669
    %s1671 = scalar_lea.vmem [#allocation8], 65
    %v1672 = vld [vmem:[%s1671] ss:$8 sm:$0xf]
    %v1673 = vld [vmem:[%s1671] ss:$8 sm:$0xf0]
    %v1674 = vor.u32 %v1672, %v1673
    %v1677 = vlaneseq
    %v1678 = vshrl.u32 %v1677, 7
    %v1679 = vsub.s32 0, %v1678
    %v1680 = vrot.slane %v1670, %v1679
    %v1681 = vlaneseq
    %v1682 = vshrl.u32 %v1681, 7
    %v1683 = vsub.s32 1, %v1682
    %v1684 = vrot.slane %v1670, %v1683
    %v1685 = vlaneseq
    %v1686 = vshrl.u32 %v1685, 7
    %v1687 = vsub.s32 2, %v1686
    %v1688 = vrot.slane %v1670, %v1687
    %v1689 = vlaneseq
    %v1690 = vshrl.u32 %v1689, 7
    %v1691 = vsub.s32 3, %v1690
    %v1692 = vrot.slane %v1670, %v1691
    %v1693 = vlaneseq
    %v1694 = vshrl.u32 %v1693, 7
    %v1695 = vsub.s32 4, %v1694
    %v1696 = vrot.slane %v1670, %v1695
    %v1697 = vlaneseq
    %v1698 = vshrl.u32 %v1697, 7
    %v1699 = vsub.s32 5, %v1698
    %v1700 = vrot.slane %v1670, %v1699
    %v1701 = vlaneseq
    %v1702 = vshrl.u32 %v1701, 7
    %v1703 = vsub.s32 6, %v1702
    %v1704 = vrot.slane %v1670, %v1703
    %v1705 = vlaneseq
    %v1706 = vshrl.u32 %v1705, 7
    %v1707 = vsub.s32 7, %v1706
    %v1708 = vrot.slane %v1670, %v1707
    %v1709 = vlaneseq
    %v1710 = vshrl.u32 %v1709, 7
    %v1711 = vsub.s32 0, %v1710
    %v1712 = vrot.slane %v1674, %v1711
    %v1713 = vlaneseq
    %v1714 = vshrl.u32 %v1713, 7
    %v1715 = vsub.s32 1, %v1714
    %v1716 = vrot.slane %v1674, %v1715
    %v1717 = vlaneseq
    %v1718 = vshrl.u32 %v1717, 7
    %v1719 = vsub.s32 2, %v1718
    %v1720 = vrot.slane %v1674, %v1719
    %v1721 = vlaneseq
    %v1722 = vshrl.u32 %v1721, 7
    %v1723 = vsub.s32 3, %v1722
    %v1724 = vrot.slane %v1674, %v1723
    %v1725 = vlaneseq
    %v1726 = vshrl.u32 %v1725, 7
    %v1727 = vsub.s32 4, %v1726
    %v1728 = vrot.slane %v1674, %v1727
    %v1729 = vlaneseq
    %v1730 = vshrl.u32 %v1729, 7
    %v1731 = vsub.s32 5, %v1730
    %v1732 = vrot.slane %v1674, %v1731
    %v1733 = vlaneseq
    %v1734 = vshrl.u32 %v1733, 7
    %v1735 = vsub.s32 6, %v1734
    %v1736 = vrot.slane %v1674, %v1735
    %v1737 = vlaneseq
    %v1738 = vshrl.u32 %v1737, 7
    %v1739 = vsub.s32 7, %v1738
    %v1740 = vrot.slane %v1674, %v1739
    %v1741 = vcombine.low %v1680, %v1684
    %v1742 = vcombine.low %v1688, %v1692
    %v1744 = vunpack.c.l.s4 1983009808
    %v1745 = vunpack.c.0.s8 %v1744
    %v1746 = vlaneseq
    %v1747 = vshrl.u32 %v1746, 7
    %v1748 = vsub.s32 %v1745, %v1747
    %v1749 = vrot.slane %v1741, %v1748
    %v1751 = vunpack.c.l.s4 1983009808
    %v1752 = vunpack.c.0.s8 %v1751
    %v1753 = vlaneseq
    %v1754 = vshrl.u32 %v1753, 7
    %v1755 = vsub.s32 %v1752, %v1754
    %v1756 = vrot.slane %v1742, %v1755
    %v1757 = vcombine.low %v1749, %v1756
    %v1758 = vcombine.low %v1696, %v1700
    %v1759 = vcombine.low %v1704, %v1708
    %v1761 = vunpack.c.l.s4 1983009808
    %v1762 = vunpack.c.0.s8 %v1761
    %v1763 = vlaneseq
    %v1764 = vshrl.u32 %v1763, 7
    %v1765 = vsub.s32 %v1762, %v1764
    %v1766 = vrot.slane %v1758, %v1765
    %v1768 = vunpack.c.l.s4 1983009808
    %v1769 = vunpack.c.0.s8 %v1768
    %v1770 = vlaneseq
    %v1771 = vshrl.u32 %v1770, 7
    %v1772 = vsub.s32 %v1769, %v1771
    %v1773 = vrot.slane %v1759, %v1772
    %v1774 = vcombine.low %v1766, %v1773
    %v1775 = vcombine.low %v1712, %v1716
    %v1776 = vcombine.low %v1720, %v1724
    %v1778 = vunpack.c.l.s4 1983009808
    %v1779 = vunpack.c.0.s8 %v1778
    %v1780 = vlaneseq
    %v1781 = vshrl.u32 %v1780, 7
    %v1782 = vsub.s32 %v1779, %v1781
    %v1783 = vrot.slane %v1775, %v1782
    %v1785 = vunpack.c.l.s4 1983009808
    %v1786 = vunpack.c.0.s8 %v1785
    %v1787 = vlaneseq
    %v1788 = vshrl.u32 %v1787, 7
    %v1789 = vsub.s32 %v1786, %v1788
    %v1790 = vrot.slane %v1776, %v1789
    %v1791 = vcombine.low %v1783, %v1790
    %v1792 = vcombine.low %v1728, %v1732
    %v1793 = vcombine.low %v1736, %v1740
    %v1795 = vunpack.c.l.s4 1983009808
    %v1796 = vunpack.c.0.s8 %v1795
    %v1797 = vlaneseq
    %v1798 = vshrl.u32 %v1797, 7
    %v1799 = vsub.s32 %v1796, %v1798
    %v1800 = vrot.slane %v1792, %v1799
    %v1802 = vunpack.c.l.s4 1983009808
    %v1803 = vunpack.c.0.s8 %v1802
    %v1804 = vlaneseq
    %v1805 = vshrl.u32 %v1804, 7
    %v1806 = vsub.s32 %v1803, %v1805
    %v1807 = vrot.slane %v1793, %v1806
    %v1808 = vcombine.low %v1800, %v1807
    %1809 = vrot.lane.b32.xlu0 %v1757, 111
    %v1810 = vpop.permute.xlu0 %1809
    %1811 = vrot.lane.b32.xlu0 %v1774, 111
    %v1812 = vpop.permute.xlu0 %1811
    %1813 = vrot.lane.b32.xlu0 %v1791, 111
    %v1814 = vpop.permute.xlu0 %1813
    %1815 = vrot.lane.b32.xlu0 %v1808, 111
    %v1816 = vpop.permute.xlu0 %1815
    %v1817 = vrot.slane %v1810, 6
    %v1818 = vrot.slane %v1812, 6
    %v1819 = vrot.slane %v1814, 6
    %v1820 = vrot.slane %v1816, 6
    %v1821 = vsel %vm1622, %v1817, %v1810
    %v1822 = vsel %vm956, %v1817, %v1818
    %v1823 = vsel %vm1622, %v1822, %v1812
    %v1824 = vsel %vm956, %v1818, %v1819
    %v1825 = vsel %vm1622, %v1824, %v1814
    %v1826 = vsel %vm956, %v1819, %v1820
    %v1827 = vsel %vm1622, %v1826, %v1816
    %v1833 = vmul.f32 %v1464, %v1821
    %v1834 = vmul.f32 %v1465, %v1823
    %v1835 = vmul.f32 %v1466, %v1825
    %v1836 = vmul.f32 %v1467, %v1827
    %v1837 = vmul.f32 %v1468, %v1820
    %v1838 = vadd.f32 %v1833, 0.0
    %v1841 = vrot.slane %v1833, 4
    %v1842 = vrot.slane %v1834, 4
    %v1843 = vsel %vm1645, %v1841, %v1842
    %v1845 = vadd.f32 %v1838, %v1843
    %v1846 = vadd.f32 %v1845, %v1834
    %v1848 = vrot.slane %v1835, 4
    %v1849 = vsel %vm1645, %v1842, %v1848
    %v1851 = vadd.f32 %v1846, %v1849
    %v1852 = vadd.f32 %v1851, %v1835
    %v1854 = vrot.slane %v1836, 4
    %v1855 = vsel %vm1645, %v1848, %v1854
    %v1857 = vadd.f32 %v1852, %v1855
    %v1858 = vadd.f32 %v1857, %v1836
    %v1860 = vrot.slane %v1837, 4
    %v1861 = vsel %vm1645, %v1854, %v1860
    %v1863 = vadd.f32 %v1858, %v1861
    %s1864 = scalar_lea.vmem [#allocation8], 2
    %v1865 = vld [vmem:[%s1864] ss:$8 sm:$0xf]
    %v1866 = vld [vmem:[%s1864] ss:$8 sm:$0xf0]
    %v1867 = vor.u32 %v1865, %v1866
    %s1868 = scalar_lea.vmem [#allocation8], 66
    %v1869 = vld [vmem:[%s1868] ss:$8 sm:$0xf]
    %v1870 = vld [vmem:[%s1868] ss:$8 sm:$0xf0]
    %v1871 = vor.u32 %v1869, %v1870
    %v1874 = vlaneseq
    %v1875 = vshrl.u32 %v1874, 7
    %v1876 = vsub.s32 0, %v1875
    %v1877 = vrot.slane %v1867, %v1876
    %v1878 = vlaneseq
    %v1879 = vshrl.u32 %v1878, 7
    %v1880 = vsub.s32 1, %v1879
    %v1881 = vrot.slane %v1867, %v1880
    %v1882 = vlaneseq
    %v1883 = vshrl.u32 %v1882, 7
    %v1884 = vsub.s32 2, %v1883
    %v1885 = vrot.slane %v1867, %v1884
    %v1886 = vlaneseq
    %v1887 = vshrl.u32 %v1886, 7
    %v1888 = vsub.s32 3, %v1887
    %v1889 = vrot.slane %v1867, %v1888
    %v1890 = vlaneseq
    %v1891 = vshrl.u32 %v1890, 7
    %v1892 = vsub.s32 4, %v1891
    %v1893 = vrot.slane %v1867, %v1892
    %v1894 = vlaneseq
    %v1895 = vshrl.u32 %v1894, 7
    %v1896 = vsub.s32 5, %v1895
    %v1897 = vrot.slane %v1867, %v1896
    %v1898 = vlaneseq
    %v1899 = vshrl.u32 %v1898, 7
    %v1900 = vsub.s32 6, %v1899
    %v1901 = vrot.slane %v1867, %v1900
    %v1902 = vlaneseq
    %v1903 = vshrl.u32 %v1902, 7
    %v1904 = vsub.s32 7, %v1903
    %v1905 = vrot.slane %v1867, %v1904
    %v1906 = vlaneseq
    %v1907 = vshrl.u32 %v1906, 7
    %v1908 = vsub.s32 0, %v1907
    %v1909 = vrot.slane %v1871, %v1908
    %v1910 = vlaneseq
    %v1911 = vshrl.u32 %v1910, 7
    %v1912 = vsub.s32 1, %v1911
    %v1913 = vrot.slane %v1871, %v1912
    %v1914 = vlaneseq
    %v1915 = vshrl.u32 %v1914, 7
    %v1916 = vsub.s32 2, %v1915
    %v1917 = vrot.slane %v1871, %v1916
    %v1918 = vlaneseq
    %v1919 = vshrl.u32 %v1918, 7
    %v1920 = vsub.s32 3, %v1919
    %v1921 = vrot.slane %v1871, %v1920
    %v1922 = vlaneseq
    %v1923 = vshrl.u32 %v1922, 7
    %v1924 = vsub.s32 4, %v1923
    %v1925 = vrot.slane %v1871, %v1924
    %v1926 = vlaneseq
    %v1927 = vshrl.u32 %v1926, 7
    %v1928 = vsub.s32 5, %v1927
    %v1929 = vrot.slane %v1871, %v1928
    %v1930 = vlaneseq
    %v1931 = vshrl.u32 %v1930, 7
    %v1932 = vsub.s32 6, %v1931
    %v1933 = vrot.slane %v1871, %v1932
    %v1934 = vlaneseq
    %v1935 = vshrl.u32 %v1934, 7
    %v1936 = vsub.s32 7, %v1935
    %v1937 = vrot.slane %v1871, %v1936
    %v1938 = vcombine.low %v1877, %v1881
    %v1939 = vcombine.low %v1885, %v1889
    %v1941 = vunpack.c.l.s4 1983009808
    %v1942 = vunpack.c.0.s8 %v1941
    %v1943 = vlaneseq
    %v1944 = vshrl.u32 %v1943, 7
    %v1945 = vsub.s32 %v1942, %v1944
    %v1946 = vrot.slane %v1938, %v1945
    %v1948 = vunpack.c.l.s4 1983009808
    %v1949 = vunpack.c.0.s8 %v1948
    %v1950 = vlaneseq
    %v1951 = vshrl.u32 %v1950, 7
    %v1952 = vsub.s32 %v1949, %v1951
    %v1953 = vrot.slane %v1939, %v1952
    %v1954 = vcombine.low %v1946, %v1953
    %v1955 = vcombine.low %v1893, %v1897
    %v1956 = vcombine.low %v1901, %v1905
    %v1958 = vunpack.c.l.s4 1983009808
    %v1959 = vunpack.c.0.s8 %v1958
    %v1960 = vlaneseq
    %v1961 = vshrl.u32 %v1960, 7
    %v1962 = vsub.s32 %v1959, %v1961
    %v1963 = vrot.slane %v1955, %v1962
    %v1965 = vunpack.c.l.s4 1983009808
    %v1966 = vunpack.c.0.s8 %v1965
    %v1967 = vlaneseq
    %v1968 = vshrl.u32 %v1967, 7
    %v1969 = vsub.s32 %v1966, %v1968
    %v1970 = vrot.slane %v1956, %v1969
    %v1971 = vcombine.low %v1963, %v1970
    %v1972 = vcombine.low %v1909, %v1913
    %v1973 = vcombine.low %v1917, %v1921
    %v1975 = vunpack.c.l.s4 1983009808
    %v1976 = vunpack.c.0.s8 %v1975
    %v1977 = vlaneseq
    %v1978 = vshrl.u32 %v1977, 7
    %v1979 = vsub.s32 %v1976, %v1978
    %v1980 = vrot.slane %v1972, %v1979
    %v1982 = vunpack.c.l.s4 1983009808
    %v1983 = vunpack.c.0.s8 %v1982
    %v1984 = vlaneseq
    %v1985 = vshrl.u32 %v1984, 7
    %v1986 = vsub.s32 %v1983, %v1985
    %v1987 = vrot.slane %v1973, %v1986
    %v1988 = vcombine.low %v1980, %v1987
    %v1989 = vcombine.low %v1925, %v1929
    %v1990 = vcombine.low %v1933, %v1937
    %v1992 = vunpack.c.l.s4 1983009808
    %v1993 = vunpack.c.0.s8 %v1992
    %v1994 = vlaneseq
    %v1995 = vshrl.u32 %v1994, 7
    %v1996 = vsub.s32 %v1993, %v1995
    %v1997 = vrot.slane %v1989, %v1996
    %v1999 = vunpack.c.l.s4 1983009808
    %v2000 = vunpack.c.0.s8 %v1999
    %v2001 = vlaneseq
    %v2002 = vshrl.u32 %v2001, 7
    %v2003 = vsub.s32 %v2000, %v2002
    %v2004 = vrot.slane %v1990, %v2003
    %v2005 = vcombine.low %v1997, %v2004
    %2006 = vrot.lane.b32.xlu0 %v1954, 111
    %v2007 = vpop.permute.xlu0 %2006
    %2008 = vrot.lane.b32.xlu0 %v1971, 111
    %v2009 = vpop.permute.xlu0 %2008
    %2010 = vrot.lane.b32.xlu0 %v1988, 111
    %v2011 = vpop.permute.xlu0 %2010
    %2012 = vrot.lane.b32.xlu0 %v2005, 111
    %v2013 = vpop.permute.xlu0 %2012
    %v2014 = vrot.slane %v2007, 6
    %v2015 = vrot.slane %v2009, 6
    %v2016 = vrot.slane %v2011, 6
    %v2017 = vrot.slane %v2013, 6
    %v2018 = vsel %vm1622, %v2014, %v2007
    %v2019 = vsel %vm956, %v2014, %v2015
    %v2020 = vsel %vm1622, %v2019, %v2009
    %v2021 = vsel %vm956, %v2015, %v2016
    %v2022 = vsel %vm1622, %v2021, %v2011
    %v2023 = vsel %vm956, %v2016, %v2017
    %v2024 = vsel %vm1622, %v2023, %v2013
    %v2030 = vmul.f32 %v1464, %v2018
    %v2031 = vmul.f32 %v1465, %v2020
    %v2032 = vmul.f32 %v1466, %v2022
    %v2033 = vmul.f32 %v1467, %v2024
    %v2034 = vmul.f32 %v1468, %v2017
    %v2035 = vadd.f32 %v2030, 0.0
    %v2038 = vrot.slane %v2030, 4
    %v2039 = vrot.slane %v2031, 4
    %v2040 = vsel %vm1645, %v2038, %v2039
    %v2042 = vadd.f32 %v2035, %v2040
    %v2043 = vadd.f32 %v2042, %v2031
    %v2045 = vrot.slane %v2032, 4
    %v2046 = vsel %vm1645, %v2039, %v2045
    %v2048 = vadd.f32 %v2043, %v2046
    %v2049 = vadd.f32 %v2048, %v2032
    %v2051 = vrot.slane %v2033, 4
    %v2052 = vsel %vm1645, %v2045, %v2051
    %v2054 = vadd.f32 %v2049, %v2052
    %v2055 = vadd.f32 %v2054, %v2033
    %v2057 = vrot.slane %v2034, 4
    %v2058 = vsel %vm1645, %v2051, %v2057
    %v2060 = vadd.f32 %v2055, %v2058
    %s2061 = scalar_lea.vmem [#allocation8], 3
    %v2062 = vld [vmem:[%s2061] ss:$8 sm:$0xf]
    %v2063 = vld [vmem:[%s2061] ss:$8 sm:$0xf0]
    %v2064 = vor.u32 %v2062, %v2063
    %s2065 = scalar_lea.vmem [#allocation8], 67
    %v2066 = vld [vmem:[%s2065] ss:$8 sm:$0xf]
    %v2067 = vld [vmem:[%s2065] ss:$8 sm:$0xf0]
    %v2068 = vor.u32 %v2066, %v2067
    %v2071 = vlaneseq
    %v2072 = vshrl.u32 %v2071, 7
    %v2073 = vsub.s32 0, %v2072
    %v2074 = vrot.slane %v2064, %v2073
    %v2075 = vlaneseq
    %v2076 = vshrl.u32 %v2075, 7
    %v2077 = vsub.s32 1, %v2076
    %v2078 = vrot.slane %v2064, %v2077
    %v2079 = vlaneseq
    %v2080 = vshrl.u32 %v2079, 7
    %v2081 = vsub.s32 2, %v2080
    %v2082 = vrot.slane %v2064, %v2081
    %v2083 = vlaneseq
    %v2084 = vshrl.u32 %v2083, 7
    %v2085 = vsub.s32 3, %v2084
    %v2086 = vrot.slane %v2064, %v2085
    %v2087 = vlaneseq
    %v2088 = vshrl.u32 %v2087, 7
    %v2089 = vsub.s32 4, %v2088
    %v2090 = vrot.slane %v2064, %v2089
    %v2091 = vlaneseq
    %v2092 = vshrl.u32 %v2091, 7
    %v2093 = vsub.s32 5, %v2092
    %v2094 = vrot.slane %v2064, %v2093
    %v2095 = vlaneseq
    %v2096 = vshrl.u32 %v2095, 7
    %v2097 = vsub.s32 6, %v2096
    %v2098 = vrot.slane %v2064, %v2097
    %v2099 = vlaneseq
    %v2100 = vshrl.u32 %v2099, 7
    %v2101 = vsub.s32 7, %v2100
    %v2102 = vrot.slane %v2064, %v2101
    %v2103 = vlaneseq
    %v2104 = vshrl.u32 %v2103, 7
    %v2105 = vsub.s32 0, %v2104
    %v2106 = vrot.slane %v2068, %v2105
    %v2107 = vlaneseq
    %v2108 = vshrl.u32 %v2107, 7
    %v2109 = vsub.s32 1, %v2108
    %v2110 = vrot.slane %v2068, %v2109
    %v2111 = vlaneseq
    %v2112 = vshrl.u32 %v2111, 7
    %v2113 = vsub.s32 2, %v2112
    %v2114 = vrot.slane %v2068, %v2113
    %v2115 = vlaneseq
    %v2116 = vshrl.u32 %v2115, 7
    %v2117 = vsub.s32 3, %v2116
    %v2118 = vrot.slane %v2068, %v2117
    %v2119 = vlaneseq
    %v2120 = vshrl.u32 %v2119, 7
    %v2121 = vsub.s32 4, %v2120
    %v2122 = vrot.slane %v2068, %v2121
    %v2123 = vlaneseq
    %v2124 = vshrl.u32 %v2123, 7
    %v2125 = vsub.s32 5, %v2124
    %v2126 = vrot.slane %v2068, %v2125
    %v2127 = vlaneseq
    %v2128 = vshrl.u32 %v2127, 7
    %v2129 = vsub.s32 6, %v2128
    %v2130 = vrot.slane %v2068, %v2129
    %v2131 = vlaneseq
    %v2132 = vshrl.u32 %v2131, 7
    %v2133 = vsub.s32 7, %v2132
    %v2134 = vrot.slane %v2068, %v2133
    %v2135 = vcombine.low %v2074, %v2078
    %v2136 = vcombine.low %v2082, %v2086
    %v2138 = vunpack.c.l.s4 1983009808
    %v2139 = vunpack.c.0.s8 %v2138
    %v2140 = vlaneseq
    %v2141 = vshrl.u32 %v2140, 7
    %v2142 = vsub.s32 %v2139, %v2141
    %v2143 = vrot.slane %v2135, %v2142
    %v2145 = vunpack.c.l.s4 1983009808
    %v2146 = vunpack.c.0.s8 %v2145
    %v2147 = vlaneseq
    %v2148 = vshrl.u32 %v2147, 7
    %v2149 = vsub.s32 %v2146, %v2148
    %v2150 = vrot.slane %v2136, %v2149
    %v2151 = vcombine.low %v2143, %v2150
    %v2152 = vcombine.low %v2090, %v2094
    %v2153 = vcombine.low %v2098, %v2102
    %v2155 = vunpack.c.l.s4 1983009808
    %v2156 = vunpack.c.0.s8 %v2155
    %v2157 = vlaneseq
    %v2158 = vshrl.u32 %v2157, 7
    %v2159 = vsub.s32 %v2156, %v2158
    %v2160 = vrot.slane %v2152, %v2159
    %v2162 = vunpack.c.l.s4 1983009808
    %v2163 = vunpack.c.0.s8 %v2162
    %v2164 = vlaneseq
    %v2165 = vshrl.u32 %v2164, 7
    %v2166 = vsub.s32 %v2163, %v2165
    %v2167 = vrot.slane %v2153, %v2166
    %v2168 = vcombine.low %v2160, %v2167
    %v2169 = vcombine.low %v2106, %v2110
    %v2170 = vcombine.low %v2114, %v2118
    %v2172 = vunpack.c.l.s4 1983009808
    %v2173 = vunpack.c.0.s8 %v2172
    %v2174 = vlaneseq
    %v2175 = vshrl.u32 %v2174, 7
    %v2176 = vsub.s32 %v2173, %v2175
    %v2177 = vrot.slane %v2169, %v2176
    %v2179 = vunpack.c.l.s4 1983009808
    %v2180 = vunpack.c.0.s8 %v2179
    %v2181 = vlaneseq
    %v2182 = vshrl.u32 %v2181, 7
    %v2183 = vsub.s32 %v2180, %v2182
    %v2184 = vrot.slane %v2170, %v2183
    %v2185 = vcombine.low %v2177, %v2184
    %v2186 = vcombine.low %v2122, %v2126
    %v2187 = vcombine.low %v2130, %v2134
    %v2189 = vunpack.c.l.s4 1983009808
    %v2190 = vunpack.c.0.s8 %v2189
    %v2191 = vlaneseq
    %v2192 = vshrl.u32 %v2191, 7
    %v2193 = vsub.s32 %v2190, %v2192
    %v2194 = vrot.slane %v2186, %v2193
    %v2196 = vunpack.c.l.s4 1983009808
    %v2197 = vunpack.c.0.s8 %v2196
    %v2198 = vlaneseq
    %v2199 = vshrl.u32 %v2198, 7
    %v2200 = vsub.s32 %v2197, %v2199
    %v2201 = vrot.slane %v2187, %v2200
    %v2202 = vcombine.low %v2194, %v2201
    %2203 = vrot.lane.b32.xlu0 %v2151, 111
    %v2204 = vpop.permute.xlu0 %2203
    %2205 = vrot.lane.b32.xlu0 %v2168, 111
    %v2206 = vpop.permute.xlu0 %2205
    %2207 = vrot.lane.b32.xlu0 %v2185, 111
    %v2208 = vpop.permute.xlu0 %2207
    %2209 = vrot.lane.b32.xlu0 %v2202, 111
    %v2210 = vpop.permute.xlu0 %2209
    %v2211 = vrot.slane %v2204, 6
    %v2212 = vrot.slane %v2206, 6
    %v2213 = vrot.slane %v2208, 6
    %v2214 = vrot.slane %v2210, 6
    %v2215 = vsel %vm1622, %v2211, %v2204
    %v2216 = vsel %vm956, %v2211, %v2212
    %v2217 = vsel %vm1622, %v2216, %v2206
    %v2218 = vsel %vm956, %v2212, %v2213
    %v2219 = vsel %vm1622, %v2218, %v2208
    %v2220 = vsel %vm956, %v2213, %v2214
    %v2221 = vsel %vm1622, %v2220, %v2210
    %v2227 = vmul.f32 %v1464, %v2215
    %v2228 = vmul.f32 %v1465, %v2217
    %v2229 = vmul.f32 %v1466, %v2219
    %v2230 = vmul.f32 %v1467, %v2221
    %v2231 = vmul.f32 %v1468, %v2214
    %v2232 = vadd.f32 %v2227, 0.0
    %v2235 = vrot.slane %v2227, 4
    %v2236 = vrot.slane %v2228, 4
    %v2237 = vsel %vm1645, %v2235, %v2236
    %v2239 = vadd.f32 %v2232, %v2237
    %v2240 = vadd.f32 %v2239, %v2228
    %v2242 = vrot.slane %v2229, 4
    %v2243 = vsel %vm1645, %v2236, %v2242
    %v2245 = vadd.f32 %v2240, %v2243
    %v2246 = vadd.f32 %v2245, %v2229
    %v2248 = vrot.slane %v2230, 4
    %v2249 = vsel %vm1645, %v2242, %v2248
    %v2251 = vadd.f32 %v2246, %v2249
    %v2252 = vadd.f32 %v2251, %v2230
    %v2254 = vrot.slane %v2231, 4
    %v2255 = vsel %vm1645, %v2248, %v2254
    %v2257 = vadd.f32 %v2252, %v2255
    %s2258 = scalar_lea.vmem [#allocation8], 4
    %v2259 = vld [vmem:[%s2258] ss:$8 sm:$0xf]
    %v2260 = vld [vmem:[%s2258] ss:$8 sm:$0xf0]
    %v2261 = vor.u32 %v2259, %v2260
    %s2262 = scalar_lea.vmem [#allocation8], 68
    %v2263 = vld [vmem:[%s2262] ss:$8 sm:$0xf]
    %v2264 = vld [vmem:[%s2262] ss:$8 sm:$0xf0]
    %v2265 = vor.u32 %v2263, %v2264
    %v2268 = vlaneseq
    %v2269 = vshrl.u32 %v2268, 7
    %v2270 = vsub.s32 0, %v2269
    %v2271 = vrot.slane %v2261, %v2270
    %v2272 = vlaneseq
    %v2273 = vshrl.u32 %v2272, 7
    %v2274 = vsub.s32 1, %v2273
    %v2275 = vrot.slane %v2261, %v2274
    %v2276 = vlaneseq
    %v2277 = vshrl.u32 %v2276, 7
    %v2278 = vsub.s32 2, %v2277
    %v2279 = vrot.slane %v2261, %v2278
    %v2280 = vlaneseq
    %v2281 = vshrl.u32 %v2280, 7
    %v2282 = vsub.s32 3, %v2281
    %v2283 = vrot.slane %v2261, %v2282
    %v2284 = vlaneseq
    %v2285 = vshrl.u32 %v2284, 7
    %v2286 = vsub.s32 4, %v2285
    %v2287 = vrot.slane %v2261, %v2286
    %v2288 = vlaneseq
    %v2289 = vshrl.u32 %v2288, 7
    %v2290 = vsub.s32 5, %v2289
    %v2291 = vrot.slane %v2261, %v2290
    %v2292 = vlaneseq
    %v2293 = vshrl.u32 %v2292, 7
    %v2294 = vsub.s32 6, %v2293
    %v2295 = vrot.slane %v2261, %v2294
    %v2296 = vlaneseq
    %v2297 = vshrl.u32 %v2296, 7
    %v2298 = vsub.s32 7, %v2297
    %v2299 = vrot.slane %v2261, %v2298
    %v2300 = vlaneseq
    %v2301 = vshrl.u32 %v2300, 7
    %v2302 = vsub.s32 0, %v2301
    %v2303 = vrot.slane %v2265, %v2302
    %v2304 = vlaneseq
    %v2305 = vshrl.u32 %v2304, 7
    %v2306 = vsub.s32 1, %v2305
    %v2307 = vrot.slane %v2265, %v2306
    %v2308 = vlaneseq
    %v2309 = vshrl.u32 %v2308, 7
    %v2310 = vsub.s32 2, %v2309
    %v2311 = vrot.slane %v2265, %v2310
    %v2312 = vlaneseq
    %v2313 = vshrl.u32 %v2312, 7
    %v2314 = vsub.s32 3, %v2313
    %v2315 = vrot.slane %v2265, %v2314
    %v2316 = vlaneseq
    %v2317 = vshrl.u32 %v2316, 7
    %v2318 = vsub.s32 4, %v2317
    %v2319 = vrot.slane %v2265, %v2318
    %v2320 = vlaneseq
    %v2321 = vshrl.u32 %v2320, 7
    %v2322 = vsub.s32 5, %v2321
    %v2323 = vrot.slane %v2265, %v2322
    %v2324 = vlaneseq
    %v2325 = vshrl.u32 %v2324, 7
    %v2326 = vsub.s32 6, %v2325
    %v2327 = vrot.slane %v2265, %v2326
    %v2328 = vlaneseq
    %v2329 = vshrl.u32 %v2328, 7
    %v2330 = vsub.s32 7, %v2329
    %v2331 = vrot.slane %v2265, %v2330
    %v2332 = vcombine.low %v2271, %v2275
    %v2333 = vcombine.low %v2279, %v2283
    %v2335 = vunpack.c.l.s4 1983009808
    %v2336 = vunpack.c.0.s8 %v2335
    %v2337 = vlaneseq
    %v2338 = vshrl.u32 %v2337, 7
    %v2339 = vsub.s32 %v2336, %v2338
    %v2340 = vrot.slane %v2332, %v2339
    %v2342 = vunpack.c.l.s4 1983009808
    %v2343 = vunpack.c.0.s8 %v2342
    %v2344 = vlaneseq
    %v2345 = vshrl.u32 %v2344, 7
    %v2346 = vsub.s32 %v2343, %v2345
    %v2347 = vrot.slane %v2333, %v2346
    %v2348 = vcombine.low %v2340, %v2347
    %v2349 = vcombine.low %v2287, %v2291
    %v2350 = vcombine.low %v2295, %v2299
    %v2352 = vunpack.c.l.s4 1983009808
    %v2353 = vunpack.c.0.s8 %v2352
    %v2354 = vlaneseq
    %v2355 = vshrl.u32 %v2354, 7
    %v2356 = vsub.s32 %v2353, %v2355
    %v2357 = vrot.slane %v2349, %v2356
    %v2359 = vunpack.c.l.s4 1983009808
    %v2360 = vunpack.c.0.s8 %v2359
    %v2361 = vlaneseq
    %v2362 = vshrl.u32 %v2361, 7
    %v2363 = vsub.s32 %v2360, %v2362
    %v2364 = vrot.slane %v2350, %v2363
    %v2365 = vcombine.low %v2357, %v2364
    %v2366 = vcombine.low %v2303, %v2307
    %v2367 = vcombine.low %v2311, %v2315
    %v2369 = vunpack.c.l.s4 1983009808
    %v2370 = vunpack.c.0.s8 %v2369
    %v2371 = vlaneseq
    %v2372 = vshrl.u32 %v2371, 7
    %v2373 = vsub.s32 %v2370, %v2372
    %v2374 = vrot.slane %v2366, %v2373
    %v2376 = vunpack.c.l.s4 1983009808
    %v2377 = vunpack.c.0.s8 %v2376
    %v2378 = vlaneseq
    %v2379 = vshrl.u32 %v2378, 7
    %v2380 = vsub.s32 %v2377, %v2379
    %v2381 = vrot.slane %v2367, %v2380
    %v2382 = vcombine.low %v2374, %v2381
    %v2383 = vcombine.low %v2319, %v2323
    %v2384 = vcombine.low %v2327, %v2331
    %v2386 = vunpack.c.l.s4 1983009808
    %v2387 = vunpack.c.0.s8 %v2386
    %v2388 = vlaneseq
    %v2389 = vshrl.u32 %v2388, 7
    %v2390 = vsub.s32 %v2387, %v2389
    %v2391 = vrot.slane %v2383, %v2390
    %v2393 = vunpack.c.l.s4 1983009808
    %v2394 = vunpack.c.0.s8 %v2393
    %v2395 = vlaneseq
    %v2396 = vshrl.u32 %v2395, 7
    %v2397 = vsub.s32 %v2394, %v2396
    %v2398 = vrot.slane %v2384, %v2397
    %v2399 = vcombine.low %v2391, %v2398
    %2400 = vrot.lane.b32.xlu0 %v2348, 112
    %v2401 = vpop.permute.xlu0 %2400
    %2402 = vrot.lane.b32.xlu0 %v2365, 112
    %v2403 = vpop.permute.xlu0 %2402
    %2404 = vrot.lane.b32.xlu0 %v2382, 112
    %v2405 = vpop.permute.xlu0 %2404
    %2406 = vrot.lane.b32.xlu0 %v2399, 112
    %v2407 = vpop.permute.xlu0 %2406
    %v2408 = vrot.slane %v2401, 6
    %v2409 = vrot.slane %v2403, 6
    %v2410 = vrot.slane %v2405, 6
    %v2411 = vrot.slane %v2407, 6
    %vm2412 = vcmask 916480
    %v2413 = vsel %vm2412, %v2408, %v2401
    %v2414 = vsel %vm956, %v2408, %v2409
    %v2415 = vsel %vm2412, %v2414, %v2403
    %v2416 = vsel %vm956, %v2409, %v2410
    %v2417 = vsel %vm2412, %v2416, %v2405
    %v2418 = vsel %vm956, %v2410, %v2411
    %v2419 = vsel %vm2412, %v2418, %v2407
    %v2425 = vmul.f32 %v1464, %v2413
    %v2426 = vmul.f32 %v1465, %v2415
    %v2427 = vmul.f32 %v1466, %v2417
    %v2428 = vmul.f32 %v1467, %v2419
    %v2429 = vmul.f32 %v1468, %v2411
    %2431 = vrot.lane.b32.xlu0 %v2425, 127
    %v2432 = vpop.permute.xlu0 %2431
    %v2433 = vrot.slane %v2432, 2
    %vm2434 = vcmask 1039360
    %v2435 = vsel %vm2434, %v2432, %v2433
    %v2437 = vadd.f32 %v1666, %v2435
    %2439 = vrot.lane.b32.xlu0 %v2426, 127
    %v2440 = vpop.permute.xlu0 %2439
    %v2441 = vrot.slane %v2432, 4
    %v2442 = vrot.slane %v2440, 4
    %v2443 = vrot.slane %v2432, 6
    %v2444 = vrot.slane %v2440, 6
    %v2445 = vsel %vm1645, %v2441, %v2442
    %v2446 = vsel %vm956, %v2443, %v2444
    %v2447 = vsel %vm2434, %v2445, %v2446
    %v2449 = vadd.f32 %v2437, %v2447
    %v2450 = vrot.slane %v2440, 2
    %v2451 = vsel %vm2434, %v2440, %v2450
    %v2453 = vadd.f32 %v2449, %v2451
    %2455 = vrot.lane.b32.xlu0 %v2427, 127
    %v2456 = vpop.permute.xlu0 %2455
    %v2457 = vrot.slane %v2456, 4
    %v2458 = vrot.slane %v2456, 6
    %v2459 = vsel %vm1645, %v2442, %v2457
    %v2460 = vsel %vm956, %v2444, %v2458
    %v2461 = vsel %vm2434, %v2459, %v2460
    %v2463 = vadd.f32 %v2453, %v2461
    %v2464 = vrot.slane %v2456, 2
    %v2465 = vsel %vm2434, %v2456, %v2464
    %v2467 = vadd.f32 %v2463, %v2465
    %2469 = vrot.lane.b32.xlu0 %v2428, 127
    %v2470 = vpop.permute.xlu0 %2469
    %v2471 = vrot.slane %v2470, 4
    %v2472 = vrot.slane %v2470, 6
    %v2473 = vsel %vm1645, %v2457, %v2471
    %v2474 = vsel %vm956, %v2458, %v2472
    %v2475 = vsel %vm2434, %v2473, %v2474
    %v2477 = vadd.f32 %v2467, %v2475
    %v2478 = vrot.slane %v2470, 2
    %v2479 = vsel %vm2434, %v2470, %v2478
    %v2481 = vadd.f32 %v2477, %v2479
    %2483 = vrot.lane.b32.xlu0 %v2429, 127
    %v2484 = vpop.permute.xlu0 %2483
    %v2485 = vrot.slane %v2484, 4
    %v2486 = vrot.slane %v2484, 6
    %v2487 = vsel %vm1645, %v2471, %v2485
    %v2488 = vsel %vm956, %v2472, %v2486
    %v2489 = vsel %vm2434, %v2487, %v2488
    %v2491 = vadd.f32 %v2481, %v2489
    %s2492 = scalar_lea.vmem [#allocation8], 5
    %v2493 = vld [vmem:[%s2492] ss:$8 sm:$0xf]
    %v2494 = vld [vmem:[%s2492] ss:$8 sm:$0xf0]
    %v2495 = vor.u32 %v2493, %v2494
    %s2496 = scalar_lea.vmem [#allocation8], 69
    %v2497 = vld [vmem:[%s2496] ss:$8 sm:$0xf]
    %v2498 = vld [vmem:[%s2496] ss:$8 sm:$0xf0]
    %v2499 = vor.u32 %v2497, %v2498
    %v2502 = vlaneseq
    %v2503 = vshrl.u32 %v2502, 7
    %v2504 = vsub.s32 0, %v2503
    %v2505 = vrot.slane %v2495, %v2504
    %v2506 = vlaneseq
    %v2507 = vshrl.u32 %v2506, 7
    %v2508 = vsub.s32 1, %v2507
    %v2509 = vrot.slane %v2495, %v2508
    %v2510 = vlaneseq
    %v2511 = vshrl.u32 %v2510, 7
    %v2512 = vsub.s32 2, %v2511
    %v2513 = vrot.slane %v2495, %v2512
    %v2514 = vlaneseq
    %v2515 = vshrl.u32 %v2514, 7
    %v2516 = vsub.s32 3, %v2515
    %v2517 = vrot.slane %v2495, %v2516
    %v2518 = vlaneseq
    %v2519 = vshrl.u32 %v2518, 7
    %v2520 = vsub.s32 4, %v2519
    %v2521 = vrot.slane %v2495, %v2520
    %v2522 = vlaneseq
    %v2523 = vshrl.u32 %v2522, 7
    %v2524 = vsub.s32 5, %v2523
    %v2525 = vrot.slane %v2495, %v2524
    %v2526 = vlaneseq
    %v2527 = vshrl.u32 %v2526, 7
    %v2528 = vsub.s32 6, %v2527
    %v2529 = vrot.slane %v2495, %v2528
    %v2530 = vlaneseq
    %v2531 = vshrl.u32 %v2530, 7
    %v2532 = vsub.s32 7, %v2531
    %v2533 = vrot.slane %v2495, %v2532
    %v2534 = vlaneseq
    %v2535 = vshrl.u32 %v2534, 7
    %v2536 = vsub.s32 0, %v2535
    %v2537 = vrot.slane %v2499, %v2536
    %v2538 = vlaneseq
    %v2539 = vshrl.u32 %v2538, 7
    %v2540 = vsub.s32 1, %v2539
    %v2541 = vrot.slane %v2499, %v2540
    %v2542 = vlaneseq
    %v2543 = vshrl.u32 %v2542, 7
    %v2544 = vsub.s32 2, %v2543
    %v2545 = vrot.slane %v2499, %v2544
    %v2546 = vlaneseq
    %v2547 = vshrl.u32 %v2546, 7
    %v2548 = vsub.s32 3, %v2547
    %v2549 = vrot.slane %v2499, %v2548
    %v2550 = vlaneseq
    %v2551 = vshrl.u32 %v2550, 7
    %v2552 = vsub.s32 4, %v2551
    %v2553 = vrot.slane %v2499, %v2552
    %v2554 = vlaneseq
    %v2555 = vshrl.u32 %v2554, 7
    %v2556 = vsub.s32 5, %v2555
    %v2557 = vrot.slane %v2499, %v2556
    %v2558 = vlaneseq
    %v2559 = vshrl.u32 %v2558, 7
    %v2560 = vsub.s32 6, %v2559
    %v2561 = vrot.slane %v2499, %v2560
    %v2562 = vlaneseq
    %v2563 = vshrl.u32 %v2562, 7
    %v2564 = vsub.s32 7, %v2563
    %v2565 = vrot.slane %v2499, %v2564
    %v2566 = vcombine.low %v2505, %v2509
    %v2567 = vcombine.low %v2513, %v2517
    %v2569 = vunpack.c.l.s4 1983009808
    %v2570 = vunpack.c.0.s8 %v2569
    %v2571 = vlaneseq
    %v2572 = vshrl.u32 %v2571, 7
    %v2573 = vsub.s32 %v2570, %v2572
    %v2574 = vrot.slane %v2566, %v2573
    %v2576 = vunpack.c.l.s4 1983009808
    %v2577 = vunpack.c.0.s8 %v2576
    %v2578 = vlaneseq
    %v2579 = vshrl.u32 %v2578, 7
    %v2580 = vsub.s32 %v2577, %v2579
    %v2581 = vrot.slane %v2567, %v2580
    %v2582 = vcombine.low %v2574, %v2581
    %v2583 = vcombine.low %v2521, %v2525
    %v2584 = vcombine.low %v2529, %v2533
    %v2586 = vunpack.c.l.s4 1983009808
    %v2587 = vunpack.c.0.s8 %v2586
    %v2588 = vlaneseq
    %v2589 = vshrl.u32 %v2588, 7
    %v2590 = vsub.s32 %v2587, %v2589
    %v2591 = vrot.slane %v2583, %v2590
    %v2593 = vunpack.c.l.s4 1983009808
    %v2594 = vunpack.c.0.s8 %v2593
    %v2595 = vlaneseq
    %v2596 = vshrl.u32 %v2595, 7
    %v2597 = vsub.s32 %v2594, %v2596
    %v2598 = vrot.slane %v2584, %v2597
    %v2599 = vcombine.low %v2591, %v2598
    %v2600 = vcombine.low %v2537, %v2541
    %v2601 = vcombine.low %v2545, %v2549
    %v2603 = vunpack.c.l.s4 1983009808
    %v2604 = vunpack.c.0.s8 %v2603
    %v2605 = vlaneseq
    %v2606 = vshrl.u32 %v2605, 7
    %v2607 = vsub.s32 %v2604, %v2606
    %v2608 = vrot.slane %v2600, %v2607
    %v2610 = vunpack.c.l.s4 1983009808
    %v2611 = vunpack.c.0.s8 %v2610
    %v2612 = vlaneseq
    %v2613 = vshrl.u32 %v2612, 7
    %v2614 = vsub.s32 %v2611, %v2613
    %v2615 = vrot.slane %v2601, %v2614
    %v2616 = vcombine.low %v2608, %v2615
    %v2617 = vcombine.low %v2553, %v2557
    %v2618 = vcombine.low %v2561, %v2565
    %v2620 = vunpack.c.l.s4 1983009808
    %v2621 = vunpack.c.0.s8 %v2620
    %v2622 = vlaneseq
    %v2623 = vshrl.u32 %v2622, 7
    %v2624 = vsub.s32 %v2621, %v2623
    %v2625 = vrot.slane %v2617, %v2624
    %v2627 = vunpack.c.l.s4 1983009808
    %v2628 = vunpack.c.0.s8 %v2627
    %v2629 = vlaneseq
    %v2630 = vshrl.u32 %v2629, 7
    %v2631 = vsub.s32 %v2628, %v2630
    %v2632 = vrot.slane %v2618, %v2631
    %v2633 = vcombine.low %v2625, %v2632
    %2634 = vrot.lane.b32.xlu0 %v2582, 112
    %v2635 = vpop.permute.xlu0 %2634
    %2636 = vrot.lane.b32.xlu0 %v2599, 112
    %v2637 = vpop.permute.xlu0 %2636
    %2638 = vrot.lane.b32.xlu0 %v2616, 112
    %v2639 = vpop.permute.xlu0 %2638
    %2640 = vrot.lane.b32.xlu0 %v2633, 112
    %v2641 = vpop.permute.xlu0 %2640
    %v2642 = vrot.slane %v2635, 6
    %v2643 = vrot.slane %v2637, 6
    %v2644 = vrot.slane %v2639, 6
    %v2645 = vrot.slane %v2641, 6
    %v2646 = vsel %vm2412, %v2642, %v2635
    %v2647 = vsel %vm956, %v2642, %v2643
    %v2648 = vsel %vm2412, %v2647, %v2637
    %v2649 = vsel %vm956, %v2643, %v2644
    %v2650 = vsel %vm2412, %v2649, %v2639
    %v2651 = vsel %vm956, %v2644, %v2645
    %v2652 = vsel %vm2412, %v2651, %v2641
    %v2658 = vmul.f32 %v1464, %v2646
    %v2659 = vmul.f32 %v1465, %v2648
    %v2660 = vmul.f32 %v1466, %v2650
    %v2661 = vmul.f32 %v1467, %v2652
    %v2662 = vmul.f32 %v1468, %v2645
    %2664 = vrot.lane.b32.xlu0 %v2658, 127
    %v2665 = vpop.permute.xlu0 %2664
    %v2666 = vrot.slane %v2665, 2
    %v2667 = vsel %vm2434, %v2665, %v2666
    %v2669 = vadd.f32 %v1863, %v2667
    %2671 = vrot.lane.b32.xlu0 %v2659, 127
    %v2672 = vpop.permute.xlu0 %2671
    %v2673 = vrot.slane %v2665, 4
    %v2674 = vrot.slane %v2672, 4
    %v2675 = vrot.slane %v2665, 6
    %v2676 = vrot.slane %v2672, 6
    %v2677 = vsel %vm1645, %v2673, %v2674
    %v2678 = vsel %vm956, %v2675, %v2676
    %v2679 = vsel %vm2434, %v2677, %v2678
    %v2681 = vadd.f32 %v2669, %v2679
    %v2682 = vrot.slane %v2672, 2
    %v2683 = vsel %vm2434, %v2672, %v2682
    %v2685 = vadd.f32 %v2681, %v2683
    %2687 = vrot.lane.b32.xlu0 %v2660, 127
    %v2688 = vpop.permute.xlu0 %2687
    %v2689 = vrot.slane %v2688, 4
    %v2690 = vrot.slane %v2688, 6
    %v2691 = vsel %vm1645, %v2674, %v2689
    %v2692 = vsel %vm956, %v2676, %v2690
    %v2693 = vsel %vm2434, %v2691, %v2692
    %v2695 = vadd.f32 %v2685, %v2693
    %v2696 = vrot.slane %v2688, 2
    %v2697 = vsel %vm2434, %v2688, %v2696
    %v2699 = vadd.f32 %v2695, %v2697
    %2701 = vrot.lane.b32.xlu0 %v2661, 127
    %v2702 = vpop.permute.xlu0 %2701
    %v2703 = vrot.slane %v2702, 4
    %v2704 = vrot.slane %v2702, 6
    %v2705 = vsel %vm1645, %v2689, %v2703
    %v2706 = vsel %vm956, %v2690, %v2704
    %v2707 = vsel %vm2434, %v2705, %v2706
    %v2709 = vadd.f32 %v2699, %v2707
    %v2710 = vrot.slane %v2702, 2
    %v2711 = vsel %vm2434, %v2702, %v2710
    %v2713 = vadd.f32 %v2709, %v2711
    %2715 = vrot.lane.b32.xlu0 %v2662, 127
    %v2716 = vpop.permute.xlu0 %2715
    %v2717 = vrot.slane %v2716, 4
    %v2718 = vrot.slane %v2716, 6
    %v2719 = vsel %vm1645, %v2703, %v2717
    %v2720 = vsel %vm956, %v2704, %v2718
    %v2721 = vsel %vm2434, %v2719, %v2720
    %v2723 = vadd.f32 %v2713, %v2721
    %s2724 = scalar_lea.vmem [#allocation8], 6
    %v2725 = vld [vmem:[%s2724] ss:$8 sm:$0xf]
    %v2726 = vld [vmem:[%s2724] ss:$8 sm:$0xf0]
    %v2727 = vor.u32 %v2725, %v2726
    %s2728 = scalar_lea.vmem [#allocation8], 70
    %v2729 = vld [vmem:[%s2728] ss:$8 sm:$0xf]
    %v2730 = vld [vmem:[%s2728] ss:$8 sm:$0xf0]
    %v2731 = vor.u32 %v2729, %v2730
    %v2734 = vlaneseq
    %v2735 = vshrl.u32 %v2734, 7
    %v2736 = vsub.s32 0, %v2735
    %v2737 = vrot.slane %v2727, %v2736
    %v2738 = vlaneseq
    %v2739 = vshrl.u32 %v2738, 7
    %v2740 = vsub.s32 1, %v2739
    %v2741 = vrot.slane %v2727, %v2740
    %v2742 = vlaneseq
    %v2743 = vshrl.u32 %v2742, 7
    %v2744 = vsub.s32 2, %v2743
    %v2745 = vrot.slane %v2727, %v2744
    %v2746 = vlaneseq
    %v2747 = vshrl.u32 %v2746, 7
    %v2748 = vsub.s32 3, %v2747
    %v2749 = vrot.slane %v2727, %v2748
    %v2750 = vlaneseq
    %v2751 = vshrl.u32 %v2750, 7
    %v2752 = vsub.s32 4, %v2751
    %v2753 = vrot.slane %v2727, %v2752
    %v2754 = vlaneseq
    %v2755 = vshrl.u32 %v2754, 7
    %v2756 = vsub.s32 5, %v2755
    %v2757 = vrot.slane %v2727, %v2756
    %v2758 = vlaneseq
    %v2759 = vshrl.u32 %v2758, 7
    %v2760 = vsub.s32 6, %v2759
    %v2761 = vrot.slane %v2727, %v2760
    %v2762 = vlaneseq
    %v2763 = vshrl.u32 %v2762, 7
    %v2764 = vsub.s32 7, %v2763
    %v2765 = vrot.slane %v2727, %v2764
    %v2766 = vlaneseq
    %v2767 = vshrl.u32 %v2766, 7
    %v2768 = vsub.s32 0, %v2767
    %v2769 = vrot.slane %v2731, %v2768
    %v2770 = vlaneseq
    %v2771 = vshrl.u32 %v2770, 7
    %v2772 = vsub.s32 1, %v2771
    %v2773 = vrot.slane %v2731, %v2772
    %v2774 = vlaneseq
    %v2775 = vshrl.u32 %v2774, 7
    %v2776 = vsub.s32 2, %v2775
    %v2777 = vrot.slane %v2731, %v2776
    %v2778 = vlaneseq
    %v2779 = vshrl.u32 %v2778, 7
    %v2780 = vsub.s32 3, %v2779
    %v2781 = vrot.slane %v2731, %v2780
    %v2782 = vlaneseq
    %v2783 = vshrl.u32 %v2782, 7
    %v2784 = vsub.s32 4, %v2783
    %v2785 = vrot.slane %v2731, %v2784
    %v2786 = vlaneseq
    %v2787 = vshrl.u32 %v2786, 7
    %v2788 = vsub.s32 5, %v2787
    %v2789 = vrot.slane %v2731, %v2788
    %v2790 = vlaneseq
    %v2791 = vshrl.u32 %v2790, 7
    %v2792 = vsub.s32 6, %v2791
    %v2793 = vrot.slane %v2731, %v2792
    %v2794 = vlaneseq
    %v2795 = vshrl.u32 %v2794, 7
    %v2796 = vsub.s32 7, %v2795
    %v2797 = vrot.slane %v2731, %v2796
    %v2798 = vcombine.low %v2737, %v2741
    %v2799 = vcombine.low %v2745, %v2749
    %v2801 = vunpack.c.l.s4 1983009808
    %v2802 = vunpack.c.0.s8 %v2801
    %v2803 = vlaneseq
    %v2804 = vshrl.u32 %v2803, 7
    %v2805 = vsub.s32 %v2802, %v2804
    %v2806 = vrot.slane %v2798, %v2805
    %v2808 = vunpack.c.l.s4 1983009808
    %v2809 = vunpack.c.0.s8 %v2808
    %v2810 = vlaneseq
    %v2811 = vshrl.u32 %v2810, 7
    %v2812 = vsub.s32 %v2809, %v2811
    %v2813 = vrot.slane %v2799, %v2812
    %v2814 = vcombine.low %v2806, %v2813
    %v2815 = vcombine.low %v2753, %v2757
    %v2816 = vcombine.low %v2761, %v2765
    %v2818 = vunpack.c.l.s4 1983009808
    %v2819 = vunpack.c.0.s8 %v2818
    %v2820 = vlaneseq
    %v2821 = vshrl.u32 %v2820, 7
    %v2822 = vsub.s32 %v2819, %v2821
    %v2823 = vrot.slane %v2815, %v2822
    %v2825 = vunpack.c.l.s4 1983009808
    %v2826 = vunpack.c.0.s8 %v2825
    %v2827 = vlaneseq
    %v2828 = vshrl.u32 %v2827, 7
    %v2829 = vsub.s32 %v2826, %v2828
    %v2830 = vrot.slane %v2816, %v2829
    %v2831 = vcombine.low %v2823, %v2830
    %v2832 = vcombine.low %v2769, %v2773
    %v2833 = vcombine.low %v2777, %v2781
    %v2835 = vunpack.c.l.s4 1983009808
    %v2836 = vunpack.c.0.s8 %v2835
    %v2837 = vlaneseq
    %v2838 = vshrl.u32 %v2837, 7
    %v2839 = vsub.s32 %v2836, %v2838
    %v2840 = vrot.slane %v2832, %v2839
    %v2842 = vunpack.c.l.s4 1983009808
    %v2843 = vunpack.c.0.s8 %v2842
    %v2844 = vlaneseq
    %v2845 = vshrl.u32 %v2844, 7
    %v2846 = vsub.s32 %v2843, %v2845
    %v2847 = vrot.slane %v2833, %v2846
    %v2848 = vcombine.low %v2840, %v2847
    %v2849 = vcombine.low %v2785, %v2789
    %v2850 = vcombine.low %v2793, %v2797
    %v2852 = vunpack.c.l.s4 1983009808
    %v2853 = vunpack.c.0.s8 %v2852
    %v2854 = vlaneseq
    %v2855 = vshrl.u32 %v2854, 7
    %v2856 = vsub.s32 %v2853, %v2855
    %v2857 = vrot.slane %v2849, %v2856
    %v2859 = vunpack.c.l.s4 1983009808
    %v2860 = vunpack.c.0.s8 %v2859
    %v2861 = vlaneseq
    %v2862 = vshrl.u32 %v2861, 7
    %v2863 = vsub.s32 %v2860, %v2862
    %v2864 = vrot.slane %v2850, %v2863
    %v2865 = vcombine.low %v2857, %v2864
    %2866 = vrot.lane.b32.xlu0 %v2814, 112
    %v2867 = vpop.permute.xlu0 %2866
    %2868 = vrot.lane.b32.xlu0 %v2831, 112
    %v2869 = vpop.permute.xlu0 %2868
    %2870 = vrot.lane.b32.xlu0 %v2848, 112
    %v2871 = vpop.permute.xlu0 %2870
    %2872 = vrot.lane.b32.xlu0 %v2865, 112
    %v2873 = vpop.permute.xlu0 %2872
    %v2874 = vrot.slane %v2867, 6
    %v2875 = vrot.slane %v2869, 6
    %v2876 = vrot.slane %v2871, 6
    %v2877 = vrot.slane %v2873, 6
    %v2878 = vsel %vm2412, %v2874, %v2867
    %v2879 = vsel %vm956, %v2874, %v2875
    %v2880 = vsel %vm2412, %v2879, %v2869
    %v2881 = vsel %vm956, %v2875, %v2876
    %v2882 = vsel %vm2412, %v2881, %v2871
    %v2883 = vsel %vm956, %v2876, %v2877
    %v2884 = vsel %vm2412, %v2883, %v2873
    %v2890 = vmul.f32 %v1464, %v2878
    %v2891 = vmul.f32 %v1465, %v2880
    %v2892 = vmul.f32 %v1466, %v2882
    %v2893 = vmul.f32 %v1467, %v2884
    %v2894 = vmul.f32 %v1468, %v2877
    %2896 = vrot.lane.b32.xlu0 %v2890, 127
    %v2897 = vpop.permute.xlu0 %2896
    %v2898 = vrot.slane %v2897, 2
    %v2899 = vsel %vm2434, %v2897, %v2898
    %v2901 = vadd.f32 %v2060, %v2899
    %2903 = vrot.lane.b32.xlu0 %v2891, 127
    %v2904 = vpop.permute.xlu0 %2903
    %v2905 = vrot.slane %v2897, 4
    %v2906 = vrot.slane %v2904, 4
    %v2907 = vrot.slane %v2897, 6
    %v2908 = vrot.slane %v2904, 6
    %v2909 = vsel %vm1645, %v2905, %v2906
    %v2910 = vsel %vm956, %v2907, %v2908
    %v2911 = vsel %vm2434, %v2909, %v2910
    %v2913 = vadd.f32 %v2901, %v2911
    %v2914 = vrot.slane %v2904, 2
    %v2915 = vsel %vm2434, %v2904, %v2914
    %v2917 = vadd.f32 %v2913, %v2915
    %2919 = vrot.lane.b32.xlu0 %v2892, 127
    %v2920 = vpop.permute.xlu0 %2919
    %v2921 = vrot.slane %v2920, 4
    %v2922 = vrot.slane %v2920, 6
    %v2923 = vsel %vm1645, %v2906, %v2921
    %v2924 = vsel %vm956, %v2908, %v2922
    %v2925 = vsel %vm2434, %v2923, %v2924
    %v2927 = vadd.f32 %v2917, %v2925
    %v2928 = vrot.slane %v2920, 2
    %v2929 = vsel %vm2434, %v2920, %v2928
    %v2931 = vadd.f32 %v2927, %v2929
    %2933 = vrot.lane.b32.xlu0 %v2893, 127
    %v2934 = vpop.permute.xlu0 %2933
    %v2935 = vrot.slane %v2934, 4
    %v2936 = vrot.slane %v2934, 6
    %v2937 = vsel %vm1645, %v2921, %v2935
    %v2938 = vsel %vm956, %v2922, %v2936
    %v2939 = vsel %vm2434, %v2937, %v2938
    %v2941 = vadd.f32 %v2931, %v2939
    %v2942 = vrot.slane %v2934, 2
    %v2943 = vsel %vm2434, %v2934, %v2942
    %v2945 = vadd.f32 %v2941, %v2943
    %2947 = vrot.lane.b32.xlu0 %v2894, 127
    %v2948 = vpop.permute.xlu0 %2947
    %v2949 = vrot.slane %v2948, 4
    %v2950 = vrot.slane %v2948, 6
    %v2951 = vsel %vm1645, %v2935, %v2949
    %v2952 = vsel %vm956, %v2936, %v2950
    %v2953 = vsel %vm2434, %v2951, %v2952
    %v2955 = vadd.f32 %v2945, %v2953
    %s2956 = scalar_lea.vmem [#allocation8], 7
    %v2957 = vld [vmem:[%s2956] ss:$8 sm:$0xf]
    %v2958 = vld [vmem:[%s2956] ss:$8 sm:$0xf0]
    %v2959 = vor.u32 %v2957, %v2958
    %s2960 = scalar_lea.vmem [#allocation8], 71
    %v2961 = vld [vmem:[%s2960] ss:$8 sm:$0xf]
    %v2962 = vld [vmem:[%s2960] ss:$8 sm:$0xf0]
    %v2963 = vor.u32 %v2961, %v2962
    %v2966 = vlaneseq
    %v2967 = vshrl.u32 %v2966, 7
    %v2968 = vsub.s32 0, %v2967
    %v2969 = vrot.slane %v2959, %v2968
    %v2970 = vlaneseq
    %v2971 = vshrl.u32 %v2970, 7
    %v2972 = vsub.s32 1, %v2971
    %v2973 = vrot.slane %v2959, %v2972
    %v2974 = vlaneseq
    %v2975 = vshrl.u32 %v2974, 7
    %v2976 = vsub.s32 2, %v2975
    %v2977 = vrot.slane %v2959, %v2976
    %v2978 = vlaneseq
    %v2979 = vshrl.u32 %v2978, 7
    %v2980 = vsub.s32 3, %v2979
    %v2981 = vrot.slane %v2959, %v2980
    %v2982 = vlaneseq
    %v2983 = vshrl.u32 %v2982, 7
    %v2984 = vsub.s32 4, %v2983
    %v2985 = vrot.slane %v2959, %v2984
    %v2986 = vlaneseq
    %v2987 = vshrl.u32 %v2986, 7
    %v2988 = vsub.s32 5, %v2987
    %v2989 = vrot.slane %v2959, %v2988
    %v2990 = vlaneseq
    %v2991 = vshrl.u32 %v2990, 7
    %v2992 = vsub.s32 6, %v2991
    %v2993 = vrot.slane %v2959, %v2992
    %v2994 = vlaneseq
    %v2995 = vshrl.u32 %v2994, 7
    %v2996 = vsub.s32 7, %v2995
    %v2997 = vrot.slane %v2959, %v2996
    %v2998 = vlaneseq
    %v2999 = vshrl.u32 %v2998, 7
    %v3000 = vsub.s32 0, %v2999
    %v3001 = vrot.slane %v2963, %v3000
    %v3002 = vlaneseq
    %v3003 = vshrl.u32 %v3002, 7
    %v3004 = vsub.s32 1, %v3003
    %v3005 = vrot.slane %v2963, %v3004
    %v3006 = vlaneseq
    %v3007 = vshrl.u32 %v3006, 7
    %v3008 = vsub.s32 2, %v3007
    %v3009 = vrot.slane %v2963, %v3008
    %v3010 = vlaneseq
    %v3011 = vshrl.u32 %v3010, 7
    %v3012 = vsub.s32 3, %v3011
    %v3013 = vrot.slane %v2963, %v3012
    %v3014 = vlaneseq
    %v3015 = vshrl.u32 %v3014, 7
    %v3016 = vsub.s32 4, %v3015
    %v3017 = vrot.slane %v2963, %v3016
    %v3018 = vlaneseq
    %v3019 = vshrl.u32 %v3018, 7
    %v3020 = vsub.s32 5, %v3019
    %v3021 = vrot.slane %v2963, %v3020
    %v3022 = vlaneseq
    %v3023 = vshrl.u32 %v3022, 7
    %v3024 = vsub.s32 6, %v3023
    %v3025 = vrot.slane %v2963, %v3024
    %v3026 = vlaneseq
    %v3027 = vshrl.u32 %v3026, 7
    %v3028 = vsub.s32 7, %v3027
    %v3029 = vrot.slane %v2963, %v3028
    %v3030 = vcombine.low %v2969, %v2973
    %v3031 = vcombine.low %v2977, %v2981
    %v3033 = vunpack.c.l.s4 1983009808
    %v3034 = vunpack.c.0.s8 %v3033
    %v3035 = vlaneseq
    %v3036 = vshrl.u32 %v3035, 7
    %v3037 = vsub.s32 %v3034, %v3036
    %v3038 = vrot.slane %v3030, %v3037
    %v3040 = vunpack.c.l.s4 1983009808
    %v3041 = vunpack.c.0.s8 %v3040
    %v3042 = vlaneseq
    %v3043 = vshrl.u32 %v3042, 7
    %v3044 = vsub.s32 %v3041, %v3043
    %v3045 = vrot.slane %v3031, %v3044
    %v3046 = vcombine.low %v3038, %v3045
    %v3047 = vcombine.low %v2985, %v2989
    %v3048 = vcombine.low %v2993, %v2997
    %v3050 = vunpack.c.l.s4 1983009808
    %v3051 = vunpack.c.0.s8 %v3050
    %v3052 = vlaneseq
    %v3053 = vshrl.u32 %v3052, 7
    %v3054 = vsub.s32 %v3051, %v3053
    %v3055 = vrot.slane %v3047, %v3054
    %v3057 = vunpack.c.l.s4 1983009808
    %v3058 = vunpack.c.0.s8 %v3057
    %v3059 = vlaneseq
    %v3060 = vshrl.u32 %v3059, 7
    %v3061 = vsub.s32 %v3058, %v3060
    %v3062 = vrot.slane %v3048, %v3061
    %v3063 = vcombine.low %v3055, %v3062
    %v3064 = vcombine.low %v3001, %v3005
    %v3065 = vcombine.low %v3009, %v3013
    %v3067 = vunpack.c.l.s4 1983009808
    %v3068 = vunpack.c.0.s8 %v3067
    %v3069 = vlaneseq
    %v3070 = vshrl.u32 %v3069, 7
    %v3071 = vsub.s32 %v3068, %v3070
    %v3072 = vrot.slane %v3064, %v3071
    %v3074 = vunpack.c.l.s4 1983009808
    %v3075 = vunpack.c.0.s8 %v3074
    %v3076 = vlaneseq
    %v3077 = vshrl.u32 %v3076, 7
    %v3078 = vsub.s32 %v3075, %v3077
    %v3079 = vrot.slane %v3065, %v3078
    %v3080 = vcombine.low %v3072, %v3079
    %v3081 = vcombine.low %v3017, %v3021
    %v3082 = vcombine.low %v3025, %v3029
    %v3084 = vunpack.c.l.s4 1983009808
    %v3085 = vunpack.c.0.s8 %v3084
    %v3086 = vlaneseq
    %v3087 = vshrl.u32 %v3086, 7
    %v3088 = vsub.s32 %v3085, %v3087
    %v3089 = vrot.slane %v3081, %v3088
    %v3091 = vunpack.c.l.s4 1983009808
    %v3092 = vunpack.c.0.s8 %v3091
    %v3093 = vlaneseq
    %v3094 = vshrl.u32 %v3093, 7
    %v3095 = vsub.s32 %v3092, %v3094
    %v3096 = vrot.slane %v3082, %v3095
    %v3097 = vcombine.low %v3089, %v3096
    %3098 = vrot.lane.b32.xlu0 %v3046, 112
    %v3099 = vpop.permute.xlu0 %3098
    %3100 = vrot.lane.b32.xlu0 %v3063, 112
    %v3101 = vpop.permute.xlu0 %3100
    %3102 = vrot.lane.b32.xlu0 %v3080, 112
    %v3103 = vpop.permute.xlu0 %3102
    %3104 = vrot.lane.b32.xlu0 %v3097, 112
    %v3105 = vpop.permute.xlu0 %3104
    %v3106 = vrot.slane %v3099, 6
    %v3107 = vrot.slane %v3101, 6
    %v3108 = vrot.slane %v3103, 6
    %v3109 = vrot.slane %v3105, 6
    %v3110 = vsel %vm2412, %v3106, %v3099
    %v3111 = vsel %vm956, %v3106, %v3107
    %v3112 = vsel %vm2412, %v3111, %v3101
    %v3113 = vsel %vm956, %v3107, %v3108
    %v3114 = vsel %vm2412, %v3113, %v3103
    %v3115 = vsel %vm956, %v3108, %v3109
    %v3116 = vsel %vm2412, %v3115, %v3105
    %v3122 = vmul.f32 %v1464, %v3110
    %v3123 = vmul.f32 %v1465, %v3112
    %v3124 = vmul.f32 %v1466, %v3114
    %v3125 = vmul.f32 %v1467, %v3116
    %v3126 = vmul.f32 %v1468, %v3109
    %3128 = vrot.lane.b32.xlu0 %v3122, 127
    %v3129 = vpop.permute.xlu0 %3128
    %v3130 = vrot.slane %v3129, 2
    %v3131 = vsel %vm2434, %v3129, %v3130
    %v3133 = vadd.f32 %v2257, %v3131
    %3135 = vrot.lane.b32.xlu0 %v3123, 127
    %v3136 = vpop.permute.xlu0 %3135
    %v3137 = vrot.slane %v3129, 4
    %v3138 = vrot.slane %v3136, 4
    %v3139 = vrot.slane %v3129, 6
    %v3140 = vrot.slane %v3136, 6
    %v3141 = vsel %vm1645, %v3137, %v3138
    %v3142 = vsel %vm956, %v3139, %v3140
    %v3143 = vsel %vm2434, %v3141, %v3142
    %v3145 = vadd.f32 %v3133, %v3143
    %v3146 = vrot.slane %v3136, 2
    %v3147 = vsel %vm2434, %v3136, %v3146
    %v3149 = vadd.f32 %v3145, %v3147
    %3151 = vrot.lane.b32.xlu0 %v3124, 127
    %v3152 = vpop.permute.xlu0 %3151
    %v3153 = vrot.slane %v3152, 4
    %v3154 = vrot.slane %v3152, 6
    %v3155 = vsel %vm1645, %v3138, %v3153
    %v3156 = vsel %vm956, %v3140, %v3154
    %v3157 = vsel %vm2434, %v3155, %v3156
    %v3159 = vadd.f32 %v3149, %v3157
    %v3160 = vrot.slane %v3152, 2
    %v3161 = vsel %vm2434, %v3152, %v3160
    %v3163 = vadd.f32 %v3159, %v3161
    %3165 = vrot.lane.b32.xlu0 %v3125, 127
    %v3166 = vpop.permute.xlu0 %3165
    %v3167 = vrot.slane %v3166, 4
    %v3168 = vrot.slane %v3166, 6
    %v3169 = vsel %vm1645, %v3153, %v3167
    %v3170 = vsel %vm956, %v3154, %v3168
    %v3171 = vsel %vm2434, %v3169, %v3170
    %v3173 = vadd.f32 %v3163, %v3171
    %v3174 = vrot.slane %v3166, 2
    %v3175 = vsel %vm2434, %v3166, %v3174
    %v3177 = vadd.f32 %v3173, %v3175
    %3179 = vrot.lane.b32.xlu0 %v3126, 127
    %v3180 = vpop.permute.xlu0 %3179
    %v3181 = vrot.slane %v3180, 4
    %v3182 = vrot.slane %v3180, 6
    %v3183 = vsel %vm1645, %v3167, %v3181
    %v3184 = vsel %vm956, %v3168, %v3182
    %v3185 = vsel %vm2434, %v3183, %v3184
    %v3187 = vadd.f32 %v3177, %v3185
    %s3188 = scalar_lea.vmem [#allocation8], 128
    %v3189 = vld [vmem:[%s3188] ss:$8 sm:$0xf]
    %v3190 = vld [vmem:[%s3188] ss:$8 sm:$0xf0]
    %v3191 = vor.u32 %v3189, %v3190
    %s3192 = scalar_lea.vmem [#allocation8], 192
    %v3193 = vld [vmem:[%s3192] ss:$8 sm:$0xf]
    %v3194 = vld [vmem:[%s3192] ss:$8 sm:$0xf0]
    %v3195 = vor.u32 %v3193, %v3194
    %v3198 = vlaneseq
    %v3199 = vshrl.u32 %v3198, 7
    %v3200 = vsub.s32 0, %v3199
    %v3201 = vrot.slane %v3191, %v3200
    %v3202 = vlaneseq
    %v3203 = vshrl.u32 %v3202, 7
    %v3204 = vsub.s32 1, %v3203
    %v3205 = vrot.slane %v3191, %v3204
    %v3206 = vlaneseq
    %v3207 = vshrl.u32 %v3206, 7
    %v3208 = vsub.s32 2, %v3207
    %v3209 = vrot.slane %v3191, %v3208
    %v3210 = vlaneseq
    %v3211 = vshrl.u32 %v3210, 7
    %v3212 = vsub.s32 3, %v3211
    %v3213 = vrot.slane %v3191, %v3212
    %v3214 = vlaneseq
    %v3215 = vshrl.u32 %v3214, 7
    %v3216 = vsub.s32 4, %v3215
    %v3217 = vrot.slane %v3191, %v3216
    %v3218 = vlaneseq
    %v3219 = vshrl.u32 %v3218, 7
    %v3220 = vsub.s32 5, %v3219
    %v3221 = vrot.slane %v3191, %v3220
    %v3222 = vlaneseq
    %v3223 = vshrl.u32 %v3222, 7
    %v3224 = vsub.s32 6, %v3223
    %v3225 = vrot.slane %v3191, %v3224
    %v3226 = vlaneseq
    %v3227 = vshrl.u32 %v3226, 7
    %v3228 = vsub.s32 7, %v3227
    %v3229 = vrot.slane %v3191, %v3228
    %v3230 = vlaneseq
    %v3231 = vshrl.u32 %v3230, 7
    %v3232 = vsub.s32 0, %v3231
    %v3233 = vrot.slane %v3195, %v3232
    %v3234 = vlaneseq
    %v3235 = vshrl.u32 %v3234, 7
    %v3236 = vsub.s32 1, %v3235
    %v3237 = vrot.slane %v3195, %v3236
    %v3238 = vlaneseq
    %v3239 = vshrl.u32 %v3238, 7
    %v3240 = vsub.s32 2, %v3239
    %v3241 = vrot.slane %v3195, %v3240
    %v3242 = vlaneseq
    %v3243 = vshrl.u32 %v3242, 7
    %v3244 = vsub.s32 3, %v3243
    %v3245 = vrot.slane %v3195, %v3244
    %v3246 = vlaneseq
    %v3247 = vshrl.u32 %v3246, 7
    %v3248 = vsub.s32 4, %v3247
    %v3249 = vrot.slane %v3195, %v3248
    %v3250 = vlaneseq
    %v3251 = vshrl.u32 %v3250, 7
    %v3252 = vsub.s32 5, %v3251
    %v3253 = vrot.slane %v3195, %v3252
    %v3254 = vlaneseq
    %v3255 = vshrl.u32 %v3254, 7
    %v3256 = vsub.s32 6, %v3255
    %v3257 = vrot.slane %v3195, %v3256
    %v3258 = vlaneseq
    %v3259 = vshrl.u32 %v3258, 7
    %v3260 = vsub.s32 7, %v3259
    %v3261 = vrot.slane %v3195, %v3260
    %v3262 = vcombine.low %v3201, %v3205
    %v3263 = vcombine.low %v3209, %v3213
    %v3265 = vunpack.c.l.s4 1983009808
    %v3266 = vunpack.c.0.s8 %v3265
    %v3267 = vlaneseq
    %v3268 = vshrl.u32 %v3267, 7
    %v3269 = vsub.s32 %v3266, %v3268
    %v3270 = vrot.slane %v3262, %v3269
    %v3272 = vunpack.c.l.s4 1983009808
    %v3273 = vunpack.c.0.s8 %v3272
    %v3274 = vlaneseq
    %v3275 = vshrl.u32 %v3274, 7
    %v3276 = vsub.s32 %v3273, %v3275
    %v3277 = vrot.slane %v3263, %v3276
    %v3278 = vcombine.low %v3270, %v3277
    %v3279 = vcombine.low %v3217, %v3221
    %v3280 = vcombine.low %v3225, %v3229
    %v3282 = vunpack.c.l.s4 1983009808
    %v3283 = vunpack.c.0.s8 %v3282
    %v3284 = vlaneseq
    %v3285 = vshrl.u32 %v3284, 7
    %v3286 = vsub.s32 %v3283, %v3285
    %v3287 = vrot.slane %v3279, %v3286
    %v3289 = vunpack.c.l.s4 1983009808
    %v3290 = vunpack.c.0.s8 %v3289
    %v3291 = vlaneseq
    %v3292 = vshrl.u32 %v3291, 7
    %v3293 = vsub.s32 %v3290, %v3292
    %v3294 = vrot.slane %v3280, %v3293
    %v3295 = vcombine.low %v3287, %v3294
    %v3296 = vcombine.low %v3233, %v3237
    %v3297 = vcombine.low %v3241, %v3245
    %v3299 = vunpack.c.l.s4 1983009808
    %v3300 = vunpack.c.0.s8 %v3299
    %v3301 = vlaneseq
    %v3302 = vshrl.u32 %v3301, 7
    %v3303 = vsub.s32 %v3300, %v3302
    %v3304 = vrot.slane %v3296, %v3303
    %v3306 = vunpack.c.l.s4 1983009808
    %v3307 = vunpack.c.0.s8 %v3306
    %v3308 = vlaneseq
    %v3309 = vshrl.u32 %v3308, 7
    %v3310 = vsub.s32 %v3307, %v3309
    %v3311 = vrot.slane %v3297, %v3310
    %v3312 = vcombine.low %v3304, %v3311
    %v3313 = vcombine.low %v3249, %v3253
    %v3314 = vcombine.low %v3257, %v3261
    %v3316 = vunpack.c.l.s4 1983009808
    %v3317 = vunpack.c.0.s8 %v3316
    %v3318 = vlaneseq
    %v3319 = vshrl.u32 %v3318, 7
    %v3320 = vsub.s32 %v3317, %v3319
    %v3321 = vrot.slane %v3313, %v3320
    %v3323 = vunpack.c.l.s4 1983009808
    %v3324 = vunpack.c.0.s8 %v3323
    %v3325 = vlaneseq
    %v3326 = vshrl.u32 %v3325, 7
    %v3327 = vsub.s32 %v3324, %v3326
    %v3328 = vrot.slane %v3314, %v3327
    %v3329 = vcombine.low %v3321, %v3328
    %3330 = vrot.lane.b32.xlu0 %v3278, 113
    %v3331 = vpop.permute.xlu0 %3330
    %3332 = vrot.lane.b32.xlu0 %v3295, 113
    %v3333 = vpop.permute.xlu0 %3332
    %3334 = vrot.lane.b32.xlu0 %v3312, 113
    %v3335 = vpop.permute.xlu0 %3334
    %3336 = vrot.lane.b32.xlu0 %v3329, 113
    %v3337 = vpop.permute.xlu0 %3336
    %v3338 = vrot.slane %v3331, 6
    %v3339 = vrot.slane %v3333, 6
    %v3340 = vrot.slane %v3335, 6
    %v3341 = vrot.slane %v3337, 6
    %vm3342 = vcmask 924672
    %v3343 = vsel %vm3342, %v3338, %v3331
    %v3344 = vsel %vm956, %v3338, %v3339
    %v3345 = vsel %vm3342, %v3344, %v3333
    %v3346 = vsel %vm956, %v3339, %v3340
    %v3347 = vsel %vm3342, %v3346, %v3335
    %v3348 = vsel %vm956, %v3340, %v3341
    %v3349 = vsel %vm3342, %v3348, %v3337
    %v3355 = vmul.f32 %v1464, %v3343
    %v3356 = vmul.f32 %v1465, %v3345
    %v3357 = vmul.f32 %v1466, %v3347
    %v3358 = vmul.f32 %v1467, %v3349
    %v3359 = vmul.f32 %v1468, %v3341
    %3361 = vrot.lane.b32.xlu0 %v3355, 126
    %v3362 = vpop.permute.xlu0 %3361
    %v3363 = vrot.slane %v3362, 2
    %vm3364 = vcmask 1031168
    %v3365 = vsel %vm3364, %v3362, %v3363
    %v3367 = vadd.f32 %v2491, %v3365
    %3369 = vrot.lane.b32.xlu0 %v3356, 126
    %v3370 = vpop.permute.xlu0 %3369
    %v3371 = vrot.slane %v3362, 4
    %v3372 = vrot.slane %v3370, 4
    %v3373 = vrot.slane %v3362, 6
    %v3374 = vrot.slane %v3370, 6
    %v3375 = vsel %vm1645, %v3371, %v3372
    %v3376 = vsel %vm956, %v3373, %v3374
    %v3377 = vsel %vm3364, %v3375, %v3376
    %v3379 = vadd.f32 %v3367, %v3377
    %v3380 = vrot.slane %v3370, 2
    %v3381 = vsel %vm3364, %v3370, %v3380
    %v3383 = vadd.f32 %v3379, %v3381
    %3385 = vrot.lane.b32.xlu0 %v3357, 126
    %v3386 = vpop.permute.xlu0 %3385
    %v3387 = vrot.slane %v3386, 4
    %v3388 = vrot.slane %v3386, 6
    %v3389 = vsel %vm1645, %v3372, %v3387
    %v3390 = vsel %vm956, %v3374, %v3388
    %v3391 = vsel %vm3364, %v3389, %v3390
    %v3393 = vadd.f32 %v3383, %v3391
    %v3394 = vrot.slane %v3386, 2
    %v3395 = vsel %vm3364, %v3386, %v3394
    %v3397 = vadd.f32 %v3393, %v3395
    %3399 = vrot.lane.b32.xlu0 %v3358, 126
    %v3400 = vpop.permute.xlu0 %3399
    %v3401 = vrot.slane %v3400, 4
    %v3402 = vrot.slane %v3400, 6
    %v3403 = vsel %vm1645, %v3387, %v3401
    %v3404 = vsel %vm956, %v3388, %v3402
    %v3405 = vsel %vm3364, %v3403, %v3404
    %v3407 = vadd.f32 %v3397, %v3405
    %v3408 = vrot.slane %v3400, 2
    %v3409 = vsel %vm3364, %v3400, %v3408
    %v3411 = vadd.f32 %v3407, %v3409
    %3413 = vrot.lane.b32.xlu0 %v3359, 126
    %v3414 = vpop.permute.xlu0 %3413
    %v3415 = vrot.slane %v3414, 4
    %v3416 = vrot.slane %v3414, 6
    %v3417 = vsel %vm1645, %v3401, %v3415
    %v3418 = vsel %vm956, %v3402, %v3416
    %v3419 = vsel %vm3364, %v3417, %v3418
    %v3421 = vadd.f32 %v3411, %v3419
    %s3422 = scalar_lea.vmem [#allocation8], 129
    %v3423 = vld [vmem:[%s3422] ss:$8 sm:$0xf]
    %v3424 = vld [vmem:[%s3422] ss:$8 sm:$0xf0]
    %v3425 = vor.u32 %v3423, %v3424
    %s3426 = scalar_lea.vmem [#allocation8], 193
    %v3427 = vld [vmem:[%s3426] ss:$8 sm:$0xf]
    %v3428 = vld [vmem:[%s3426] ss:$8 sm:$0xf0]
    %v3429 = vor.u32 %v3427, %v3428
    %v3432 = vlaneseq
    %v3433 = vshrl.u32 %v3432, 7
    %v3434 = vsub.s32 0, %v3433
    %v3435 = vrot.slane %v3425, %v3434
    %v3436 = vlaneseq
    %v3437 = vshrl.u32 %v3436, 7
    %v3438 = vsub.s32 1, %v3437
    %v3439 = vrot.slane %v3425, %v3438
    %v3440 = vlaneseq
    %v3441 = vshrl.u32 %v3440, 7
    %v3442 = vsub.s32 2, %v3441
    %v3443 = vrot.slane %v3425, %v3442
    %v3444 = vlaneseq
    %v3445 = vshrl.u32 %v3444, 7
    %v3446 = vsub.s32 3, %v3445
    %v3447 = vrot.slane %v3425, %v3446
    %v3448 = vlaneseq
    %v3449 = vshrl.u32 %v3448, 7
    %v3450 = vsub.s32 4, %v3449
    %v3451 = vrot.slane %v3425, %v3450
    %v3452 = vlaneseq
    %v3453 = vshrl.u32 %v3452, 7
    %v3454 = vsub.s32 5, %v3453
    %v3455 = vrot.slane %v3425, %v3454
    %v3456 = vlaneseq
    %v3457 = vshrl.u32 %v3456, 7
    %v3458 = vsub.s32 6, %v3457
    %v3459 = vrot.slane %v3425, %v3458
    %v3460 = vlaneseq
    %v3461 = vshrl.u32 %v3460, 7
    %v3462 = vsub.s32 7, %v3461
    %v3463 = vrot.slane %v3425, %v3462
    %v3464 = vlaneseq
    %v3465 = vshrl.u32 %v3464, 7
    %v3466 = vsub.s32 0, %v3465
    %v3467 = vrot.slane %v3429, %v3466
    %v3468 = vlaneseq
    %v3469 = vshrl.u32 %v3468, 7
    %v3470 = vsub.s32 1, %v3469
    %v3471 = vrot.slane %v3429, %v3470
    %v3472 = vlaneseq
    %v3473 = vshrl.u32 %v3472, 7
    %v3474 = vsub.s32 2, %v3473
    %v3475 = vrot.slane %v3429, %v3474
    %v3476 = vlaneseq
    %v3477 = vshrl.u32 %v3476, 7
    %v3478 = vsub.s32 3, %v3477
    %v3479 = vrot.slane %v3429, %v3478
    %v3480 = vlaneseq
    %v3481 = vshrl.u32 %v3480, 7
    %v3482 = vsub.s32 4, %v3481
    %v3483 = vrot.slane %v3429, %v3482
    %v3484 = vlaneseq
    %v3485 = vshrl.u32 %v3484, 7
    %v3486 = vsub.s32 5, %v3485
    %v3487 = vrot.slane %v3429, %v3486
    %v3488 = vlaneseq
    %v3489 = vshrl.u32 %v3488, 7
    %v3490 = vsub.s32 6, %v3489
    %v3491 = vrot.slane %v3429, %v3490
    %v3492 = vlaneseq
    %v3493 = vshrl.u32 %v3492, 7
    %v3494 = vsub.s32 7, %v3493
    %v3495 = vrot.slane %v3429, %v3494
    %v3496 = vcombine.low %v3435, %v3439
    %v3497 = vcombine.low %v3443, %v3447
    %v3499 = vunpack.c.l.s4 1983009808
    %v3500 = vunpack.c.0.s8 %v3499
    %v3501 = vlaneseq
    %v3502 = vshrl.u32 %v3501, 7
    %v3503 = vsub.s32 %v3500, %v3502
    %v3504 = vrot.slane %v3496, %v3503
    %v3506 = vunpack.c.l.s4 1983009808
    %v3507 = vunpack.c.0.s8 %v3506
    %v3508 = vlaneseq
    %v3509 = vshrl.u32 %v3508, 7
    %v3510 = vsub.s32 %v3507, %v3509
    %v3511 = vrot.slane %v3497, %v3510
    %v3512 = vcombine.low %v3504, %v3511
    %v3513 = vcombine.low %v3451, %v3455
    %v3514 = vcombine.low %v3459, %v3463
    %v3516 = vunpack.c.l.s4 1983009808
    %v3517 = vunpack.c.0.s8 %v3516
    %v3518 = vlaneseq
    %v3519 = vshrl.u32 %v3518, 7
    %v3520 = vsub.s32 %v3517, %v3519
    %v3521 = vrot.slane %v3513, %v3520
    %v3523 = vunpack.c.l.s4 1983009808
    %v3524 = vunpack.c.0.s8 %v3523
    %v3525 = vlaneseq
    %v3526 = vshrl.u32 %v3525, 7
    %v3527 = vsub.s32 %v3524, %v3526
    %v3528 = vrot.slane %v3514, %v3527
    %v3529 = vcombine.low %v3521, %v3528
    %v3530 = vcombine.low %v3467, %v3471
    %v3531 = vcombine.low %v3475, %v3479
    %v3533 = vunpack.c.l.s4 1983009808
    %v3534 = vunpack.c.0.s8 %v3533
    %v3535 = vlaneseq
    %v3536 = vshrl.u32 %v3535, 7
    %v3537 = vsub.s32 %v3534, %v3536
    %v3538 = vrot.slane %v3530, %v3537
    %v3540 = vunpack.c.l.s4 1983009808
    %v3541 = vunpack.c.0.s8 %v3540
    %v3542 = vlaneseq
    %v3543 = vshrl.u32 %v3542, 7
    %v3544 = vsub.s32 %v3541, %v3543
    %v3545 = vrot.slane %v3531, %v3544
    %v3546 = vcombine.low %v3538, %v3545
    %v3547 = vcombine.low %v3483, %v3487
    %v3548 = vcombine.low %v3491, %v3495
    %v3550 = vunpack.c.l.s4 1983009808
    %v3551 = vunpack.c.0.s8 %v3550
    %v3552 = vlaneseq
    %v3553 = vshrl.u32 %v3552, 7
    %v3554 = vsub.s32 %v3551, %v3553
    %v3555 = vrot.slane %v3547, %v3554
    %v3557 = vunpack.c.l.s4 1983009808
    %v3558 = vunpack.c.0.s8 %v3557
    %v3559 = vlaneseq
    %v3560 = vshrl.u32 %v3559, 7
    %v3561 = vsub.s32 %v3558, %v3560
    %v3562 = vrot.slane %v3548, %v3561
    %v3563 = vcombine.low %v3555, %v3562
    %3564 = vrot.lane.b32.xlu0 %v3512, 113
    %v3565 = vpop.permute.xlu0 %3564
    %3566 = vrot.lane.b32.xlu0 %v3529, 113
    %v3567 = vpop.permute.xlu0 %3566
    %3568 = vrot.lane.b32.xlu0 %v3546, 113
    %v3569 = vpop.permute.xlu0 %3568
    %3570 = vrot.lane.b32.xlu0 %v3563, 113
    %v3571 = vpop.permute.xlu0 %3570
    %v3572 = vrot.slane %v3565, 6
    %v3573 = vrot.slane %v3567, 6
    %v3574 = vrot.slane %v3569, 6
    %v3575 = vrot.slane %v3571, 6
    %v3576 = vsel %vm3342, %v3572, %v3565
    %v3577 = vsel %vm956, %v3572, %v3573
    %v3578 = vsel %vm3342, %v3577, %v3567
    %v3579 = vsel %vm956, %v3573, %v3574
    %v3580 = vsel %vm3342, %v3579, %v3569
    %v3581 = vsel %vm956, %v3574, %v3575
    %v3582 = vsel %vm3342, %v3581, %v3571
    %v3588 = vmul.f32 %v1464, %v3576
    %v3589 = vmul.f32 %v1465, %v3578
    %v3590 = vmul.f32 %v1466, %v3580
    %v3591 = vmul.f32 %v1467, %v3582
    %v3592 = vmul.f32 %v1468, %v3575
    %3594 = vrot.lane.b32.xlu0 %v3588, 126
    %v3595 = vpop.permute.xlu0 %3594
    %v3596 = vrot.slane %v3595, 2
    %v3597 = vsel %vm3364, %v3595, %v3596
    %v3599 = vadd.f32 %v2723, %v3597
    %3601 = vrot.lane.b32.xlu0 %v3589, 126
    %v3602 = vpop.permute.xlu0 %3601
    %v3603 = vrot.slane %v3595, 4
    %v3604 = vrot.slane %v3602, 4
    %v3605 = vrot.slane %v3595, 6
    %v3606 = vrot.slane %v3602, 6
    %v3607 = vsel %vm1645, %v3603, %v3604
    %v3608 = vsel %vm956, %v3605, %v3606
    %v3609 = vsel %vm3364, %v3607, %v3608
    %v3611 = vadd.f32 %v3599, %v3609
    %v3612 = vrot.slane %v3602, 2
    %v3613 = vsel %vm3364, %v3602, %v3612
    %v3615 = vadd.f32 %v3611, %v3613
    %3617 = vrot.lane.b32.xlu0 %v3590, 126
    %v3618 = vpop.permute.xlu0 %3617
    %v3619 = vrot.slane %v3618, 4
    %v3620 = vrot.slane %v3618, 6
    %v3621 = vsel %vm1645, %v3604, %v3619
    %v3622 = vsel %vm956, %v3606, %v3620
    %v3623 = vsel %vm3364, %v3621, %v3622
    %v3625 = vadd.f32 %v3615, %v3623
    %v3626 = vrot.slane %v3618, 2
    %v3627 = vsel %vm3364, %v3618, %v3626
    %v3629 = vadd.f32 %v3625, %v3627
    %3631 = vrot.lane.b32.xlu0 %v3591, 126
    %v3632 = vpop.permute.xlu0 %3631
    %v3633 = vrot.slane %v3632, 4
    %v3634 = vrot.slane %v3632, 6
    %v3635 = vsel %vm1645, %v3619, %v3633
    %v3636 = vsel %vm956, %v3620, %v3634
    %v3637 = vsel %vm3364, %v3635, %v3636
    %v3639 = vadd.f32 %v3629, %v3637
    %v3640 = vrot.slane %v3632, 2
    %v3641 = vsel %vm3364, %v3632, %v3640
    %v3643 = vadd.f32 %v3639, %v3641
    %3645 = vrot.lane.b32.xlu0 %v3592, 126
    %v3646 = vpop.permute.xlu0 %3645
    %v3647 = vrot.slane %v3646, 4
    %v3648 = vrot.slane %v3646, 6
    %v3649 = vsel %vm1645, %v3633, %v3647
    %v3650 = vsel %vm956, %v3634, %v3648
    %v3651 = vsel %vm3364, %v3649, %v3650
    %v3653 = vadd.f32 %v3643, %v3651
    %s3654 = scalar_lea.vmem [#allocation8], 130
    %v3655 = vld [vmem:[%s3654] ss:$8 sm:$0xf]
    %v3656 = vld [vmem:[%s3654] ss:$8 sm:$0xf0]
    %v3657 = vor.u32 %v3655, %v3656
    %s3658 = scalar_lea.vmem [#allocation8], 194
    %v3659 = vld [vmem:[%s3658] ss:$8 sm:$0xf]
    %v3660 = vld [vmem:[%s3658] ss:$8 sm:$0xf0]
    %v3661 = vor.u32 %v3659, %v3660
    %v3664 = vlaneseq
    %v3665 = vshrl.u32 %v3664, 7
    %v3666 = vsub.s32 0, %v3665
    %v3667 = vrot.slane %v3657, %v3666
    %v3668 = vlaneseq
    %v3669 = vshrl.u32 %v3668, 7
    %v3670 = vsub.s32 1, %v3669
    %v3671 = vrot.slane %v3657, %v3670
    %v3672 = vlaneseq
    %v3673 = vshrl.u32 %v3672, 7
    %v3674 = vsub.s32 2, %v3673
    %v3675 = vrot.slane %v3657, %v3674
    %v3676 = vlaneseq
    %v3677 = vshrl.u32 %v3676, 7
    %v3678 = vsub.s32 3, %v3677
    %v3679 = vrot.slane %v3657, %v3678
    %v3680 = vlaneseq
    %v3681 = vshrl.u32 %v3680, 7
    %v3682 = vsub.s32 4, %v3681
    %v3683 = vrot.slane %v3657, %v3682
    %v3684 = vlaneseq
    %v3685 = vshrl.u32 %v3684, 7
    %v3686 = vsub.s32 5, %v3685
    %v3687 = vrot.slane %v3657, %v3686
    %v3688 = vlaneseq
    %v3689 = vshrl.u32 %v3688, 7
    %v3690 = vsub.s32 6, %v3689
    %v3691 = vrot.slane %v3657, %v3690
    %v3692 = vlaneseq
    %v3693 = vshrl.u32 %v3692, 7
    %v3694 = vsub.s32 7, %v3693
    %v3695 = vrot.slane %v3657, %v3694
    %v3696 = vlaneseq
    %v3697 = vshrl.u32 %v3696, 7
    %v3698 = vsub.s32 0, %v3697
    %v3699 = vrot.slane %v3661, %v3698
    %v3700 = vlaneseq
    %v3701 = vshrl.u32 %v3700, 7
    %v3702 = vsub.s32 1, %v3701
    %v3703 = vrot.slane %v3661, %v3702
    %v3704 = vlaneseq
    %v3705 = vshrl.u32 %v3704, 7
    %v3706 = vsub.s32 2, %v3705
    %v3707 = vrot.slane %v3661, %v3706
    %v3708 = vlaneseq
    %v3709 = vshrl.u32 %v3708, 7
    %v3710 = vsub.s32 3, %v3709
    %v3711 = vrot.slane %v3661, %v3710
    %v3712 = vlaneseq
    %v3713 = vshrl.u32 %v3712, 7
    %v3714 = vsub.s32 4, %v3713
    %v3715 = vrot.slane %v3661, %v3714
    %v3716 = vlaneseq
    %v3717 = vshrl.u32 %v3716, 7
    %v3718 = vsub.s32 5, %v3717
    %v3719 = vrot.slane %v3661, %v3718
    %v3720 = vlaneseq
    %v3721 = vshrl.u32 %v3720, 7
    %v3722 = vsub.s32 6, %v3721
    %v3723 = vrot.slane %v3661, %v3722
    %v3724 = vlaneseq
    %v3725 = vshrl.u32 %v3724, 7
    %v3726 = vsub.s32 7, %v3725
    %v3727 = vrot.slane %v3661, %v3726
    %v3728 = vcombine.low %v3667, %v3671
    %v3729 = vcombine.low %v3675, %v3679
    %v3731 = vunpack.c.l.s4 1983009808
    %v3732 = vunpack.c.0.s8 %v3731
    %v3733 = vlaneseq
    %v3734 = vshrl.u32 %v3733, 7
    %v3735 = vsub.s32 %v3732, %v3734
    %v3736 = vrot.slane %v3728, %v3735
    %v3738 = vunpack.c.l.s4 1983009808
    %v3739 = vunpack.c.0.s8 %v3738
    %v3740 = vlaneseq
    %v3741 = vshrl.u32 %v3740, 7
    %v3742 = vsub.s32 %v3739, %v3741
    %v3743 = vrot.slane %v3729, %v3742
    %v3744 = vcombine.low %v3736, %v3743
    %v3745 = vcombine.low %v3683, %v3687
    %v3746 = vcombine.low %v3691, %v3695
    %v3748 = vunpack.c.l.s4 1983009808
    %v3749 = vunpack.c.0.s8 %v3748
    %v3750 = vlaneseq
    %v3751 = vshrl.u32 %v3750, 7
    %v3752 = vsub.s32 %v3749, %v3751
    %v3753 = vrot.slane %v3745, %v3752
    %v3755 = vunpack.c.l.s4 1983009808
    %v3756 = vunpack.c.0.s8 %v3755
    %v3757 = vlaneseq
    %v3758 = vshrl.u32 %v3757, 7
    %v3759 = vsub.s32 %v3756, %v3758
    %v3760 = vrot.slane %v3746, %v3759
    %v3761 = vcombine.low %v3753, %v3760
    %v3762 = vcombine.low %v3699, %v3703
    %v3763 = vcombine.low %v3707, %v3711
    %v3765 = vunpack.c.l.s4 1983009808
    %v3766 = vunpack.c.0.s8 %v3765
    %v3767 = vlaneseq
    %v3768 = vshrl.u32 %v3767, 7
    %v3769 = vsub.s32 %v3766, %v3768
    %v3770 = vrot.slane %v3762, %v3769
    %v3772 = vunpack.c.l.s4 1983009808
    %v3773 = vunpack.c.0.s8 %v3772
    %v3774 = vlaneseq
    %v3775 = vshrl.u32 %v3774, 7
    %v3776 = vsub.s32 %v3773, %v3775
    %v3777 = vrot.slane %v3763, %v3776
    %v3778 = vcombine.low %v3770, %v3777
    %v3779 = vcombine.low %v3715, %v3719
    %v3780 = vcombine.low %v3723, %v3727
    %v3782 = vunpack.c.l.s4 1983009808
    %v3783 = vunpack.c.0.s8 %v3782
    %v3784 = vlaneseq
    %v3785 = vshrl.u32 %v3784, 7
    %v3786 = vsub.s32 %v3783, %v3785
    %v3787 = vrot.slane %v3779, %v3786
    %v3789 = vunpack.c.l.s4 1983009808
    %v3790 = vunpack.c.0.s8 %v3789
    %v3791 = vlaneseq
    %v3792 = vshrl.u32 %v3791, 7
    %v3793 = vsub.s32 %v3790, %v3792
    %v3794 = vrot.slane %v3780, %v3793
    %v3795 = vcombine.low %v3787, %v3794
    %3796 = vrot.lane.b32.xlu0 %v3744, 113
    %v3797 = vpop.permute.xlu0 %3796
    %3798 = vrot.lane.b32.xlu0 %v3761, 113
    %v3799 = vpop.permute.xlu0 %3798
    %3800 = vrot.lane.b32.xlu0 %v3778, 113
    %v3801 = vpop.permute.xlu0 %3800
    %3802 = vrot.lane.b32.xlu0 %v3795, 113
    %v3803 = vpop.permute.xlu0 %3802
    %v3804 = vrot.slane %v3797, 6
    %v3805 = vrot.slane %v3799, 6
    %v3806 = vrot.slane %v3801, 6
    %v3807 = vrot.slane %v3803, 6
    %v3808 = vsel %vm3342, %v3804, %v3797
    %v3809 = vsel %vm956, %v3804, %v3805
    %v3810 = vsel %vm3342, %v3809, %v3799
    %v3811 = vsel %vm956, %v3805, %v3806
    %v3812 = vsel %vm3342, %v3811, %v3801
    %v3813 = vsel %vm956, %v3806, %v3807
    %v3814 = vsel %vm3342, %v3813, %v3803
    %v3820 = vmul.f32 %v1464, %v3808
    %v3821 = vmul.f32 %v1465, %v3810
    %v3822 = vmul.f32 %v1466, %v3812
    %v3823 = vmul.f32 %v1467, %v3814
    %v3824 = vmul.f32 %v1468, %v3807
    %3826 = vrot.lane.b32.xlu0 %v3820, 126
    %v3827 = vpop.permute.xlu0 %3826
    %v3828 = vrot.slane %v3827, 2
    %v3829 = vsel %vm3364, %v3827, %v3828
    %v3831 = vadd.f32 %v2955, %v3829
    %3833 = vrot.lane.b32.xlu0 %v3821, 126
    %v3834 = vpop.permute.xlu0 %3833
    %v3835 = vrot.slane %v3827, 4
    %v3836 = vrot.slane %v3834, 4
    %v3837 = vrot.slane %v3827, 6
    %v3838 = vrot.slane %v3834, 6
    %v3839 = vsel %vm1645, %v3835, %v3836
    %v3840 = vsel %vm956, %v3837, %v3838
    %v3841 = vsel %vm3364, %v3839, %v3840
    %v3843 = vadd.f32 %v3831, %v3841
    %v3844 = vrot.slane %v3834, 2
    %v3845 = vsel %vm3364, %v3834, %v3844
    %v3847 = vadd.f32 %v3843, %v3845
    %3849 = vrot.lane.b32.xlu0 %v3822, 126
    %v3850 = vpop.permute.xlu0 %3849
    %v3851 = vrot.slane %v3850, 4
    %v3852 = vrot.slane %v3850, 6
    %v3853 = vsel %vm1645, %v3836, %v3851
    %v3854 = vsel %vm956, %v3838, %v3852
    %v3855 = vsel %vm3364, %v3853, %v3854
    %v3857 = vadd.f32 %v3847, %v3855
    %v3858 = vrot.slane %v3850, 2
    %v3859 = vsel %vm3364, %v3850, %v3858
    %v3861 = vadd.f32 %v3857, %v3859
    %3863 = vrot.lane.b32.xlu0 %v3823, 126
    %v3864 = vpop.permute.xlu0 %3863
    %v3865 = vrot.slane %v3864, 4
    %v3866 = vrot.slane %v3864, 6
    %v3867 = vsel %vm1645, %v3851, %v3865
    %v3868 = vsel %vm956, %v3852, %v3866
    %v3869 = vsel %vm3364, %v3867, %v3868
    %v3871 = vadd.f32 %v3861, %v3869
    %v3872 = vrot.slane %v3864, 2
    %v3873 = vsel %vm3364, %v3864, %v3872
    %v3875 = vadd.f32 %v3871, %v3873
    %3877 = vrot.lane.b32.xlu0 %v3824, 126
    %v3878 = vpop.permute.xlu0 %3877
    %v3879 = vrot.slane %v3878, 4
    %v3880 = vrot.slane %v3878, 6
    %v3881 = vsel %vm1645, %v3865, %v3879
    %v3882 = vsel %vm956, %v3866, %v3880
    %v3883 = vsel %vm3364, %v3881, %v3882
    %v3885 = vadd.f32 %v3875, %v3883
    %s3886 = scalar_lea.vmem [#allocation8], 131
    %v3887 = vld [vmem:[%s3886] ss:$8 sm:$0xf]
    %v3888 = vld [vmem:[%s3886] ss:$8 sm:$0xf0]
    %v3889 = vor.u32 %v3887, %v3888
    %s3890 = scalar_lea.vmem [#allocation8], 195
    %v3891 = vld [vmem:[%s3890] ss:$8 sm:$0xf]
    %v3892 = vld [vmem:[%s3890] ss:$8 sm:$0xf0]
    %v3893 = vor.u32 %v3891, %v3892
    %v3896 = vlaneseq
    %v3897 = vshrl.u32 %v3896, 7
    %v3898 = vsub.s32 0, %v3897
    %v3899 = vrot.slane %v3889, %v3898
    %v3900 = vlaneseq
    %v3901 = vshrl.u32 %v3900, 7
    %v3902 = vsub.s32 1, %v3901
    %v3903 = vrot.slane %v3889, %v3902
    %v3904 = vlaneseq
    %v3905 = vshrl.u32 %v3904, 7
    %v3906 = vsub.s32 2, %v3905
    %v3907 = vrot.slane %v3889, %v3906
    %v3908 = vlaneseq
    %v3909 = vshrl.u32 %v3908, 7
    %v3910 = vsub.s32 3, %v3909
    %v3911 = vrot.slane %v3889, %v3910
    %v3912 = vlaneseq
    %v3913 = vshrl.u32 %v3912, 7
    %v3914 = vsub.s32 4, %v3913
    %v3915 = vrot.slane %v3889, %v3914
    %v3916 = vlaneseq
    %v3917 = vshrl.u32 %v3916, 7
    %v3918 = vsub.s32 5, %v3917
    %v3919 = vrot.slane %v3889, %v3918
    %v3920 = vlaneseq
    %v3921 = vshrl.u32 %v3920, 7
    %v3922 = vsub.s32 6, %v3921
    %v3923 = vrot.slane %v3889, %v3922
    %v3924 = vlaneseq
    %v3925 = vshrl.u32 %v3924, 7
    %v3926 = vsub.s32 7, %v3925
    %v3927 = vrot.slane %v3889, %v3926
    %v3928 = vlaneseq
    %v3929 = vshrl.u32 %v3928, 7
    %v3930 = vsub.s32 0, %v3929
    %v3931 = vrot.slane %v3893, %v3930
    %v3932 = vlaneseq
    %v3933 = vshrl.u32 %v3932, 7
    %v3934 = vsub.s32 1, %v3933
    %v3935 = vrot.slane %v3893, %v3934
    %v3936 = vlaneseq
    %v3937 = vshrl.u32 %v3936, 7
    %v3938 = vsub.s32 2, %v3937
    %v3939 = vrot.slane %v3893, %v3938
    %v3940 = vlaneseq
    %v3941 = vshrl.u32 %v3940, 7
    %v3942 = vsub.s32 3, %v3941
    %v3943 = vrot.slane %v3893, %v3942
    %v3944 = vlaneseq
    %v3945 = vshrl.u32 %v3944, 7
    %v3946 = vsub.s32 4, %v3945
    %v3947 = vrot.slane %v3893, %v3946
    %v3948 = vlaneseq
    %v3949 = vshrl.u32 %v3948, 7
    %v3950 = vsub.s32 5, %v3949
    %v3951 = vrot.slane %v3893, %v3950
    %v3952 = vlaneseq
    %v3953 = vshrl.u32 %v3952, 7
    %v3954 = vsub.s32 6, %v3953
    %v3955 = vrot.slane %v3893, %v3954
    %v3956 = vlaneseq
    %v3957 = vshrl.u32 %v3956, 7
    %v3958 = vsub.s32 7, %v3957
    %v3959 = vrot.slane %v3893, %v3958
    %v3960 = vcombine.low %v3899, %v3903
    %v3961 = vcombine.low %v3907, %v3911
    %v3963 = vunpack.c.l.s4 1983009808
    %v3964 = vunpack.c.0.s8 %v3963
    %v3965 = vlaneseq
    %v3966 = vshrl.u32 %v3965, 7
    %v3967 = vsub.s32 %v3964, %v3966
    %v3968 = vrot.slane %v3960, %v3967
    %v3970 = vunpack.c.l.s4 1983009808
    %v3971 = vunpack.c.0.s8 %v3970
    %v3972 = vlaneseq
    %v3973 = vshrl.u32 %v3972, 7
    %v3974 = vsub.s32 %v3971, %v3973
    %v3975 = vrot.slane %v3961, %v3974
    %v3976 = vcombine.low %v3968, %v3975
    %v3977 = vcombine.low %v3915, %v3919
    %v3978 = vcombine.low %v3923, %v3927
    %v3980 = vunpack.c.l.s4 1983009808
    %v3981 = vunpack.c.0.s8 %v3980
    %v3982 = vlaneseq
    %v3983 = vshrl.u32 %v3982, 7
    %v3984 = vsub.s32 %v3981, %v3983
    %v3985 = vrot.slane %v3977, %v3984
    %v3987 = vunpack.c.l.s4 1983009808
    %v3988 = vunpack.c.0.s8 %v3987
    %v3989 = vlaneseq
    %v3990 = vshrl.u32 %v3989, 7
    %v3991 = vsub.s32 %v3988, %v3990
    %v3992 = vrot.slane %v3978, %v3991
    %v3993 = vcombine.low %v3985, %v3992
    %v3994 = vcombine.low %v3931, %v3935
    %v3995 = vcombine.low %v3939, %v3943
    %v3997 = vunpack.c.l.s4 1983009808
    %v3998 = vunpack.c.0.s8 %v3997
    %v3999 = vlaneseq
    %v4000 = vshrl.u32 %v3999, 7
    %v4001 = vsub.s32 %v3998, %v4000
    %v4002 = vrot.slane %v3994, %v4001
    %v4004 = vunpack.c.l.s4 1983009808
    %v4005 = vunpack.c.0.s8 %v4004
    %v4006 = vlaneseq
    %v4007 = vshrl.u32 %v4006, 7
    %v4008 = vsub.s32 %v4005, %v4007
    %v4009 = vrot.slane %v3995, %v4008
    %v4010 = vcombine.low %v4002, %v4009
    %v4011 = vcombine.low %v3947, %v3951
    %v4012 = vcombine.low %v3955, %v3959
    %v4014 = vunpack.c.l.s4 1983009808
    %v4015 = vunpack.c.0.s8 %v4014
    %v4016 = vlaneseq
    %v4017 = vshrl.u32 %v4016, 7
    %v4018 = vsub.s32 %v4015, %v4017
    %v4019 = vrot.slane %v4011, %v4018
    %v4021 = vunpack.c.l.s4 1983009808
    %v4022 = vunpack.c.0.s8 %v4021
    %v4023 = vlaneseq
    %v4024 = vshrl.u32 %v4023, 7
    %v4025 = vsub.s32 %v4022, %v4024
    %v4026 = vrot.slane %v4012, %v4025
    %v4027 = vcombine.low %v4019, %v4026
    %4028 = vrot.lane.b32.xlu0 %v3976, 113
    %v4029 = vpop.permute.xlu0 %4028
    %4030 = vrot.lane.b32.xlu0 %v3993, 113
    %v4031 = vpop.permute.xlu0 %4030
    %4032 = vrot.lane.b32.xlu0 %v4010, 113
    %v4033 = vpop.permute.xlu0 %4032
    %4034 = vrot.lane.b32.xlu0 %v4027, 113
    %v4035 = vpop.permute.xlu0 %4034
    %v4036 = vrot.slane %v4029, 6
    %v4037 = vrot.slane %v4031, 6
    %v4038 = vrot.slane %v4033, 6
    %v4039 = vrot.slane %v4035, 6
    %v4040 = vsel %vm3342, %v4036, %v4029
    %v4041 = vsel %vm956, %v4036, %v4037
    %v4042 = vsel %vm3342, %v4041, %v4031
    %v4043 = vsel %vm956, %v4037, %v4038
    %v4044 = vsel %vm3342, %v4043, %v4033
    %v4045 = vsel %vm956, %v4038, %v4039
    %v4046 = vsel %vm3342, %v4045, %v4035
    %v4052 = vmul.f32 %v1464, %v4040
    %v4053 = vmul.f32 %v1465, %v4042
    %v4054 = vmul.f32 %v1466, %v4044
    %v4055 = vmul.f32 %v1467, %v4046
    %v4056 = vmul.f32 %v1468, %v4039
    %4058 = vrot.lane.b32.xlu0 %v4052, 126
    %v4059 = vpop.permute.xlu0 %4058
    %v4060 = vrot.slane %v4059, 2
    %v4061 = vsel %vm3364, %v4059, %v4060
    %v4063 = vadd.f32 %v3187, %v4061
    %4065 = vrot.lane.b32.xlu0 %v4053, 126
    %v4066 = vpop.permute.xlu0 %4065
    %v4067 = vrot.slane %v4059, 4
    %v4068 = vrot.slane %v4066, 4
    %v4069 = vrot.slane %v4059, 6
    %v4070 = vrot.slane %v4066, 6
    %v4071 = vsel %vm1645, %v4067, %v4068
    %v4072 = vsel %vm956, %v4069, %v4070
    %v4073 = vsel %vm3364, %v4071, %v4072
    %v4075 = vadd.f32 %v4063, %v4073
    %v4076 = vrot.slane %v4066, 2
    %v4077 = vsel %vm3364, %v4066, %v4076
    %v4079 = vadd.f32 %v4075, %v4077
    %4081 = vrot.lane.b32.xlu0 %v4054, 126
    %v4082 = vpop.permute.xlu0 %4081
    %v4083 = vrot.slane %v4082, 4
    %v4084 = vrot.slane %v4082, 6
    %v4085 = vsel %vm1645, %v4068, %v4083
    %v4086 = vsel %vm956, %v4070, %v4084
    %v4087 = vsel %vm3364, %v4085, %v4086
    %v4089 = vadd.f32 %v4079, %v4087
    %v4090 = vrot.slane %v4082, 2
    %v4091 = vsel %vm3364, %v4082, %v4090
    %v4093 = vadd.f32 %v4089, %v4091
    %4095 = vrot.lane.b32.xlu0 %v4055, 126
    %v4096 = vpop.permute.xlu0 %4095
    %v4097 = vrot.slane %v4096, 4
    %v4098 = vrot.slane %v4096, 6
    %v4099 = vsel %vm1645, %v4083, %v4097
    %v4100 = vsel %vm956, %v4084, %v4098
    %v4101 = vsel %vm3364, %v4099, %v4100
    %v4103 = vadd.f32 %v4093, %v4101
    %v4104 = vrot.slane %v4096, 2
    %v4105 = vsel %vm3364, %v4096, %v4104
    %v4107 = vadd.f32 %v4103, %v4105
    %4109 = vrot.lane.b32.xlu0 %v4056, 126
    %v4110 = vpop.permute.xlu0 %4109
    %v4111 = vrot.slane %v4110, 4
    %v4112 = vrot.slane %v4110, 6
    %v4113 = vsel %vm1645, %v4097, %v4111
    %v4114 = vsel %vm956, %v4098, %v4112
    %v4115 = vsel %vm3364, %v4113, %v4114
    %v4117 = vadd.f32 %v4107, %v4115
    %s4118 = scalar_lea.vmem [#allocation8], 132
    %v4119 = vld [vmem:[%s4118] ss:$8 sm:$0xf]
    %v4120 = vld [vmem:[%s4118] ss:$8 sm:$0xf0]
    %v4121 = vor.u32 %v4119, %v4120
    %s4122 = scalar_lea.vmem [#allocation8], 196
    %v4123 = vld [vmem:[%s4122] ss:$8 sm:$0xf]
    %v4124 = vld [vmem:[%s4122] ss:$8 sm:$0xf0]
    %v4125 = vor.u32 %v4123, %v4124
    %v4128 = vlaneseq
    %v4129 = vshrl.u32 %v4128, 7
    %v4130 = vsub.s32 0, %v4129
    %v4131 = vrot.slane %v4121, %v4130
    %v4132 = vlaneseq
    %v4133 = vshrl.u32 %v4132, 7
    %v4134 = vsub.s32 1, %v4133
    %v4135 = vrot.slane %v4121, %v4134
    %v4136 = vlaneseq
    %v4137 = vshrl.u32 %v4136, 7
    %v4138 = vsub.s32 2, %v4137
    %v4139 = vrot.slane %v4121, %v4138
    %v4140 = vlaneseq
    %v4141 = vshrl.u32 %v4140, 7
    %v4142 = vsub.s32 3, %v4141
    %v4143 = vrot.slane %v4121, %v4142
    %v4144 = vlaneseq
    %v4145 = vshrl.u32 %v4144, 7
    %v4146 = vsub.s32 4, %v4145
    %v4147 = vrot.slane %v4121, %v4146
    %v4148 = vlaneseq
    %v4149 = vshrl.u32 %v4148, 7
    %v4150 = vsub.s32 5, %v4149
    %v4151 = vrot.slane %v4121, %v4150
    %v4152 = vlaneseq
    %v4153 = vshrl.u32 %v4152, 7
    %v4154 = vsub.s32 6, %v4153
    %v4155 = vrot.slane %v4121, %v4154
    %v4156 = vlaneseq
    %v4157 = vshrl.u32 %v4156, 7
    %v4158 = vsub.s32 7, %v4157
    %v4159 = vrot.slane %v4121, %v4158
    %v4160 = vlaneseq
    %v4161 = vshrl.u32 %v4160, 7
    %v4162 = vsub.s32 0, %v4161
    %v4163 = vrot.slane %v4125, %v4162
    %v4164 = vlaneseq
    %v4165 = vshrl.u32 %v4164, 7
    %v4166 = vsub.s32 1, %v4165
    %v4167 = vrot.slane %v4125, %v4166
    %v4168 = vlaneseq
    %v4169 = vshrl.u32 %v4168, 7
    %v4170 = vsub.s32 2, %v4169
    %v4171 = vrot.slane %v4125, %v4170
    %v4172 = vlaneseq
    %v4173 = vshrl.u32 %v4172, 7
    %v4174 = vsub.s32 3, %v4173
    %v4175 = vrot.slane %v4125, %v4174
    %v4176 = vlaneseq
    %v4177 = vshrl.u32 %v4176, 7
    %v4178 = vsub.s32 4, %v4177
    %v4179 = vrot.slane %v4125, %v4178
    %v4180 = vlaneseq
    %v4181 = vshrl.u32 %v4180, 7
    %v4182 = vsub.s32 5, %v4181
    %v4183 = vrot.slane %v4125, %v4182
    %v4184 = vlaneseq
    %v4185 = vshrl.u32 %v4184, 7
    %v4186 = vsub.s32 6, %v4185
    %v4187 = vrot.slane %v4125, %v4186
    %v4188 = vlaneseq
    %v4189 = vshrl.u32 %v4188, 7
    %v4190 = vsub.s32 7, %v4189
    %v4191 = vrot.slane %v4125, %v4190
    %v4192 = vcombine.low %v4131, %v4135
    %v4193 = vcombine.low %v4139, %v4143
    %v4195 = vunpack.c.l.s4 1983009808
    %v4196 = vunpack.c.0.s8 %v4195
    %v4197 = vlaneseq
    %v4198 = vshrl.u32 %v4197, 7
    %v4199 = vsub.s32 %v4196, %v4198
    %v4200 = vrot.slane %v4192, %v4199
    %v4202 = vunpack.c.l.s4 1983009808
    %v4203 = vunpack.c.0.s8 %v4202
    %v4204 = vlaneseq
    %v4205 = vshrl.u32 %v4204, 7
    %v4206 = vsub.s32 %v4203, %v4205
    %v4207 = vrot.slane %v4193, %v4206
    %v4208 = vcombine.low %v4200, %v4207
    %v4209 = vcombine.low %v4147, %v4151
    %v4210 = vcombine.low %v4155, %v4159
    %v4212 = vunpack.c.l.s4 1983009808
    %v4213 = vunpack.c.0.s8 %v4212
    %v4214 = vlaneseq
    %v4215 = vshrl.u32 %v4214, 7
    %v4216 = vsub.s32 %v4213, %v4215
    %v4217 = vrot.slane %v4209, %v4216
    %v4219 = vunpack.c.l.s4 1983009808
    %v4220 = vunpack.c.0.s8 %v4219
    %v4221 = vlaneseq
    %v4222 = vshrl.u32 %v4221, 7
    %v4223 = vsub.s32 %v4220, %v4222
    %v4224 = vrot.slane %v4210, %v4223
    %v4225 = vcombine.low %v4217, %v4224
    %v4226 = vcombine.low %v4163, %v4167
    %v4227 = vcombine.low %v4171, %v4175
    %v4229 = vunpack.c.l.s4 1983009808
    %v4230 = vunpack.c.0.s8 %v4229
    %v4231 = vlaneseq
    %v4232 = vshrl.u32 %v4231, 7
    %v4233 = vsub.s32 %v4230, %v4232
    %v4234 = vrot.slane %v4226, %v4233
    %v4236 = vunpack.c.l.s4 1983009808
    %v4237 = vunpack.c.0.s8 %v4236
    %v4238 = vlaneseq
    %v4239 = vshrl.u32 %v4238, 7
    %v4240 = vsub.s32 %v4237, %v4239
    %v4241 = vrot.slane %v4227, %v4240
    %v4242 = vcombine.low %v4234, %v4241
    %v4243 = vcombine.low %v4179, %v4183
    %v4244 = vcombine.low %v4187, %v4191
    %v4246 = vunpack.c.l.s4 1983009808
    %v4247 = vunpack.c.0.s8 %v4246
    %v4248 = vlaneseq
    %v4249 = vshrl.u32 %v4248, 7
    %v4250 = vsub.s32 %v4247, %v4249
    %v4251 = vrot.slane %v4243, %v4250
    %v4253 = vunpack.c.l.s4 1983009808
    %v4254 = vunpack.c.0.s8 %v4253
    %v4255 = vlaneseq
    %v4256 = vshrl.u32 %v4255, 7
    %v4257 = vsub.s32 %v4254, %v4256
    %v4258 = vrot.slane %v4244, %v4257
    %v4259 = vcombine.low %v4251, %v4258
    %4260 = vrot.lane.b32.xlu0 %v4208, 127
    %v4261 = vpop.permute.xlu0 %4260
    %4262 = vrot.lane.b32.xlu0 %v4225, 127
    %v4263 = vpop.permute.xlu0 %4262
    %4264 = vrot.lane.b32.xlu0 %v4242, 127
    %v4265 = vpop.permute.xlu0 %4264
    %4266 = vrot.lane.b32.xlu0 %v4259, 127
    %v4267 = vpop.permute.xlu0 %4266
    %v4268 = vrot.slane %v4261, 6
    %v4269 = vrot.slane %v4263, 6
    %v4270 = vrot.slane %v4265, 6
    %v4271 = vrot.slane %v4267, 6
    %v4272 = vsel %vm2434, %v4268, %v4261
    %v4273 = vsel %vm956, %v4268, %v4269
    %v4274 = vsel %vm2434, %v4273, %v4263
    %v4275 = vsel %vm956, %v4269, %v4270
    %v4276 = vsel %vm2434, %v4275, %v4265
    %v4277 = vsel %vm956, %v4270, %v4271
    %v4278 = vsel %vm2434, %v4277, %v4267
    %v4284 = vmul.f32 %v1464, %v4272
    %v4285 = vmul.f32 %v1465, %v4274
    %v4286 = vmul.f32 %v1466, %v4276
    %v4287 = vmul.f32 %v1467, %v4278
    %v4288 = vmul.f32 %v1468, %v4271
    %4290 = vrot.lane.b32.xlu0 %v4284, 112
    %v4291 = vpop.permute.xlu0 %4290
    %v4292 = vrot.slane %v4291, 2
    %v4293 = vsel %vm2412, %v4291, %v4292
    %v4295 = vadd.f32 %v3421, %v4293
    %4297 = vrot.lane.b32.xlu0 %v4285, 112
    %v4298 = vpop.permute.xlu0 %4297
    %v4299 = vrot.slane %v4291, 4
    %v4300 = vrot.slane %v4298, 4
    %v4301 = vrot.slane %v4291, 6
    %v4302 = vrot.slane %v4298, 6
    %v4303 = vsel %vm1645, %v4299, %v4300
    %v4304 = vsel %vm956, %v4301, %v4302
    %v4305 = vsel %vm2412, %v4303, %v4304
    %v4307 = vadd.f32 %v4295, %v4305
    %v4308 = vrot.slane %v4298, 2
    %v4309 = vsel %vm2412, %v4298, %v4308
    %v4311 = vadd.f32 %v4307, %v4309
    %4313 = vrot.lane.b32.xlu0 %v4286, 112
    %v4314 = vpop.permute.xlu0 %4313
    %v4315 = vrot.slane %v4314, 4
    %v4316 = vrot.slane %v4314, 6
    %v4317 = vsel %vm1645, %v4300, %v4315
    %v4318 = vsel %vm956, %v4302, %v4316
    %v4319 = vsel %vm2412, %v4317, %v4318
    %v4321 = vadd.f32 %v4311, %v4319
    %v4322 = vrot.slane %v4314, 2
    %v4323 = vsel %vm2412, %v4314, %v4322
    %v4325 = vadd.f32 %v4321, %v4323
    %4327 = vrot.lane.b32.xlu0 %v4287, 112
    %v4328 = vpop.permute.xlu0 %4327
    %v4329 = vrot.slane %v4328, 4
    %v4330 = vrot.slane %v4328, 6
    %v4331 = vsel %vm1645, %v4315, %v4329
    %v4332 = vsel %vm956, %v4316, %v4330
    %v4333 = vsel %vm2412, %v4331, %v4332
    %v4335 = vadd.f32 %v4325, %v4333
    %v4336 = vrot.slane %v4328, 2
    %v4337 = vsel %vm2412, %v4328, %v4336
    %v4339 = vadd.f32 %v4335, %v4337
    %4341 = vrot.lane.b32.xlu0 %v4288, 112
    %v4342 = vpop.permute.xlu0 %4341
    %v4343 = vrot.slane %v4342, 4
    %v4344 = vrot.slane %v4342, 6
    %v4345 = vsel %vm1645, %v4329, %v4343
    %v4346 = vsel %vm956, %v4330, %v4344
    %v4347 = vsel %vm2412, %v4345, %v4346
    %v4349 = vadd.f32 %v4339, %v4347
    %s4350 = scalar_lea.vmem [#allocation8], 133
    %v4351 = vld [vmem:[%s4350] ss:$8 sm:$0xf]
    %v4352 = vld [vmem:[%s4350] ss:$8 sm:$0xf0]
    %v4353 = vor.u32 %v4351, %v4352
    %s4354 = scalar_lea.vmem [#allocation8], 197
    %v4355 = vld [vmem:[%s4354] ss:$8 sm:$0xf]
    %v4356 = vld [vmem:[%s4354] ss:$8 sm:$0xf0]
    %v4357 = vor.u32 %v4355, %v4356
    %v4360 = vlaneseq
    %v4361 = vshrl.u32 %v4360, 7
    %v4362 = vsub.s32 0, %v4361
    %v4363 = vrot.slane %v4353, %v4362
    %v4364 = vlaneseq
    %v4365 = vshrl.u32 %v4364, 7
    %v4366 = vsub.s32 1, %v4365
    %v4367 = vrot.slane %v4353, %v4366
    %v4368 = vlaneseq
    %v4369 = vshrl.u32 %v4368, 7
    %v4370 = vsub.s32 2, %v4369
    %v4371 = vrot.slane %v4353, %v4370
    %v4372 = vlaneseq
    %v4373 = vshrl.u32 %v4372, 7
    %v4374 = vsub.s32 3, %v4373
    %v4375 = vrot.slane %v4353, %v4374
    %v4376 = vlaneseq
    %v4377 = vshrl.u32 %v4376, 7
    %v4378 = vsub.s32 4, %v4377
    %v4379 = vrot.slane %v4353, %v4378
    %v4380 = vlaneseq
    %v4381 = vshrl.u32 %v4380, 7
    %v4382 = vsub.s32 5, %v4381
    %v4383 = vrot.slane %v4353, %v4382
    %v4384 = vlaneseq
    %v4385 = vshrl.u32 %v4384, 7
    %v4386 = vsub.s32 6, %v4385
    %v4387 = vrot.slane %v4353, %v4386
    %v4388 = vlaneseq
    %v4389 = vshrl.u32 %v4388, 7
    %v4390 = vsub.s32 7, %v4389
    %v4391 = vrot.slane %v4353, %v4390
    %v4392 = vlaneseq
    %v4393 = vshrl.u32 %v4392, 7
    %v4394 = vsub.s32 0, %v4393
    %v4395 = vrot.slane %v4357, %v4394
    %v4396 = vlaneseq
    %v4397 = vshrl.u32 %v4396, 7
    %v4398 = vsub.s32 1, %v4397
    %v4399 = vrot.slane %v4357, %v4398
    %v4400 = vlaneseq
    %v4401 = vshrl.u32 %v4400, 7
    %v4402 = vsub.s32 2, %v4401
    %v4403 = vrot.slane %v4357, %v4402
    %v4404 = vlaneseq
    %v4405 = vshrl.u32 %v4404, 7
    %v4406 = vsub.s32 3, %v4405
    %v4407 = vrot.slane %v4357, %v4406
    %v4408 = vlaneseq
    %v4409 = vshrl.u32 %v4408, 7
    %v4410 = vsub.s32 4, %v4409
    %v4411 = vrot.slane %v4357, %v4410
    %v4412 = vlaneseq
    %v4413 = vshrl.u32 %v4412, 7
    %v4414 = vsub.s32 5, %v4413
    %v4415 = vrot.slane %v4357, %v4414
    %v4416 = vlaneseq
    %v4417 = vshrl.u32 %v4416, 7
    %v4418 = vsub.s32 6, %v4417
    %v4419 = vrot.slane %v4357, %v4418
    %v4420 = vlaneseq
    %v4421 = vshrl.u32 %v4420, 7
    %v4422 = vsub.s32 7, %v4421
    %v4423 = vrot.slane %v4357, %v4422
    %v4424 = vcombine.low %v4363, %v4367
    %v4425 = vcombine.low %v4371, %v4375
    %v4427 = vunpack.c.l.s4 1983009808
    %v4428 = vunpack.c.0.s8 %v4427
    %v4429 = vlaneseq
    %v4430 = vshrl.u32 %v4429, 7
    %v4431 = vsub.s32 %v4428, %v4430
    %v4432 = vrot.slane %v4424, %v4431
    %v4434 = vunpack.c.l.s4 1983009808
    %v4435 = vunpack.c.0.s8 %v4434
    %v4436 = vlaneseq
    %v4437 = vshrl.u32 %v4436, 7
    %v4438 = vsub.s32 %v4435, %v4437
    %v4439 = vrot.slane %v4425, %v4438
    %v4440 = vcombine.low %v4432, %v4439
    %v4441 = vcombine.low %v4379, %v4383
    %v4442 = vcombine.low %v4387, %v4391
    %v4444 = vunpack.c.l.s4 1983009808
    %v4445 = vunpack.c.0.s8 %v4444
    %v4446 = vlaneseq
    %v4447 = vshrl.u32 %v4446, 7
    %v4448 = vsub.s32 %v4445, %v4447
    %v4449 = vrot.slane %v4441, %v4448
    %v4451 = vunpack.c.l.s4 1983009808
    %v4452 = vunpack.c.0.s8 %v4451
    %v4453 = vlaneseq
    %v4454 = vshrl.u32 %v4453, 7
    %v4455 = vsub.s32 %v4452, %v4454
    %v4456 = vrot.slane %v4442, %v4455
    %v4457 = vcombine.low %v4449, %v4456
    %v4458 = vcombine.low %v4395, %v4399
    %v4459 = vcombine.low %v4403, %v4407
    %v4461 = vunpack.c.l.s4 1983009808
    %v4462 = vunpack.c.0.s8 %v4461
    %v4463 = vlaneseq
    %v4464 = vshrl.u32 %v4463, 7
    %v4465 = vsub.s32 %v4462, %v4464
    %v4466 = vrot.slane %v4458, %v4465
    %v4468 = vunpack.c.l.s4 1983009808
    %v4469 = vunpack.c.0.s8 %v4468
    %v4470 = vlaneseq
    %v4471 = vshrl.u32 %v4470, 7
    %v4472 = vsub.s32 %v4469, %v4471
    %v4473 = vrot.slane %v4459, %v4472
    %v4474 = vcombine.low %v4466, %v4473
    %v4475 = vcombine.low %v4411, %v4415
    %v4476 = vcombine.low %v4419, %v4423
    %v4478 = vunpack.c.l.s4 1983009808
    %v4479 = vunpack.c.0.s8 %v4478
    %v4480 = vlaneseq
    %v4481 = vshrl.u32 %v4480, 7
    %v4482 = vsub.s32 %v4479, %v4481
    %v4483 = vrot.slane %v4475, %v4482
    %v4485 = vunpack.c.l.s4 1983009808
    %v4486 = vunpack.c.0.s8 %v4485
    %v4487 = vlaneseq
    %v4488 = vshrl.u32 %v4487, 7
    %v4489 = vsub.s32 %v4486, %v4488
    %v4490 = vrot.slane %v4476, %v4489
    %v4491 = vcombine.low %v4483, %v4490
    %4492 = vrot.lane.b32.xlu0 %v4440, 127
    %v4493 = vpop.permute.xlu0 %4492
    %4494 = vrot.lane.b32.xlu0 %v4457, 127
    %v4495 = vpop.permute.xlu0 %4494
    %4496 = vrot.lane.b32.xlu0 %v4474, 127
    %v4497 = vpop.permute.xlu0 %4496
    %4498 = vrot.lane.b32.xlu0 %v4491, 127
    %v4499 = vpop.permute.xlu0 %4498
    %v4500 = vrot.slane %v4493, 6
    %v4501 = vrot.slane %v4495, 6
    %v4502 = vrot.slane %v4497, 6
    %v4503 = vrot.slane %v4499, 6
    %v4504 = vsel %vm2434, %v4500, %v4493
    %v4505 = vsel %vm956, %v4500, %v4501
    %v4506 = vsel %vm2434, %v4505, %v4495
    %v4507 = vsel %vm956, %v4501, %v4502
    %v4508 = vsel %vm2434, %v4507, %v4497
    %v4509 = vsel %vm956, %v4502, %v4503
    %v4510 = vsel %vm2434, %v4509, %v4499
    %v4516 = vmul.f32 %v1464, %v4504
    %v4517 = vmul.f32 %v1465, %v4506
    %v4518 = vmul.f32 %v1466, %v4508
    %v4519 = vmul.f32 %v1467, %v4510
    %v4520 = vmul.f32 %v1468, %v4503
    %4522 = vrot.lane.b32.xlu0 %v4516, 112
    %v4523 = vpop.permute.xlu0 %4522
    %v4524 = vrot.slane %v4523, 2
    %v4525 = vsel %vm2412, %v4523, %v4524
    %v4527 = vadd.f32 %v3653, %v4525
    %4529 = vrot.lane.b32.xlu0 %v4517, 112
    %v4530 = vpop.permute.xlu0 %4529
    %v4531 = vrot.slane %v4523, 4
    %v4532 = vrot.slane %v4530, 4
    %v4533 = vrot.slane %v4523, 6
    %v4534 = vrot.slane %v4530, 6
    %v4535 = vsel %vm1645, %v4531, %v4532
    %v4536 = vsel %vm956, %v4533, %v4534
    %v4537 = vsel %vm2412, %v4535, %v4536
    %v4539 = vadd.f32 %v4527, %v4537
    %v4540 = vrot.slane %v4530, 2
    %v4541 = vsel %vm2412, %v4530, %v4540
    %v4543 = vadd.f32 %v4539, %v4541
    %4545 = vrot.lane.b32.xlu0 %v4518, 112
    %v4546 = vpop.permute.xlu0 %4545
    %v4547 = vrot.slane %v4546, 4
    %v4548 = vrot.slane %v4546, 6
    %v4549 = vsel %vm1645, %v4532, %v4547
    %v4550 = vsel %vm956, %v4534, %v4548
    %v4551 = vsel %vm2412, %v4549, %v4550
    %v4553 = vadd.f32 %v4543, %v4551
    %v4554 = vrot.slane %v4546, 2
    %v4555 = vsel %vm2412, %v4546, %v4554
    %v4557 = vadd.f32 %v4553, %v4555
    %4559 = vrot.lane.b32.xlu0 %v4519, 112
    %v4560 = vpop.permute.xlu0 %4559
    %v4561 = vrot.slane %v4560, 4
    %v4562 = vrot.slane %v4560, 6
    %v4563 = vsel %vm1645, %v4547, %v4561
    %v4564 = vsel %vm956, %v4548, %v4562
    %v4565 = vsel %vm2412, %v4563, %v4564
    %v4567 = vadd.f32 %v4557, %v4565
    %v4568 = vrot.slane %v4560, 2
    %v4569 = vsel %vm2412, %v4560, %v4568
    %v4571 = vadd.f32 %v4567, %v4569
    %4573 = vrot.lane.b32.xlu0 %v4520, 112
    %v4574 = vpop.permute.xlu0 %4573
    %v4575 = vrot.slane %v4574, 4
    %v4576 = vrot.slane %v4574, 6
    %v4577 = vsel %vm1645, %v4561, %v4575
    %v4578 = vsel %vm956, %v4562, %v4576
    %v4579 = vsel %vm2412, %v4577, %v4578
    %v4581 = vadd.f32 %v4571, %v4579
    %s4582 = scalar_lea.vmem [#allocation8], 134
    %v4583 = vld [vmem:[%s4582] ss:$8 sm:$0xf]
    %v4584 = vld [vmem:[%s4582] ss:$8 sm:$0xf0]
    %v4585 = vor.u32 %v4583, %v4584
    %s4586 = scalar_lea.vmem [#allocation8], 198
    %v4587 = vld [vmem:[%s4586] ss:$8 sm:$0xf]
    %v4588 = vld [vmem:[%s4586] ss:$8 sm:$0xf0]
    %v4589 = vor.u32 %v4587, %v4588
    %v4592 = vlaneseq
    %v4593 = vshrl.u32 %v4592, 7
    %v4594 = vsub.s32 0, %v4593
    %v4595 = vrot.slane %v4585, %v4594
    %v4596 = vlaneseq
    %v4597 = vshrl.u32 %v4596, 7
    %v4598 = vsub.s32 1, %v4597
    %v4599 = vrot.slane %v4585, %v4598
    %v4600 = vlaneseq
    %v4601 = vshrl.u32 %v4600, 7
    %v4602 = vsub.s32 2, %v4601
    %v4603 = vrot.slane %v4585, %v4602
    %v4604 = vlaneseq
    %v4605 = vshrl.u32 %v4604, 7
    %v4606 = vsub.s32 3, %v4605
    %v4607 = vrot.slane %v4585, %v4606
    %v4608 = vlaneseq
    %v4609 = vshrl.u32 %v4608, 7
    %v4610 = vsub.s32 4, %v4609
    %v4611 = vrot.slane %v4585, %v4610
    %v4612 = vlaneseq
    %v4613 = vshrl.u32 %v4612, 7
    %v4614 = vsub.s32 5, %v4613
    %v4615 = vrot.slane %v4585, %v4614
    %v4616 = vlaneseq
    %v4617 = vshrl.u32 %v4616, 7
    %v4618 = vsub.s32 6, %v4617
    %v4619 = vrot.slane %v4585, %v4618
    %v4620 = vlaneseq
    %v4621 = vshrl.u32 %v4620, 7
    %v4622 = vsub.s32 7, %v4621
    %v4623 = vrot.slane %v4585, %v4622
    %v4624 = vlaneseq
    %v4625 = vshrl.u32 %v4624, 7
    %v4626 = vsub.s32 0, %v4625
    %v4627 = vrot.slane %v4589, %v4626
    %v4628 = vlaneseq
    %v4629 = vshrl.u32 %v4628, 7
    %v4630 = vsub.s32 1, %v4629
    %v4631 = vrot.slane %v4589, %v4630
    %v4632 = vlaneseq
    %v4633 = vshrl.u32 %v4632, 7
    %v4634 = vsub.s32 2, %v4633
    %v4635 = vrot.slane %v4589, %v4634
    %v4636 = vlaneseq
    %v4637 = vshrl.u32 %v4636, 7
    %v4638 = vsub.s32 3, %v4637
    %v4639 = vrot.slane %v4589, %v4638
    %v4640 = vlaneseq
    %v4641 = vshrl.u32 %v4640, 7
    %v4642 = vsub.s32 4, %v4641
    %v4643 = vrot.slane %v4589, %v4642
    %v4644 = vlaneseq
    %v4645 = vshrl.u32 %v4644, 7
    %v4646 = vsub.s32 5, %v4645
    %v4647 = vrot.slane %v4589, %v4646
    %v4648 = vlaneseq
    %v4649 = vshrl.u32 %v4648, 7
    %v4650 = vsub.s32 6, %v4649
    %v4651 = vrot.slane %v4589, %v4650
    %v4652 = vlaneseq
    %v4653 = vshrl.u32 %v4652, 7
    %v4654 = vsub.s32 7, %v4653
    %v4655 = vrot.slane %v4589, %v4654
    %v4656 = vcombine.low %v4595, %v4599
    %v4657 = vcombine.low %v4603, %v4607
    %v4659 = vunpack.c.l.s4 1983009808
    %v4660 = vunpack.c.0.s8 %v4659
    %v4661 = vlaneseq
    %v4662 = vshrl.u32 %v4661, 7
    %v4663 = vsub.s32 %v4660, %v4662
    %v4664 = vrot.slane %v4656, %v4663
    %v4666 = vunpack.c.l.s4 1983009808
    %v4667 = vunpack.c.0.s8 %v4666
    %v4668 = vlaneseq
    %v4669 = vshrl.u32 %v4668, 7
    %v4670 = vsub.s32 %v4667, %v4669
    %v4671 = vrot.slane %v4657, %v4670
    %v4672 = vcombine.low %v4664, %v4671
    %v4673 = vcombine.low %v4611, %v4615
    %v4674 = vcombine.low %v4619, %v4623
    %v4676 = vunpack.c.l.s4 1983009808
    %v4677 = vunpack.c.0.s8 %v4676
    %v4678 = vlaneseq
    %v4679 = vshrl.u32 %v4678, 7
    %v4680 = vsub.s32 %v4677, %v4679
    %v4681 = vrot.slane %v4673, %v4680
    %v4683 = vunpack.c.l.s4 1983009808
    %v4684 = vunpack.c.0.s8 %v4683
    %v4685 = vlaneseq
    %v4686 = vshrl.u32 %v4685, 7
    %v4687 = vsub.s32 %v4684, %v4686
    %v4688 = vrot.slane %v4674, %v4687
    %v4689 = vcombine.low %v4681, %v4688
    %v4690 = vcombine.low %v4627, %v4631
    %v4691 = vcombine.low %v4635, %v4639
    %v4693 = vunpack.c.l.s4 1983009808
    %v4694 = vunpack.c.0.s8 %v4693
    %v4695 = vlaneseq
    %v4696 = vshrl.u32 %v4695, 7
    %v4697 = vsub.s32 %v4694, %v4696
    %v4698 = vrot.slane %v4690, %v4697
    %v4700 = vunpack.c.l.s4 1983009808
    %v4701 = vunpack.c.0.s8 %v4700
    %v4702 = vlaneseq
    %v4703 = vshrl.u32 %v4702, 7
    %v4704 = vsub.s32 %v4701, %v4703
    %v4705 = vrot.slane %v4691, %v4704
    %v4706 = vcombine.low %v4698, %v4705
    %v4707 = vcombine.low %v4643, %v4647
    %v4708 = vcombine.low %v4651, %v4655
    %v4710 = vunpack.c.l.s4 1983009808
    %v4711 = vunpack.c.0.s8 %v4710
    %v4712 = vlaneseq
    %v4713 = vshrl.u32 %v4712, 7
    %v4714 = vsub.s32 %v4711, %v4713
    %v4715 = vrot.slane %v4707, %v4714
    %v4717 = vunpack.c.l.s4 1983009808
    %v4718 = vunpack.c.0.s8 %v4717
    %v4719 = vlaneseq
    %v4720 = vshrl.u32 %v4719, 7
    %v4721 = vsub.s32 %v4718, %v4720
    %v4722 = vrot.slane %v4708, %v4721
    %v4723 = vcombine.low %v4715, %v4722
    %4724 = vrot.lane.b32.xlu0 %v4672, 127
    %v4725 = vpop.permute.xlu0 %4724
    %4726 = vrot.lane.b32.xlu0 %v4689, 127
    %v4727 = vpop.permute.xlu0 %4726
    %4728 = vrot.lane.b32.xlu0 %v4706, 127
    %v4729 = vpop.permute.xlu0 %4728
    %4730 = vrot.lane.b32.xlu0 %v4723, 127
    %v4731 = vpop.permute.xlu0 %4730
    %v4732 = vrot.slane %v4725, 6
    %v4733 = vrot.slane %v4727, 6
    %v4734 = vrot.slane %v4729, 6
    %v4735 = vrot.slane %v4731, 6
    %v4736 = vsel %vm2434, %v4732, %v4725
    %v4737 = vsel %vm956, %v4732, %v4733
    %v4738 = vsel %vm2434, %v4737, %v4727
    %v4739 = vsel %vm956, %v4733, %v4734
    %v4740 = vsel %vm2434, %v4739, %v4729
    %v4741 = vsel %vm956, %v4734, %v4735
    %v4742 = vsel %vm2434, %v4741, %v4731
    %v4748 = vmul.f32 %v1464, %v4736
    %v4749 = vmul.f32 %v1465, %v4738
    %v4750 = vmul.f32 %v1466, %v4740
    %v4751 = vmul.f32 %v1467, %v4742
    %v4752 = vmul.f32 %v1468, %v4735
    %4754 = vrot.lane.b32.xlu0 %v4748, 112
    %v4755 = vpop.permute.xlu0 %4754
    %v4756 = vrot.slane %v4755, 2
    %v4757 = vsel %vm2412, %v4755, %v4756
    %v4759 = vadd.f32 %v3885, %v4757
    %4761 = vrot.lane.b32.xlu0 %v4749, 112
    %v4762 = vpop.permute.xlu0 %4761
    %v4763 = vrot.slane %v4755, 4
    %v4764 = vrot.slane %v4762, 4
    %v4765 = vrot.slane %v4755, 6
    %v4766 = vrot.slane %v4762, 6
    %v4767 = vsel %vm1645, %v4763, %v4764
    %v4768 = vsel %vm956, %v4765, %v4766
    %v4769 = vsel %vm2412, %v4767, %v4768
    %v4771 = vadd.f32 %v4759, %v4769
    %v4772 = vrot.slane %v4762, 2
    %v4773 = vsel %vm2412, %v4762, %v4772
    %v4775 = vadd.f32 %v4771, %v4773
    %4777 = vrot.lane.b32.xlu0 %v4750, 112
    %v4778 = vpop.permute.xlu0 %4777
    %v4779 = vrot.slane %v4778, 4
    %v4780 = vrot.slane %v4778, 6
    %v4781 = vsel %vm1645, %v4764, %v4779
    %v4782 = vsel %vm956, %v4766, %v4780
    %v4783 = vsel %vm2412, %v4781, %v4782
    %v4785 = vadd.f32 %v4775, %v4783
    %v4786 = vrot.slane %v4778, 2
    %v4787 = vsel %vm2412, %v4778, %v4786
    %v4789 = vadd.f32 %v4785, %v4787
    %4791 = vrot.lane.b32.xlu0 %v4751, 112
    %v4792 = vpop.permute.xlu0 %4791
    %v4793 = vrot.slane %v4792, 4
    %v4794 = vrot.slane %v4792, 6
    %v4795 = vsel %vm1645, %v4779, %v4793
    %v4796 = vsel %vm956, %v4780, %v4794
    %v4797 = vsel %vm2412, %v4795, %v4796
    %v4799 = vadd.f32 %v4789, %v4797
    %v4800 = vrot.slane %v4792, 2
    %v4801 = vsel %vm2412, %v4792, %v4800
    %v4803 = vadd.f32 %v4799, %v4801
    %4805 = vrot.lane.b32.xlu0 %v4752, 112
    %v4806 = vpop.permute.xlu0 %4805
    %v4807 = vrot.slane %v4806, 4
    %v4808 = vrot.slane %v4806, 6
    %v4809 = vsel %vm1645, %v4793, %v4807
    %v4810 = vsel %vm956, %v4794, %v4808
    %v4811 = vsel %vm2412, %v4809, %v4810
    %v4813 = vadd.f32 %v4803, %v4811
    %s4814 = scalar_lea.vmem [#allocation8], 135
    %v4815 = vld [vmem:[%s4814] ss:$8 sm:$0xf]
    %v4816 = vld [vmem:[%s4814] ss:$8 sm:$0xf0]
    %v4817 = vor.u32 %v4815, %v4816
    %s4818 = scalar_lea.vmem [#allocation8], 199
    %v4819 = vld [vmem:[%s4818] ss:$8 sm:$0xf]
    %v4820 = vld [vmem:[%s4818] ss:$8 sm:$0xf0]
    %v4821 = vor.u32 %v4819, %v4820
    %v4824 = vlaneseq
    %v4825 = vshrl.u32 %v4824, 7
    %v4826 = vsub.s32 0, %v4825
    %v4827 = vrot.slane %v4817, %v4826
    %v4828 = vlaneseq
    %v4829 = vshrl.u32 %v4828, 7
    %v4830 = vsub.s32 1, %v4829
    %v4831 = vrot.slane %v4817, %v4830
    %v4832 = vlaneseq
    %v4833 = vshrl.u32 %v4832, 7
    %v4834 = vsub.s32 2, %v4833
    %v4835 = vrot.slane %v4817, %v4834
    %v4836 = vlaneseq
    %v4837 = vshrl.u32 %v4836, 7
    %v4838 = vsub.s32 3, %v4837
    %v4839 = vrot.slane %v4817, %v4838
    %v4840 = vlaneseq
    %v4841 = vshrl.u32 %v4840, 7
    %v4842 = vsub.s32 4, %v4841
    %v4843 = vrot.slane %v4817, %v4842
    %v4844 = vlaneseq
    %v4845 = vshrl.u32 %v4844, 7
    %v4846 = vsub.s32 5, %v4845
    %v4847 = vrot.slane %v4817, %v4846
    %v4848 = vlaneseq
    %v4849 = vshrl.u32 %v4848, 7
    %v4850 = vsub.s32 6, %v4849
    %v4851 = vrot.slane %v4817, %v4850
    %v4852 = vlaneseq
    %v4853 = vshrl.u32 %v4852, 7
    %v4854 = vsub.s32 7, %v4853
    %v4855 = vrot.slane %v4817, %v4854
    %v4856 = vlaneseq
    %v4857 = vshrl.u32 %v4856, 7
    %v4858 = vsub.s32 0, %v4857
    %v4859 = vrot.slane %v4821, %v4858
    %v4860 = vlaneseq
    %v4861 = vshrl.u32 %v4860, 7
    %v4862 = vsub.s32 1, %v4861
    %v4863 = vrot.slane %v4821, %v4862
    %v4864 = vlaneseq
    %v4865 = vshrl.u32 %v4864, 7
    %v4866 = vsub.s32 2, %v4865
    %v4867 = vrot.slane %v4821, %v4866
    %v4868 = vlaneseq
    %v4869 = vshrl.u32 %v4868, 7
    %v4870 = vsub.s32 3, %v4869
    %v4871 = vrot.slane %v4821, %v4870
    %v4872 = vlaneseq
    %v4873 = vshrl.u32 %v4872, 7
    %v4874 = vsub.s32 4, %v4873
    %v4875 = vrot.slane %v4821, %v4874
    %v4876 = vlaneseq
    %v4877 = vshrl.u32 %v4876, 7
    %v4878 = vsub.s32 5, %v4877
    %v4879 = vrot.slane %v4821, %v4878
    %v4880 = vlaneseq
    %v4881 = vshrl.u32 %v4880, 7
    %v4882 = vsub.s32 6, %v4881
    %v4883 = vrot.slane %v4821, %v4882
    %v4884 = vlaneseq
    %v4885 = vshrl.u32 %v4884, 7
    %v4886 = vsub.s32 7, %v4885
    %v4887 = vrot.slane %v4821, %v4886
    %v4888 = vcombine.low %v4827, %v4831
    %v4889 = vcombine.low %v4835, %v4839
    %v4891 = vunpack.c.l.s4 1983009808
    %v4892 = vunpack.c.0.s8 %v4891
    %v4893 = vlaneseq
    %v4894 = vshrl.u32 %v4893, 7
    %v4895 = vsub.s32 %v4892, %v4894
    %v4896 = vrot.slane %v4888, %v4895
    %v4898 = vunpack.c.l.s4 1983009808
    %v4899 = vunpack.c.0.s8 %v4898
    %v4900 = vlaneseq
    %v4901 = vshrl.u32 %v4900, 7
    %v4902 = vsub.s32 %v4899, %v4901
    %v4903 = vrot.slane %v4889, %v4902
    %v4904 = vcombine.low %v4896, %v4903
    %v4905 = vcombine.low %v4843, %v4847
    %v4906 = vcombine.low %v4851, %v4855
    %v4908 = vunpack.c.l.s4 1983009808
    %v4909 = vunpack.c.0.s8 %v4908
    %v4910 = vlaneseq
    %v4911 = vshrl.u32 %v4910, 7
    %v4912 = vsub.s32 %v4909, %v4911
    %v4913 = vrot.slane %v4905, %v4912
    %v4915 = vunpack.c.l.s4 1983009808
    %v4916 = vunpack.c.0.s8 %v4915
    %v4917 = vlaneseq
    %v4918 = vshrl.u32 %v4917, 7
    %v4919 = vsub.s32 %v4916, %v4918
    %v4920 = vrot.slane %v4906, %v4919
    %v4921 = vcombine.low %v4913, %v4920
    %v4922 = vcombine.low %v4859, %v4863
    %v4923 = vcombine.low %v4867, %v4871
    %v4925 = vunpack.c.l.s4 1983009808
    %v4926 = vunpack.c.0.s8 %v4925
    %v4927 = vlaneseq
    %v4928 = vshrl.u32 %v4927, 7
    %v4929 = vsub.s32 %v4926, %v4928
    %v4930 = vrot.slane %v4922, %v4929
    %v4932 = vunpack.c.l.s4 1983009808
    %v4933 = vunpack.c.0.s8 %v4932
    %v4934 = vlaneseq
    %v4935 = vshrl.u32 %v4934, 7
    %v4936 = vsub.s32 %v4933, %v4935
    %v4937 = vrot.slane %v4923, %v4936
    %v4938 = vcombine.low %v4930, %v4937
    %v4939 = vcombine.low %v4875, %v4879
    %v4940 = vcombine.low %v4883, %v4887
    %v4942 = vunpack.c.l.s4 1983009808
    %v4943 = vunpack.c.0.s8 %v4942
    %v4944 = vlaneseq
    %v4945 = vshrl.u32 %v4944, 7
    %v4946 = vsub.s32 %v4943, %v4945
    %v4947 = vrot.slane %v4939, %v4946
    %v4949 = vunpack.c.l.s4 1983009808
    %v4950 = vunpack.c.0.s8 %v4949
    %v4951 = vlaneseq
    %v4952 = vshrl.u32 %v4951, 7
    %v4953 = vsub.s32 %v4950, %v4952
    %v4954 = vrot.slane %v4940, %v4953
    %v4955 = vcombine.low %v4947, %v4954
    %4956 = vrot.lane.b32.xlu0 %v4904, 127
    %v4957 = vpop.permute.xlu0 %4956
    %4958 = vrot.lane.b32.xlu0 %v4921, 127
    %v4959 = vpop.permute.xlu0 %4958
    %4960 = vrot.lane.b32.xlu0 %v4938, 127
    %v4961 = vpop.permute.xlu0 %4960
    %4962 = vrot.lane.b32.xlu0 %v4955, 127
    %v4963 = vpop.permute.xlu0 %4962
    %v4964 = vrot.slane %v4957, 6
    %v4965 = vrot.slane %v4959, 6
    %v4966 = vrot.slane %v4961, 6
    %v4967 = vrot.slane %v4963, 6
    %v4968 = vsel %vm2434, %v4964, %v4957
    %v4969 = vsel %vm956, %v4964, %v4965
    %v4970 = vsel %vm2434, %v4969, %v4959
    %v4971 = vsel %vm956, %v4965, %v4966
    %v4972 = vsel %vm2434, %v4971, %v4961
    %v4973 = vsel %vm956, %v4966, %v4967
    %v4974 = vsel %vm2434, %v4973, %v4963
    %v4980 = vmul.f32 %v1464, %v4968
    %v4981 = vmul.f32 %v1465, %v4970
    %v4982 = vmul.f32 %v1466, %v4972
    %v4983 = vmul.f32 %v1467, %v4974
    %v4984 = vmul.f32 %v1468, %v4967
    %4986 = vrot.lane.b32.xlu0 %v4980, 112
    %v4987 = vpop.permute.xlu0 %4986
    %v4988 = vrot.slane %v4987, 2
    %v4989 = vsel %vm2412, %v4987, %v4988
    %v4991 = vadd.f32 %v4117, %v4989
    %4993 = vrot.lane.b32.xlu0 %v4981, 112
    %v4994 = vpop.permute.xlu0 %4993
    %v4995 = vrot.slane %v4987, 4
    %v4996 = vrot.slane %v4994, 4
    %v4997 = vrot.slane %v4987, 6
    %v4998 = vrot.slane %v4994, 6
    %v4999 = vsel %vm1645, %v4995, %v4996
    %v5000 = vsel %vm956, %v4997, %v4998
    %v5001 = vsel %vm2412, %v4999, %v5000
    %v5003 = vadd.f32 %v4991, %v5001
    %v5004 = vrot.slane %v4994, 2
    %v5005 = vsel %vm2412, %v4994, %v5004
    %v5007 = vadd.f32 %v5003, %v5005
    %5009 = vrot.lane.b32.xlu0 %v4982, 112
    %v5010 = vpop.permute.xlu0 %5009
    %v5011 = vrot.slane %v5010, 4
    %v5012 = vrot.slane %v5010, 6
    %v5013 = vsel %vm1645, %v4996, %v5011
    %v5014 = vsel %vm956, %v4998, %v5012
    %v5015 = vsel %vm2412, %v5013, %v5014
    %v5017 = vadd.f32 %v5007, %v5015
    %v5018 = vrot.slane %v5010, 2
    %v5019 = vsel %vm2412, %v5010, %v5018
    %v5021 = vadd.f32 %v5017, %v5019
    %5023 = vrot.lane.b32.xlu0 %v4983, 112
    %v5024 = vpop.permute.xlu0 %5023
    %v5025 = vrot.slane %v5024, 4
    %v5026 = vrot.slane %v5024, 6
    %v5027 = vsel %vm1645, %v5011, %v5025
    %v5028 = vsel %vm956, %v5012, %v5026
    %v5029 = vsel %vm2412, %v5027, %v5028
    %v5031 = vadd.f32 %v5021, %v5029
    %v5032 = vrot.slane %v5024, 2
    %v5033 = vsel %vm2412, %v5024, %v5032
    %v5035 = vadd.f32 %v5031, %v5033
    %5037 = vrot.lane.b32.xlu0 %v4984, 112
    %v5038 = vpop.permute.xlu0 %5037
    %v5039 = vrot.slane %v5038, 4
    %v5040 = vrot.slane %v5038, 6
    %v5041 = vsel %vm1645, %v5025, %v5039
    %v5042 = vsel %vm956, %v5026, %v5040
    %v5043 = vsel %vm2412, %v5041, %v5042
    %v5045 = vadd.f32 %v5035, %v5043
    %v5046 = vld [vmem:[#allocation2 + $0x2] sm:$0xff]
    %v5047 = vld [vmem:[#allocation2 + $0xa] sm:$0xff]
    %v5048 = vld [vmem:[#allocation2 + $0x12] sm:$0xff]
    %v5049 = vld [vmem:[#allocation2 + $0x1a] sm:$0xff]
    %s5050 = scalar_lea.vmem [#allocation8], 256
    %v5051 = vld [vmem:[%s5050] ss:$8 sm:$0xf]
    %v5052 = vld [vmem:[%s5050] ss:$8 sm:$0xf0]
    %v5053 = vor.u32 %v5051, %v5052
    %s5054 = scalar_lea.vmem [#allocation8], 320
    %v5055 = vld [vmem:[%s5054] ss:$8 sm:$0xf]
    %v5056 = vld [vmem:[%s5054] ss:$8 sm:$0xf0]
    %v5057 = vor.u32 %v5055, %v5056
    %v5060 = vlaneseq
    %v5061 = vshrl.u32 %v5060, 7
    %v5062 = vsub.s32 0, %v5061
    %v5063 = vrot.slane %v5053, %v5062
    %v5064 = vlaneseq
    %v5065 = vshrl.u32 %v5064, 7
    %v5066 = vsub.s32 1, %v5065
    %v5067 = vrot.slane %v5053, %v5066
    %v5068 = vlaneseq
    %v5069 = vshrl.u32 %v5068, 7
    %v5070 = vsub.s32 2, %v5069
    %v5071 = vrot.slane %v5053, %v5070
    %v5072 = vlaneseq
    %v5073 = vshrl.u32 %v5072, 7
    %v5074 = vsub.s32 3, %v5073
    %v5075 = vrot.slane %v5053, %v5074
    %v5076 = vlaneseq
    %v5077 = vshrl.u32 %v5076, 7
    %v5078 = vsub.s32 4, %v5077
    %v5079 = vrot.slane %v5053, %v5078
    %v5080 = vlaneseq
    %v5081 = vshrl.u32 %v5080, 7
    %v5082 = vsub.s32 5, %v5081
    %v5083 = vrot.slane %v5053, %v5082
    %v5084 = vlaneseq
    %v5085 = vshrl.u32 %v5084, 7
    %v5086 = vsub.s32 6, %v5085
    %v5087 = vrot.slane %v5053, %v5086
    %v5088 = vlaneseq
    %v5089 = vshrl.u32 %v5088, 7
    %v5090 = vsub.s32 7, %v5089
    %v5091 = vrot.slane %v5053, %v5090
    %v5092 = vlaneseq
    %v5093 = vshrl.u32 %v5092, 7
    %v5094 = vsub.s32 0, %v5093
    %v5095 = vrot.slane %v5057, %v5094
    %v5096 = vlaneseq
    %v5097 = vshrl.u32 %v5096, 7
    %v5098 = vsub.s32 1, %v5097
    %v5099 = vrot.slane %v5057, %v5098
    %v5100 = vlaneseq
    %v5101 = vshrl.u32 %v5100, 7
    %v5102 = vsub.s32 2, %v5101
    %v5103 = vrot.slane %v5057, %v5102
    %v5104 = vlaneseq
    %v5105 = vshrl.u32 %v5104, 7
    %v5106 = vsub.s32 3, %v5105
    %v5107 = vrot.slane %v5057, %v5106
    %v5108 = vlaneseq
    %v5109 = vshrl.u32 %v5108, 7
    %v5110 = vsub.s32 4, %v5109
    %v5111 = vrot.slane %v5057, %v5110
    %v5112 = vlaneseq
    %v5113 = vshrl.u32 %v5112, 7
    %v5114 = vsub.s32 5, %v5113
    %v5115 = vrot.slane %v5057, %v5114
    %v5116 = vlaneseq
    %v5117 = vshrl.u32 %v5116, 7
    %v5118 = vsub.s32 6, %v5117
    %v5119 = vrot.slane %v5057, %v5118
    %v5120 = vlaneseq
    %v5121 = vshrl.u32 %v5120, 7
    %v5122 = vsub.s32 7, %v5121
    %v5123 = vrot.slane %v5057, %v5122
    %v5124 = vcombine.low %v5063, %v5067
    %v5125 = vcombine.low %v5071, %v5075
    %v5127 = vunpack.c.l.s4 1983009808
    %v5128 = vunpack.c.0.s8 %v5127
    %v5129 = vlaneseq
    %v5130 = vshrl.u32 %v5129, 7
    %v5131 = vsub.s32 %v5128, %v5130
    %v5132 = vrot.slane %v5124, %v5131
    %v5134 = vunpack.c.l.s4 1983009808
    %v5135 = vunpack.c.0.s8 %v5134
    %v5136 = vlaneseq
    %v5137 = vshrl.u32 %v5136, 7
    %v5138 = vsub.s32 %v5135, %v5137
    %v5139 = vrot.slane %v5125, %v5138
    %v5140 = vcombine.low %v5132, %v5139
    %v5141 = vcombine.low %v5079, %v5083
    %v5142 = vcombine.low %v5087, %v5091
    %v5144 = vunpack.c.l.s4 1983009808
    %v5145 = vunpack.c.0.s8 %v5144
    %v5146 = vlaneseq
    %v5147 = vshrl.u32 %v5146, 7
    %v5148 = vsub.s32 %v5145, %v5147
    %v5149 = vrot.slane %v5141, %v5148
    %v5151 = vunpack.c.l.s4 1983009808
    %v5152 = vunpack.c.0.s8 %v5151
    %v5153 = vlaneseq
    %v5154 = vshrl.u32 %v5153, 7
    %v5155 = vsub.s32 %v5152, %v5154
    %v5156 = vrot.slane %v5142, %v5155
    %v5157 = vcombine.low %v5149, %v5156
    %v5158 = vcombine.low %v5095, %v5099
    %v5159 = vcombine.low %v5103, %v5107
    %v5161 = vunpack.c.l.s4 1983009808
    %v5162 = vunpack.c.0.s8 %v5161
    %v5163 = vlaneseq
    %v5164 = vshrl.u32 %v5163, 7
    %v5165 = vsub.s32 %v5162, %v5164
    %v5166 = vrot.slane %v5158, %v5165
    %v5168 = vunpack.c.l.s4 1983009808
    %v5169 = vunpack.c.0.s8 %v5168
    %v5170 = vlaneseq
    %v5171 = vshrl.u32 %v5170, 7
    %v5172 = vsub.s32 %v5169, %v5171
    %v5173 = vrot.slane %v5159, %v5172
    %v5174 = vcombine.low %v5166, %v5173
    %v5175 = vcombine.low %v5111, %v5115
    %v5176 = vcombine.low %v5119, %v5123
    %v5178 = vunpack.c.l.s4 1983009808
    %v5179 = vunpack.c.0.s8 %v5178
    %v5180 = vlaneseq
    %v5181 = vshrl.u32 %v5180, 7
    %v5182 = vsub.s32 %v5179, %v5181
    %v5183 = vrot.slane %v5175, %v5182
    %v5185 = vunpack.c.l.s4 1983009808
    %v5186 = vunpack.c.0.s8 %v5185
    %v5187 = vlaneseq
    %v5188 = vshrl.u32 %v5187, 7
    %v5189 = vsub.s32 %v5186, %v5188
    %v5190 = vrot.slane %v5176, %v5189
    %v5191 = vcombine.low %v5183, %v5190
    %v5196 = vmul.f32 %v5046, %v5140
    %v5197 = vmul.f32 %v5047, %v5157
    %v5198 = vmul.f32 %v5048, %v5174
    %v5199 = vmul.f32 %v5049, %v5191
    %5201 = vrot.lane.b32.xlu0 %v5196, 111
    %v5202 = vpop.permute.xlu0 %5201
    %v5203 = vrot.slane %v5202, 6
    %v5204 = vsel %vm1622, %v5203, %v5202
    %v5206 = vadd.f32 %v4349, %v5204
    %v5207 = vrot.slane %v5202, 2
    %v5208 = vrot.slane %v5202, 4
    %v5209 = vsel %vm1622, %v5207, %v5208
    %v5211 = vadd.f32 %v5206, %v5209
    %5213 = vrot.lane.b32.xlu0 %v5197, 111
    %v5214 = vpop.permute.xlu0 %5213
    %v5215 = vrot.slane %v5214, 6
    %v5216 = vsel %vm1622, %v5215, %v5214
    %v5218 = vadd.f32 %v5211, %v5216
    %v5219 = vrot.slane %v5214, 2
    %v5220 = vrot.slane %v5214, 4
    %v5221 = vsel %vm1622, %v5219, %v5220
    %v5223 = vadd.f32 %v5218, %v5221
    %5225 = vrot.lane.b32.xlu0 %v5198, 111
    %v5226 = vpop.permute.xlu0 %5225
    %v5227 = vrot.slane %v5226, 6
    %v5228 = vsel %vm1622, %v5227, %v5226
    %v5230 = vadd.f32 %v5223, %v5228
    %v5231 = vrot.slane %v5226, 2
    %v5232 = vrot.slane %v5226, 4
    %v5233 = vsel %vm1622, %v5231, %v5232
    %v5235 = vadd.f32 %v5230, %v5233
    %5237 = vrot.lane.b32.xlu0 %v5199, 111
    %v5238 = vpop.permute.xlu0 %5237
    %v5239 = vrot.slane %v5238, 6
    %v5240 = vsel %vm1622, %v5239, %v5238
    %v5242 = vadd.f32 %v5235, %v5240
    %v5243 = vrot.slane %v5238, 2
    %v5244 = vrot.slane %v5238, 4
    %v5245 = vsel %vm1622, %v5243, %v5244
    %v5247 = vadd.f32 %v5242, %v5245
    %s5248 = scalar_lea.vmem [#allocation8], 257
    %v5249 = vld [vmem:[%s5248] ss:$8 sm:$0xf]
    %v5250 = vld [vmem:[%s5248] ss:$8 sm:$0xf0]
    %v5251 = vor.u32 %v5249, %v5250
    %s5252 = scalar_lea.vmem [#allocation8], 321
    %v5253 = vld [vmem:[%s5252] ss:$8 sm:$0xf]
    %v5254 = vld [vmem:[%s5252] ss:$8 sm:$0xf0]
    %v5255 = vor.u32 %v5253, %v5254
    %v5258 = vlaneseq
    %v5259 = vshrl.u32 %v5258, 7
    %v5260 = vsub.s32 0, %v5259
    %v5261 = vrot.slane %v5251, %v5260
    %v5262 = vlaneseq
    %v5263 = vshrl.u32 %v5262, 7
    %v5264 = vsub.s32 1, %v5263
    %v5265 = vrot.slane %v5251, %v5264
    %v5266 = vlaneseq
    %v5267 = vshrl.u32 %v5266, 7
    %v5268 = vsub.s32 2, %v5267
    %v5269 = vrot.slane %v5251, %v5268
    %v5270 = vlaneseq
    %v5271 = vshrl.u32 %v5270, 7
    %v5272 = vsub.s32 3, %v5271
    %v5273 = vrot.slane %v5251, %v5272
    %v5274 = vlaneseq
    %v5275 = vshrl.u32 %v5274, 7
    %v5276 = vsub.s32 4, %v5275
    %v5277 = vrot.slane %v5251, %v5276
    %v5278 = vlaneseq
    %v5279 = vshrl.u32 %v5278, 7
    %v5280 = vsub.s32 5, %v5279
    %v5281 = vrot.slane %v5251, %v5280
    %v5282 = vlaneseq
    %v5283 = vshrl.u32 %v5282, 7
    %v5284 = vsub.s32 6, %v5283
    %v5285 = vrot.slane %v5251, %v5284
    %v5286 = vlaneseq
    %v5287 = vshrl.u32 %v5286, 7
    %v5288 = vsub.s32 7, %v5287
    %v5289 = vrot.slane %v5251, %v5288
    %v5290 = vlaneseq
    %v5291 = vshrl.u32 %v5290, 7
    %v5292 = vsub.s32 0, %v5291
    %v5293 = vrot.slane %v5255, %v5292
    %v5294 = vlaneseq
    %v5295 = vshrl.u32 %v5294, 7
    %v5296 = vsub.s32 1, %v5295
    %v5297 = vrot.slane %v5255, %v5296
    %v5298 = vlaneseq
    %v5299 = vshrl.u32 %v5298, 7
    %v5300 = vsub.s32 2, %v5299
    %v5301 = vrot.slane %v5255, %v5300
    %v5302 = vlaneseq
    %v5303 = vshrl.u32 %v5302, 7
    %v5304 = vsub.s32 3, %v5303
    %v5305 = vrot.slane %v5255, %v5304
    %v5306 = vlaneseq
    %v5307 = vshrl.u32 %v5306, 7
    %v5308 = vsub.s32 4, %v5307
    %v5309 = vrot.slane %v5255, %v5308
    %v5310 = vlaneseq
    %v5311 = vshrl.u32 %v5310, 7
    %v5312 = vsub.s32 5, %v5311
    %v5313 = vrot.slane %v5255, %v5312
    %v5314 = vlaneseq
    %v5315 = vshrl.u32 %v5314, 7
    %v5316 = vsub.s32 6, %v5315
    %v5317 = vrot.slane %v5255, %v5316
    %v5318 = vlaneseq
    %v5319 = vshrl.u32 %v5318, 7
    %v5320 = vsub.s32 7, %v5319
    %v5321 = vrot.slane %v5255, %v5320
    %v5322 = vcombine.low %v5261, %v5265
    %v5323 = vcombine.low %v5269, %v5273
    %v5325 = vunpack.c.l.s4 1983009808
    %v5326 = vunpack.c.0.s8 %v5325
    %v5327 = vlaneseq
    %v5328 = vshrl.u32 %v5327, 7
    %v5329 = vsub.s32 %v5326, %v5328
    %v5330 = vrot.slane %v5322, %v5329
    %v5332 = vunpack.c.l.s4 1983009808
    %v5333 = vunpack.c.0.s8 %v5332
    %v5334 = vlaneseq
    %v5335 = vshrl.u32 %v5334, 7
    %v5336 = vsub.s32 %v5333, %v5335
    %v5337 = vrot.slane %v5323, %v5336
    %v5338 = vcombine.low %v5330, %v5337
    %v5339 = vcombine.low %v5277, %v5281
    %v5340 = vcombine.low %v5285, %v5289
    %v5342 = vunpack.c.l.s4 1983009808
    %v5343 = vunpack.c.0.s8 %v5342
    %v5344 = vlaneseq
    %v5345 = vshrl.u32 %v5344, 7
    %v5346 = vsub.s32 %v5343, %v5345
    %v5347 = vrot.slane %v5339, %v5346
    %v5349 = vunpack.c.l.s4 1983009808
    %v5350 = vunpack.c.0.s8 %v5349
    %v5351 = vlaneseq
    %v5352 = vshrl.u32 %v5351, 7
    %v5353 = vsub.s32 %v5350, %v5352
    %v5354 = vrot.slane %v5340, %v5353
    %v5355 = vcombine.low %v5347, %v5354
    %v5356 = vcombine.low %v5293, %v5297
    %v5357 = vcombine.low %v5301, %v5305
    %v5359 = vunpack.c.l.s4 1983009808
    %v5360 = vunpack.c.0.s8 %v5359
    %v5361 = vlaneseq
    %v5362 = vshrl.u32 %v5361, 7
    %v5363 = vsub.s32 %v5360, %v5362
    %v5364 = vrot.slane %v5356, %v5363
    %v5366 = vunpack.c.l.s4 1983009808
    %v5367 = vunpack.c.0.s8 %v5366
    %v5368 = vlaneseq
    %v5369 = vshrl.u32 %v5368, 7
    %v5370 = vsub.s32 %v5367, %v5369
    %v5371 = vrot.slane %v5357, %v5370
    %v5372 = vcombine.low %v5364, %v5371
    %v5373 = vcombine.low %v5309, %v5313
    %v5374 = vcombine.low %v5317, %v5321
    %v5376 = vunpack.c.l.s4 1983009808
    %v5377 = vunpack.c.0.s8 %v5376
    %v5378 = vlaneseq
    %v5379 = vshrl.u32 %v5378, 7
    %v5380 = vsub.s32 %v5377, %v5379
    %v5381 = vrot.slane %v5373, %v5380
    %v5383 = vunpack.c.l.s4 1983009808
    %v5384 = vunpack.c.0.s8 %v5383
    %v5385 = vlaneseq
    %v5386 = vshrl.u32 %v5385, 7
    %v5387 = vsub.s32 %v5384, %v5386
    %v5388 = vrot.slane %v5374, %v5387
    %v5389 = vcombine.low %v5381, %v5388
    %v5394 = vmul.f32 %v5046, %v5338
    %v5395 = vmul.f32 %v5047, %v5355
    %v5396 = vmul.f32 %v5048, %v5372
    %v5397 = vmul.f32 %v5049, %v5389
    %5399 = vrot.lane.b32.xlu0 %v5394, 111
    %v5400 = vpop.permute.xlu0 %5399
    %v5401 = vrot.slane %v5400, 6
    %v5402 = vsel %vm1622, %v5401, %v5400
    %v5404 = vadd.f32 %v4581, %v5402
    %v5405 = vrot.slane %v5400, 2
    %v5406 = vrot.slane %v5400, 4
    %v5407 = vsel %vm1622, %v5405, %v5406
    %v5409 = vadd.f32 %v5404, %v5407
    %5411 = vrot.lane.b32.xlu0 %v5395, 111
    %v5412 = vpop.permute.xlu0 %5411
    %v5413 = vrot.slane %v5412, 6
    %v5414 = vsel %vm1622, %v5413, %v5412
    %v5416 = vadd.f32 %v5409, %v5414
    %v5417 = vrot.slane %v5412, 2
    %v5418 = vrot.slane %v5412, 4
    %v5419 = vsel %vm1622, %v5417, %v5418
    %v5421 = vadd.f32 %v5416, %v5419
    %5423 = vrot.lane.b32.xlu0 %v5396, 111
    %v5424 = vpop.permute.xlu0 %5423
    %v5425 = vrot.slane %v5424, 6
    %v5426 = vsel %vm1622, %v5425, %v5424
    %v5428 = vadd.f32 %v5421, %v5426
    %v5429 = vrot.slane %v5424, 2
    %v5430 = vrot.slane %v5424, 4
    %v5431 = vsel %vm1622, %v5429, %v5430
    %v5433 = vadd.f32 %v5428, %v5431
    %5435 = vrot.lane.b32.xlu0 %v5397, 111
    %v5436 = vpop.permute.xlu0 %5435
    %v5437 = vrot.slane %v5436, 6
    %v5438 = vsel %vm1622, %v5437, %v5436
    %v5440 = vadd.f32 %v5433, %v5438
    %v5441 = vrot.slane %v5436, 2
    %v5442 = vrot.slane %v5436, 4
    %v5443 = vsel %vm1622, %v5441, %v5442
    %v5445 = vadd.f32 %v5440, %v5443
    %s5446 = scalar_lea.vmem [#allocation8], 258
    %v5447 = vld [vmem:[%s5446] ss:$8 sm:$0xf]
    %v5448 = vld [vmem:[%s5446] ss:$8 sm:$0xf0]
    %v5449 = vor.u32 %v5447, %v5448
    %s5450 = scalar_lea.vmem [#allocation8], 322
    %v5451 = vld [vmem:[%s5450] ss:$8 sm:$0xf]
    %v5452 = vld [vmem:[%s5450] ss:$8 sm:$0xf0]
    %v5453 = vor.u32 %v5451, %v5452
    %v5456 = vlaneseq
    %v5457 = vshrl.u32 %v5456, 7
    %v5458 = vsub.s32 0, %v5457
    %v5459 = vrot.slane %v5449, %v5458
    %v5460 = vlaneseq
    %v5461 = vshrl.u32 %v5460, 7
    %v5462 = vsub.s32 1, %v5461
    %v5463 = vrot.slane %v5449, %v5462
    %v5464 = vlaneseq
    %v5465 = vshrl.u32 %v5464, 7
    %v5466 = vsub.s32 2, %v5465
    %v5467 = vrot.slane %v5449, %v5466
    %v5468 = vlaneseq
    %v5469 = vshrl.u32 %v5468, 7
    %v5470 = vsub.s32 3, %v5469
    %v5471 = vrot.slane %v5449, %v5470
    %v5472 = vlaneseq
    %v5473 = vshrl.u32 %v5472, 7
    %v5474 = vsub.s32 4, %v5473
    %v5475 = vrot.slane %v5449, %v5474
    %v5476 = vlaneseq
    %v5477 = vshrl.u32 %v5476, 7
    %v5478 = vsub.s32 5, %v5477
    %v5479 = vrot.slane %v5449, %v5478
    %v5480 = vlaneseq
    %v5481 = vshrl.u32 %v5480, 7
    %v5482 = vsub.s32 6, %v5481
    %v5483 = vrot.slane %v5449, %v5482
    %v5484 = vlaneseq
    %v5485 = vshrl.u32 %v5484, 7
    %v5486 = vsub.s32 7, %v5485
    %v5487 = vrot.slane %v5449, %v5486
    %v5488 = vlaneseq
    %v5489 = vshrl.u32 %v5488, 7
    %v5490 = vsub.s32 0, %v5489
    %v5491 = vrot.slane %v5453, %v5490
    %v5492 = vlaneseq
    %v5493 = vshrl.u32 %v5492, 7
    %v5494 = vsub.s32 1, %v5493
    %v5495 = vrot.slane %v5453, %v5494
    %v5496 = vlaneseq
    %v5497 = vshrl.u32 %v5496, 7
    %v5498 = vsub.s32 2, %v5497
    %v5499 = vrot.slane %v5453, %v5498
    %v5500 = vlaneseq
    %v5501 = vshrl.u32 %v5500, 7
    %v5502 = vsub.s32 3, %v5501
    %v5503 = vrot.slane %v5453, %v5502
    %v5504 = vlaneseq
    %v5505 = vshrl.u32 %v5504, 7
    %v5506 = vsub.s32 4, %v5505
    %v5507 = vrot.slane %v5453, %v5506
    %v5508 = vlaneseq
    %v5509 = vshrl.u32 %v5508, 7
    %v5510 = vsub.s32 5, %v5509
    %v5511 = vrot.slane %v5453, %v5510
    %v5512 = vlaneseq
    %v5513 = vshrl.u32 %v5512, 7
    %v5514 = vsub.s32 6, %v5513
    %v5515 = vrot.slane %v5453, %v5514
    %v5516 = vlaneseq
    %v5517 = vshrl.u32 %v5516, 7
    %v5518 = vsub.s32 7, %v5517
    %v5519 = vrot.slane %v5453, %v5518
    %v5520 = vcombine.low %v5459, %v5463
    %v5521 = vcombine.low %v5467, %v5471
    %v5523 = vunpack.c.l.s4 1983009808
    %v5524 = vunpack.c.0.s8 %v5523
    %v5525 = vlaneseq
    %v5526 = vshrl.u32 %v5525, 7
    %v5527 = vsub.s32 %v5524, %v5526
    %v5528 = vrot.slane %v5520, %v5527
    %v5530 = vunpack.c.l.s4 1983009808
    %v5531 = vunpack.c.0.s8 %v5530
    %v5532 = vlaneseq
    %v5533 = vshrl.u32 %v5532, 7
    %v5534 = vsub.s32 %v5531, %v5533
    %v5535 = vrot.slane %v5521, %v5534
    %v5536 = vcombine.low %v5528, %v5535
    %v5537 = vcombine.low %v5475, %v5479
    %v5538 = vcombine.low %v5483, %v5487
    %v5540 = vunpack.c.l.s4 1983009808
    %v5541 = vunpack.c.0.s8 %v5540
    %v5542 = vlaneseq
    %v5543 = vshrl.u32 %v5542, 7
    %v5544 = vsub.s32 %v5541, %v5543
    %v5545 = vrot.slane %v5537, %v5544
    %v5547 = vunpack.c.l.s4 1983009808
    %v5548 = vunpack.c.0.s8 %v5547
    %v5549 = vlaneseq
    %v5550 = vshrl.u32 %v5549, 7
    %v5551 = vsub.s32 %v5548, %v5550
    %v5552 = vrot.slane %v5538, %v5551
    %v5553 = vcombine.low %v5545, %v5552
    %v5554 = vcombine.low %v5491, %v5495
    %v5555 = vcombine.low %v5499, %v5503
    %v5557 = vunpack.c.l.s4 1983009808
    %v5558 = vunpack.c.0.s8 %v5557
    %v5559 = vlaneseq
    %v5560 = vshrl.u32 %v5559, 7
    %v5561 = vsub.s32 %v5558, %v5560
    %v5562 = vrot.slane %v5554, %v5561
    %v5564 = vunpack.c.l.s4 1983009808
    %v5565 = vunpack.c.0.s8 %v5564
    %v5566 = vlaneseq
    %v5567 = vshrl.u32 %v5566, 7
    %v5568 = vsub.s32 %v5565, %v5567
    %v5569 = vrot.slane %v5555, %v5568
    %v5570 = vcombine.low %v5562, %v5569
    %v5571 = vcombine.low %v5507, %v5511
    %v5572 = vcombine.low %v5515, %v5519
    %v5574 = vunpack.c.l.s4 1983009808
    %v5575 = vunpack.c.0.s8 %v5574
    %v5576 = vlaneseq
    %v5577 = vshrl.u32 %v5576, 7
    %v5578 = vsub.s32 %v5575, %v5577
    %v5579 = vrot.slane %v5571, %v5578
    %v5581 = vunpack.c.l.s4 1983009808
    %v5582 = vunpack.c.0.s8 %v5581
    %v5583 = vlaneseq
    %v5584 = vshrl.u32 %v5583, 7
    %v5585 = vsub.s32 %v5582, %v5584
    %v5586 = vrot.slane %v5572, %v5585
    %v5587 = vcombine.low %v5579, %v5586
    %v5592 = vmul.f32 %v5046, %v5536
    %v5593 = vmul.f32 %v5047, %v5553
    %v5594 = vmul.f32 %v5048, %v5570
    %v5595 = vmul.f32 %v5049, %v5587
    %5597 = vrot.lane.b32.xlu0 %v5592, 111
    %v5598 = vpop.permute.xlu0 %5597
    %v5599 = vrot.slane %v5598, 6
    %v5600 = vsel %vm1622, %v5599, %v5598
    %v5602 = vadd.f32 %v4813, %v5600
    %v5603 = vrot.slane %v5598, 2
    %v5604 = vrot.slane %v5598, 4
    %v5605 = vsel %vm1622, %v5603, %v5604
    %v5607 = vadd.f32 %v5602, %v5605
    %5609 = vrot.lane.b32.xlu0 %v5593, 111
    %v5610 = vpop.permute.xlu0 %5609
    %v5611 = vrot.slane %v5610, 6
    %v5612 = vsel %vm1622, %v5611, %v5610
    %v5614 = vadd.f32 %v5607, %v5612
    %v5615 = vrot.slane %v5610, 2
    %v5616 = vrot.slane %v5610, 4
    %v5617 = vsel %vm1622, %v5615, %v5616
    %v5619 = vadd.f32 %v5614, %v5617
    %5621 = vrot.lane.b32.xlu0 %v5594, 111
    %v5622 = vpop.permute.xlu0 %5621
    %v5623 = vrot.slane %v5622, 6
    %v5624 = vsel %vm1622, %v5623, %v5622
    %v5626 = vadd.f32 %v5619, %v5624
    %v5627 = vrot.slane %v5622, 2
    %v5628 = vrot.slane %v5622, 4
    %v5629 = vsel %vm1622, %v5627, %v5628
    %v5631 = vadd.f32 %v5626, %v5629
    %5633 = vrot.lane.b32.xlu0 %v5595, 111
    %v5634 = vpop.permute.xlu0 %5633
    %v5635 = vrot.slane %v5634, 6
    %v5636 = vsel %vm1622, %v5635, %v5634
    %v5638 = vadd.f32 %v5631, %v5636
    %v5639 = vrot.slane %v5634, 2
    %v5640 = vrot.slane %v5634, 4
    %v5641 = vsel %vm1622, %v5639, %v5640
    %v5643 = vadd.f32 %v5638, %v5641
    %s5644 = scalar_lea.vmem [#allocation8], 259
    %v5645 = vld [vmem:[%s5644] ss:$8 sm:$0xf]
    %v5646 = vld [vmem:[%s5644] ss:$8 sm:$0xf0]
    %v5647 = vor.u32 %v5645, %v5646
    %s5648 = scalar_lea.vmem [#allocation8], 323
    %v5649 = vld [vmem:[%s5648] ss:$8 sm:$0xf]
    %v5650 = vld [vmem:[%s5648] ss:$8 sm:$0xf0]
    %v5651 = vor.u32 %v5649, %v5650
    %v5654 = vlaneseq
    %v5655 = vshrl.u32 %v5654, 7
    %v5656 = vsub.s32 0, %v5655
    %v5657 = vrot.slane %v5647, %v5656
    %v5658 = vlaneseq
    %v5659 = vshrl.u32 %v5658, 7
    %v5660 = vsub.s32 1, %v5659
    %v5661 = vrot.slane %v5647, %v5660
    %v5662 = vlaneseq
    %v5663 = vshrl.u32 %v5662, 7
    %v5664 = vsub.s32 2, %v5663
    %v5665 = vrot.slane %v5647, %v5664
    %v5666 = vlaneseq
    %v5667 = vshrl.u32 %v5666, 7
    %v5668 = vsub.s32 3, %v5667
    %v5669 = vrot.slane %v5647, %v5668
    %v5670 = vlaneseq
    %v5671 = vshrl.u32 %v5670, 7
    %v5672 = vsub.s32 4, %v5671
    %v5673 = vrot.slane %v5647, %v5672
    %v5674 = vlaneseq
    %v5675 = vshrl.u32 %v5674, 7
    %v5676 = vsub.s32 5, %v5675
    %v5677 = vrot.slane %v5647, %v5676
    %v5678 = vlaneseq
    %v5679 = vshrl.u32 %v5678, 7
    %v5680 = vsub.s32 6, %v5679
    %v5681 = vrot.slane %v5647, %v5680
    %v5682 = vlaneseq
    %v5683 = vshrl.u32 %v5682, 7
    %v5684 = vsub.s32 7, %v5683
    %v5685 = vrot.slane %v5647, %v5684
    %v5686 = vlaneseq
    %v5687 = vshrl.u32 %v5686, 7
    %v5688 = vsub.s32 0, %v5687
    %v5689 = vrot.slane %v5651, %v5688
    %v5690 = vlaneseq
    %v5691 = vshrl.u32 %v5690, 7
    %v5692 = vsub.s32 1, %v5691
    %v5693 = vrot.slane %v5651, %v5692
    %v5694 = vlaneseq
    %v5695 = vshrl.u32 %v5694, 7
    %v5696 = vsub.s32 2, %v5695
    %v5697 = vrot.slane %v5651, %v5696
    %v5698 = vlaneseq
    %v5699 = vshrl.u32 %v5698, 7
    %v5700 = vsub.s32 3, %v5699
    %v5701 = vrot.slane %v5651, %v5700
    %v5702 = vlaneseq
    %v5703 = vshrl.u32 %v5702, 7
    %v5704 = vsub.s32 4, %v5703
    %v5705 = vrot.slane %v5651, %v5704
    %v5706 = vlaneseq
    %v5707 = vshrl.u32 %v5706, 7
    %v5708 = vsub.s32 5, %v5707
    %v5709 = vrot.slane %v5651, %v5708
    %v5710 = vlaneseq
    %v5711 = vshrl.u32 %v5710, 7
    %v5712 = vsub.s32 6, %v5711
    %v5713 = vrot.slane %v5651, %v5712
    %v5714 = vlaneseq
    %v5715 = vshrl.u32 %v5714, 7
    %v5716 = vsub.s32 7, %v5715
    %v5717 = vrot.slane %v5651, %v5716
    %v5718 = vcombine.low %v5657, %v5661
    %v5719 = vcombine.low %v5665, %v5669
    %v5721 = vunpack.c.l.s4 1983009808
    %v5722 = vunpack.c.0.s8 %v5721
    %v5723 = vlaneseq
    %v5724 = vshrl.u32 %v5723, 7
    %v5725 = vsub.s32 %v5722, %v5724
    %v5726 = vrot.slane %v5718, %v5725
    %v5728 = vunpack.c.l.s4 1983009808
    %v5729 = vunpack.c.0.s8 %v5728
    %v5730 = vlaneseq
    %v5731 = vshrl.u32 %v5730, 7
    %v5732 = vsub.s32 %v5729, %v5731
    %v5733 = vrot.slane %v5719, %v5732
    %v5734 = vcombine.low %v5726, %v5733
    %v5735 = vcombine.low %v5673, %v5677
    %v5736 = vcombine.low %v5681, %v5685
    %v5738 = vunpack.c.l.s4 1983009808
    %v5739 = vunpack.c.0.s8 %v5738
    %v5740 = vlaneseq
    %v5741 = vshrl.u32 %v5740, 7
    %v5742 = vsub.s32 %v5739, %v5741
    %v5743 = vrot.slane %v5735, %v5742
    %v5745 = vunpack.c.l.s4 1983009808
    %v5746 = vunpack.c.0.s8 %v5745
    %v5747 = vlaneseq
    %v5748 = vshrl.u32 %v5747, 7
    %v5749 = vsub.s32 %v5746, %v5748
    %v5750 = vrot.slane %v5736, %v5749
    %v5751 = vcombine.low %v5743, %v5750
    %v5752 = vcombine.low %v5689, %v5693
    %v5753 = vcombine.low %v5697, %v5701
    %v5755 = vunpack.c.l.s4 1983009808
    %v5756 = vunpack.c.0.s8 %v5755
    %v5757 = vlaneseq
    %v5758 = vshrl.u32 %v5757, 7
    %v5759 = vsub.s32 %v5756, %v5758
    %v5760 = vrot.slane %v5752, %v5759
    %v5762 = vunpack.c.l.s4 1983009808
    %v5763 = vunpack.c.0.s8 %v5762
    %v5764 = vlaneseq
    %v5765 = vshrl.u32 %v5764, 7
    %v5766 = vsub.s32 %v5763, %v5765
    %v5767 = vrot.slane %v5753, %v5766
    %v5768 = vcombine.low %v5760, %v5767
    %v5769 = vcombine.low %v5705, %v5709
    %v5770 = vcombine.low %v5713, %v5717
    %v5772 = vunpack.c.l.s4 1983009808
    %v5773 = vunpack.c.0.s8 %v5772
    %v5774 = vlaneseq
    %v5775 = vshrl.u32 %v5774, 7
    %v5776 = vsub.s32 %v5773, %v5775
    %v5777 = vrot.slane %v5769, %v5776
    %v5779 = vunpack.c.l.s4 1983009808
    %v5780 = vunpack.c.0.s8 %v5779
    %v5781 = vlaneseq
    %v5782 = vshrl.u32 %v5781, 7
    %v5783 = vsub.s32 %v5780, %v5782
    %v5784 = vrot.slane %v5770, %v5783
    %v5785 = vcombine.low %v5777, %v5784
    %v5790 = vmul.f32 %v5046, %v5734
    %v5791 = vmul.f32 %v5047, %v5751
    %v5792 = vmul.f32 %v5048, %v5768
    %v5793 = vmul.f32 %v5049, %v5785
    %5795 = vrot.lane.b32.xlu0 %v5790, 111
    %v5796 = vpop.permute.xlu0 %5795
    %v5797 = vrot.slane %v5796, 6
    %v5798 = vsel %vm1622, %v5797, %v5796
    %v5800 = vadd.f32 %v5045, %v5798
    %v5801 = vrot.slane %v5796, 2
    %v5802 = vrot.slane %v5796, 4
    %v5803 = vsel %vm1622, %v5801, %v5802
    %v5805 = vadd.f32 %v5800, %v5803
    %5807 = vrot.lane.b32.xlu0 %v5791, 111
    %v5808 = vpop.permute.xlu0 %5807
    %v5809 = vrot.slane %v5808, 6
    %v5810 = vsel %vm1622, %v5809, %v5808
    %v5812 = vadd.f32 %v5805, %v5810
    %v5813 = vrot.slane %v5808, 2
    %v5814 = vrot.slane %v5808, 4
    %v5815 = vsel %vm1622, %v5813, %v5814
    %v5817 = vadd.f32 %v5812, %v5815
    %5819 = vrot.lane.b32.xlu0 %v5792, 111
    %v5820 = vpop.permute.xlu0 %5819
    %v5821 = vrot.slane %v5820, 6
    %v5822 = vsel %vm1622, %v5821, %v5820
    %v5824 = vadd.f32 %v5817, %v5822
    %v5825 = vrot.slane %v5820, 2
    %v5826 = vrot.slane %v5820, 4
    %v5827 = vsel %vm1622, %v5825, %v5826
    %v5829 = vadd.f32 %v5824, %v5827
    %5831 = vrot.lane.b32.xlu0 %v5793, 111
    %v5832 = vpop.permute.xlu0 %5831
    %v5833 = vrot.slane %v5832, 6
    %v5834 = vsel %vm1622, %v5833, %v5832
    %v5836 = vadd.f32 %v5829, %v5834
    %v5837 = vrot.slane %v5832, 2
    %v5838 = vrot.slane %v5832, 4
    %v5839 = vsel %vm1622, %v5837, %v5838
    %v5841 = vadd.f32 %v5836, %v5839
    %v5842 = vld [vmem:[#allocation2 + $0x2] sm:$0xff]
    %v5843 = vld [vmem:[#allocation2 + $0xa] sm:$0xff]
    %v5844 = vld [vmem:[#allocation2 + $0x12] sm:$0xff]
    %v5845 = vld [vmem:[#allocation2 + $0x1a] sm:$0xff]
    %v5846 = vld [vmem:[#allocation2 + $0x22] sm:$0x3]
    %s5847 = scalar_lea.vmem [#allocation8], 260
    %v5848 = vld [vmem:[%s5847] ss:$8 sm:$0xf]
    %v5849 = vld [vmem:[%s5847] ss:$8 sm:$0xf0]
    %v5850 = vor.u32 %v5848, %v5849
    %s5851 = scalar_lea.vmem [#allocation8], 324
    %v5852 = vld [vmem:[%s5851] ss:$8 sm:$0xf]
    %v5853 = vld [vmem:[%s5851] ss:$8 sm:$0xf0]
    %v5854 = vor.u32 %v5852, %v5853
    %v5857 = vlaneseq
    %v5858 = vshrl.u32 %v5857, 7
    %v5859 = vsub.s32 0, %v5858
    %v5860 = vrot.slane %v5850, %v5859
    %v5861 = vlaneseq
    %v5862 = vshrl.u32 %v5861, 7
    %v5863 = vsub.s32 1, %v5862
    %v5864 = vrot.slane %v5850, %v5863
    %v5865 = vlaneseq
    %v5866 = vshrl.u32 %v5865, 7
    %v5867 = vsub.s32 2, %v5866
    %v5868 = vrot.slane %v5850, %v5867
    %v5869 = vlaneseq
    %v5870 = vshrl.u32 %v5869, 7
    %v5871 = vsub.s32 3, %v5870
    %v5872 = vrot.slane %v5850, %v5871
    %v5873 = vlaneseq
    %v5874 = vshrl.u32 %v5873, 7
    %v5875 = vsub.s32 4, %v5874
    %v5876 = vrot.slane %v5850, %v5875
    %v5877 = vlaneseq
    %v5878 = vshrl.u32 %v5877, 7
    %v5879 = vsub.s32 5, %v5878
    %v5880 = vrot.slane %v5850, %v5879
    %v5881 = vlaneseq
    %v5882 = vshrl.u32 %v5881, 7
    %v5883 = vsub.s32 6, %v5882
    %v5884 = vrot.slane %v5850, %v5883
    %v5885 = vlaneseq
    %v5886 = vshrl.u32 %v5885, 7
    %v5887 = vsub.s32 7, %v5886
    %v5888 = vrot.slane %v5850, %v5887
    %v5889 = vlaneseq
    %v5890 = vshrl.u32 %v5889, 7
    %v5891 = vsub.s32 0, %v5890
    %v5892 = vrot.slane %v5854, %v5891
    %v5893 = vlaneseq
    %v5894 = vshrl.u32 %v5893, 7
    %v5895 = vsub.s32 1, %v5894
    %v5896 = vrot.slane %v5854, %v5895
    %v5897 = vlaneseq
    %v5898 = vshrl.u32 %v5897, 7
    %v5899 = vsub.s32 2, %v5898
    %v5900 = vrot.slane %v5854, %v5899
    %v5901 = vlaneseq
    %v5902 = vshrl.u32 %v5901, 7
    %v5903 = vsub.s32 3, %v5902
    %v5904 = vrot.slane %v5854, %v5903
    %v5905 = vlaneseq
    %v5906 = vshrl.u32 %v5905, 7
    %v5907 = vsub.s32 4, %v5906
    %v5908 = vrot.slane %v5854, %v5907
    %v5909 = vlaneseq
    %v5910 = vshrl.u32 %v5909, 7
    %v5911 = vsub.s32 5, %v5910
    %v5912 = vrot.slane %v5854, %v5911
    %v5913 = vlaneseq
    %v5914 = vshrl.u32 %v5913, 7
    %v5915 = vsub.s32 6, %v5914
    %v5916 = vrot.slane %v5854, %v5915
    %v5917 = vlaneseq
    %v5918 = vshrl.u32 %v5917, 7
    %v5919 = vsub.s32 7, %v5918
    %v5920 = vrot.slane %v5854, %v5919
    %v5921 = vcombine.low %v5860, %v5864
    %v5922 = vcombine.low %v5868, %v5872
    %v5924 = vunpack.c.l.s4 1983009808
    %v5925 = vunpack.c.0.s8 %v5924
    %v5926 = vlaneseq
    %v5927 = vshrl.u32 %v5926, 7
    %v5928 = vsub.s32 %v5925, %v5927
    %v5929 = vrot.slane %v5921, %v5928
    %v5931 = vunpack.c.l.s4 1983009808
    %v5932 = vunpack.c.0.s8 %v5931
    %v5933 = vlaneseq
    %v5934 = vshrl.u32 %v5933, 7
    %v5935 = vsub.s32 %v5932, %v5934
    %v5936 = vrot.slane %v5922, %v5935
    %v5937 = vcombine.low %v5929, %v5936
    %v5938 = vcombine.low %v5876, %v5880
    %v5939 = vcombine.low %v5884, %v5888
    %v5941 = vunpack.c.l.s4 1983009808
    %v5942 = vunpack.c.0.s8 %v5941
    %v5943 = vlaneseq
    %v5944 = vshrl.u32 %v5943, 7
    %v5945 = vsub.s32 %v5942, %v5944
    %v5946 = vrot.slane %v5938, %v5945
    %v5948 = vunpack.c.l.s4 1983009808
    %v5949 = vunpack.c.0.s8 %v5948
    %v5950 = vlaneseq
    %v5951 = vshrl.u32 %v5950, 7
    %v5952 = vsub.s32 %v5949, %v5951
    %v5953 = vrot.slane %v5939, %v5952
    %v5954 = vcombine.low %v5946, %v5953
    %v5955 = vcombine.low %v5892, %v5896
    %v5956 = vcombine.low %v5900, %v5904
    %v5958 = vunpack.c.l.s4 1983009808
    %v5959 = vunpack.c.0.s8 %v5958
    %v5960 = vlaneseq
    %v5961 = vshrl.u32 %v5960, 7
    %v5962 = vsub.s32 %v5959, %v5961
    %v5963 = vrot.slane %v5955, %v5962
    %v5965 = vunpack.c.l.s4 1983009808
    %v5966 = vunpack.c.0.s8 %v5965
    %v5967 = vlaneseq
    %v5968 = vshrl.u32 %v5967, 7
    %v5969 = vsub.s32 %v5966, %v5968
    %v5970 = vrot.slane %v5956, %v5969
    %v5971 = vcombine.low %v5963, %v5970
    %v5972 = vcombine.low %v5908, %v5912
    %v5973 = vcombine.low %v5916, %v5920
    %v5975 = vunpack.c.l.s4 1983009808
    %v5976 = vunpack.c.0.s8 %v5975
    %v5977 = vlaneseq
    %v5978 = vshrl.u32 %v5977, 7
    %v5979 = vsub.s32 %v5976, %v5978
    %v5980 = vrot.slane %v5972, %v5979
    %v5982 = vunpack.c.l.s4 1983009808
    %v5983 = vunpack.c.0.s8 %v5982
    %v5984 = vlaneseq
    %v5985 = vshrl.u32 %v5984, 7
    %v5986 = vsub.s32 %v5983, %v5985
    %v5987 = vrot.slane %v5973, %v5986
    %v5988 = vcombine.low %v5980, %v5987
    %5989 = vrot.lane.b32.xlu0 %v5937, 1
    %v5990 = vpop.permute.xlu0 %5989
    %5991 = vrot.lane.b32.xlu0 %v5954, 1
    %v5992 = vpop.permute.xlu0 %5991
    %5993 = vrot.lane.b32.xlu0 %v5971, 1
    %v5994 = vpop.permute.xlu0 %5993
    %5995 = vrot.lane.b32.xlu0 %v5988, 1
    %v5996 = vpop.permute.xlu0 %5995
    %v5997 = vrot.slane %v5990, 6
    %v5998 = vrot.slane %v5992, 6
    %v5999 = vrot.slane %v5994, 6
    %v6000 = vrot.slane %v5996, 6
    %vm6001 = vcmask 7168
    %v6002 = vsel %vm6001, %v5997, %v5990
    %v6003 = vsel %vm956, %v5997, %v5998
    %v6004 = vsel %vm6001, %v6003, %v5992
    %v6005 = vsel %vm956, %v5998, %v5999
    %v6006 = vsel %vm6001, %v6005, %v5994
    %v6007 = vsel %vm956, %v5999, %v6000
    %v6008 = vsel %vm6001, %v6007, %v5996
    %v6014 = vmul.f32 %v5842, %v6002
    %v6015 = vmul.f32 %v5843, %v6004
    %v6016 = vmul.f32 %v5844, %v6006
    %v6017 = vmul.f32 %v5845, %v6008
    %v6018 = vmul.f32 %v5846, %v6000
    %6020 = vrot.lane.b32.xlu0 %v6014, 110
    %v6021 = vpop.permute.xlu0 %6020
    %v6022 = vrot.slane %v6021, 6
    %vm6023 = vcmask 900096
    %v6024 = vsel %vm6023, %v6022, %v6021
    %v6026 = vadd.f32 %v5247, %v6024
    %6028 = vrot.lane.b32.xlu0 %v6015, 110
    %v6029 = vpop.permute.xlu0 %6028
    %v6030 = vrot.slane %v6021, 2
    %v6031 = vrot.slane %v6021, 4
    %v6032 = vrot.slane %v6029, 4
    %v6033 = vsel %vm1645, %v6031, %v6032
    %v6034 = vsel %vm6023, %v6030, %v6033
    %v6036 = vadd.f32 %v6026, %v6034
    %v6037 = vrot.slane %v6029, 6
    %v6038 = vsel %vm6023, %v6037, %v6029
    %v6040 = vadd.f32 %v6036, %v6038
    %6042 = vrot.lane.b32.xlu0 %v6016, 110
    %v6043 = vpop.permute.xlu0 %6042
    %v6044 = vrot.slane %v6029, 2
    %v6045 = vrot.slane %v6043, 4
    %v6046 = vsel %vm1645, %v6032, %v6045
    %v6047 = vsel %vm6023, %v6044, %v6046
    %v6049 = vadd.f32 %v6040, %v6047
    %v6050 = vrot.slane %v6043, 6
    %v6051 = vsel %vm6023, %v6050, %v6043
    %v6053 = vadd.f32 %v6049, %v6051
    %6055 = vrot.lane.b32.xlu0 %v6017, 110
    %v6056 = vpop.permute.xlu0 %6055
    %v6057 = vrot.slane %v6043, 2
    %v6058 = vrot.slane %v6056, 4
    %v6059 = vsel %vm1645, %v6045, %v6058
    %v6060 = vsel %vm6023, %v6057, %v6059
    %v6062 = vadd.f32 %v6053, %v6060
    %v6063 = vrot.slane %v6056, 6
    %v6064 = vsel %vm6023, %v6063, %v6056
    %v6066 = vadd.f32 %v6062, %v6064
    %6068 = vrot.lane.b32.xlu0 %v6018, 110
    %v6069 = vpop.permute.xlu0 %6068
    %v6070 = vrot.slane %v6056, 2
    %v6071 = vrot.slane %v6069, 4
    %v6072 = vsel %vm1645, %v6058, %v6071
    %v6073 = vsel %vm6023, %v6070, %v6072
    %v6075 = vadd.f32 %v6066, %v6073
    %s6076 = scalar_lea.vmem [#allocation8], 261
    %v6077 = vld [vmem:[%s6076] ss:$8 sm:$0xf]
    %v6078 = vld [vmem:[%s6076] ss:$8 sm:$0xf0]
    %v6079 = vor.u32 %v6077, %v6078
    %s6080 = scalar_lea.vmem [#allocation8], 325
    %v6081 = vld [vmem:[%s6080] ss:$8 sm:$0xf]
    %v6082 = vld [vmem:[%s6080] ss:$8 sm:$0xf0]
    %v6083 = vor.u32 %v6081, %v6082
    %v6086 = vlaneseq
    %v6087 = vshrl.u32 %v6086, 7
    %v6088 = vsub.s32 0, %v6087
    %v6089 = vrot.slane %v6079, %v6088
    %v6090 = vlaneseq
    %v6091 = vshrl.u32 %v6090, 7
    %v6092 = vsub.s32 1, %v6091
    %v6093 = vrot.slane %v6079, %v6092
    %v6094 = vlaneseq
    %v6095 = vshrl.u32 %v6094, 7
    %v6096 = vsub.s32 2, %v6095
    %v6097 = vrot.slane %v6079, %v6096
    %v6098 = vlaneseq
    %v6099 = vshrl.u32 %v6098, 7
    %v6100 = vsub.s32 3, %v6099
    %v6101 = vrot.slane %v6079, %v6100
    %v6102 = vlaneseq
    %v6103 = vshrl.u32 %v6102, 7
    %v6104 = vsub.s32 4, %v6103
    %v6105 = vrot.slane %v6079, %v6104
    %v6106 = vlaneseq
    %v6107 = vshrl.u32 %v6106, 7
    %v6108 = vsub.s32 5, %v6107
    %v6109 = vrot.slane %v6079, %v6108
    %v6110 = vlaneseq
    %v6111 = vshrl.u32 %v6110, 7
    %v6112 = vsub.s32 6, %v6111
    %v6113 = vrot.slane %v6079, %v6112
    %v6114 = vlaneseq
    %v6115 = vshrl.u32 %v6114, 7
    %v6116 = vsub.s32 7, %v6115
    %v6117 = vrot.slane %v6079, %v6116
    %v6118 = vlaneseq
    %v6119 = vshrl.u32 %v6118, 7
    %v6120 = vsub.s32 0, %v6119
    %v6121 = vrot.slane %v6083, %v6120
    %v6122 = vlaneseq
    %v6123 = vshrl.u32 %v6122, 7
    %v6124 = vsub.s32 1, %v6123
    %v6125 = vrot.slane %v6083, %v6124
    %v6126 = vlaneseq
    %v6127 = vshrl.u32 %v6126, 7
    %v6128 = vsub.s32 2, %v6127
    %v6129 = vrot.slane %v6083, %v6128
    %v6130 = vlaneseq
    %v6131 = vshrl.u32 %v6130, 7
    %v6132 = vsub.s32 3, %v6131
    %v6133 = vrot.slane %v6083, %v6132
    %v6134 = vlaneseq
    %v6135 = vshrl.u32 %v6134, 7
    %v6136 = vsub.s32 4, %v6135
    %v6137 = vrot.slane %v6083, %v6136
    %v6138 = vlaneseq
    %v6139 = vshrl.u32 %v6138, 7
    %v6140 = vsub.s32 5, %v6139
    %v6141 = vrot.slane %v6083, %v6140
    %v6142 = vlaneseq
    %v6143 = vshrl.u32 %v6142, 7
    %v6144 = vsub.s32 6, %v6143
    %v6145 = vrot.slane %v6083, %v6144
    %v6146 = vlaneseq
    %v6147 = vshrl.u32 %v6146, 7
    %v6148 = vsub.s32 7, %v6147
    %v6149 = vrot.slane %v6083, %v6148
    %v6150 = vcombine.low %v6089, %v6093
    %v6151 = vcombine.low %v6097, %v6101
    %v6153 = vunpack.c.l.s4 1983009808
    %v6154 = vunpack.c.0.s8 %v6153
    %v6155 = vlaneseq
    %v6156 = vshrl.u32 %v6155, 7
    %v6157 = vsub.s32 %v6154, %v6156
    %v6158 = vrot.slane %v6150, %v6157
    %v6160 = vunpack.c.l.s4 1983009808
    %v6161 = vunpack.c.0.s8 %v6160
    %v6162 = vlaneseq
    %v6163 = vshrl.u32 %v6162, 7
    %v6164 = vsub.s32 %v6161, %v6163
    %v6165 = vrot.slane %v6151, %v6164
    %v6166 = vcombine.low %v6158, %v6165
    %v6167 = vcombine.low %v6105, %v6109
    %v6168 = vcombine.low %v6113, %v6117
    %v6170 = vunpack.c.l.s4 1983009808
    %v6171 = vunpack.c.0.s8 %v6170
    %v6172 = vlaneseq
    %v6173 = vshrl.u32 %v6172, 7
    %v6174 = vsub.s32 %v6171, %v6173
    %v6175 = vrot.slane %v6167, %v6174
    %v6177 = vunpack.c.l.s4 1983009808
    %v6178 = vunpack.c.0.s8 %v6177
    %v6179 = vlaneseq
    %v6180 = vshrl.u32 %v6179, 7
    %v6181 = vsub.s32 %v6178, %v6180
    %v6182 = vrot.slane %v6168, %v6181
    %v6183 = vcombine.low %v6175, %v6182
    %v6184 = vcombine.low %v6121, %v6125
    %v6185 = vcombine.low %v6129, %v6133
    %v6187 = vunpack.c.l.s4 1983009808
    %v6188 = vunpack.c.0.s8 %v6187
    %v6189 = vlaneseq
    %v6190 = vshrl.u32 %v6189, 7
    %v6191 = vsub.s32 %v6188, %v6190
    %v6192 = vrot.slane %v6184, %v6191
    %v6194 = vunpack.c.l.s4 1983009808
    %v6195 = vunpack.c.0.s8 %v6194
    %v6196 = vlaneseq
    %v6197 = vshrl.u32 %v6196, 7
    %v6198 = vsub.s32 %v6195, %v6197
    %v6199 = vrot.slane %v6185, %v6198
    %v6200 = vcombine.low %v6192, %v6199
    %v6201 = vcombine.low %v6137, %v6141
    %v6202 = vcombine.low %v6145, %v6149
    %v6204 = vunpack.c.l.s4 1983009808
    %v6205 = vunpack.c.0.s8 %v6204
    %v6206 = vlaneseq
    %v6207 = vshrl.u32 %v6206, 7
    %v6208 = vsub.s32 %v6205, %v6207
    %v6209 = vrot.slane %v6201, %v6208
    %v6211 = vunpack.c.l.s4 1983009808
    %v6212 = vunpack.c.0.s8 %v6211
    %v6213 = vlaneseq
    %v6214 = vshrl.u32 %v6213, 7
    %v6215 = vsub.s32 %v6212, %v6214
    %v6216 = vrot.slane %v6202, %v6215
    %v6217 = vcombine.low %v6209, %v6216
    %6218 = vrot.lane.b32.xlu0 %v6166, 1
    %v6219 = vpop.permute.xlu0 %6218
    %6220 = vrot.lane.b32.xlu0 %v6183, 1
    %v6221 = vpop.permute.xlu0 %6220
    %6222 = vrot.lane.b32.xlu0 %v6200, 1
    %v6223 = vpop.permute.xlu0 %6222
    %6224 = vrot.lane.b32.xlu0 %v6217, 1
    %v6225 = vpop.permute.xlu0 %6224
    %v6226 = vrot.slane %v6219, 6
    %v6227 = vrot.slane %v6221, 6
    %v6228 = vrot.slane %v6223, 6
    %v6229 = vrot.slane %v6225, 6
    %v6230 = vsel %vm6001, %v6226, %v6219
    %v6231 = vsel %vm956, %v6226, %v6227
    %v6232 = vsel %vm6001, %v6231, %v6221
    %v6233 = vsel %vm956, %v6227, %v6228
    %v6234 = vsel %vm6001, %v6233, %v6223
    %v6235 = vsel %vm956, %v6228, %v6229
    %v6236 = vsel %vm6001, %v6235, %v6225
    %v6242 = vmul.f32 %v5842, %v6230
    %v6243 = vmul.f32 %v5843, %v6232
    %v6244 = vmul.f32 %v5844, %v6234
    %v6245 = vmul.f32 %v5845, %v6236
    %v6246 = vmul.f32 %v5846, %v6229
    %6248 = vrot.lane.b32.xlu0 %v6242, 110
    %v6249 = vpop.permute.xlu0 %6248
    %v6250 = vrot.slane %v6249, 6
    %v6251 = vsel %vm6023, %v6250, %v6249
    %v6253 = vadd.f32 %v5445, %v6251
    %6255 = vrot.lane.b32.xlu0 %v6243, 110
    %v6256 = vpop.permute.xlu0 %6255
    %v6257 = vrot.slane %v6249, 2
    %v6258 = vrot.slane %v6249, 4
    %v6259 = vrot.slane %v6256, 4
    %v6260 = vsel %vm1645, %v6258, %v6259
    %v6261 = vsel %vm6023, %v6257, %v6260
    %v6263 = vadd.f32 %v6253, %v6261
    %v6264 = vrot.slane %v6256, 6
    %v6265 = vsel %vm6023, %v6264, %v6256
    %v6267 = vadd.f32 %v6263, %v6265
    %6269 = vrot.lane.b32.xlu0 %v6244, 110
    %v6270 = vpop.permute.xlu0 %6269
    %v6271 = vrot.slane %v6256, 2
    %v6272 = vrot.slane %v6270, 4
    %v6273 = vsel %vm1645, %v6259, %v6272
    %v6274 = vsel %vm6023, %v6271, %v6273
    %v6276 = vadd.f32 %v6267, %v6274
    %v6277 = vrot.slane %v6270, 6
    %v6278 = vsel %vm6023, %v6277, %v6270
    %v6280 = vadd.f32 %v6276, %v6278
    %6282 = vrot.lane.b32.xlu0 %v6245, 110
    %v6283 = vpop.permute.xlu0 %6282
    %v6284 = vrot.slane %v6270, 2
    %v6285 = vrot.slane %v6283, 4
    %v6286 = vsel %vm1645, %v6272, %v6285
    %v6287 = vsel %vm6023, %v6284, %v6286
    %v6289 = vadd.f32 %v6280, %v6287
    %v6290 = vrot.slane %v6283, 6
    %v6291 = vsel %vm6023, %v6290, %v6283
    %v6293 = vadd.f32 %v6289, %v6291
    %6295 = vrot.lane.b32.xlu0 %v6246, 110
    %v6296 = vpop.permute.xlu0 %6295
    %v6297 = vrot.slane %v6283, 2
    %v6298 = vrot.slane %v6296, 4
    %v6299 = vsel %vm1645, %v6285, %v6298
    %v6300 = vsel %vm6023, %v6297, %v6299
    %v6302 = vadd.f32 %v6293, %v6300
    %s6303 = scalar_lea.vmem [#allocation8], 262
    %v6304 = vld [vmem:[%s6303] ss:$8 sm:$0xf]
    %v6305 = vld [vmem:[%s6303] ss:$8 sm:$0xf0]
    %v6306 = vor.u32 %v6304, %v6305
    %s6307 = scalar_lea.vmem [#allocation8], 326
    %v6308 = vld [vmem:[%s6307] ss:$8 sm:$0xf]
    %v6309 = vld [vmem:[%s6307] ss:$8 sm:$0xf0]
    %v6310 = vor.u32 %v6308, %v6309
    %v6313 = vlaneseq
    %v6314 = vshrl.u32 %v6313, 7
    %v6315 = vsub.s32 0, %v6314
    %v6316 = vrot.slane %v6306, %v6315
    %v6317 = vlaneseq
    %v6318 = vshrl.u32 %v6317, 7
    %v6319 = vsub.s32 1, %v6318
    %v6320 = vrot.slane %v6306, %v6319
    %v6321 = vlaneseq
    %v6322 = vshrl.u32 %v6321, 7
    %v6323 = vsub.s32 2, %v6322
    %v6324 = vrot.slane %v6306, %v6323
    %v6325 = vlaneseq
    %v6326 = vshrl.u32 %v6325, 7
    %v6327 = vsub.s32 3, %v6326
    %v6328 = vrot.slane %v6306, %v6327
    %v6329 = vlaneseq
    %v6330 = vshrl.u32 %v6329, 7
    %v6331 = vsub.s32 4, %v6330
    %v6332 = vrot.slane %v6306, %v6331
    %v6333 = vlaneseq
    %v6334 = vshrl.u32 %v6333, 7
    %v6335 = vsub.s32 5, %v6334
    %v6336 = vrot.slane %v6306, %v6335
    %v6337 = vlaneseq
    %v6338 = vshrl.u32 %v6337, 7
    %v6339 = vsub.s32 6, %v6338
    %v6340 = vrot.slane %v6306, %v6339
    %v6341 = vlaneseq
    %v6342 = vshrl.u32 %v6341, 7
    %v6343 = vsub.s32 7, %v6342
    %v6344 = vrot.slane %v6306, %v6343
    %v6345 = vlaneseq
    %v6346 = vshrl.u32 %v6345, 7
    %v6347 = vsub.s32 0, %v6346
    %v6348 = vrot.slane %v6310, %v6347
    %v6349 = vlaneseq
    %v6350 = vshrl.u32 %v6349, 7
    %v6351 = vsub.s32 1, %v6350
    %v6352 = vrot.slane %v6310, %v6351
    %v6353 = vlaneseq
    %v6354 = vshrl.u32 %v6353, 7
    %v6355 = vsub.s32 2, %v6354
    %v6356 = vrot.slane %v6310, %v6355
    %v6357 = vlaneseq
    %v6358 = vshrl.u32 %v6357, 7
    %v6359 = vsub.s32 3, %v6358
    %v6360 = vrot.slane %v6310, %v6359
    %v6361 = vlaneseq
    %v6362 = vshrl.u32 %v6361, 7
    %v6363 = vsub.s32 4, %v6362
    %v6364 = vrot.slane %v6310, %v6363
    %v6365 = vlaneseq
    %v6366 = vshrl.u32 %v6365, 7
    %v6367 = vsub.s32 5, %v6366
    %v6368 = vrot.slane %v6310, %v6367
    %v6369 = vlaneseq
    %v6370 = vshrl.u32 %v6369, 7
    %v6371 = vsub.s32 6, %v6370
    %v6372 = vrot.slane %v6310, %v6371
    %v6373 = vlaneseq
    %v6374 = vshrl.u32 %v6373, 7
    %v6375 = vsub.s32 7, %v6374
    %v6376 = vrot.slane %v6310, %v6375
    %v6377 = vcombine.low %v6316, %v6320
    %v6378 = vcombine.low %v6324, %v6328
    %v6380 = vunpack.c.l.s4 1983009808
    %v6381 = vunpack.c.0.s8 %v6380
    %v6382 = vlaneseq
    %v6383 = vshrl.u32 %v6382, 7
    %v6384 = vsub.s32 %v6381, %v6383
    %v6385 = vrot.slane %v6377, %v6384
    %v6387 = vunpack.c.l.s4 1983009808
    %v6388 = vunpack.c.0.s8 %v6387
    %v6389 = vlaneseq
    %v6390 = vshrl.u32 %v6389, 7
    %v6391 = vsub.s32 %v6388, %v6390
    %v6392 = vrot.slane %v6378, %v6391
    %v6393 = vcombine.low %v6385, %v6392
    %v6394 = vcombine.low %v6332, %v6336
    %v6395 = vcombine.low %v6340, %v6344
    %v6397 = vunpack.c.l.s4 1983009808
    %v6398 = vunpack.c.0.s8 %v6397
    %v6399 = vlaneseq
    %v6400 = vshrl.u32 %v6399, 7
    %v6401 = vsub.s32 %v6398, %v6400
    %v6402 = vrot.slane %v6394, %v6401
    %v6404 = vunpack.c.l.s4 1983009808
    %v6405 = vunpack.c.0.s8 %v6404
    %v6406 = vlaneseq
    %v6407 = vshrl.u32 %v6406, 7
    %v6408 = vsub.s32 %v6405, %v6407
    %v6409 = vrot.slane %v6395, %v6408
    %v6410 = vcombine.low %v6402, %v6409
    %v6411 = vcombine.low %v6348, %v6352
    %v6412 = vcombine.low %v6356, %v6360
    %v6414 = vunpack.c.l.s4 1983009808
    %v6415 = vunpack.c.0.s8 %v6414
    %v6416 = vlaneseq
    %v6417 = vshrl.u32 %v6416, 7
    %v6418 = vsub.s32 %v6415, %v6417
    %v6419 = vrot.slane %v6411, %v6418
    %v6421 = vunpack.c.l.s4 1983009808
    %v6422 = vunpack.c.0.s8 %v6421
    %v6423 = vlaneseq
    %v6424 = vshrl.u32 %v6423, 7
    %v6425 = vsub.s32 %v6422, %v6424
    %v6426 = vrot.slane %v6412, %v6425
    %v6427 = vcombine.low %v6419, %v6426
    %v6428 = vcombine.low %v6364, %v6368
    %v6429 = vcombine.low %v6372, %v6376
    %v6431 = vunpack.c.l.s4 1983009808
    %v6432 = vunpack.c.0.s8 %v6431
    %v6433 = vlaneseq
    %v6434 = vshrl.u32 %v6433, 7
    %v6435 = vsub.s32 %v6432, %v6434
    %v6436 = vrot.slane %v6428, %v6435
    %v6438 = vunpack.c.l.s4 1983009808
    %v6439 = vunpack.c.0.s8 %v6438
    %v6440 = vlaneseq
    %v6441 = vshrl.u32 %v6440, 7
    %v6442 = vsub.s32 %v6439, %v6441
    %v6443 = vrot.slane %v6429, %v6442
    %v6444 = vcombine.low %v6436, %v6443
    %6445 = vrot.lane.b32.xlu0 %v6393, 1
    %v6446 = vpop.permute.xlu0 %6445
    %6447 = vrot.lane.b32.xlu0 %v6410, 1
    %v6448 = vpop.permute.xlu0 %6447
    %6449 = vrot.lane.b32.xlu0 %v6427, 1
    %v6450 = vpop.permute.xlu0 %6449
    %6451 = vrot.lane.b32.xlu0 %v6444, 1
    %v6452 = vpop.permute.xlu0 %6451
    %v6453 = vrot.slane %v6446, 6
    %v6454 = vrot.slane %v6448, 6
    %v6455 = vrot.slane %v6450, 6
    %v6456 = vrot.slane %v6452, 6
    %v6457 = vsel %vm6001, %v6453, %v6446
    %v6458 = vsel %vm956, %v6453, %v6454
    %v6459 = vsel %vm6001, %v6458, %v6448
    %v6460 = vsel %vm956, %v6454, %v6455
    %v6461 = vsel %vm6001, %v6460, %v6450
    %v6462 = vsel %vm956, %v6455, %v6456
    %v6463 = vsel %vm6001, %v6462, %v6452
    %v6469 = vmul.f32 %v5842, %v6457
    %v6470 = vmul.f32 %v5843, %v6459
    %v6471 = vmul.f32 %v5844, %v6461
    %v6472 = vmul.f32 %v5845, %v6463
    %v6473 = vmul.f32 %v5846, %v6456
    %6475 = vrot.lane.b32.xlu0 %v6469, 110
    %v6476 = vpop.permute.xlu0 %6475
    %v6477 = vrot.slane %v6476, 6
    %v6478 = vsel %vm6023, %v6477, %v6476
    %v6480 = vadd.f32 %v5643, %v6478
    %6482 = vrot.lane.b32.xlu0 %v6470, 110
    %v6483 = vpop.permute.xlu0 %6482
    %v6484 = vrot.slane %v6476, 2
    %v6485 = vrot.slane %v6476, 4
    %v6486 = vrot.slane %v6483, 4
    %v6487 = vsel %vm1645, %v6485, %v6486
    %v6488 = vsel %vm6023, %v6484, %v6487
    %v6490 = vadd.f32 %v6480, %v6488
    %v6491 = vrot.slane %v6483, 6
    %v6492 = vsel %vm6023, %v6491, %v6483
    %v6494 = vadd.f32 %v6490, %v6492
    %6496 = vrot.lane.b32.xlu0 %v6471, 110
    %v6497 = vpop.permute.xlu0 %6496
    %v6498 = vrot.slane %v6483, 2
    %v6499 = vrot.slane %v6497, 4
    %v6500 = vsel %vm1645, %v6486, %v6499
    %v6501 = vsel %vm6023, %v6498, %v6500
    %v6503 = vadd.f32 %v6494, %v6501
    %v6504 = vrot.slane %v6497, 6
    %v6505 = vsel %vm6023, %v6504, %v6497
    %v6507 = vadd.f32 %v6503, %v6505
    %6509 = vrot.lane.b32.xlu0 %v6472, 110
    %v6510 = vpop.permute.xlu0 %6509
    %v6511 = vrot.slane %v6497, 2
    %v6512 = vrot.slane %v6510, 4
    %v6513 = vsel %vm1645, %v6499, %v6512
    %v6514 = vsel %vm6023, %v6511, %v6513
    %v6516 = vadd.f32 %v6507, %v6514
    %v6517 = vrot.slane %v6510, 6
    %v6518 = vsel %vm6023, %v6517, %v6510
    %v6520 = vadd.f32 %v6516, %v6518
    %6522 = vrot.lane.b32.xlu0 %v6473, 110
    %v6523 = vpop.permute.xlu0 %6522
    %v6524 = vrot.slane %v6510, 2
    %v6525 = vrot.slane %v6523, 4
    %v6526 = vsel %vm1645, %v6512, %v6525
    %v6527 = vsel %vm6023, %v6524, %v6526
    %v6529 = vadd.f32 %v6520, %v6527
    %s6530 = scalar_lea.vmem [#allocation8], 263
    %v6531 = vld [vmem:[%s6530] ss:$8 sm:$0xf]
    %v6532 = vld [vmem:[%s6530] ss:$8 sm:$0xf0]
    %v6533 = vor.u32 %v6531, %v6532
    %s6534 = scalar_lea.vmem [#allocation8], 327
    %v6535 = vld [vmem:[%s6534] ss:$8 sm:$0xf]
    %v6536 = vld [vmem:[%s6534] ss:$8 sm:$0xf0]
    %v6537 = vor.u32 %v6535, %v6536
    %v6540 = vlaneseq
    %v6541 = vshrl.u32 %v6540, 7
    %v6542 = vsub.s32 0, %v6541
    %v6543 = vrot.slane %v6533, %v6542
    %v6544 = vlaneseq
    %v6545 = vshrl.u32 %v6544, 7
    %v6546 = vsub.s32 1, %v6545
    %v6547 = vrot.slane %v6533, %v6546
    %v6548 = vlaneseq
    %v6549 = vshrl.u32 %v6548, 7
    %v6550 = vsub.s32 2, %v6549
    %v6551 = vrot.slane %v6533, %v6550
    %v6552 = vlaneseq
    %v6553 = vshrl.u32 %v6552, 7
    %v6554 = vsub.s32 3, %v6553
    %v6555 = vrot.slane %v6533, %v6554
    %v6556 = vlaneseq
    %v6557 = vshrl.u32 %v6556, 7
    %v6558 = vsub.s32 4, %v6557
    %v6559 = vrot.slane %v6533, %v6558
    %v6560 = vlaneseq
    %v6561 = vshrl.u32 %v6560, 7
    %v6562 = vsub.s32 5, %v6561
    %v6563 = vrot.slane %v6533, %v6562
    %v6564 = vlaneseq
    %v6565 = vshrl.u32 %v6564, 7
    %v6566 = vsub.s32 6, %v6565
    %v6567 = vrot.slane %v6533, %v6566
    %v6568 = vlaneseq
    %v6569 = vshrl.u32 %v6568, 7
    %v6570 = vsub.s32 7, %v6569
    %v6571 = vrot.slane %v6533, %v6570
    %v6572 = vlaneseq
    %v6573 = vshrl.u32 %v6572, 7
    %v6574 = vsub.s32 0, %v6573
    %v6575 = vrot.slane %v6537, %v6574
    %v6576 = vlaneseq
    %v6577 = vshrl.u32 %v6576, 7
    %v6578 = vsub.s32 1, %v6577
    %v6579 = vrot.slane %v6537, %v6578
    %v6580 = vlaneseq
    %v6581 = vshrl.u32 %v6580, 7
    %v6582 = vsub.s32 2, %v6581
    %v6583 = vrot.slane %v6537, %v6582
    %v6584 = vlaneseq
    %v6585 = vshrl.u32 %v6584, 7
    %v6586 = vsub.s32 3, %v6585
    %v6587 = vrot.slane %v6537, %v6586
    %v6588 = vlaneseq
    %v6589 = vshrl.u32 %v6588, 7
    %v6590 = vsub.s32 4, %v6589
    %v6591 = vrot.slane %v6537, %v6590
    %v6592 = vlaneseq
    %v6593 = vshrl.u32 %v6592, 7
    %v6594 = vsub.s32 5, %v6593
    %v6595 = vrot.slane %v6537, %v6594
    %v6596 = vlaneseq
    %v6597 = vshrl.u32 %v6596, 7
    %v6598 = vsub.s32 6, %v6597
    %v6599 = vrot.slane %v6537, %v6598
    %v6600 = vlaneseq
    %v6601 = vshrl.u32 %v6600, 7
    %v6602 = vsub.s32 7, %v6601
    %v6603 = vrot.slane %v6537, %v6602
    %v6604 = vcombine.low %v6543, %v6547
    %v6605 = vcombine.low %v6551, %v6555
    %v6607 = vunpack.c.l.s4 1983009808
    %v6608 = vunpack.c.0.s8 %v6607
    %v6609 = vlaneseq
    %v6610 = vshrl.u32 %v6609, 7
    %v6611 = vsub.s32 %v6608, %v6610
    %v6612 = vrot.slane %v6604, %v6611
    %v6614 = vunpack.c.l.s4 1983009808
    %v6615 = vunpack.c.0.s8 %v6614
    %v6616 = vlaneseq
    %v6617 = vshrl.u32 %v6616, 7
    %v6618 = vsub.s32 %v6615, %v6617
    %v6619 = vrot.slane %v6605, %v6618
    %v6620 = vcombine.low %v6612, %v6619
    %v6621 = vcombine.low %v6559, %v6563
    %v6622 = vcombine.low %v6567, %v6571
    %v6624 = vunpack.c.l.s4 1983009808
    %v6625 = vunpack.c.0.s8 %v6624
    %v6626 = vlaneseq
    %v6627 = vshrl.u32 %v6626, 7
    %v6628 = vsub.s32 %v6625, %v6627
    %v6629 = vrot.slane %v6621, %v6628
    %v6631 = vunpack.c.l.s4 1983009808
    %v6632 = vunpack.c.0.s8 %v6631
    %v6633 = vlaneseq
    %v6634 = vshrl.u32 %v6633, 7
    %v6635 = vsub.s32 %v6632, %v6634
    %v6636 = vrot.slane %v6622, %v6635
    %v6637 = vcombine.low %v6629, %v6636
    %v6638 = vcombine.low %v6575, %v6579
    %v6639 = vcombine.low %v6583, %v6587
    %v6641 = vunpack.c.l.s4 1983009808
    %v6642 = vunpack.c.0.s8 %v6641
    %v6643 = vlaneseq
    %v6644 = vshrl.u32 %v6643, 7
    %v6645 = vsub.s32 %v6642, %v6644
    %v6646 = vrot.slane %v6638, %v6645
    %v6648 = vunpack.c.l.s4 1983009808
    %v6649 = vunpack.c.0.s8 %v6648
    %v6650 = vlaneseq
    %v6651 = vshrl.u32 %v6650, 7
    %v6652 = vsub.s32 %v6649, %v6651
    %v6653 = vrot.slane %v6639, %v6652
    %v6654 = vcombine.low %v6646, %v6653
    %v6655 = vcombine.low %v6591, %v6595
    %v6656 = vcombine.low %v6599, %v6603
    %v6658 = vunpack.c.l.s4 1983009808
    %v6659 = vunpack.c.0.s8 %v6658
    %v6660 = vlaneseq
    %v6661 = vshrl.u32 %v6660, 7
    %v6662 = vsub.s32 %v6659, %v6661
    %v6663 = vrot.slane %v6655, %v6662
    %v6665 = vunpack.c.l.s4 1983009808
    %v6666 = vunpack.c.0.s8 %v6665
    %v6667 = vlaneseq
    %v6668 = vshrl.u32 %v6667, 7
    %v6669 = vsub.s32 %v6666, %v6668
    %v6670 = vrot.slane %v6656, %v6669
    %v6671 = vcombine.low %v6663, %v6670
    %6672 = vrot.lane.b32.xlu0 %v6620, 1
    %v6673 = vpop.permute.xlu0 %6672
    %6674 = vrot.lane.b32.xlu0 %v6637, 1
    %v6675 = vpop.permute.xlu0 %6674
    %6676 = vrot.lane.b32.xlu0 %v6654, 1
    %v6677 = vpop.permute.xlu0 %6676
    %6678 = vrot.lane.b32.xlu0 %v6671, 1
    %v6679 = vpop.permute.xlu0 %6678
    %v6680 = vrot.slane %v6673, 6
    %v6681 = vrot.slane %v6675, 6
    %v6682 = vrot.slane %v6677, 6
    %v6683 = vrot.slane %v6679, 6
    %v6684 = vsel %vm6001, %v6680, %v6673
    %v6685 = vsel %vm956, %v6680, %v6681
    %v6686 = vsel %vm6001, %v6685, %v6675
    %v6687 = vsel %vm956, %v6681, %v6682
    %v6688 = vsel %vm6001, %v6687, %v6677
    %v6689 = vsel %vm956, %v6682, %v6683
    %v6690 = vsel %vm6001, %v6689, %v6679
    %v6696 = vmul.f32 %v5842, %v6684
    %v6697 = vmul.f32 %v5843, %v6686
    %v6698 = vmul.f32 %v5844, %v6688
    %v6699 = vmul.f32 %v5845, %v6690
    %v6700 = vmul.f32 %v5846, %v6683
    %6702 = vrot.lane.b32.xlu0 %v6696, 110
    %v6703 = vpop.permute.xlu0 %6702
    %v6704 = vrot.slane %v6703, 6
    %v6705 = vsel %vm6023, %v6704, %v6703
    %v6707 = vadd.f32 %v5841, %v6705
    %6709 = vrot.lane.b32.xlu0 %v6697, 110
    %v6710 = vpop.permute.xlu0 %6709
    %v6711 = vrot.slane %v6703, 2
    %v6712 = vrot.slane %v6703, 4
    %v6713 = vrot.slane %v6710, 4
    %v6714 = vsel %vm1645, %v6712, %v6713
    %v6715 = vsel %vm6023, %v6711, %v6714
    %v6717 = vadd.f32 %v6707, %v6715
    %v6718 = vrot.slane %v6710, 6
    %v6719 = vsel %vm6023, %v6718, %v6710
    %v6721 = vadd.f32 %v6717, %v6719
    %6723 = vrot.lane.b32.xlu0 %v6698, 110
    %v6724 = vpop.permute.xlu0 %6723
    %v6725 = vrot.slane %v6710, 2
    %v6726 = vrot.slane %v6724, 4
    %v6727 = vsel %vm1645, %v6713, %v6726
    %v6728 = vsel %vm6023, %v6725, %v6727
    %v6730 = vadd.f32 %v6721, %v6728
    %v6731 = vrot.slane %v6724, 6
    %v6732 = vsel %vm6023, %v6731, %v6724
    %v6734 = vadd.f32 %v6730, %v6732
    %6736 = vrot.lane.b32.xlu0 %v6699, 110
    %v6737 = vpop.permute.xlu0 %6736
    %v6738 = vrot.slane %v6724, 2
    %v6739 = vrot.slane %v6737, 4
    %v6740 = vsel %vm1645, %v6726, %v6739
    %v6741 = vsel %vm6023, %v6738, %v6740
    %v6743 = vadd.f32 %v6734, %v6741
    %v6744 = vrot.slane %v6737, 6
    %v6745 = vsel %vm6023, %v6744, %v6737
    %v6747 = vadd.f32 %v6743, %v6745
    %6749 = vrot.lane.b32.xlu0 %v6700, 110
    %v6750 = vpop.permute.xlu0 %6749
    %v6751 = vrot.slane %v6737, 2
    %v6752 = vrot.slane %v6750, 4
    %v6753 = vsel %vm1645, %v6739, %v6752
    %v6754 = vsel %vm6023, %v6751, %v6753
    %v6756 = vadd.f32 %v6747, %v6754
    %s6757 = scalar_lea.vmem [#allocation8], 384
    %v6758 = vld [vmem:[%s6757] ss:$8 sm:$0xf]
    %v6759 = vld [vmem:[%s6757] ss:$8 sm:$0xf0]
    %v6760 = vor.u32 %v6758, %v6759
    %s6761 = scalar_lea.vmem [#allocation8], 448
    %v6762 = vld [vmem:[%s6761] ss:$8 sm:$0xf]
    %v6763 = vld [vmem:[%s6761] ss:$8 sm:$0xf0]
    %v6764 = vor.u32 %v6762, %v6763
    %v6767 = vlaneseq
    %v6768 = vshrl.u32 %v6767, 7
    %v6769 = vsub.s32 0, %v6768
    %v6770 = vrot.slane %v6760, %v6769
    %v6771 = vlaneseq
    %v6772 = vshrl.u32 %v6771, 7
    %v6773 = vsub.s32 1, %v6772
    %v6774 = vrot.slane %v6760, %v6773
    %v6775 = vlaneseq
    %v6776 = vshrl.u32 %v6775, 7
    %v6777 = vsub.s32 2, %v6776
    %v6778 = vrot.slane %v6760, %v6777
    %v6779 = vlaneseq
    %v6780 = vshrl.u32 %v6779, 7
    %v6781 = vsub.s32 3, %v6780
    %v6782 = vrot.slane %v6760, %v6781
    %v6783 = vlaneseq
    %v6784 = vshrl.u32 %v6783, 7
    %v6785 = vsub.s32 4, %v6784
    %v6786 = vrot.slane %v6760, %v6785
    %v6787 = vlaneseq
    %v6788 = vshrl.u32 %v6787, 7
    %v6789 = vsub.s32 5, %v6788
    %v6790 = vrot.slane %v6760, %v6789
    %v6791 = vlaneseq
    %v6792 = vshrl.u32 %v6791, 7
    %v6793 = vsub.s32 6, %v6792
    %v6794 = vrot.slane %v6760, %v6793
    %v6795 = vlaneseq
    %v6796 = vshrl.u32 %v6795, 7
    %v6797 = vsub.s32 7, %v6796
    %v6798 = vrot.slane %v6760, %v6797
    %v6799 = vlaneseq
    %v6800 = vshrl.u32 %v6799, 7
    %v6801 = vsub.s32 0, %v6800
    %v6802 = vrot.slane %v6764, %v6801
    %v6803 = vlaneseq
    %v6804 = vshrl.u32 %v6803, 7
    %v6805 = vsub.s32 1, %v6804
    %v6806 = vrot.slane %v6764, %v6805
    %v6807 = vlaneseq
    %v6808 = vshrl.u32 %v6807, 7
    %v6809 = vsub.s32 2, %v6808
    %v6810 = vrot.slane %v6764, %v6809
    %v6811 = vlaneseq
    %v6812 = vshrl.u32 %v6811, 7
    %v6813 = vsub.s32 3, %v6812
    %v6814 = vrot.slane %v6764, %v6813
    %v6815 = vlaneseq
    %v6816 = vshrl.u32 %v6815, 7
    %v6817 = vsub.s32 4, %v6816
    %v6818 = vrot.slane %v6764, %v6817
    %v6819 = vlaneseq
    %v6820 = vshrl.u32 %v6819, 7
    %v6821 = vsub.s32 5, %v6820
    %v6822 = vrot.slane %v6764, %v6821
    %v6823 = vlaneseq
    %v6824 = vshrl.u32 %v6823, 7
    %v6825 = vsub.s32 6, %v6824
    %v6826 = vrot.slane %v6764, %v6825
    %v6827 = vlaneseq
    %v6828 = vshrl.u32 %v6827, 7
    %v6829 = vsub.s32 7, %v6828
    %v6830 = vrot.slane %v6764, %v6829
    %v6831 = vcombine.low %v6770, %v6774
    %v6832 = vcombine.low %v6778, %v6782
    %v6834 = vunpack.c.l.s4 1983009808
    %v6835 = vunpack.c.0.s8 %v6834
    %v6836 = vlaneseq
    %v6837 = vshrl.u32 %v6836, 7
    %v6838 = vsub.s32 %v6835, %v6837
    %v6839 = vrot.slane %v6831, %v6838
    %v6841 = vunpack.c.l.s4 1983009808
    %v6842 = vunpack.c.0.s8 %v6841
    %v6843 = vlaneseq
    %v6844 = vshrl.u32 %v6843, 7
    %v6845 = vsub.s32 %v6842, %v6844
    %v6846 = vrot.slane %v6832, %v6845
    %v6847 = vcombine.low %v6839, %v6846
    %v6848 = vcombine.low %v6786, %v6790
    %v6849 = vcombine.low %v6794, %v6798
    %v6851 = vunpack.c.l.s4 1983009808
    %v6852 = vunpack.c.0.s8 %v6851
    %v6853 = vlaneseq
    %v6854 = vshrl.u32 %v6853, 7
    %v6855 = vsub.s32 %v6852, %v6854
    %v6856 = vrot.slane %v6848, %v6855
    %v6858 = vunpack.c.l.s4 1983009808
    %v6859 = vunpack.c.0.s8 %v6858
    %v6860 = vlaneseq
    %v6861 = vshrl.u32 %v6860, 7
    %v6862 = vsub.s32 %v6859, %v6861
    %v6863 = vrot.slane %v6849, %v6862
    %v6864 = vcombine.low %v6856, %v6863
    %v6865 = vcombine.low %v6802, %v6806
    %v6866 = vcombine.low %v6810, %v6814
    %v6868 = vunpack.c.l.s4 1983009808
    %v6869 = vunpack.c.0.s8 %v6868
    %v6870 = vlaneseq
    %v6871 = vshrl.u32 %v6870, 7
    %v6872 = vsub.s32 %v6869, %v6871
    %v6873 = vrot.slane %v6865, %v6872
    %v6875 = vunpack.c.l.s4 1983009808
    %v6876 = vunpack.c.0.s8 %v6875
    %v6877 = vlaneseq
    %v6878 = vshrl.u32 %v6877, 7
    %v6879 = vsub.s32 %v6876, %v6878
    %v6880 = vrot.slane %v6866, %v6879
    %v6881 = vcombine.low %v6873, %v6880
    %v6882 = vcombine.low %v6818, %v6822
    %v6883 = vcombine.low %v6826, %v6830
    %v6885 = vunpack.c.l.s4 1983009808
    %v6886 = vunpack.c.0.s8 %v6885
    %v6887 = vlaneseq
    %v6888 = vshrl.u32 %v6887, 7
    %v6889 = vsub.s32 %v6886, %v6888
    %v6890 = vrot.slane %v6882, %v6889
    %v6892 = vunpack.c.l.s4 1983009808
    %v6893 = vunpack.c.0.s8 %v6892
    %v6894 = vlaneseq
    %v6895 = vshrl.u32 %v6894, 7
    %v6896 = vsub.s32 %v6893, %v6895
    %v6897 = vrot.slane %v6883, %v6896
    %v6898 = vcombine.low %v6890, %v6897
    %6899 = vrot.lane.b32.xlu0 %v6847, 15
    %v6900 = vpop.permute.xlu0 %6899
    %6901 = vrot.lane.b32.xlu0 %v6864, 15
    %v6902 = vpop.permute.xlu0 %6901
    %6903 = vrot.lane.b32.xlu0 %v6881, 15
    %v6904 = vpop.permute.xlu0 %6903
    %6905 = vrot.lane.b32.xlu0 %v6898, 15
    %v6906 = vpop.permute.xlu0 %6905
    %v6907 = vrot.slane %v6900, 6
    %v6908 = vrot.slane %v6902, 6
    %v6909 = vrot.slane %v6904, 6
    %v6910 = vrot.slane %v6906, 6
    %vm6911 = vcmask 121856
    %v6912 = vsel %vm6911, %v6907, %v6900
    %v6913 = vsel %vm956, %v6907, %v6908
    %v6914 = vsel %vm6911, %v6913, %v6902
    %v6915 = vsel %vm956, %v6908, %v6909
    %v6916 = vsel %vm6911, %v6915, %v6904
    %v6917 = vsel %vm956, %v6909, %v6910
    %v6918 = vsel %vm6911, %v6917, %v6906
    %v6924 = vmul.f32 %v5842, %v6912
    %v6925 = vmul.f32 %v5843, %v6914
    %v6926 = vmul.f32 %v5844, %v6916
    %v6927 = vmul.f32 %v5845, %v6918
    %v6928 = vmul.f32 %v5846, %v6910
    %6930 = vrot.lane.b32.xlu0 %v6924, 96
    %v6931 = vpop.permute.xlu0 %6930
    %v6932 = vrot.slane %v6931, 6
    %vm6933 = vcmask 785408
    %v6934 = vsel %vm6933, %v6932, %v6931
    %v6936 = vadd.f32 %v6075, %v6934
    %6938 = vrot.lane.b32.xlu0 %v6925, 96
    %v6939 = vpop.permute.xlu0 %6938
    %v6940 = vrot.slane %v6931, 2
    %v6941 = vrot.slane %v6931, 4
    %v6942 = vrot.slane %v6939, 4
    %v6943 = vsel %vm1645, %v6941, %v6942
    %v6944 = vsel %vm6933, %v6940, %v6943
    %v6946 = vadd.f32 %v6936, %v6944
    %v6947 = vrot.slane %v6939, 6
    %v6948 = vsel %vm6933, %v6947, %v6939
    %v6950 = vadd.f32 %v6946, %v6948
    %6952 = vrot.lane.b32.xlu0 %v6926, 96
    %v6953 = vpop.permute.xlu0 %6952
    %v6954 = vrot.slane %v6939, 2
    %v6955 = vrot.slane %v6953, 4
    %v6956 = vsel %vm1645, %v6942, %v6955
    %v6957 = vsel %vm6933, %v6954, %v6956
    %v6959 = vadd.f32 %v6950, %v6957
    %v6960 = vrot.slane %v6953, 6
    %v6961 = vsel %vm6933, %v6960, %v6953
    %v6963 = vadd.f32 %v6959, %v6961
    %6965 = vrot.lane.b32.xlu0 %v6927, 96
    %v6966 = vpop.permute.xlu0 %6965
    %v6967 = vrot.slane %v6953, 2
    %v6968 = vrot.slane %v6966, 4
    %v6969 = vsel %vm1645, %v6955, %v6968
    %v6970 = vsel %vm6933, %v6967, %v6969
    %v6972 = vadd.f32 %v6963, %v6970
    %v6973 = vrot.slane %v6966, 6
    %v6974 = vsel %vm6933, %v6973, %v6966
    %v6976 = vadd.f32 %v6972, %v6974
    %6978 = vrot.lane.b32.xlu0 %v6928, 96
    %v6979 = vpop.permute.xlu0 %6978
    %v6980 = vrot.slane %v6966, 2
    %v6981 = vrot.slane %v6979, 4
    %v6982 = vsel %vm1645, %v6968, %v6981
    %v6983 = vsel %vm6933, %v6980, %v6982
    %v6985 = vadd.f32 %v6976, %v6983
    %s6986 = scalar_lea.vmem [#allocation8], 385
    %v6987 = vld [vmem:[%s6986] ss:$8 sm:$0xf]
    %v6988 = vld [vmem:[%s6986] ss:$8 sm:$0xf0]
    %v6989 = vor.u32 %v6987, %v6988
    %s6990 = scalar_lea.vmem [#allocation8], 449
    %v6991 = vld [vmem:[%s6990] ss:$8 sm:$0xf]
    %v6992 = vld [vmem:[%s6990] ss:$8 sm:$0xf0]
    %v6993 = vor.u32 %v6991, %v6992
    %v6996 = vlaneseq
    %v6997 = vshrl.u32 %v6996, 7
    %v6998 = vsub.s32 0, %v6997
    %v6999 = vrot.slane %v6989, %v6998
    %v7000 = vlaneseq
    %v7001 = vshrl.u32 %v7000, 7
    %v7002 = vsub.s32 1, %v7001
    %v7003 = vrot.slane %v6989, %v7002
    %v7004 = vlaneseq
    %v7005 = vshrl.u32 %v7004, 7
    %v7006 = vsub.s32 2, %v7005
    %v7007 = vrot.slane %v6989, %v7006
    %v7008 = vlaneseq
    %v7009 = vshrl.u32 %v7008, 7
    %v7010 = vsub.s32 3, %v7009
    %v7011 = vrot.slane %v6989, %v7010
    %v7012 = vlaneseq
    %v7013 = vshrl.u32 %v7012, 7
    %v7014 = vsub.s32 4, %v7013
    %v7015 = vrot.slane %v6989, %v7014
    %v7016 = vlaneseq
    %v7017 = vshrl.u32 %v7016, 7
    %v7018 = vsub.s32 5, %v7017
    %v7019 = vrot.slane %v6989, %v7018
    %v7020 = vlaneseq
    %v7021 = vshrl.u32 %v7020, 7
    %v7022 = vsub.s32 6, %v7021
    %v7023 = vrot.slane %v6989, %v7022
    %v7024 = vlaneseq
    %v7025 = vshrl.u32 %v7024, 7
    %v7026 = vsub.s32 7, %v7025
    %v7027 = vrot.slane %v6989, %v7026
    %v7028 = vlaneseq
    %v7029 = vshrl.u32 %v7028, 7
    %v7030 = vsub.s32 0, %v7029
    %v7031 = vrot.slane %v6993, %v7030
    %v7032 = vlaneseq
    %v7033 = vshrl.u32 %v7032, 7
    %v7034 = vsub.s32 1, %v7033
    %v7035 = vrot.slane %v6993, %v7034
    %v7036 = vlaneseq
    %v7037 = vshrl.u32 %v7036, 7
    %v7038 = vsub.s32 2, %v7037
    %v7039 = vrot.slane %v6993, %v7038
    %v7040 = vlaneseq
    %v7041 = vshrl.u32 %v7040, 7
    %v7042 = vsub.s32 3, %v7041
    %v7043 = vrot.slane %v6993, %v7042
    %v7044 = vlaneseq
    %v7045 = vshrl.u32 %v7044, 7
    %v7046 = vsub.s32 4, %v7045
    %v7047 = vrot.slane %v6993, %v7046
    %v7048 = vlaneseq
    %v7049 = vshrl.u32 %v7048, 7
    %v7050 = vsub.s32 5, %v7049
    %v7051 = vrot.slane %v6993, %v7050
    %v7052 = vlaneseq
    %v7053 = vshrl.u32 %v7052, 7
    %v7054 = vsub.s32 6, %v7053
    %v7055 = vrot.slane %v6993, %v7054
    %v7056 = vlaneseq
    %v7057 = vshrl.u32 %v7056, 7
    %v7058 = vsub.s32 7, %v7057
    %v7059 = vrot.slane %v6993, %v7058
    %v7060 = vcombine.low %v6999, %v7003
    %v7061 = vcombine.low %v7007, %v7011
    %v7063 = vunpack.c.l.s4 1983009808
    %v7064 = vunpack.c.0.s8 %v7063
    %v7065 = vlaneseq
    %v7066 = vshrl.u32 %v7065, 7
    %v7067 = vsub.s32 %v7064, %v7066
    %v7068 = vrot.slane %v7060, %v7067
    %v7070 = vunpack.c.l.s4 1983009808
    %v7071 = vunpack.c.0.s8 %v7070
    %v7072 = vlaneseq
    %v7073 = vshrl.u32 %v7072, 7
    %v7074 = vsub.s32 %v7071, %v7073
    %v7075 = vrot.slane %v7061, %v7074
    %v7076 = vcombine.low %v7068, %v7075
    %v7077 = vcombine.low %v7015, %v7019
    %v7078 = vcombine.low %v7023, %v7027
    %v7080 = vunpack.c.l.s4 1983009808
    %v7081 = vunpack.c.0.s8 %v7080
    %v7082 = vlaneseq
    %v7083 = vshrl.u32 %v7082, 7
    %v7084 = vsub.s32 %v7081, %v7083
    %v7085 = vrot.slane %v7077, %v7084
    %v7087 = vunpack.c.l.s4 1983009808
    %v7088 = vunpack.c.0.s8 %v7087
    %v7089 = vlaneseq
    %v7090 = vshrl.u32 %v7089, 7
    %v7091 = vsub.s32 %v7088, %v7090
    %v7092 = vrot.slane %v7078, %v7091
    %v7093 = vcombine.low %v7085, %v7092
    %v7094 = vcombine.low %v7031, %v7035
    %v7095 = vcombine.low %v7039, %v7043
    %v7097 = vunpack.c.l.s4 1983009808
    %v7098 = vunpack.c.0.s8 %v7097
    %v7099 = vlaneseq
    %v7100 = vshrl.u32 %v7099, 7
    %v7101 = vsub.s32 %v7098, %v7100
    %v7102 = vrot.slane %v7094, %v7101
    %v7104 = vunpack.c.l.s4 1983009808
    %v7105 = vunpack.c.0.s8 %v7104
    %v7106 = vlaneseq
    %v7107 = vshrl.u32 %v7106, 7
    %v7108 = vsub.s32 %v7105, %v7107
    %v7109 = vrot.slane %v7095, %v7108
    %v7110 = vcombine.low %v7102, %v7109
    %v7111 = vcombine.low %v7047, %v7051
    %v7112 = vcombine.low %v7055, %v7059
    %v7114 = vunpack.c.l.s4 1983009808
    %v7115 = vunpack.c.0.s8 %v7114
    %v7116 = vlaneseq
    %v7117 = vshrl.u32 %v7116, 7
    %v7118 = vsub.s32 %v7115, %v7117
    %v7119 = vrot.slane %v7111, %v7118
    %v7121 = vunpack.c.l.s4 1983009808
    %v7122 = vunpack.c.0.s8 %v7121
    %v7123 = vlaneseq
    %v7124 = vshrl.u32 %v7123, 7
    %v7125 = vsub.s32 %v7122, %v7124
    %v7126 = vrot.slane %v7112, %v7125
    %v7127 = vcombine.low %v7119, %v7126
    %7128 = vrot.lane.b32.xlu0 %v7076, 15
    %v7129 = vpop.permute.xlu0 %7128
    %7130 = vrot.lane.b32.xlu0 %v7093, 15
    %v7131 = vpop.permute.xlu0 %7130
    %7132 = vrot.lane.b32.xlu0 %v7110, 15
    %v7133 = vpop.permute.xlu0 %7132
    %7134 = vrot.lane.b32.xlu0 %v7127, 15
    %v7135 = vpop.permute.xlu0 %7134
    %v7136 = vrot.slane %v7129, 6
    %v7137 = vrot.slane %v7131, 6
    %v7138 = vrot.slane %v7133, 6
    %v7139 = vrot.slane %v7135, 6
    %v7140 = vsel %vm6911, %v7136, %v7129
    %v7141 = vsel %vm956, %v7136, %v7137
    %v7142 = vsel %vm6911, %v7141, %v7131
    %v7143 = vsel %vm956, %v7137, %v7138
    %v7144 = vsel %vm6911, %v7143, %v7133
    %v7145 = vsel %vm956, %v7138, %v7139
    %v7146 = vsel %vm6911, %v7145, %v7135
    %v7152 = vmul.f32 %v5842, %v7140
    %v7153 = vmul.f32 %v5843, %v7142
    %v7154 = vmul.f32 %v5844, %v7144
    %v7155 = vmul.f32 %v5845, %v7146
    %v7156 = vmul.f32 %v5846, %v7139
    %7158 = vrot.lane.b32.xlu0 %v7152, 96
    %v7159 = vpop.permute.xlu0 %7158
    %v7160 = vrot.slane %v7159, 6
    %v7161 = vsel %vm6933, %v7160, %v7159
    %v7163 = vadd.f32 %v6302, %v7161
    %7165 = vrot.lane.b32.xlu0 %v7153, 96
    %v7166 = vpop.permute.xlu0 %7165
    %v7167 = vrot.slane %v7159, 2
    %v7168 = vrot.slane %v7159, 4
    %v7169 = vrot.slane %v7166, 4
    %v7170 = vsel %vm1645, %v7168, %v7169
    %v7171 = vsel %vm6933, %v7167, %v7170
    %v7173 = vadd.f32 %v7163, %v7171
    %v7174 = vrot.slane %v7166, 6
    %v7175 = vsel %vm6933, %v7174, %v7166
    %v7177 = vadd.f32 %v7173, %v7175
    %7179 = vrot.lane.b32.xlu0 %v7154, 96
    %v7180 = vpop.permute.xlu0 %7179
    %v7181 = vrot.slane %v7166, 2
    %v7182 = vrot.slane %v7180, 4
    %v7183 = vsel %vm1645, %v7169, %v7182
    %v7184 = vsel %vm6933, %v7181, %v7183
    %v7186 = vadd.f32 %v7177, %v7184
    %v7187 = vrot.slane %v7180, 6
    %v7188 = vsel %vm6933, %v7187, %v7180
    %v7190 = vadd.f32 %v7186, %v7188
    %7192 = vrot.lane.b32.xlu0 %v7155, 96
    %v7193 = vpop.permute.xlu0 %7192
    %v7194 = vrot.slane %v7180, 2
    %v7195 = vrot.slane %v7193, 4
    %v7196 = vsel %vm1645, %v7182, %v7195
    %v7197 = vsel %vm6933, %v7194, %v7196
    %v7199 = vadd.f32 %v7190, %v7197
    %v7200 = vrot.slane %v7193, 6
    %v7201 = vsel %vm6933, %v7200, %v7193
    %v7203 = vadd.f32 %v7199, %v7201
    %7205 = vrot.lane.b32.xlu0 %v7156, 96
    %v7206 = vpop.permute.xlu0 %7205
    %v7207 = vrot.slane %v7193, 2
    %v7208 = vrot.slane %v7206, 4
    %v7209 = vsel %vm1645, %v7195, %v7208
    %v7210 = vsel %vm6933, %v7207, %v7209
    %v7212 = vadd.f32 %v7203, %v7210
    %s7213 = scalar_lea.vmem [#allocation8], 386
    %v7214 = vld [vmem:[%s7213] ss:$8 sm:$0xf]
    %v7215 = vld [vmem:[%s7213] ss:$8 sm:$0xf0]
    %v7216 = vor.u32 %v7214, %v7215
    %s7217 = scalar_lea.vmem [#allocation8], 450
    %v7218 = vld [vmem:[%s7217] ss:$8 sm:$0xf]
    %v7219 = vld [vmem:[%s7217] ss:$8 sm:$0xf0]
    %v7220 = vor.u32 %v7218, %v7219
    %v7223 = vlaneseq
    %v7224 = vshrl.u32 %v7223, 7
    %v7225 = vsub.s32 0, %v7224
    %v7226 = vrot.slane %v7216, %v7225
    %v7227 = vlaneseq
    %v7228 = vshrl.u32 %v7227, 7
    %v7229 = vsub.s32 1, %v7228
    %v7230 = vrot.slane %v7216, %v7229
    %v7231 = vlaneseq
    %v7232 = vshrl.u32 %v7231, 7
    %v7233 = vsub.s32 2, %v7232
    %v7234 = vrot.slane %v7216, %v7233
    %v7235 = vlaneseq
    %v7236 = vshrl.u32 %v7235, 7
    %v7237 = vsub.s32 3, %v7236
    %v7238 = vrot.slane %v7216, %v7237
    %v7239 = vlaneseq
    %v7240 = vshrl.u32 %v7239, 7
    %v7241 = vsub.s32 4, %v7240
    %v7242 = vrot.slane %v7216, %v7241
    %v7243 = vlaneseq
    %v7244 = vshrl.u32 %v7243, 7
    %v7245 = vsub.s32 5, %v7244
    %v7246 = vrot.slane %v7216, %v7245
    %v7247 = vlaneseq
    %v7248 = vshrl.u32 %v7247, 7
    %v7249 = vsub.s32 6, %v7248
    %v7250 = vrot.slane %v7216, %v7249
    %v7251 = vlaneseq
    %v7252 = vshrl.u32 %v7251, 7
    %v7253 = vsub.s32 7, %v7252
    %v7254 = vrot.slane %v7216, %v7253
    %v7255 = vlaneseq
    %v7256 = vshrl.u32 %v7255, 7
    %v7257 = vsub.s32 0, %v7256
    %v7258 = vrot.slane %v7220, %v7257
    %v7259 = vlaneseq
    %v7260 = vshrl.u32 %v7259, 7
    %v7261 = vsub.s32 1, %v7260
    %v7262 = vrot.slane %v7220, %v7261
    %v7263 = vlaneseq
    %v7264 = vshrl.u32 %v7263, 7
    %v7265 = vsub.s32 2, %v7264
    %v7266 = vrot.slane %v7220, %v7265
    %v7267 = vlaneseq
    %v7268 = vshrl.u32 %v7267, 7
    %v7269 = vsub.s32 3, %v7268
    %v7270 = vrot.slane %v7220, %v7269
    %v7271 = vlaneseq
    %v7272 = vshrl.u32 %v7271, 7
    %v7273 = vsub.s32 4, %v7272
    %v7274 = vrot.slane %v7220, %v7273
    %v7275 = vlaneseq
    %v7276 = vshrl.u32 %v7275, 7
    %v7277 = vsub.s32 5, %v7276
    %v7278 = vrot.slane %v7220, %v7277
    %v7279 = vlaneseq
    %v7280 = vshrl.u32 %v7279, 7
    %v7281 = vsub.s32 6, %v7280
    %v7282 = vrot.slane %v7220, %v7281
    %v7283 = vlaneseq
    %v7284 = vshrl.u32 %v7283, 7
    %v7285 = vsub.s32 7, %v7284
    %v7286 = vrot.slane %v7220, %v7285
    %v7287 = vcombine.low %v7226, %v7230
    %v7288 = vcombine.low %v7234, %v7238
    %v7290 = vunpack.c.l.s4 1983009808
    %v7291 = vunpack.c.0.s8 %v7290
    %v7292 = vlaneseq
    %v7293 = vshrl.u32 %v7292, 7
    %v7294 = vsub.s32 %v7291, %v7293
    %v7295 = vrot.slane %v7287, %v7294
    %v7297 = vunpack.c.l.s4 1983009808
    %v7298 = vunpack.c.0.s8 %v7297
    %v7299 = vlaneseq
    %v7300 = vshrl.u32 %v7299, 7
    %v7301 = vsub.s32 %v7298, %v7300
    %v7302 = vrot.slane %v7288, %v7301
    %v7303 = vcombine.low %v7295, %v7302
    %v7304 = vcombine.low %v7242, %v7246
    %v7305 = vcombine.low %v7250, %v7254
    %v7307 = vunpack.c.l.s4 1983009808
    %v7308 = vunpack.c.0.s8 %v7307
    %v7309 = vlaneseq
    %v7310 = vshrl.u32 %v7309, 7
    %v7311 = vsub.s32 %v7308, %v7310
    %v7312 = vrot.slane %v7304, %v7311
    %v7314 = vunpack.c.l.s4 1983009808
    %v7315 = vunpack.c.0.s8 %v7314
    %v7316 = vlaneseq
    %v7317 = vshrl.u32 %v7316, 7
    %v7318 = vsub.s32 %v7315, %v7317
    %v7319 = vrot.slane %v7305, %v7318
    %v7320 = vcombine.low %v7312, %v7319
    %v7321 = vcombine.low %v7258, %v7262
    %v7322 = vcombine.low %v7266, %v7270
    %v7324 = vunpack.c.l.s4 1983009808
    %v7325 = vunpack.c.0.s8 %v7324
    %v7326 = vlaneseq
    %v7327 = vshrl.u32 %v7326, 7
    %v7328 = vsub.s32 %v7325, %v7327
    %v7329 = vrot.slane %v7321, %v7328
    %v7331 = vunpack.c.l.s4 1983009808
    %v7332 = vunpack.c.0.s8 %v7331
    %v7333 = vlaneseq
    %v7334 = vshrl.u32 %v7333, 7
    %v7335 = vsub.s32 %v7332, %v7334
    %v7336 = vrot.slane %v7322, %v7335
    %v7337 = vcombine.low %v7329, %v7336
    %v7338 = vcombine.low %v7274, %v7278
    %v7339 = vcombine.low %v7282, %v7286
    %v7341 = vunpack.c.l.s4 1983009808
    %v7342 = vunpack.c.0.s8 %v7341
    %v7343 = vlaneseq
    %v7344 = vshrl.u32 %v7343, 7
    %v7345 = vsub.s32 %v7342, %v7344
    %v7346 = vrot.slane %v7338, %v7345
    %v7348 = vunpack.c.l.s4 1983009808
    %v7349 = vunpack.c.0.s8 %v7348
    %v7350 = vlaneseq
    %v7351 = vshrl.u32 %v7350, 7
    %v7352 = vsub.s32 %v7349, %v7351
    %v7353 = vrot.slane %v7339, %v7352
    %v7354 = vcombine.low %v7346, %v7353
    %7355 = vrot.lane.b32.xlu0 %v7303, 15
    %v7356 = vpop.permute.xlu0 %7355
    %7357 = vrot.lane.b32.xlu0 %v7320, 15
    %v7358 = vpop.permute.xlu0 %7357
    %7359 = vrot.lane.b32.xlu0 %v7337, 15
    %v7360 = vpop.permute.xlu0 %7359
    %7361 = vrot.lane.b32.xlu0 %v7354, 15
    %v7362 = vpop.permute.xlu0 %7361
    %v7363 = vrot.slane %v7356, 6
    %v7364 = vrot.slane %v7358, 6
    %v7365 = vrot.slane %v7360, 6
    %v7366 = vrot.slane %v7362, 6
    %v7367 = vsel %vm6911, %v7363, %v7356
    %v7368 = vsel %vm956, %v7363, %v7364
    %v7369 = vsel %vm6911, %v7368, %v7358
    %v7370 = vsel %vm956, %v7364, %v7365
    %v7371 = vsel %vm6911, %v7370, %v7360
    %v7372 = vsel %vm956, %v7365, %v7366
    %v7373 = vsel %vm6911, %v7372, %v7362
    %v7379 = vmul.f32 %v5842, %v7367
    %v7380 = vmul.f32 %v5843, %v7369
    %v7381 = vmul.f32 %v5844, %v7371
    %v7382 = vmul.f32 %v5845, %v7373
    %v7383 = vmul.f32 %v5846, %v7366
    %7385 = vrot.lane.b32.xlu0 %v7379, 96
    %v7386 = vpop.permute.xlu0 %7385
    %v7387 = vrot.slane %v7386, 6
    %v7388 = vsel %vm6933, %v7387, %v7386
    %v7390 = vadd.f32 %v6529, %v7388
    %7392 = vrot.lane.b32.xlu0 %v7380, 96
    %v7393 = vpop.permute.xlu0 %7392
    %v7394 = vrot.slane %v7386, 2
    %v7395 = vrot.slane %v7386, 4
    %v7396 = vrot.slane %v7393, 4
    %v7397 = vsel %vm1645, %v7395, %v7396
    %v7398 = vsel %vm6933, %v7394, %v7397
    %v7400 = vadd.f32 %v7390, %v7398
    %v7401 = vrot.slane %v7393, 6
    %v7402 = vsel %vm6933, %v7401, %v7393
    %v7404 = vadd.f32 %v7400, %v7402
    %7406 = vrot.lane.b32.xlu0 %v7381, 96
    %v7407 = vpop.permute.xlu0 %7406
    %v7408 = vrot.slane %v7393, 2
    %v7409 = vrot.slane %v7407, 4
    %v7410 = vsel %vm1645, %v7396, %v7409
    %v7411 = vsel %vm6933, %v7408, %v7410
    %v7413 = vadd.f32 %v7404, %v7411
    %v7414 = vrot.slane %v7407, 6
    %v7415 = vsel %vm6933, %v7414, %v7407
    %v7417 = vadd.f32 %v7413, %v7415
    %7419 = vrot.lane.b32.xlu0 %v7382, 96
    %v7420 = vpop.permute.xlu0 %7419
    %v7421 = vrot.slane %v7407, 2
    %v7422 = vrot.slane %v7420, 4
    %v7423 = vsel %vm1645, %v7409, %v7422
    %v7424 = vsel %vm6933, %v7421, %v7423
    %v7426 = vadd.f32 %v7417, %v7424
    %v7427 = vrot.slane %v7420, 6
    %v7428 = vsel %vm6933, %v7427, %v7420
    %v7430 = vadd.f32 %v7426, %v7428
    %7432 = vrot.lane.b32.xlu0 %v7383, 96
    %v7433 = vpop.permute.xlu0 %7432
    %v7434 = vrot.slane %v7420, 2
    %v7435 = vrot.slane %v7433, 4
    %v7436 = vsel %vm1645, %v7422, %v7435
    %v7437 = vsel %vm6933, %v7434, %v7436
    %v7439 = vadd.f32 %v7430, %v7437
    %s7440 = scalar_lea.vmem [#allocation8], 387
    %v7441 = vld [vmem:[%s7440] ss:$8 sm:$0xf]
    %v7442 = vld [vmem:[%s7440] ss:$8 sm:$0xf0]
    %v7443 = vor.u32 %v7441, %v7442
    %s7444 = scalar_lea.vmem [#allocation8], 451
    %v7445 = vld [vmem:[%s7444] ss:$8 sm:$0xf]
    %v7446 = vld [vmem:[%s7444] ss:$8 sm:$0xf0]
    %v7447 = vor.u32 %v7445, %v7446
    %v7450 = vlaneseq
    %v7451 = vshrl.u32 %v7450, 7
    %v7452 = vsub.s32 0, %v7451
    %v7453 = vrot.slane %v7443, %v7452
    %v7454 = vlaneseq
    %v7455 = vshrl.u32 %v7454, 7
    %v7456 = vsub.s32 1, %v7455
    %v7457 = vrot.slane %v7443, %v7456
    %v7458 = vlaneseq
    %v7459 = vshrl.u32 %v7458, 7
    %v7460 = vsub.s32 2, %v7459
    %v7461 = vrot.slane %v7443, %v7460
    %v7462 = vlaneseq
    %v7463 = vshrl.u32 %v7462, 7
    %v7464 = vsub.s32 3, %v7463
    %v7465 = vrot.slane %v7443, %v7464
    %v7466 = vlaneseq
    %v7467 = vshrl.u32 %v7466, 7
    %v7468 = vsub.s32 4, %v7467
    %v7469 = vrot.slane %v7443, %v7468
    %v7470 = vlaneseq
    %v7471 = vshrl.u32 %v7470, 7
    %v7472 = vsub.s32 5, %v7471
    %v7473 = vrot.slane %v7443, %v7472
    %v7474 = vlaneseq
    %v7475 = vshrl.u32 %v7474, 7
    %v7476 = vsub.s32 6, %v7475
    %v7477 = vrot.slane %v7443, %v7476
    %v7478 = vlaneseq
    %v7479 = vshrl.u32 %v7478, 7
    %v7480 = vsub.s32 7, %v7479
    %v7481 = vrot.slane %v7443, %v7480
    %v7482 = vlaneseq
    %v7483 = vshrl.u32 %v7482, 7
    %v7484 = vsub.s32 0, %v7483
    %v7485 = vrot.slane %v7447, %v7484
    %v7486 = vlaneseq
    %v7487 = vshrl.u32 %v7486, 7
    %v7488 = vsub.s32 1, %v7487
    %v7489 = vrot.slane %v7447, %v7488
    %v7490 = vlaneseq
    %v7491 = vshrl.u32 %v7490, 7
    %v7492 = vsub.s32 2, %v7491
    %v7493 = vrot.slane %v7447, %v7492
    %v7494 = vlaneseq
    %v7495 = vshrl.u32 %v7494, 7
    %v7496 = vsub.s32 3, %v7495
    %v7497 = vrot.slane %v7447, %v7496
    %v7498 = vlaneseq
    %v7499 = vshrl.u32 %v7498, 7
    %v7500 = vsub.s32 4, %v7499
    %v7501 = vrot.slane %v7447, %v7500
    %v7502 = vlaneseq
    %v7503 = vshrl.u32 %v7502, 7
    %v7504 = vsub.s32 5, %v7503
    %v7505 = vrot.slane %v7447, %v7504
    %v7506 = vlaneseq
    %v7507 = vshrl.u32 %v7506, 7
    %v7508 = vsub.s32 6, %v7507
    %v7509 = vrot.slane %v7447, %v7508
    %v7510 = vlaneseq
    %v7511 = vshrl.u32 %v7510, 7
    %v7512 = vsub.s32 7, %v7511
    %v7513 = vrot.slane %v7447, %v7512
    %v7514 = vcombine.low %v7453, %v7457
    %v7515 = vcombine.low %v7461, %v7465
    %v7517 = vunpack.c.l.s4 1983009808
    %v7518 = vunpack.c.0.s8 %v7517
    %v7519 = vlaneseq
    %v7520 = vshrl.u32 %v7519, 7
    %v7521 = vsub.s32 %v7518, %v7520
    %v7522 = vrot.slane %v7514, %v7521
    %v7524 = vunpack.c.l.s4 1983009808
    %v7525 = vunpack.c.0.s8 %v7524
    %v7526 = vlaneseq
    %v7527 = vshrl.u32 %v7526, 7
    %v7528 = vsub.s32 %v7525, %v7527
    %v7529 = vrot.slane %v7515, %v7528
    %v7530 = vcombine.low %v7522, %v7529
    %v7531 = vcombine.low %v7469, %v7473
    %v7532 = vcombine.low %v7477, %v7481
    %v7534 = vunpack.c.l.s4 1983009808
    %v7535 = vunpack.c.0.s8 %v7534
    %v7536 = vlaneseq
    %v7537 = vshrl.u32 %v7536, 7
    %v7538 = vsub.s32 %v7535, %v7537
    %v7539 = vrot.slane %v7531, %v7538
    %v7541 = vunpack.c.l.s4 1983009808
    %v7542 = vunpack.c.0.s8 %v7541
    %v7543 = vlaneseq
    %v7544 = vshrl.u32 %v7543, 7
    %v7545 = vsub.s32 %v7542, %v7544
    %v7546 = vrot.slane %v7532, %v7545
    %v7547 = vcombine.low %v7539, %v7546
    %v7548 = vcombine.low %v7485, %v7489
    %v7549 = vcombine.low %v7493, %v7497
    %v7551 = vunpack.c.l.s4 1983009808
    %v7552 = vunpack.c.0.s8 %v7551
    %v7553 = vlaneseq
    %v7554 = vshrl.u32 %v7553, 7
    %v7555 = vsub.s32 %v7552, %v7554
    %v7556 = vrot.slane %v7548, %v7555
    %v7558 = vunpack.c.l.s4 1983009808
    %v7559 = vunpack.c.0.s8 %v7558
    %v7560 = vlaneseq
    %v7561 = vshrl.u32 %v7560, 7
    %v7562 = vsub.s32 %v7559, %v7561
    %v7563 = vrot.slane %v7549, %v7562
    %v7564 = vcombine.low %v7556, %v7563
    %v7565 = vcombine.low %v7501, %v7505
    %v7566 = vcombine.low %v7509, %v7513
    %v7568 = vunpack.c.l.s4 1983009808
    %v7569 = vunpack.c.0.s8 %v7568
    %v7570 = vlaneseq
    %v7571 = vshrl.u32 %v7570, 7
    %v7572 = vsub.s32 %v7569, %v7571
    %v7573 = vrot.slane %v7565, %v7572
    %v7575 = vunpack.c.l.s4 1983009808
    %v7576 = vunpack.c.0.s8 %v7575
    %v7577 = vlaneseq
    %v7578 = vshrl.u32 %v7577, 7
    %v7579 = vsub.s32 %v7576, %v7578
    %v7580 = vrot.slane %v7566, %v7579
    %v7581 = vcombine.low %v7573, %v7580
    %7582 = vrot.lane.b32.xlu0 %v7530, 15
    %v7583 = vpop.permute.xlu0 %7582
    %7584 = vrot.lane.b32.xlu0 %v7547, 15
    %v7585 = vpop.permute.xlu0 %7584
    %7586 = vrot.lane.b32.xlu0 %v7564, 15
    %v7587 = vpop.permute.xlu0 %7586
    %7588 = vrot.lane.b32.xlu0 %v7581, 15
    %v7589 = vpop.permute.xlu0 %7588
    %v7590 = vrot.slane %v7583, 6
    %v7591 = vrot.slane %v7585, 6
    %v7592 = vrot.slane %v7587, 6
    %v7593 = vrot.slane %v7589, 6
    %v7594 = vsel %vm6911, %v7590, %v7583
    %v7595 = vsel %vm956, %v7590, %v7591
    %v7596 = vsel %vm6911, %v7595, %v7585
    %v7597 = vsel %vm956, %v7591, %v7592
    %v7598 = vsel %vm6911, %v7597, %v7587
    %v7599 = vsel %vm956, %v7592, %v7593
    %v7600 = vsel %vm6911, %v7599, %v7589
    %v7606 = vmul.f32 %v5842, %v7594
    %v7607 = vmul.f32 %v5843, %v7596
    %v7608 = vmul.f32 %v5844, %v7598
    %v7609 = vmul.f32 %v5845, %v7600
    %v7610 = vmul.f32 %v5846, %v7593
    %7612 = vrot.lane.b32.xlu0 %v7606, 96
    %v7613 = vpop.permute.xlu0 %7612
    %v7614 = vrot.slane %v7613, 6
    %v7615 = vsel %vm6933, %v7614, %v7613
    %v7617 = vadd.f32 %v6756, %v7615
    %7619 = vrot.lane.b32.xlu0 %v7607, 96
    %v7620 = vpop.permute.xlu0 %7619
    %v7621 = vrot.slane %v7613, 2
    %v7622 = vrot.slane %v7613, 4
    %v7623 = vrot.slane %v7620, 4
    %v7624 = vsel %vm1645, %v7622, %v7623
    %v7625 = vsel %vm6933, %v7621, %v7624
    %v7627 = vadd.f32 %v7617, %v7625
    %v7628 = vrot.slane %v7620, 6
    %v7629 = vsel %vm6933, %v7628, %v7620
    %v7631 = vadd.f32 %v7627, %v7629
    %7633 = vrot.lane.b32.xlu0 %v7608, 96
    %v7634 = vpop.permute.xlu0 %7633
    %v7635 = vrot.slane %v7620, 2
    %v7636 = vrot.slane %v7634, 4
    %v7637 = vsel %vm1645, %v7623, %v7636
    %v7638 = vsel %vm6933, %v7635, %v7637
    %v7640 = vadd.f32 %v7631, %v7638
    %v7641 = vrot.slane %v7634, 6
    %v7642 = vsel %vm6933, %v7641, %v7634
    %v7644 = vadd.f32 %v7640, %v7642
    %7646 = vrot.lane.b32.xlu0 %v7609, 96
    %v7647 = vpop.permute.xlu0 %7646
    %v7648 = vrot.slane %v7634, 2
    %v7649 = vrot.slane %v7647, 4
    %v7650 = vsel %vm1645, %v7636, %v7649
    %v7651 = vsel %vm6933, %v7648, %v7650
    %v7653 = vadd.f32 %v7644, %v7651
    %v7654 = vrot.slane %v7647, 6
    %v7655 = vsel %vm6933, %v7654, %v7647
    %v7657 = vadd.f32 %v7653, %v7655
    %7659 = vrot.lane.b32.xlu0 %v7610, 96
    %v7660 = vpop.permute.xlu0 %7659
    %v7661 = vrot.slane %v7647, 2
    %v7662 = vrot.slane %v7660, 4
    %v7663 = vsel %vm1645, %v7649, %v7662
    %v7664 = vsel %vm6933, %v7661, %v7663
    %v7666 = vadd.f32 %v7657, %v7664
    %s7667 = scalar_lea.vmem [#allocation8], 388
    %v7668 = vld [vmem:[%s7667] ss:$8 sm:$0xf]
    %v7669 = vld [vmem:[%s7667] ss:$8 sm:$0xf0]
    %v7670 = vor.u32 %v7668, %v7669
    %s7671 = scalar_lea.vmem [#allocation8], 452
    %v7672 = vld [vmem:[%s7671] ss:$8 sm:$0xf]
    %v7673 = vld [vmem:[%s7671] ss:$8 sm:$0xf0]
    %v7674 = vor.u32 %v7672, %v7673
    %v7677 = vlaneseq
    %v7678 = vshrl.u32 %v7677, 7
    %v7679 = vsub.s32 0, %v7678
    %v7680 = vrot.slane %v7670, %v7679
    %v7681 = vlaneseq
    %v7682 = vshrl.u32 %v7681, 7
    %v7683 = vsub.s32 1, %v7682
    %v7684 = vrot.slane %v7670, %v7683
    %v7685 = vlaneseq
    %v7686 = vshrl.u32 %v7685, 7
    %v7687 = vsub.s32 2, %v7686
    %v7688 = vrot.slane %v7670, %v7687
    %v7689 = vlaneseq
    %v7690 = vshrl.u32 %v7689, 7
    %v7691 = vsub.s32 3, %v7690
    %v7692 = vrot.slane %v7670, %v7691
    %v7693 = vlaneseq
    %v7694 = vshrl.u32 %v7693, 7
    %v7695 = vsub.s32 4, %v7694
    %v7696 = vrot.slane %v7670, %v7695
    %v7697 = vlaneseq
    %v7698 = vshrl.u32 %v7697, 7
    %v7699 = vsub.s32 5, %v7698
    %v7700 = vrot.slane %v7670, %v7699
    %v7701 = vlaneseq
    %v7702 = vshrl.u32 %v7701, 7
    %v7703 = vsub.s32 6, %v7702
    %v7704 = vrot.slane %v7670, %v7703
    %v7705 = vlaneseq
    %v7706 = vshrl.u32 %v7705, 7
    %v7707 = vsub.s32 7, %v7706
    %v7708 = vrot.slane %v7670, %v7707
    %v7709 = vlaneseq
    %v7710 = vshrl.u32 %v7709, 7
    %v7711 = vsub.s32 0, %v7710
    %v7712 = vrot.slane %v7674, %v7711
    %v7713 = vlaneseq
    %v7714 = vshrl.u32 %v7713, 7
    %v7715 = vsub.s32 1, %v7714
    %v7716 = vrot.slane %v7674, %v7715
    %v7717 = vlaneseq
    %v7718 = vshrl.u32 %v7717, 7
    %v7719 = vsub.s32 2, %v7718
    %v7720 = vrot.slane %v7674, %v7719
    %v7721 = vlaneseq
    %v7722 = vshrl.u32 %v7721, 7
    %v7723 = vsub.s32 3, %v7722
    %v7724 = vrot.slane %v7674, %v7723
    %v7725 = vlaneseq
    %v7726 = vshrl.u32 %v7725, 7
    %v7727 = vsub.s32 4, %v7726
    %v7728 = vrot.slane %v7674, %v7727
    %v7729 = vlaneseq
    %v7730 = vshrl.u32 %v7729, 7
    %v7731 = vsub.s32 5, %v7730
    %v7732 = vrot.slane %v7674, %v7731
    %v7733 = vlaneseq
    %v7734 = vshrl.u32 %v7733, 7
    %v7735 = vsub.s32 6, %v7734
    %v7736 = vrot.slane %v7674, %v7735
    %v7737 = vlaneseq
    %v7738 = vshrl.u32 %v7737, 7
    %v7739 = vsub.s32 7, %v7738
    %v7740 = vrot.slane %v7674, %v7739
    %v7741 = vcombine.low %v7680, %v7684
    %v7742 = vcombine.low %v7688, %v7692
    %v7744 = vunpack.c.l.s4 1983009808
    %v7745 = vunpack.c.0.s8 %v7744
    %v7746 = vlaneseq
    %v7747 = vshrl.u32 %v7746, 7
    %v7748 = vsub.s32 %v7745, %v7747
    %v7749 = vrot.slane %v7741, %v7748
    %v7751 = vunpack.c.l.s4 1983009808
    %v7752 = vunpack.c.0.s8 %v7751
    %v7753 = vlaneseq
    %v7754 = vshrl.u32 %v7753, 7
    %v7755 = vsub.s32 %v7752, %v7754
    %v7756 = vrot.slane %v7742, %v7755
    %v7757 = vcombine.low %v7749, %v7756
    %v7758 = vcombine.low %v7696, %v7700
    %v7759 = vcombine.low %v7704, %v7708
    %v7761 = vunpack.c.l.s4 1983009808
    %v7762 = vunpack.c.0.s8 %v7761
    %v7763 = vlaneseq
    %v7764 = vshrl.u32 %v7763, 7
    %v7765 = vsub.s32 %v7762, %v7764
    %v7766 = vrot.slane %v7758, %v7765
    %v7768 = vunpack.c.l.s4 1983009808
    %v7769 = vunpack.c.0.s8 %v7768
    %v7770 = vlaneseq
    %v7771 = vshrl.u32 %v7770, 7
    %v7772 = vsub.s32 %v7769, %v7771
    %v7773 = vrot.slane %v7759, %v7772
    %v7774 = vcombine.low %v7766, %v7773
    %v7775 = vcombine.low %v7712, %v7716
    %v7776 = vcombine.low %v7720, %v7724
    %v7778 = vunpack.c.l.s4 1983009808
    %v7779 = vunpack.c.0.s8 %v7778
    %v7780 = vlaneseq
    %v7781 = vshrl.u32 %v7780, 7
    %v7782 = vsub.s32 %v7779, %v7781
    %v7783 = vrot.slane %v7775, %v7782
    %v7785 = vunpack.c.l.s4 1983009808
    %v7786 = vunpack.c.0.s8 %v7785
    %v7787 = vlaneseq
    %v7788 = vshrl.u32 %v7787, 7
    %v7789 = vsub.s32 %v7786, %v7788
    %v7790 = vrot.slane %v7776, %v7789
    %v7791 = vcombine.low %v7783, %v7790
    %v7792 = vcombine.low %v7728, %v7732
    %v7793 = vcombine.low %v7736, %v7740
    %v7795 = vunpack.c.l.s4 1983009808
    %v7796 = vunpack.c.0.s8 %v7795
    %v7797 = vlaneseq
    %v7798 = vshrl.u32 %v7797, 7
    %v7799 = vsub.s32 %v7796, %v7798
    %v7800 = vrot.slane %v7792, %v7799
    %v7802 = vunpack.c.l.s4 1983009808
    %v7803 = vunpack.c.0.s8 %v7802
    %v7804 = vlaneseq
    %v7805 = vshrl.u32 %v7804, 7
    %v7806 = vsub.s32 %v7803, %v7805
    %v7807 = vrot.slane %v7793, %v7806
    %v7808 = vcombine.low %v7800, %v7807
    %7809 = vrot.lane.b32.xlu0 %v7757, 16
    %v7810 = vpop.permute.xlu0 %7809
    %7811 = vrot.lane.b32.xlu0 %v7774, 16
    %v7812 = vpop.permute.xlu0 %7811
    %7813 = vrot.lane.b32.xlu0 %v7791, 16
    %v7814 = vpop.permute.xlu0 %7813
    %7815 = vrot.lane.b32.xlu0 %v7808, 16
    %v7816 = vpop.permute.xlu0 %7815
    %v7817 = vrot.slane %v7810, 6
    %v7818 = vrot.slane %v7812, 6
    %v7819 = vrot.slane %v7814, 6
    %v7820 = vrot.slane %v7816, 6
    %vm7821 = vcmask 130048
    %v7822 = vsel %vm7821, %v7817, %v7810
    %v7823 = vsel %vm956, %v7817, %v7818
    %v7824 = vsel %vm7821, %v7823, %v7812
    %v7825 = vsel %vm956, %v7818, %v7819
    %v7826 = vsel %vm7821, %v7825, %v7814
    %v7827 = vsel %vm956, %v7819, %v7820
    %v7828 = vsel %vm7821, %v7827, %v7816
    %v7834 = vmul.f32 %v5842, %v7822
    %v7835 = vmul.f32 %v5843, %v7824
    %v7836 = vmul.f32 %v5844, %v7826
    %v7837 = vmul.f32 %v5845, %v7828
    %v7838 = vmul.f32 %v5846, %v7820
    %7840 = vrot.lane.b32.xlu0 %v7834, 95
    %v7841 = vpop.permute.xlu0 %7840
    %v7842 = vrot.slane %v7841, 6
    %vm7843 = vcmask 777216
    %v7844 = vsel %vm7843, %v7842, %v7841
    %v7846 = vadd.f32 %v6985, %v7844
    %7848 = vrot.lane.b32.xlu0 %v7835, 95
    %v7849 = vpop.permute.xlu0 %7848
    %v7850 = vrot.slane %v7841, 2
    %v7851 = vrot.slane %v7841, 4
    %v7852 = vrot.slane %v7849, 4
    %v7853 = vsel %vm1645, %v7851, %v7852
    %v7854 = vsel %vm7843, %v7850, %v7853
    %v7856 = vadd.f32 %v7846, %v7854
    %v7857 = vrot.slane %v7849, 6
    %v7858 = vsel %vm7843, %v7857, %v7849
    %v7860 = vadd.f32 %v7856, %v7858
    %7862 = vrot.lane.b32.xlu0 %v7836, 95
    %v7863 = vpop.permute.xlu0 %7862
    %v7864 = vrot.slane %v7849, 2
    %v7865 = vrot.slane %v7863, 4
    %v7866 = vsel %vm1645, %v7852, %v7865
    %v7867 = vsel %vm7843, %v7864, %v7866
    %v7869 = vadd.f32 %v7860, %v7867
    %v7870 = vrot.slane %v7863, 6
    %v7871 = vsel %vm7843, %v7870, %v7863
    %v7873 = vadd.f32 %v7869, %v7871
    %7875 = vrot.lane.b32.xlu0 %v7837, 95
    %v7876 = vpop.permute.xlu0 %7875
    %v7877 = vrot.slane %v7863, 2
    %v7878 = vrot.slane %v7876, 4
    %v7879 = vsel %vm1645, %v7865, %v7878
    %v7880 = vsel %vm7843, %v7877, %v7879
    %v7882 = vadd.f32 %v7873, %v7880
    %v7883 = vrot.slane %v7876, 6
    %v7884 = vsel %vm7843, %v7883, %v7876
    %v7886 = vadd.f32 %v7882, %v7884
    %7888 = vrot.lane.b32.xlu0 %v7838, 95
    %v7889 = vpop.permute.xlu0 %7888
    %v7890 = vrot.slane %v7876, 2
    %v7891 = vrot.slane %v7889, 4
    %v7892 = vsel %vm1645, %v7878, %v7891
    %v7893 = vsel %vm7843, %v7890, %v7892
    %v7895 = vadd.f32 %v7886, %v7893
    %s7896 = scalar_lea.vmem [#allocation8], 389
    %v7897 = vld [vmem:[%s7896] ss:$8 sm:$0xf]
    %v7898 = vld [vmem:[%s7896] ss:$8 sm:$0xf0]
    %v7899 = vor.u32 %v7897, %v7898
    %s7900 = scalar_lea.vmem [#allocation8], 453
    %v7901 = vld [vmem:[%s7900] ss:$8 sm:$0xf]
    %v7902 = vld [vmem:[%s7900] ss:$8 sm:$0xf0]
    %v7903 = vor.u32 %v7901, %v7902
    %v7906 = vlaneseq
    %v7907 = vshrl.u32 %v7906, 7
    %v7908 = vsub.s32 0, %v7907
    %v7909 = vrot.slane %v7899, %v7908
    %v7910 = vlaneseq
    %v7911 = vshrl.u32 %v7910, 7
    %v7912 = vsub.s32 1, %v7911
    %v7913 = vrot.slane %v7899, %v7912
    %v7914 = vlaneseq
    %v7915 = vshrl.u32 %v7914, 7
    %v7916 = vsub.s32 2, %v7915
    %v7917 = vrot.slane %v7899, %v7916
    %v7918 = vlaneseq
    %v7919 = vshrl.u32 %v7918, 7
    %v7920 = vsub.s32 3, %v7919
    %v7921 = vrot.slane %v7899, %v7920
    %v7922 = vlaneseq
    %v7923 = vshrl.u32 %v7922, 7
    %v7924 = vsub.s32 4, %v7923
    %v7925 = vrot.slane %v7899, %v7924
    %v7926 = vlaneseq
    %v7927 = vshrl.u32 %v7926, 7
    %v7928 = vsub.s32 5, %v7927
    %v7929 = vrot.slane %v7899, %v7928
    %v7930 = vlaneseq
    %v7931 = vshrl.u32 %v7930, 7
    %v7932 = vsub.s32 6, %v7931
    %v7933 = vrot.slane %v7899, %v7932
    %v7934 = vlaneseq
    %v7935 = vshrl.u32 %v7934, 7
    %v7936 = vsub.s32 7, %v7935
    %v7937 = vrot.slane %v7899, %v7936
    %v7938 = vlaneseq
    %v7939 = vshrl.u32 %v7938, 7
    %v7940 = vsub.s32 0, %v7939
    %v7941 = vrot.slane %v7903, %v7940
    %v7942 = vlaneseq
    %v7943 = vshrl.u32 %v7942, 7
    %v7944 = vsub.s32 1, %v7943
    %v7945 = vrot.slane %v7903, %v7944
    %v7946 = vlaneseq
    %v7947 = vshrl.u32 %v7946, 7
    %v7948 = vsub.s32 2, %v7947
    %v7949 = vrot.slane %v7903, %v7948
    %v7950 = vlaneseq
    %v7951 = vshrl.u32 %v7950, 7
    %v7952 = vsub.s32 3, %v7951
    %v7953 = vrot.slane %v7903, %v7952
    %v7954 = vlaneseq
    %v7955 = vshrl.u32 %v7954, 7
    %v7956 = vsub.s32 4, %v7955
    %v7957 = vrot.slane %v7903, %v7956
    %v7958 = vlaneseq
    %v7959 = vshrl.u32 %v7958, 7
    %v7960 = vsub.s32 5, %v7959
    %v7961 = vrot.slane %v7903, %v7960
    %v7962 = vlaneseq
    %v7963 = vshrl.u32 %v7962, 7
    %v7964 = vsub.s32 6, %v7963
    %v7965 = vrot.slane %v7903, %v7964
    %v7966 = vlaneseq
    %v7967 = vshrl.u32 %v7966, 7
    %v7968 = vsub.s32 7, %v7967
    %v7969 = vrot.slane %v7903, %v7968
    %v7970 = vcombine.low %v7909, %v7913
    %v7971 = vcombine.low %v7917, %v7921
    %v7973 = vunpack.c.l.s4 1983009808
    %v7974 = vunpack.c.0.s8 %v7973
    %v7975 = vlaneseq
    %v7976 = vshrl.u32 %v7975, 7
    %v7977 = vsub.s32 %v7974, %v7976
    %v7978 = vrot.slane %v7970, %v7977
    %v7980 = vunpack.c.l.s4 1983009808
    %v7981 = vunpack.c.0.s8 %v7980
    %v7982 = vlaneseq
    %v7983 = vshrl.u32 %v7982, 7
    %v7984 = vsub.s32 %v7981, %v7983
    %v7985 = vrot.slane %v7971, %v7984
    %v7986 = vcombine.low %v7978, %v7985
    %v7987 = vcombine.low %v7925, %v7929
    %v7988 = vcombine.low %v7933, %v7937
    %v7990 = vunpack.c.l.s4 1983009808
    %v7991 = vunpack.c.0.s8 %v7990
    %v7992 = vlaneseq
    %v7993 = vshrl.u32 %v7992, 7
    %v7994 = vsub.s32 %v7991, %v7993
    %v7995 = vrot.slane %v7987, %v7994
    %v7997 = vunpack.c.l.s4 1983009808
    %v7998 = vunpack.c.0.s8 %v7997
    %v7999 = vlaneseq
    %v8000 = vshrl.u32 %v7999, 7
    %v8001 = vsub.s32 %v7998, %v8000
    %v8002 = vrot.slane %v7988, %v8001
    %v8003 = vcombine.low %v7995, %v8002
    %v8004 = vcombine.low %v7941, %v7945
    %v8005 = vcombine.low %v7949, %v7953
    %v8007 = vunpack.c.l.s4 1983009808
    %v8008 = vunpack.c.0.s8 %v8007
    %v8009 = vlaneseq
    %v8010 = vshrl.u32 %v8009, 7
    %v8011 = vsub.s32 %v8008, %v8010
    %v8012 = vrot.slane %v8004, %v8011
    %v8014 = vunpack.c.l.s4 1983009808
    %v8015 = vunpack.c.0.s8 %v8014
    %v8016 = vlaneseq
    %v8017 = vshrl.u32 %v8016, 7
    %v8018 = vsub.s32 %v8015, %v8017
    %v8019 = vrot.slane %v8005, %v8018
    %v8020 = vcombine.low %v8012, %v8019
    %v8021 = vcombine.low %v7957, %v7961
    %v8022 = vcombine.low %v7965, %v7969
    %v8024 = vunpack.c.l.s4 1983009808
    %v8025 = vunpack.c.0.s8 %v8024
    %v8026 = vlaneseq
    %v8027 = vshrl.u32 %v8026, 7
    %v8028 = vsub.s32 %v8025, %v8027
    %v8029 = vrot.slane %v8021, %v8028
    %v8031 = vunpack.c.l.s4 1983009808
    %v8032 = vunpack.c.0.s8 %v8031
    %v8033 = vlaneseq
    %v8034 = vshrl.u32 %v8033, 7
    %v8035 = vsub.s32 %v8032, %v8034
    %v8036 = vrot.slane %v8022, %v8035
    %v8037 = vcombine.low %v8029, %v8036
    %8038 = vrot.lane.b32.xlu0 %v7986, 16
    %v8039 = vpop.permute.xlu0 %8038
    %8040 = vrot.lane.b32.xlu0 %v8003, 16
    %v8041 = vpop.permute.xlu0 %8040
    %8042 = vrot.lane.b32.xlu0 %v8020, 16
    %v8043 = vpop.permute.xlu0 %8042
    %8044 = vrot.lane.b32.xlu0 %v8037, 16
    %v8045 = vpop.permute.xlu0 %8044
    %v8046 = vrot.slane %v8039, 6
    %v8047 = vrot.slane %v8041, 6
    %v8048 = vrot.slane %v8043, 6
    %v8049 = vrot.slane %v8045, 6
    %v8050 = vsel %vm7821, %v8046, %v8039
    %v8051 = vsel %vm956, %v8046, %v8047
    %v8052 = vsel %vm7821, %v8051, %v8041
    %v8053 = vsel %vm956, %v8047, %v8048
    %v8054 = vsel %vm7821, %v8053, %v8043
    %v8055 = vsel %vm956, %v8048, %v8049
    %v8056 = vsel %vm7821, %v8055, %v8045
    %v8062 = vmul.f32 %v5842, %v8050
    %v8063 = vmul.f32 %v5843, %v8052
    %v8064 = vmul.f32 %v5844, %v8054
    %v8065 = vmul.f32 %v5845, %v8056
    %v8066 = vmul.f32 %v5846, %v8049
    %8068 = vrot.lane.b32.xlu0 %v8062, 95
    %v8069 = vpop.permute.xlu0 %8068
    %v8070 = vrot.slane %v8069, 6
    %v8071 = vsel %vm7843, %v8070, %v8069
    %v8073 = vadd.f32 %v7212, %v8071
    %8075 = vrot.lane.b32.xlu0 %v8063, 95
    %v8076 = vpop.permute.xlu0 %8075
    %v8077 = vrot.slane %v8069, 2
    %v8078 = vrot.slane %v8069, 4
    %v8079 = vrot.slane %v8076, 4
    %v8080 = vsel %vm1645, %v8078, %v8079
    %v8081 = vsel %vm7843, %v8077, %v8080
    %v8083 = vadd.f32 %v8073, %v8081
    %v8084 = vrot.slane %v8076, 6
    %v8085 = vsel %vm7843, %v8084, %v8076
    %v8087 = vadd.f32 %v8083, %v8085
    %8089 = vrot.lane.b32.xlu0 %v8064, 95
    %v8090 = vpop.permute.xlu0 %8089
    %v8091 = vrot.slane %v8076, 2
    %v8092 = vrot.slane %v8090, 4
    %v8093 = vsel %vm1645, %v8079, %v8092
    %v8094 = vsel %vm7843, %v8091, %v8093
    %v8096 = vadd.f32 %v8087, %v8094
    %v8097 = vrot.slane %v8090, 6
    %v8098 = vsel %vm7843, %v8097, %v8090
    %v8100 = vadd.f32 %v8096, %v8098
    %8102 = vrot.lane.b32.xlu0 %v8065, 95
    %v8103 = vpop.permute.xlu0 %8102
    %v8104 = vrot.slane %v8090, 2
    %v8105 = vrot.slane %v8103, 4
    %v8106 = vsel %vm1645, %v8092, %v8105
    %v8107 = vsel %vm7843, %v8104, %v8106
    %v8109 = vadd.f32 %v8100, %v8107
    %v8110 = vrot.slane %v8103, 6
    %v8111 = vsel %vm7843, %v8110, %v8103
    %v8113 = vadd.f32 %v8109, %v8111
    %8115 = vrot.lane.b32.xlu0 %v8066, 95
    %v8116 = vpop.permute.xlu0 %8115
    %v8117 = vrot.slane %v8103, 2
    %v8118 = vrot.slane %v8116, 4
    %v8119 = vsel %vm1645, %v8105, %v8118
    %v8120 = vsel %vm7843, %v8117, %v8119
    %v8122 = vadd.f32 %v8113, %v8120
    %s8123 = scalar_lea.vmem [#allocation8], 390
    %v8124 = vld [vmem:[%s8123] ss:$8 sm:$0xf]
    %v8125 = vld [vmem:[%s8123] ss:$8 sm:$0xf0]
    %v8126 = vor.u32 %v8124, %v8125
    %s8127 = scalar_lea.vmem [#allocation8], 454
    %v8128 = vld [vmem:[%s8127] ss:$8 sm:$0xf]
    %v8129 = vld [vmem:[%s8127] ss:$8 sm:$0xf0]
    %v8130 = vor.u32 %v8128, %v8129
    %v8133 = vlaneseq
    %v8134 = vshrl.u32 %v8133, 7
    %v8135 = vsub.s32 0, %v8134
    %v8136 = vrot.slane %v8126, %v8135
    %v8137 = vlaneseq
    %v8138 = vshrl.u32 %v8137, 7
    %v8139 = vsub.s32 1, %v8138
    %v8140 = vrot.slane %v8126, %v8139
    %v8141 = vlaneseq
    %v8142 = vshrl.u32 %v8141, 7
    %v8143 = vsub.s32 2, %v8142
    %v8144 = vrot.slane %v8126, %v8143
    %v8145 = vlaneseq
    %v8146 = vshrl.u32 %v8145, 7
    %v8147 = vsub.s32 3, %v8146
    %v8148 = vrot.slane %v8126, %v8147
    %v8149 = vlaneseq
    %v8150 = vshrl.u32 %v8149, 7
    %v8151 = vsub.s32 4, %v8150
    %v8152 = vrot.slane %v8126, %v8151
    %v8153 = vlaneseq
    %v8154 = vshrl.u32 %v8153, 7
    %v8155 = vsub.s32 5, %v8154
    %v8156 = vrot.slane %v8126, %v8155
    %v8157 = vlaneseq
    %v8158 = vshrl.u32 %v8157, 7
    %v8159 = vsub.s32 6, %v8158
    %v8160 = vrot.slane %v8126, %v8159
    %v8161 = vlaneseq
    %v8162 = vshrl.u32 %v8161, 7
    %v8163 = vsub.s32 7, %v8162
    %v8164 = vrot.slane %v8126, %v8163
    %v8165 = vlaneseq
    %v8166 = vshrl.u32 %v8165, 7
    %v8167 = vsub.s32 0, %v8166
    %v8168 = vrot.slane %v8130, %v8167
    %v8169 = vlaneseq
    %v8170 = vshrl.u32 %v8169, 7
    %v8171 = vsub.s32 1, %v8170
    %v8172 = vrot.slane %v8130, %v8171
    %v8173 = vlaneseq
    %v8174 = vshrl.u32 %v8173, 7
    %v8175 = vsub.s32 2, %v8174
    %v8176 = vrot.slane %v8130, %v8175
    %v8177 = vlaneseq
    %v8178 = vshrl.u32 %v8177, 7
    %v8179 = vsub.s32 3, %v8178
    %v8180 = vrot.slane %v8130, %v8179
    %v8181 = vlaneseq
    %v8182 = vshrl.u32 %v8181, 7
    %v8183 = vsub.s32 4, %v8182
    %v8184 = vrot.slane %v8130, %v8183
    %v8185 = vlaneseq
    %v8186 = vshrl.u32 %v8185, 7
    %v8187 = vsub.s32 5, %v8186
    %v8188 = vrot.slane %v8130, %v8187
    %v8189 = vlaneseq
    %v8190 = vshrl.u32 %v8189, 7
    %v8191 = vsub.s32 6, %v8190
    %v8192 = vrot.slane %v8130, %v8191
    %v8193 = vlaneseq
    %v8194 = vshrl.u32 %v8193, 7
    %v8195 = vsub.s32 7, %v8194
    %v8196 = vrot.slane %v8130, %v8195
    %v8197 = vcombine.low %v8136, %v8140
    %v8198 = vcombine.low %v8144, %v8148
    %v8200 = vunpack.c.l.s4 1983009808
    %v8201 = vunpack.c.0.s8 %v8200
    %v8202 = vlaneseq
    %v8203 = vshrl.u32 %v8202, 7
    %v8204 = vsub.s32 %v8201, %v8203
    %v8205 = vrot.slane %v8197, %v8204
    %v8207 = vunpack.c.l.s4 1983009808
    %v8208 = vunpack.c.0.s8 %v8207
    %v8209 = vlaneseq
    %v8210 = vshrl.u32 %v8209, 7
    %v8211 = vsub.s32 %v8208, %v8210
    %v8212 = vrot.slane %v8198, %v8211
    %v8213 = vcombine.low %v8205, %v8212
    %v8214 = vcombine.low %v8152, %v8156
    %v8215 = vcombine.low %v8160, %v8164
    %v8217 = vunpack.c.l.s4 1983009808
    %v8218 = vunpack.c.0.s8 %v8217
    %v8219 = vlaneseq
    %v8220 = vshrl.u32 %v8219, 7
    %v8221 = vsub.s32 %v8218, %v8220
    %v8222 = vrot.slane %v8214, %v8221
    %v8224 = vunpack.c.l.s4 1983009808
    %v8225 = vunpack.c.0.s8 %v8224
    %v8226 = vlaneseq
    %v8227 = vshrl.u32 %v8226, 7
    %v8228 = vsub.s32 %v8225, %v8227
    %v8229 = vrot.slane %v8215, %v8228
    %v8230 = vcombine.low %v8222, %v8229
    %v8231 = vcombine.low %v8168, %v8172
    %v8232 = vcombine.low %v8176, %v8180
    %v8234 = vunpack.c.l.s4 1983009808
    %v8235 = vunpack.c.0.s8 %v8234
    %v8236 = vlaneseq
    %v8237 = vshrl.u32 %v8236, 7
    %v8238 = vsub.s32 %v8235, %v8237
    %v8239 = vrot.slane %v8231, %v8238
    %v8241 = vunpack.c.l.s4 1983009808
    %v8242 = vunpack.c.0.s8 %v8241
    %v8243 = vlaneseq
    %v8244 = vshrl.u32 %v8243, 7
    %v8245 = vsub.s32 %v8242, %v8244
    %v8246 = vrot.slane %v8232, %v8245
    %v8247 = vcombine.low %v8239, %v8246
    %v8248 = vcombine.low %v8184, %v8188
    %v8249 = vcombine.low %v8192, %v8196
    %v8251 = vunpack.c.l.s4 1983009808
    %v8252 = vunpack.c.0.s8 %v8251
    %v8253 = vlaneseq
    %v8254 = vshrl.u32 %v8253, 7
    %v8255 = vsub.s32 %v8252, %v8254
    %v8256 = vrot.slane %v8248, %v8255
    %v8258 = vunpack.c.l.s4 1983009808
    %v8259 = vunpack.c.0.s8 %v8258
    %v8260 = vlaneseq
    %v8261 = vshrl.u32 %v8260, 7
    %v8262 = vsub.s32 %v8259, %v8261
    %v8263 = vrot.slane %v8249, %v8262
    %v8264 = vcombine.low %v8256, %v8263
    %8265 = vrot.lane.b32.xlu0 %v8213, 16
    %v8266 = vpop.permute.xlu0 %8265
    %8267 = vrot.lane.b32.xlu0 %v8230, 16
    %v8268 = vpop.permute.xlu0 %8267
    %8269 = vrot.lane.b32.xlu0 %v8247, 16
    %v8270 = vpop.permute.xlu0 %8269
    %8271 = vrot.lane.b32.xlu0 %v8264, 16
    %v8272 = vpop.permute.xlu0 %8271
    %v8273 = vrot.slane %v8266, 6
    %v8274 = vrot.slane %v8268, 6
    %v8275 = vrot.slane %v8270, 6
    %v8276 = vrot.slane %v8272, 6
    %v8277 = vsel %vm7821, %v8273, %v8266
    %v8278 = vsel %vm956, %v8273, %v8274
    %v8279 = vsel %vm7821, %v8278, %v8268
    %v8280 = vsel %vm956, %v8274, %v8275
    %v8281 = vsel %vm7821, %v8280, %v8270
    %v8282 = vsel %vm956, %v8275, %v8276
    %v8283 = vsel %vm7821, %v8282, %v8272
    %v8289 = vmul.f32 %v5842, %v8277
    %v8290 = vmul.f32 %v5843, %v8279
    %v8291 = vmul.f32 %v5844, %v8281
    %v8292 = vmul.f32 %v5845, %v8283
    %v8293 = vmul.f32 %v5846, %v8276
    %8295 = vrot.lane.b32.xlu0 %v8289, 95
    %v8296 = vpop.permute.xlu0 %8295
    %v8297 = vrot.slane %v8296, 6
    %v8298 = vsel %vm7843, %v8297, %v8296
    %v8300 = vadd.f32 %v7439, %v8298
    %8302 = vrot.lane.b32.xlu0 %v8290, 95
    %v8303 = vpop.permute.xlu0 %8302
    %v8304 = vrot.slane %v8296, 2
    %v8305 = vrot.slane %v8296, 4
    %v8306 = vrot.slane %v8303, 4
    %v8307 = vsel %vm1645, %v8305, %v8306
    %v8308 = vsel %vm7843, %v8304, %v8307
    %v8310 = vadd.f32 %v8300, %v8308
    %v8311 = vrot.slane %v8303, 6
    %v8312 = vsel %vm7843, %v8311, %v8303
    %v8314 = vadd.f32 %v8310, %v8312
    %8316 = vrot.lane.b32.xlu0 %v8291, 95
    %v8317 = vpop.permute.xlu0 %8316
    %v8318 = vrot.slane %v8303, 2
    %v8319 = vrot.slane %v8317, 4
    %v8320 = vsel %vm1645, %v8306, %v8319
    %v8321 = vsel %vm7843, %v8318, %v8320
    %v8323 = vadd.f32 %v8314, %v8321
    %v8324 = vrot.slane %v8317, 6
    %v8325 = vsel %vm7843, %v8324, %v8317
    %v8327 = vadd.f32 %v8323, %v8325
    %8329 = vrot.lane.b32.xlu0 %v8292, 95
    %v8330 = vpop.permute.xlu0 %8329
    %v8331 = vrot.slane %v8317, 2
    %v8332 = vrot.slane %v8330, 4
    %v8333 = vsel %vm1645, %v8319, %v8332
    %v8334 = vsel %vm7843, %v8331, %v8333
    %v8336 = vadd.f32 %v8327, %v8334
    %v8337 = vrot.slane %v8330, 6
    %v8338 = vsel %vm7843, %v8337, %v8330
    %v8340 = vadd.f32 %v8336, %v8338
    %8342 = vrot.lane.b32.xlu0 %v8293, 95
    %v8343 = vpop.permute.xlu0 %8342
    %v8344 = vrot.slane %v8330, 2
    %v8345 = vrot.slane %v8343, 4
    %v8346 = vsel %vm1645, %v8332, %v8345
    %v8347 = vsel %vm7843, %v8344, %v8346
    %v8349 = vadd.f32 %v8340, %v8347
    %s8350 = scalar_lea.vmem [#allocation8], 391
    %v8351 = vld [vmem:[%s8350] ss:$8 sm:$0xf]
    %v8352 = vld [vmem:[%s8350] ss:$8 sm:$0xf0]
    %v8353 = vor.u32 %v8351, %v8352
    %s8354 = scalar_lea.vmem [#allocation8], 455
    %v8355 = vld [vmem:[%s8354] ss:$8 sm:$0xf]
    %v8356 = vld [vmem:[%s8354] ss:$8 sm:$0xf0]
    %v8357 = vor.u32 %v8355, %v8356
    %v8360 = vlaneseq
    %v8361 = vshrl.u32 %v8360, 7
    %v8362 = vsub.s32 0, %v8361
    %v8363 = vrot.slane %v8353, %v8362
    %v8364 = vlaneseq
    %v8365 = vshrl.u32 %v8364, 7
    %v8366 = vsub.s32 1, %v8365
    %v8367 = vrot.slane %v8353, %v8366
    %v8368 = vlaneseq
    %v8369 = vshrl.u32 %v8368, 7
    %v8370 = vsub.s32 2, %v8369
    %v8371 = vrot.slane %v8353, %v8370
    %v8372 = vlaneseq
    %v8373 = vshrl.u32 %v8372, 7
    %v8374 = vsub.s32 3, %v8373
    %v8375 = vrot.slane %v8353, %v8374
    %v8376 = vlaneseq
    %v8377 = vshrl.u32 %v8376, 7
    %v8378 = vsub.s32 4, %v8377
    %v8379 = vrot.slane %v8353, %v8378
    %v8380 = vlaneseq
    %v8381 = vshrl.u32 %v8380, 7
    %v8382 = vsub.s32 5, %v8381
    %v8383 = vrot.slane %v8353, %v8382
    %v8384 = vlaneseq
    %v8385 = vshrl.u32 %v8384, 7
    %v8386 = vsub.s32 6, %v8385
    %v8387 = vrot.slane %v8353, %v8386
    %v8388 = vlaneseq
    %v8389 = vshrl.u32 %v8388, 7
    %v8390 = vsub.s32 7, %v8389
    %v8391 = vrot.slane %v8353, %v8390
    %v8392 = vlaneseq
    %v8393 = vshrl.u32 %v8392, 7
    %v8394 = vsub.s32 0, %v8393
    %v8395 = vrot.slane %v8357, %v8394
    %v8396 = vlaneseq
    %v8397 = vshrl.u32 %v8396, 7
    %v8398 = vsub.s32 1, %v8397
    %v8399 = vrot.slane %v8357, %v8398
    %v8400 = vlaneseq
    %v8401 = vshrl.u32 %v8400, 7
    %v8402 = vsub.s32 2, %v8401
    %v8403 = vrot.slane %v8357, %v8402
    %v8404 = vlaneseq
    %v8405 = vshrl.u32 %v8404, 7
    %v8406 = vsub.s32 3, %v8405
    %v8407 = vrot.slane %v8357, %v8406
    %v8408 = vlaneseq
    %v8409 = vshrl.u32 %v8408, 7
    %v8410 = vsub.s32 4, %v8409
    %v8411 = vrot.slane %v8357, %v8410
    %v8412 = vlaneseq
    %v8413 = vshrl.u32 %v8412, 7
    %v8414 = vsub.s32 5, %v8413
    %v8415 = vrot.slane %v8357, %v8414
    %v8416 = vlaneseq
    %v8417 = vshrl.u32 %v8416, 7
    %v8418 = vsub.s32 6, %v8417
    %v8419 = vrot.slane %v8357, %v8418
    %v8420 = vlaneseq
    %v8421 = vshrl.u32 %v8420, 7
    %v8422 = vsub.s32 7, %v8421
    %v8423 = vrot.slane %v8357, %v8422
    %v8424 = vcombine.low %v8363, %v8367
    %v8425 = vcombine.low %v8371, %v8375
    %v8427 = vunpack.c.l.s4 1983009808
    %v8428 = vunpack.c.0.s8 %v8427
    %v8429 = vlaneseq
    %v8430 = vshrl.u32 %v8429, 7
    %v8431 = vsub.s32 %v8428, %v8430
    %v8432 = vrot.slane %v8424, %v8431
    %v8434 = vunpack.c.l.s4 1983009808
    %v8435 = vunpack.c.0.s8 %v8434
    %v8436 = vlaneseq
    %v8437 = vshrl.u32 %v8436, 7
    %v8438 = vsub.s32 %v8435, %v8437
    %v8439 = vrot.slane %v8425, %v8438
    %v8440 = vcombine.low %v8432, %v8439
    %v8441 = vcombine.low %v8379, %v8383
    %v8442 = vcombine.low %v8387, %v8391
    %v8444 = vunpack.c.l.s4 1983009808
    %v8445 = vunpack.c.0.s8 %v8444
    %v8446 = vlaneseq
    %v8447 = vshrl.u32 %v8446, 7
    %v8448 = vsub.s32 %v8445, %v8447
    %v8449 = vrot.slane %v8441, %v8448
    %v8451 = vunpack.c.l.s4 1983009808
    %v8452 = vunpack.c.0.s8 %v8451
    %v8453 = vlaneseq
    %v8454 = vshrl.u32 %v8453, 7
    %v8455 = vsub.s32 %v8452, %v8454
    %v8456 = vrot.slane %v8442, %v8455
    %v8457 = vcombine.low %v8449, %v8456
    %v8458 = vcombine.low %v8395, %v8399
    %v8459 = vcombine.low %v8403, %v8407
    %v8461 = vunpack.c.l.s4 1983009808
    %v8462 = vunpack.c.0.s8 %v8461
    %v8463 = vlaneseq
    %v8464 = vshrl.u32 %v8463, 7
    %v8465 = vsub.s32 %v8462, %v8464
    %v8466 = vrot.slane %v8458, %v8465
    %v8468 = vunpack.c.l.s4 1983009808
    %v8469 = vunpack.c.0.s8 %v8468
    %v8470 = vlaneseq
    %v8471 = vshrl.u32 %v8470, 7
    %v8472 = vsub.s32 %v8469, %v8471
    %v8473 = vrot.slane %v8459, %v8472
    %v8474 = vcombine.low %v8466, %v8473
    %v8475 = vcombine.low %v8411, %v8415
    %v8476 = vcombine.low %v8419, %v8423
    %v8478 = vunpack.c.l.s4 1983009808
    %v8479 = vunpack.c.0.s8 %v8478
    %v8480 = vlaneseq
    %v8481 = vshrl.u32 %v8480, 7
    %v8482 = vsub.s32 %v8479, %v8481
    %v8483 = vrot.slane %v8475, %v8482
    %v8485 = vunpack.c.l.s4 1983009808
    %v8486 = vunpack.c.0.s8 %v8485
    %v8487 = vlaneseq
    %v8488 = vshrl.u32 %v8487, 7
    %v8489 = vsub.s32 %v8486, %v8488
    %v8490 = vrot.slane %v8476, %v8489
    %v8491 = vcombine.low %v8483, %v8490
    %8492 = vrot.lane.b32.xlu0 %v8440, 16
    %v8493 = vpop.permute.xlu0 %8492
    %8494 = vrot.lane.b32.xlu0 %v8457, 16
    %v8495 = vpop.permute.xlu0 %8494
    %8496 = vrot.lane.b32.xlu0 %v8474, 16
    %v8497 = vpop.permute.xlu0 %8496
    %8498 = vrot.lane.b32.xlu0 %v8491, 16
    %v8499 = vpop.permute.xlu0 %8498
    %v8500 = vrot.slane %v8493, 6
    %v8501 = vrot.slane %v8495, 6
    %v8502 = vrot.slane %v8497, 6
    %v8503 = vrot.slane %v8499, 6
    %v8504 = vsel %vm7821, %v8500, %v8493
    %v8505 = vsel %vm956, %v8500, %v8501
    %v8506 = vsel %vm7821, %v8505, %v8495
    %v8507 = vsel %vm956, %v8501, %v8502
    %v8508 = vsel %vm7821, %v8507, %v8497
    %v8509 = vsel %vm956, %v8502, %v8503
    %v8510 = vsel %vm7821, %v8509, %v8499
    %v8516 = vmul.f32 %v5842, %v8504
    %v8517 = vmul.f32 %v5843, %v8506
    %v8518 = vmul.f32 %v5844, %v8508
    %v8519 = vmul.f32 %v5845, %v8510
    %v8520 = vmul.f32 %v5846, %v8503
    %8522 = vrot.lane.b32.xlu0 %v8516, 95
    %v8523 = vpop.permute.xlu0 %8522
    %v8524 = vrot.slane %v8523, 6
    %v8525 = vsel %vm7843, %v8524, %v8523
    %v8527 = vadd.f32 %v7666, %v8525
    %8529 = vrot.lane.b32.xlu0 %v8517, 95
    %v8530 = vpop.permute.xlu0 %8529
    %v8531 = vrot.slane %v8523, 2
    %v8532 = vrot.slane %v8523, 4
    %v8533 = vrot.slane %v8530, 4
    %v8534 = vsel %vm1645, %v8532, %v8533
    %v8535 = vsel %vm7843, %v8531, %v8534
    %v8537 = vadd.f32 %v8527, %v8535
    %v8538 = vrot.slane %v8530, 6
    %v8539 = vsel %vm7843, %v8538, %v8530
    %v8541 = vadd.f32 %v8537, %v8539
    %8543 = vrot.lane.b32.xlu0 %v8518, 95
    %v8544 = vpop.permute.xlu0 %8543
    %v8545 = vrot.slane %v8530, 2
    %v8546 = vrot.slane %v8544, 4
    %v8547 = vsel %vm1645, %v8533, %v8546
    %v8548 = vsel %vm7843, %v8545, %v8547
    %v8550 = vadd.f32 %v8541, %v8548
    %v8551 = vrot.slane %v8544, 6
    %v8552 = vsel %vm7843, %v8551, %v8544
    %v8554 = vadd.f32 %v8550, %v8552
    %8556 = vrot.lane.b32.xlu0 %v8519, 95
    %v8557 = vpop.permute.xlu0 %8556
    %v8558 = vrot.slane %v8544, 2
    %v8559 = vrot.slane %v8557, 4
    %v8560 = vsel %vm1645, %v8546, %v8559
    %v8561 = vsel %vm7843, %v8558, %v8560
    %v8563 = vadd.f32 %v8554, %v8561
    %v8564 = vrot.slane %v8557, 6
    %v8565 = vsel %vm7843, %v8564, %v8557
    %v8567 = vadd.f32 %v8563, %v8565
    %8569 = vrot.lane.b32.xlu0 %v8520, 95
    %v8570 = vpop.permute.xlu0 %8569
    %v8571 = vrot.slane %v8557, 2
    %v8572 = vrot.slane %v8570, 4
    %v8573 = vsel %vm1645, %v8559, %v8572
    %v8574 = vsel %vm7843, %v8571, %v8573
    %v8576 = vadd.f32 %v8567, %v8574
    %s8577 = scalar_lea.vmem [#allocation8], 512
    %v8578 = vld [vmem:[%s8577] ss:$8 sm:$0xf]
    %v8579 = vld [vmem:[%s8577] ss:$8 sm:$0xf0]
    %v8580 = vor.u32 %v8578, %v8579
    %s8581 = scalar_lea.vmem [#allocation8], 576
    %v8582 = vld [vmem:[%s8581] ss:$8 sm:$0xf]
    %v8583 = vld [vmem:[%s8581] ss:$8 sm:$0xf0]
    %v8584 = vor.u32 %v8582, %v8583
    %v8587 = vlaneseq
    %v8588 = vshrl.u32 %v8587, 7
    %v8589 = vsub.s32 0, %v8588
    %v8590 = vrot.slane %v8580, %v8589
    %v8591 = vlaneseq
    %v8592 = vshrl.u32 %v8591, 7
    %v8593 = vsub.s32 1, %v8592
    %v8594 = vrot.slane %v8580, %v8593
    %v8595 = vlaneseq
    %v8596 = vshrl.u32 %v8595, 7
    %v8597 = vsub.s32 2, %v8596
    %v8598 = vrot.slane %v8580, %v8597
    %v8599 = vlaneseq
    %v8600 = vshrl.u32 %v8599, 7
    %v8601 = vsub.s32 3, %v8600
    %v8602 = vrot.slane %v8580, %v8601
    %v8603 = vlaneseq
    %v8604 = vshrl.u32 %v8603, 7
    %v8605 = vsub.s32 4, %v8604
    %v8606 = vrot.slane %v8580, %v8605
    %v8607 = vlaneseq
    %v8608 = vshrl.u32 %v8607, 7
    %v8609 = vsub.s32 5, %v8608
    %v8610 = vrot.slane %v8580, %v8609
    %v8611 = vlaneseq
    %v8612 = vshrl.u32 %v8611, 7
    %v8613 = vsub.s32 6, %v8612
    %v8614 = vrot.slane %v8580, %v8613
    %v8615 = vlaneseq
    %v8616 = vshrl.u32 %v8615, 7
    %v8617 = vsub.s32 7, %v8616
    %v8618 = vrot.slane %v8580, %v8617
    %v8619 = vlaneseq
    %v8620 = vshrl.u32 %v8619, 7
    %v8621 = vsub.s32 0, %v8620
    %v8622 = vrot.slane %v8584, %v8621
    %v8623 = vlaneseq
    %v8624 = vshrl.u32 %v8623, 7
    %v8625 = vsub.s32 1, %v8624
    %v8626 = vrot.slane %v8584, %v8625
    %v8627 = vlaneseq
    %v8628 = vshrl.u32 %v8627, 7
    %v8629 = vsub.s32 2, %v8628
    %v8630 = vrot.slane %v8584, %v8629
    %v8631 = vlaneseq
    %v8632 = vshrl.u32 %v8631, 7
    %v8633 = vsub.s32 3, %v8632
    %v8634 = vrot.slane %v8584, %v8633
    %v8635 = vlaneseq
    %v8636 = vshrl.u32 %v8635, 7
    %v8637 = vsub.s32 4, %v8636
    %v8638 = vrot.slane %v8584, %v8637
    %v8639 = vlaneseq
    %v8640 = vshrl.u32 %v8639, 7
    %v8641 = vsub.s32 5, %v8640
    %v8642 = vrot.slane %v8584, %v8641
    %v8643 = vlaneseq
    %v8644 = vshrl.u32 %v8643, 7
    %v8645 = vsub.s32 6, %v8644
    %v8646 = vrot.slane %v8584, %v8645
    %v8647 = vlaneseq
    %v8648 = vshrl.u32 %v8647, 7
    %v8649 = vsub.s32 7, %v8648
    %v8650 = vrot.slane %v8584, %v8649
    %v8651 = vcombine.low %v8590, %v8594
    %v8652 = vcombine.low %v8598, %v8602
    %v8654 = vunpack.c.l.s4 1983009808
    %v8655 = vunpack.c.0.s8 %v8654
    %v8656 = vlaneseq
    %v8657 = vshrl.u32 %v8656, 7
    %v8658 = vsub.s32 %v8655, %v8657
    %v8659 = vrot.slane %v8651, %v8658
    %v8661 = vunpack.c.l.s4 1983009808
    %v8662 = vunpack.c.0.s8 %v8661
    %v8663 = vlaneseq
    %v8664 = vshrl.u32 %v8663, 7
    %v8665 = vsub.s32 %v8662, %v8664
    %v8666 = vrot.slane %v8652, %v8665
    %v8667 = vcombine.low %v8659, %v8666
    %v8668 = vcombine.low %v8606, %v8610
    %v8669 = vcombine.low %v8614, %v8618
    %v8671 = vunpack.c.l.s4 1983009808
    %v8672 = vunpack.c.0.s8 %v8671
    %v8673 = vlaneseq
    %v8674 = vshrl.u32 %v8673, 7
    %v8675 = vsub.s32 %v8672, %v8674
    %v8676 = vrot.slane %v8668, %v8675
    %v8678 = vunpack.c.l.s4 1983009808
    %v8679 = vunpack.c.0.s8 %v8678
    %v8680 = vlaneseq
    %v8681 = vshrl.u32 %v8680, 7
    %v8682 = vsub.s32 %v8679, %v8681
    %v8683 = vrot.slane %v8669, %v8682
    %v8684 = vcombine.low %v8676, %v8683
    %v8685 = vcombine.low %v8622, %v8626
    %v8686 = vcombine.low %v8630, %v8634
    %v8688 = vunpack.c.l.s4 1983009808
    %v8689 = vunpack.c.0.s8 %v8688
    %v8690 = vlaneseq
    %v8691 = vshrl.u32 %v8690, 7
    %v8692 = vsub.s32 %v8689, %v8691
    %v8693 = vrot.slane %v8685, %v8692
    %v8695 = vunpack.c.l.s4 1983009808
    %v8696 = vunpack.c.0.s8 %v8695
    %v8697 = vlaneseq
    %v8698 = vshrl.u32 %v8697, 7
    %v8699 = vsub.s32 %v8696, %v8698
    %v8700 = vrot.slane %v8686, %v8699
    %v8701 = vcombine.low %v8693, %v8700
    %v8702 = vcombine.low %v8638, %v8642
    %v8703 = vcombine.low %v8646, %v8650
    %v8705 = vunpack.c.l.s4 1983009808
    %v8706 = vunpack.c.0.s8 %v8705
    %v8707 = vlaneseq
    %v8708 = vshrl.u32 %v8707, 7
    %v8709 = vsub.s32 %v8706, %v8708
    %v8710 = vrot.slane %v8702, %v8709
    %v8712 = vunpack.c.l.s4 1983009808
    %v8713 = vunpack.c.0.s8 %v8712
    %v8714 = vlaneseq
    %v8715 = vshrl.u32 %v8714, 7
    %v8716 = vsub.s32 %v8713, %v8715
    %v8717 = vrot.slane %v8703, %v8716
    %v8718 = vcombine.low %v8710, %v8717
    %8719 = vrot.lane.b32.xlu0 %v8667, 17
    %v8720 = vpop.permute.xlu0 %8719
    %8721 = vrot.lane.b32.xlu0 %v8684, 17
    %v8722 = vpop.permute.xlu0 %8721
    %8723 = vrot.lane.b32.xlu0 %v8701, 17
    %v8724 = vpop.permute.xlu0 %8723
    %8725 = vrot.lane.b32.xlu0 %v8718, 17
    %v8726 = vpop.permute.xlu0 %8725
    %v8727 = vrot.slane %v8720, 6
    %v8728 = vrot.slane %v8722, 6
    %v8729 = vrot.slane %v8724, 6
    %v8730 = vrot.slane %v8726, 6
    %vm8731 = vcmask 138240
    %v8732 = vsel %vm8731, %v8727, %v8720
    %v8733 = vsel %vm956, %v8727, %v8728
    %v8734 = vsel %vm8731, %v8733, %v8722
    %v8735 = vsel %vm956, %v8728, %v8729
    %v8736 = vsel %vm8731, %v8735, %v8724
    %v8737 = vsel %vm956, %v8729, %v8730
    %v8738 = vsel %vm8731, %v8737, %v8726
    %v8744 = vmul.f32 %v5842, %v8732
    %v8745 = vmul.f32 %v5843, %v8734
    %v8746 = vmul.f32 %v5844, %v8736
    %v8747 = vmul.f32 %v5845, %v8738
    %v8748 = vmul.f32 %v5846, %v8730
    %8750 = vrot.lane.b32.xlu0 %v8744, 94
    %v8751 = vpop.permute.xlu0 %8750
    %v8752 = vrot.slane %v8751, 6
    %vm8753 = vcmask 769024
    %v8754 = vsel %vm8753, %v8752, %v8751
    %v8756 = vadd.f32 %v7895, %v8754
    %8758 = vrot.lane.b32.xlu0 %v8745, 94
    %v8759 = vpop.permute.xlu0 %8758
    %v8760 = vrot.slane %v8751, 2
    %v8761 = vrot.slane %v8751, 4
    %v8762 = vrot.slane %v8759, 4
    %v8763 = vsel %vm1645, %v8761, %v8762
    %v8764 = vsel %vm8753, %v8760, %v8763
    %v8766 = vadd.f32 %v8756, %v8764
    %v8767 = vrot.slane %v8759, 6
    %v8768 = vsel %vm8753, %v8767, %v8759
    %v8770 = vadd.f32 %v8766, %v8768
    %8772 = vrot.lane.b32.xlu0 %v8746, 94
    %v8773 = vpop.permute.xlu0 %8772
    %v8774 = vrot.slane %v8759, 2
    %v8775 = vrot.slane %v8773, 4
    %v8776 = vsel %vm1645, %v8762, %v8775
    %v8777 = vsel %vm8753, %v8774, %v8776
    %v8779 = vadd.f32 %v8770, %v8777
    %v8780 = vrot.slane %v8773, 6
    %v8781 = vsel %vm8753, %v8780, %v8773
    %v8783 = vadd.f32 %v8779, %v8781
    %8785 = vrot.lane.b32.xlu0 %v8747, 94
    %v8786 = vpop.permute.xlu0 %8785
    %v8787 = vrot.slane %v8773, 2
    %v8788 = vrot.slane %v8786, 4
    %v8789 = vsel %vm1645, %v8775, %v8788
    %v8790 = vsel %vm8753, %v8787, %v8789
    %v8792 = vadd.f32 %v8783, %v8790
    %v8793 = vrot.slane %v8786, 6
    %v8794 = vsel %vm8753, %v8793, %v8786
    %v8796 = vadd.f32 %v8792, %v8794
    %8798 = vrot.lane.b32.xlu0 %v8748, 94
    %v8799 = vpop.permute.xlu0 %8798
    %v8800 = vrot.slane %v8786, 2
    %v8801 = vrot.slane %v8799, 4
    %v8802 = vsel %vm1645, %v8788, %v8801
    %v8803 = vsel %vm8753, %v8800, %v8802
    %v8805 = vadd.f32 %v8796, %v8803
    %s8806 = scalar_lea.vmem [#allocation8], 513
    %v8807 = vld [vmem:[%s8806] ss:$8 sm:$0xf]
    %v8808 = vld [vmem:[%s8806] ss:$8 sm:$0xf0]
    %v8809 = vor.u32 %v8807, %v8808
    %s8810 = scalar_lea.vmem [#allocation8], 577
    %v8811 = vld [vmem:[%s8810] ss:$8 sm:$0xf]
    %v8812 = vld [vmem:[%s8810] ss:$8 sm:$0xf0]
    %v8813 = vor.u32 %v8811, %v8812
    %v8816 = vlaneseq
    %v8817 = vshrl.u32 %v8816, 7
    %v8818 = vsub.s32 0, %v8817
    %v8819 = vrot.slane %v8809, %v8818
    %v8820 = vlaneseq
    %v8821 = vshrl.u32 %v8820, 7
    %v8822 = vsub.s32 1, %v8821
    %v8823 = vrot.slane %v8809, %v8822
    %v8824 = vlaneseq
    %v8825 = vshrl.u32 %v8824, 7
    %v8826 = vsub.s32 2, %v8825
    %v8827 = vrot.slane %v8809, %v8826
    %v8828 = vlaneseq
    %v8829 = vshrl.u32 %v8828, 7
    %v8830 = vsub.s32 3, %v8829
    %v8831 = vrot.slane %v8809, %v8830
    %v8832 = vlaneseq
    %v8833 = vshrl.u32 %v8832, 7
    %v8834 = vsub.s32 4, %v8833
    %v8835 = vrot.slane %v8809, %v8834
    %v8836 = vlaneseq
    %v8837 = vshrl.u32 %v8836, 7
    %v8838 = vsub.s32 5, %v8837
    %v8839 = vrot.slane %v8809, %v8838
    %v8840 = vlaneseq
    %v8841 = vshrl.u32 %v8840, 7
    %v8842 = vsub.s32 6, %v8841
    %v8843 = vrot.slane %v8809, %v8842
    %v8844 = vlaneseq
    %v8845 = vshrl.u32 %v8844, 7
    %v8846 = vsub.s32 7, %v8845
    %v8847 = vrot.slane %v8809, %v8846
    %v8848 = vlaneseq
    %v8849 = vshrl.u32 %v8848, 7
    %v8850 = vsub.s32 0, %v8849
    %v8851 = vrot.slane %v8813, %v8850
    %v8852 = vlaneseq
    %v8853 = vshrl.u32 %v8852, 7
    %v8854 = vsub.s32 1, %v8853
    %v8855 = vrot.slane %v8813, %v8854
    %v8856 = vlaneseq
    %v8857 = vshrl.u32 %v8856, 7
    %v8858 = vsub.s32 2, %v8857
    %v8859 = vrot.slane %v8813, %v8858
    %v8860 = vlaneseq
    %v8861 = vshrl.u32 %v8860, 7
    %v8862 = vsub.s32 3, %v8861
    %v8863 = vrot.slane %v8813, %v8862
    %v8864 = vlaneseq
    %v8865 = vshrl.u32 %v8864, 7
    %v8866 = vsub.s32 4, %v8865
    %v8867 = vrot.slane %v8813, %v8866
    %v8868 = vlaneseq
    %v8869 = vshrl.u32 %v8868, 7
    %v8870 = vsub.s32 5, %v8869
    %v8871 = vrot.slane %v8813, %v8870
    %v8872 = vlaneseq
    %v8873 = vshrl.u32 %v8872, 7
    %v8874 = vsub.s32 6, %v8873
    %v8875 = vrot.slane %v8813, %v8874
    %v8876 = vlaneseq
    %v8877 = vshrl.u32 %v8876, 7
    %v8878 = vsub.s32 7, %v8877
    %v8879 = vrot.slane %v8813, %v8878
    %v8880 = vcombine.low %v8819, %v8823
    %v8881 = vcombine.low %v8827, %v8831
    %v8883 = vunpack.c.l.s4 1983009808
    %v8884 = vunpack.c.0.s8 %v8883
    %v8885 = vlaneseq
    %v8886 = vshrl.u32 %v8885, 7
    %v8887 = vsub.s32 %v8884, %v8886
    %v8888 = vrot.slane %v8880, %v8887
    %v8890 = vunpack.c.l.s4 1983009808
    %v8891 = vunpack.c.0.s8 %v8890
    %v8892 = vlaneseq
    %v8893 = vshrl.u32 %v8892, 7
    %v8894 = vsub.s32 %v8891, %v8893
    %v8895 = vrot.slane %v8881, %v8894
    %v8896 = vcombine.low %v8888, %v8895
    %v8897 = vcombine.low %v8835, %v8839
    %v8898 = vcombine.low %v8843, %v8847
    %v8900 = vunpack.c.l.s4 1983009808
    %v8901 = vunpack.c.0.s8 %v8900
    %v8902 = vlaneseq
    %v8903 = vshrl.u32 %v8902, 7
    %v8904 = vsub.s32 %v8901, %v8903
    %v8905 = vrot.slane %v8897, %v8904
    %v8907 = vunpack.c.l.s4 1983009808
    %v8908 = vunpack.c.0.s8 %v8907
    %v8909 = vlaneseq
    %v8910 = vshrl.u32 %v8909, 7
    %v8911 = vsub.s32 %v8908, %v8910
    %v8912 = vrot.slane %v8898, %v8911
    %v8913 = vcombine.low %v8905, %v8912
    %v8914 = vcombine.low %v8851, %v8855
    %v8915 = vcombine.low %v8859, %v8863
    %v8917 = vunpack.c.l.s4 1983009808
    %v8918 = vunpack.c.0.s8 %v8917
    %v8919 = vlaneseq
    %v8920 = vshrl.u32 %v8919, 7
    %v8921 = vsub.s32 %v8918, %v8920
    %v8922 = vrot.slane %v8914, %v8921
    %v8924 = vunpack.c.l.s4 1983009808
    %v8925 = vunpack.c.0.s8 %v8924
    %v8926 = vlaneseq
    %v8927 = vshrl.u32 %v8926, 7
    %v8928 = vsub.s32 %v8925, %v8927
    %v8929 = vrot.slane %v8915, %v8928
    %v8930 = vcombine.low %v8922, %v8929
    %v8931 = vcombine.low %v8867, %v8871
    %v8932 = vcombine.low %v8875, %v8879
    %v8934 = vunpack.c.l.s4 1983009808
    %v8935 = vunpack.c.0.s8 %v8934
    %v8936 = vlaneseq
    %v8937 = vshrl.u32 %v8936, 7
    %v8938 = vsub.s32 %v8935, %v8937
    %v8939 = vrot.slane %v8931, %v8938
    %v8941 = vunpack.c.l.s4 1983009808
    %v8942 = vunpack.c.0.s8 %v8941
    %v8943 = vlaneseq
    %v8944 = vshrl.u32 %v8943, 7
    %v8945 = vsub.s32 %v8942, %v8944
    %v8946 = vrot.slane %v8932, %v8945
    %v8947 = vcombine.low %v8939, %v8946
    %8948 = vrot.lane.b32.xlu0 %v8896, 17
    %v8949 = vpop.permute.xlu0 %8948
    %8950 = vrot.lane.b32.xlu0 %v8913, 17
    %v8951 = vpop.permute.xlu0 %8950
    %8952 = vrot.lane.b32.xlu0 %v8930, 17
    %v8953 = vpop.permute.xlu0 %8952
    %8954 = vrot.lane.b32.xlu0 %v8947, 17
    %v8955 = vpop.permute.xlu0 %8954
    %v8956 = vrot.slane %v8949, 6
    %v8957 = vrot.slane %v8951, 6
    %v8958 = vrot.slane %v8953, 6
    %v8959 = vrot.slane %v8955, 6
    %v8960 = vsel %vm8731, %v8956, %v8949
    %v8961 = vsel %vm956, %v8956, %v8957
    %v8962 = vsel %vm8731, %v8961, %v8951
    %v8963 = vsel %vm956, %v8957, %v8958
    %v8964 = vsel %vm8731, %v8963, %v8953
    %v8965 = vsel %vm956, %v8958, %v8959
    %v8966 = vsel %vm8731, %v8965, %v8955
    %v8972 = vmul.f32 %v5842, %v8960
    %v8973 = vmul.f32 %v5843, %v8962
    %v8974 = vmul.f32 %v5844, %v8964
    %v8975 = vmul.f32 %v5845, %v8966
    %v8976 = vmul.f32 %v5846, %v8959
    %8978 = vrot.lane.b32.xlu0 %v8972, 94
    %v8979 = vpop.permute.xlu0 %8978
    %v8980 = vrot.slane %v8979, 6
    %v8981 = vsel %vm8753, %v8980, %v8979
    %v8983 = vadd.f32 %v8122, %v8981
    %8985 = vrot.lane.b32.xlu0 %v8973, 94
    %v8986 = vpop.permute.xlu0 %8985
    %v8987 = vrot.slane %v8979, 2
    %v8988 = vrot.slane %v8979, 4
    %v8989 = vrot.slane %v8986, 4
    %v8990 = vsel %vm1645, %v8988, %v8989
    %v8991 = vsel %vm8753, %v8987, %v8990
    %v8993 = vadd.f32 %v8983, %v8991
    %v8994 = vrot.slane %v8986, 6
    %v8995 = vsel %vm8753, %v8994, %v8986
    %v8997 = vadd.f32 %v8993, %v8995
    %8999 = vrot.lane.b32.xlu0 %v8974, 94
    %v9000 = vpop.permute.xlu0 %8999
    %v9001 = vrot.slane %v8986, 2
    %v9002 = vrot.slane %v9000, 4
    %v9003 = vsel %vm1645, %v8989, %v9002
    %v9004 = vsel %vm8753, %v9001, %v9003
    %v9006 = vadd.f32 %v8997, %v9004
    %v9007 = vrot.slane %v9000, 6
    %v9008 = vsel %vm8753, %v9007, %v9000
    %v9010 = vadd.f32 %v9006, %v9008
    %9012 = vrot.lane.b32.xlu0 %v8975, 94
    %v9013 = vpop.permute.xlu0 %9012
    %v9014 = vrot.slane %v9000, 2
    %v9015 = vrot.slane %v9013, 4
    %v9016 = vsel %vm1645, %v9002, %v9015
    %v9017 = vsel %vm8753, %v9014, %v9016
    %v9019 = vadd.f32 %v9010, %v9017
    %v9020 = vrot.slane %v9013, 6
    %v9021 = vsel %vm8753, %v9020, %v9013
    %v9023 = vadd.f32 %v9019, %v9021
    %9025 = vrot.lane.b32.xlu0 %v8976, 94
    %v9026 = vpop.permute.xlu0 %9025
    %v9027 = vrot.slane %v9013, 2
    %v9028 = vrot.slane %v9026, 4
    %v9029 = vsel %vm1645, %v9015, %v9028
    %v9030 = vsel %vm8753, %v9027, %v9029
    %v9032 = vadd.f32 %v9023, %v9030
    %s9033 = scalar_lea.vmem [#allocation8], 514
    %v9034 = vld [vmem:[%s9033] ss:$8 sm:$0xf]
    %v9035 = vld [vmem:[%s9033] ss:$8 sm:$0xf0]
    %v9036 = vor.u32 %v9034, %v9035
    %s9037 = scalar_lea.vmem [#allocation8], 578
    %v9038 = vld [vmem:[%s9037] ss:$8 sm:$0xf]
    %v9039 = vld [vmem:[%s9037] ss:$8 sm:$0xf0]
    %v9040 = vor.u32 %v9038, %v9039
    %v9043 = vlaneseq
    %v9044 = vshrl.u32 %v9043, 7
    %v9045 = vsub.s32 0, %v9044
    %v9046 = vrot.slane %v9036, %v9045
    %v9047 = vlaneseq
    %v9048 = vshrl.u32 %v9047, 7
    %v9049 = vsub.s32 1, %v9048
    %v9050 = vrot.slane %v9036, %v9049
    %v9051 = vlaneseq
    %v9052 = vshrl.u32 %v9051, 7
    %v9053 = vsub.s32 2, %v9052
    %v9054 = vrot.slane %v9036, %v9053
    %v9055 = vlaneseq
    %v9056 = vshrl.u32 %v9055, 7
    %v9057 = vsub.s32 3, %v9056
    %v9058 = vrot.slane %v9036, %v9057
    %v9059 = vlaneseq
    %v9060 = vshrl.u32 %v9059, 7
    %v9061 = vsub.s32 4, %v9060
    %v9062 = vrot.slane %v9036, %v9061
    %v9063 = vlaneseq
    %v9064 = vshrl.u32 %v9063, 7
    %v9065 = vsub.s32 5, %v9064
    %v9066 = vrot.slane %v9036, %v9065
    %v9067 = vlaneseq
    %v9068 = vshrl.u32 %v9067, 7
    %v9069 = vsub.s32 6, %v9068
    %v9070 = vrot.slane %v9036, %v9069
    %v9071 = vlaneseq
    %v9072 = vshrl.u32 %v9071, 7
    %v9073 = vsub.s32 7, %v9072
    %v9074 = vrot.slane %v9036, %v9073
    %v9075 = vlaneseq
    %v9076 = vshrl.u32 %v9075, 7
    %v9077 = vsub.s32 0, %v9076
    %v9078 = vrot.slane %v9040, %v9077
    %v9079 = vlaneseq
    %v9080 = vshrl.u32 %v9079, 7
    %v9081 = vsub.s32 1, %v9080
    %v9082 = vrot.slane %v9040, %v9081
    %v9083 = vlaneseq
    %v9084 = vshrl.u32 %v9083, 7
    %v9085 = vsub.s32 2, %v9084
    %v9086 = vrot.slane %v9040, %v9085
    %v9087 = vlaneseq
    %v9088 = vshrl.u32 %v9087, 7
    %v9089 = vsub.s32 3, %v9088
    %v9090 = vrot.slane %v9040, %v9089
    %v9091 = vlaneseq
    %v9092 = vshrl.u32 %v9091, 7
    %v9093 = vsub.s32 4, %v9092
    %v9094 = vrot.slane %v9040, %v9093
    %v9095 = vlaneseq
    %v9096 = vshrl.u32 %v9095, 7
    %v9097 = vsub.s32 5, %v9096
    %v9098 = vrot.slane %v9040, %v9097
    %v9099 = vlaneseq
    %v9100 = vshrl.u32 %v9099, 7
    %v9101 = vsub.s32 6, %v9100
    %v9102 = vrot.slane %v9040, %v9101
    %v9103 = vlaneseq
    %v9104 = vshrl.u32 %v9103, 7
    %v9105 = vsub.s32 7, %v9104
    %v9106 = vrot.slane %v9040, %v9105
    %v9107 = vcombine.low %v9046, %v9050
    %v9108 = vcombine.low %v9054, %v9058
    %v9110 = vunpack.c.l.s4 1983009808
    %v9111 = vunpack.c.0.s8 %v9110
    %v9112 = vlaneseq
    %v9113 = vshrl.u32 %v9112, 7
    %v9114 = vsub.s32 %v9111, %v9113
    %v9115 = vrot.slane %v9107, %v9114
    %v9117 = vunpack.c.l.s4 1983009808
    %v9118 = vunpack.c.0.s8 %v9117
    %v9119 = vlaneseq
    %v9120 = vshrl.u32 %v9119, 7
    %v9121 = vsub.s32 %v9118, %v9120
    %v9122 = vrot.slane %v9108, %v9121
    %v9123 = vcombine.low %v9115, %v9122
    %v9124 = vcombine.low %v9062, %v9066
    %v9125 = vcombine.low %v9070, %v9074
    %v9127 = vunpack.c.l.s4 1983009808
    %v9128 = vunpack.c.0.s8 %v9127
    %v9129 = vlaneseq
    %v9130 = vshrl.u32 %v9129, 7
    %v9131 = vsub.s32 %v9128, %v9130
    %v9132 = vrot.slane %v9124, %v9131
    %v9134 = vunpack.c.l.s4 1983009808
    %v9135 = vunpack.c.0.s8 %v9134
    %v9136 = vlaneseq
    %v9137 = vshrl.u32 %v9136, 7
    %v9138 = vsub.s32 %v9135, %v9137
    %v9139 = vrot.slane %v9125, %v9138
    %v9140 = vcombine.low %v9132, %v9139
    %v9141 = vcombine.low %v9078, %v9082
    %v9142 = vcombine.low %v9086, %v9090
    %v9144 = vunpack.c.l.s4 1983009808
    %v9145 = vunpack.c.0.s8 %v9144
    %v9146 = vlaneseq
    %v9147 = vshrl.u32 %v9146, 7
    %v9148 = vsub.s32 %v9145, %v9147
    %v9149 = vrot.slane %v9141, %v9148
    %v9151 = vunpack.c.l.s4 1983009808
    %v9152 = vunpack.c.0.s8 %v9151
    %v9153 = vlaneseq
    %v9154 = vshrl.u32 %v9153, 7
    %v9155 = vsub.s32 %v9152, %v9154
    %v9156 = vrot.slane %v9142, %v9155
    %v9157 = vcombine.low %v9149, %v9156
    %v9158 = vcombine.low %v9094, %v9098
    %v9159 = vcombine.low %v9102, %v9106
    %v9161 = vunpack.c.l.s4 1983009808
    %v9162 = vunpack.c.0.s8 %v9161
    %v9163 = vlaneseq
    %v9164 = vshrl.u32 %v9163, 7
    %v9165 = vsub.s32 %v9162, %v9164
    %v9166 = vrot.slane %v9158, %v9165
    %v9168 = vunpack.c.l.s4 1983009808
    %v9169 = vunpack.c.0.s8 %v9168
    %v9170 = vlaneseq
    %v9171 = vshrl.u32 %v9170, 7
    %v9172 = vsub.s32 %v9169, %v9171
    %v9173 = vrot.slane %v9159, %v9172
    %v9174 = vcombine.low %v9166, %v9173
    %9175 = vrot.lane.b32.xlu0 %v9123, 17
    %v9176 = vpop.permute.xlu0 %9175
    %9177 = vrot.lane.b32.xlu0 %v9140, 17
    %v9178 = vpop.permute.xlu0 %9177
    %9179 = vrot.lane.b32.xlu0 %v9157, 17
    %v9180 = vpop.permute.xlu0 %9179
    %9181 = vrot.lane.b32.xlu0 %v9174, 17
    %v9182 = vpop.permute.xlu0 %9181
    %v9183 = vrot.slane %v9176, 6
    %v9184 = vrot.slane %v9178, 6
    %v9185 = vrot.slane %v9180, 6
    %v9186 = vrot.slane %v9182, 6
    %v9187 = vsel %vm8731, %v9183, %v9176
    %v9188 = vsel %vm956, %v9183, %v9184
    %v9189 = vsel %vm8731, %v9188, %v9178
    %v9190 = vsel %vm956, %v9184, %v9185
    %v9191 = vsel %vm8731, %v9190, %v9180
    %v9192 = vsel %vm956, %v9185, %v9186
    %v9193 = vsel %vm8731, %v9192, %v9182
    %v9199 = vmul.f32 %v5842, %v9187
    %v9200 = vmul.f32 %v5843, %v9189
    %v9201 = vmul.f32 %v5844, %v9191
    %v9202 = vmul.f32 %v5845, %v9193
    %v9203 = vmul.f32 %v5846, %v9186
    %9205 = vrot.lane.b32.xlu0 %v9199, 94
    %v9206 = vpop.permute.xlu0 %9205
    %v9207 = vrot.slane %v9206, 6
    %v9208 = vsel %vm8753, %v9207, %v9206
    %v9210 = vadd.f32 %v8349, %v9208
    %9212 = vrot.lane.b32.xlu0 %v9200, 94
    %v9213 = vpop.permute.xlu0 %9212
    %v9214 = vrot.slane %v9206, 2
    %v9215 = vrot.slane %v9206, 4
    %v9216 = vrot.slane %v9213, 4
    %v9217 = vsel %vm1645, %v9215, %v9216
    %v9218 = vsel %vm8753, %v9214, %v9217
    %v9220 = vadd.f32 %v9210, %v9218
    %v9221 = vrot.slane %v9213, 6
    %v9222 = vsel %vm8753, %v9221, %v9213
    %v9224 = vadd.f32 %v9220, %v9222
    %9226 = vrot.lane.b32.xlu0 %v9201, 94
    %v9227 = vpop.permute.xlu0 %9226
    %v9228 = vrot.slane %v9213, 2
    %v9229 = vrot.slane %v9227, 4
    %v9230 = vsel %vm1645, %v9216, %v9229
    %v9231 = vsel %vm8753, %v9228, %v9230
    %v9233 = vadd.f32 %v9224, %v9231
    %v9234 = vrot.slane %v9227, 6
    %v9235 = vsel %vm8753, %v9234, %v9227
    %v9237 = vadd.f32 %v9233, %v9235
    %9239 = vrot.lane.b32.xlu0 %v9202, 94
    %v9240 = vpop.permute.xlu0 %9239
    %v9241 = vrot.slane %v9227, 2
    %v9242 = vrot.slane %v9240, 4
    %v9243 = vsel %vm1645, %v9229, %v9242
    %v9244 = vsel %vm8753, %v9241, %v9243
    %v9246 = vadd.f32 %v9237, %v9244
    %v9247 = vrot.slane %v9240, 6
    %v9248 = vsel %vm8753, %v9247, %v9240
    %v9250 = vadd.f32 %v9246, %v9248
    %9252 = vrot.lane.b32.xlu0 %v9203, 94
    %v9253 = vpop.permute.xlu0 %9252
    %v9254 = vrot.slane %v9240, 2
    %v9255 = vrot.slane %v9253, 4
    %v9256 = vsel %vm1645, %v9242, %v9255
    %v9257 = vsel %vm8753, %v9254, %v9256
    %v9259 = vadd.f32 %v9250, %v9257
    %s9260 = scalar_lea.vmem [#allocation8], 515
    %v9261 = vld [vmem:[%s9260] ss:$8 sm:$0xf]
    %v9262 = vld [vmem:[%s9260] ss:$8 sm:$0xf0]
    %v9263 = vor.u32 %v9261, %v9262
    %s9264 = scalar_lea.vmem [#allocation8], 579
    %v9265 = vld [vmem:[%s9264] ss:$8 sm:$0xf]
    %v9266 = vld [vmem:[%s9264] ss:$8 sm:$0xf0]
    %v9267 = vor.u32 %v9265, %v9266
    %v9270 = vlaneseq
    %v9271 = vshrl.u32 %v9270, 7
    %v9272 = vsub.s32 0, %v9271
    %v9273 = vrot.slane %v9263, %v9272
    %v9274 = vlaneseq
    %v9275 = vshrl.u32 %v9274, 7
    %v9276 = vsub.s32 1, %v9275
    %v9277 = vrot.slane %v9263, %v9276
    %v9278 = vlaneseq
    %v9279 = vshrl.u32 %v9278, 7
    %v9280 = vsub.s32 2, %v9279
    %v9281 = vrot.slane %v9263, %v9280
    %v9282 = vlaneseq
    %v9283 = vshrl.u32 %v9282, 7
    %v9284 = vsub.s32 3, %v9283
    %v9285 = vrot.slane %v9263, %v9284
    %v9286 = vlaneseq
    %v9287 = vshrl.u32 %v9286, 7
    %v9288 = vsub.s32 4, %v9287
    %v9289 = vrot.slane %v9263, %v9288
    %v9290 = vlaneseq
    %v9291 = vshrl.u32 %v9290, 7
    %v9292 = vsub.s32 5, %v9291
    %v9293 = vrot.slane %v9263, %v9292
    %v9294 = vlaneseq
    %v9295 = vshrl.u32 %v9294, 7
    %v9296 = vsub.s32 6, %v9295
    %v9297 = vrot.slane %v9263, %v9296
    %v9298 = vlaneseq
    %v9299 = vshrl.u32 %v9298, 7
    %v9300 = vsub.s32 7, %v9299
    %v9301 = vrot.slane %v9263, %v9300
    %v9302 = vlaneseq
    %v9303 = vshrl.u32 %v9302, 7
    %v9304 = vsub.s32 0, %v9303
    %v9305 = vrot.slane %v9267, %v9304
    %v9306 = vlaneseq
    %v9307 = vshrl.u32 %v9306, 7
    %v9308 = vsub.s32 1, %v9307
    %v9309 = vrot.slane %v9267, %v9308
    %v9310 = vlaneseq
    %v9311 = vshrl.u32 %v9310, 7
    %v9312 = vsub.s32 2, %v9311
    %v9313 = vrot.slane %v9267, %v9312
    %v9314 = vlaneseq
    %v9315 = vshrl.u32 %v9314, 7
    %v9316 = vsub.s32 3, %v9315
    %v9317 = vrot.slane %v9267, %v9316
    %v9318 = vlaneseq
    %v9319 = vshrl.u32 %v9318, 7
    %v9320 = vsub.s32 4, %v9319
    %v9321 = vrot.slane %v9267, %v9320
    %v9322 = vlaneseq
    %v9323 = vshrl.u32 %v9322, 7
    %v9324 = vsub.s32 5, %v9323
    %v9325 = vrot.slane %v9267, %v9324
    %v9326 = vlaneseq
    %v9327 = vshrl.u32 %v9326, 7
    %v9328 = vsub.s32 6, %v9327
    %v9329 = vrot.slane %v9267, %v9328
    %v9330 = vlaneseq
    %v9331 = vshrl.u32 %v9330, 7
    %v9332 = vsub.s32 7, %v9331
    %v9333 = vrot.slane %v9267, %v9332
    %v9334 = vcombine.low %v9273, %v9277
    %v9335 = vcombine.low %v9281, %v9285
    %v9337 = vunpack.c.l.s4 1983009808
    %v9338 = vunpack.c.0.s8 %v9337
    %v9339 = vlaneseq
    %v9340 = vshrl.u32 %v9339, 7
    %v9341 = vsub.s32 %v9338, %v9340
    %v9342 = vrot.slane %v9334, %v9341
    %v9344 = vunpack.c.l.s4 1983009808
    %v9345 = vunpack.c.0.s8 %v9344
    %v9346 = vlaneseq
    %v9347 = vshrl.u32 %v9346, 7
    %v9348 = vsub.s32 %v9345, %v9347
    %v9349 = vrot.slane %v9335, %v9348
    %v9350 = vcombine.low %v9342, %v9349
    %v9351 = vcombine.low %v9289, %v9293
    %v9352 = vcombine.low %v9297, %v9301
    %v9354 = vunpack.c.l.s4 1983009808
    %v9355 = vunpack.c.0.s8 %v9354
    %v9356 = vlaneseq
    %v9357 = vshrl.u32 %v9356, 7
    %v9358 = vsub.s32 %v9355, %v9357
    %v9359 = vrot.slane %v9351, %v9358
    %v9361 = vunpack.c.l.s4 1983009808
    %v9362 = vunpack.c.0.s8 %v9361
    %v9363 = vlaneseq
    %v9364 = vshrl.u32 %v9363, 7
    %v9365 = vsub.s32 %v9362, %v9364
    %v9366 = vrot.slane %v9352, %v9365
    %v9367 = vcombine.low %v9359, %v9366
    %v9368 = vcombine.low %v9305, %v9309
    %v9369 = vcombine.low %v9313, %v9317
    %v9371 = vunpack.c.l.s4 1983009808
    %v9372 = vunpack.c.0.s8 %v9371
    %v9373 = vlaneseq
    %v9374 = vshrl.u32 %v9373, 7
    %v9375 = vsub.s32 %v9372, %v9374
    %v9376 = vrot.slane %v9368, %v9375
    %v9378 = vunpack.c.l.s4 1983009808
    %v9379 = vunpack.c.0.s8 %v9378
    %v9380 = vlaneseq
    %v9381 = vshrl.u32 %v9380, 7
    %v9382 = vsub.s32 %v9379, %v9381
    %v9383 = vrot.slane %v9369, %v9382
    %v9384 = vcombine.low %v9376, %v9383
    %v9385 = vcombine.low %v9321, %v9325
    %v9386 = vcombine.low %v9329, %v9333
    %v9388 = vunpack.c.l.s4 1983009808
    %v9389 = vunpack.c.0.s8 %v9388
    %v9390 = vlaneseq
    %v9391 = vshrl.u32 %v9390, 7
    %v9392 = vsub.s32 %v9389, %v9391
    %v9393 = vrot.slane %v9385, %v9392
    %v9395 = vunpack.c.l.s4 1983009808
    %v9396 = vunpack.c.0.s8 %v9395
    %v9397 = vlaneseq
    %v9398 = vshrl.u32 %v9397, 7
    %v9399 = vsub.s32 %v9396, %v9398
    %v9400 = vrot.slane %v9386, %v9399
    %v9401 = vcombine.low %v9393, %v9400
    %9402 = vrot.lane.b32.xlu0 %v9350, 17
    %v9403 = vpop.permute.xlu0 %9402
    %9404 = vrot.lane.b32.xlu0 %v9367, 17
    %v9405 = vpop.permute.xlu0 %9404
    %9406 = vrot.lane.b32.xlu0 %v9384, 17
    %v9407 = vpop.permute.xlu0 %9406
    %9408 = vrot.lane.b32.xlu0 %v9401, 17
    %v9409 = vpop.permute.xlu0 %9408
    %v9410 = vrot.slane %v9403, 6
    %v9411 = vrot.slane %v9405, 6
    %v9412 = vrot.slane %v9407, 6
    %v9413 = vrot.slane %v9409, 6
    %v9414 = vsel %vm8731, %v9410, %v9403
    %v9415 = vsel %vm956, %v9410, %v9411
    %v9416 = vsel %vm8731, %v9415, %v9405
    %v9417 = vsel %vm956, %v9411, %v9412
    %v9418 = vsel %vm8731, %v9417, %v9407
    %v9419 = vsel %vm956, %v9412, %v9413
    %v9420 = vsel %vm8731, %v9419, %v9409
    %v9426 = vmul.f32 %v5842, %v9414
    %v9427 = vmul.f32 %v5843, %v9416
    %v9428 = vmul.f32 %v5844, %v9418
    %v9429 = vmul.f32 %v5845, %v9420
    %v9430 = vmul.f32 %v5846, %v9413
    %9432 = vrot.lane.b32.xlu0 %v9426, 94
    %v9433 = vpop.permute.xlu0 %9432
    %v9434 = vrot.slane %v9433, 6
    %v9435 = vsel %vm8753, %v9434, %v9433
    %v9437 = vadd.f32 %v8576, %v9435
    %9439 = vrot.lane.b32.xlu0 %v9427, 94
    %v9440 = vpop.permute.xlu0 %9439
    %v9441 = vrot.slane %v9433, 2
    %v9442 = vrot.slane %v9433, 4
    %v9443 = vrot.slane %v9440, 4
    %v9444 = vsel %vm1645, %v9442, %v9443
    %v9445 = vsel %vm8753, %v9441, %v9444
    %v9447 = vadd.f32 %v9437, %v9445
    %v9448 = vrot.slane %v9440, 6
    %v9449 = vsel %vm8753, %v9448, %v9440
    %v9451 = vadd.f32 %v9447, %v9449
    %9453 = vrot.lane.b32.xlu0 %v9428, 94
    %v9454 = vpop.permute.xlu0 %9453
    %v9455 = vrot.slane %v9440, 2
    %v9456 = vrot.slane %v9454, 4
    %v9457 = vsel %vm1645, %v9443, %v9456
    %v9458 = vsel %vm8753, %v9455, %v9457
    %v9460 = vadd.f32 %v9451, %v9458
    %v9461 = vrot.slane %v9454, 6
    %v9462 = vsel %vm8753, %v9461, %v9454
    %v9464 = vadd.f32 %v9460, %v9462
    %9466 = vrot.lane.b32.xlu0 %v9429, 94
    %v9467 = vpop.permute.xlu0 %9466
    %v9468 = vrot.slane %v9454, 2
    %v9469 = vrot.slane %v9467, 4
    %v9470 = vsel %vm1645, %v9456, %v9469
    %v9471 = vsel %vm8753, %v9468, %v9470
    %v9473 = vadd.f32 %v9464, %v9471
    %v9474 = vrot.slane %v9467, 6
    %v9475 = vsel %vm8753, %v9474, %v9467
    %v9477 = vadd.f32 %v9473, %v9475
    %9479 = vrot.lane.b32.xlu0 %v9430, 94
    %v9480 = vpop.permute.xlu0 %9479
    %v9481 = vrot.slane %v9467, 2
    %v9482 = vrot.slane %v9480, 4
    %v9483 = vsel %vm1645, %v9469, %v9482
    %v9484 = vsel %vm8753, %v9481, %v9483
    %v9486 = vadd.f32 %v9477, %v9484
    %9487 = vst [vmem:[#allocation3] sm:$0xff] 0.0
    %9488 = vst [vmem:[#allocation3 + $0x8] sm:$0xff] 0.0
    %9489 = vst [vmem:[#allocation3 + $0x10] sm:$0xf] 0.0
    %v9491 = vcombine.high %v8805, %v8805
    %v9493 = vunpack.c.l.s4 1983009808
    %v9494 = vunpack.c.0.s8 %v9493
    %v9495 = vlaneseq
    %v9496 = vshrl.u32 %v9495, 7
    %v9497 = vsub.s32 %v9494, %v9496
    %v9498 = vrot.slane %v8805, %v9497
    %v9500 = vunpack.c.l.s4 1983009808
    %v9501 = vunpack.c.0.s8 %v9500
    %v9502 = vlaneseq
    %v9503 = vshrl.u32 %v9502, 7
    %v9504 = vsub.s32 %v9501, %v9503
    %v9505 = vrot.slane %v9491, %v9504
    %v9506 = vcombine.high %v9498, %v9498
    %9507 = vrot.lane.b32.xlu0 %v9498, 17
    %v9508 = vpop.permute.xlu0 %9507
    %9509 = vrot.lane.b32.xlu0 %v9506, 17
    %v9510 = vpop.permute.xlu0 %9509
    %9511 = vrot.lane.b32.xlu0 %v9505, 17
    %v9512 = vpop.permute.xlu0 %9511
    %v9513 = vsel %vm8731, %v9508, %v9510
    %v9514 = vsel %vm8731, %v9510, %v9512
    %v9517 = vsel %vm956, %v9513, 0.0
    %v9518 = vsel %vm956, %v9514, 0.0
    %v9519 = vadd.f32 %v9517, %v9518
    %9520 = vadd.xlane.f32.xlu0 %v9519
    %v9521 = vpop.xlane.xlu0 %9520
    %v9522 = vrot.slane %v9521, 4
    %v9523 = vadd.f32 %v9521, %v9522
    %v9524 = vrot.slane %v9523, 2
    %v9525 = vadd.f32 %v9523, %v9524
    %v9526 = vrot.slane %v9525, 1
    %v9527 = vadd.f32 %v9525, %v9526
    %s9528 = vtos %v9527
    %s9529 = smul.f32 %s9528, 0.001953125
    %v9530 = vmul.f32 %v8805, %v8805
    %v9532 = vcombine.high %v9530, %v9530
    %v9534 = vunpack.c.l.s4 1983009808
    %v9535 = vunpack.c.0.s8 %v9534
    %v9536 = vlaneseq
    %v9537 = vshrl.u32 %v9536, 7
    %v9538 = vsub.s32 %v9535, %v9537
    %v9539 = vrot.slane %v9530, %v9538
    %v9541 = vunpack.c.l.s4 1983009808
    %v9542 = vunpack.c.0.s8 %v9541
    %v9543 = vlaneseq
    %v9544 = vshrl.u32 %v9543, 7
    %v9545 = vsub.s32 %v9542, %v9544
    %v9546 = vrot.slane %v9532, %v9545
    %v9547 = vcombine.high %v9539, %v9539
    %9548 = vrot.lane.b32.xlu0 %v9539, 17
    %v9549 = vpop.permute.xlu0 %9548
    %9550 = vrot.lane.b32.xlu0 %v9547, 17
    %v9551 = vpop.permute.xlu0 %9550
    %9552 = vrot.lane.b32.xlu0 %v9546, 17
    %v9553 = vpop.permute.xlu0 %9552
    %v9554 = vsel %vm8731, %v9549, %v9551
    %v9555 = vsel %vm8731, %v9551, %v9553
    %v9558 = vsel %vm956, %v9554, 0.0
    %v9559 = vsel %vm956, %v9555, 0.0
    %v9560 = vadd.f32 %v9558, %v9559
    %9561 = vadd.xlane.f32.xlu0 %v9560
    %v9562 = vpop.xlane.xlu0 %9561
    %v9563 = vrot.slane %v9562, 4
    %v9564 = vadd.f32 %v9562, %v9563
    %v9565 = vrot.slane %v9564, 2
    %v9566 = vadd.f32 %v9564, %v9565
    %v9567 = vrot.slane %v9566, 1
    %v9568 = vadd.f32 %v9566, %v9567
    %s9569 = vtos %v9568
    %s9570 = smul.f32 %s9569, 0.001953125
    %s9571 = smul.f32 %s9529, %s9529
    %s9572 = ssub.f32 %s9570, %s9571
    %s9573 = sld [smem:[#allocation13]]
    %s9574 = sadd.f32 %s9572, 1e-05
    %v9575 = vstv %s9574
    %v9576 = vrsqrt.pop %v9575
    %s9577 = vtos %v9576
    %s9578 = smul.f32 %s9573, %s9577
    %v9579 = vstv %s9529
    %v9580 = vsub.f32 %v8805, %v9579
    %v9581 = vstv %s9578
    %v9582 = vmul.f32 %v9580, %v9581
    %s9583 = sld [smem:[#allocation15]]
    %v9584 = vstv %s9583
    %v9585 = vadd.f32 %v9582, %v9584
    %v9586 = vmax.f32 %v9585, 0.0
    %9588 = vrot.lane.b32.xlu0 %v9586, 17
    %v9589 = vpop.permute.xlu0 %9588
    %v9590 = vrot.slane %v9589, 2
    %v9591 = vsel %vm8731, %v9589, %v9590
    %9593 = vst [vmem:[#allocation3 + $0x2] sm:$0xf] %v9591
    %v9595 = vcombine.high %v9032, %v9032
    %v9597 = vunpack.c.l.s4 1983009808
    %v9598 = vunpack.c.0.s8 %v9597
    %v9599 = vlaneseq
    %v9600 = vshrl.u32 %v9599, 7
    %v9601 = vsub.s32 %v9598, %v9600
    %v9602 = vrot.slane %v9032, %v9601
    %v9604 = vunpack.c.l.s4 1983009808
    %v9605 = vunpack.c.0.s8 %v9604
    %v9606 = vlaneseq
    %v9607 = vshrl.u32 %v9606, 7
    %v9608 = vsub.s32 %v9605, %v9607
    %v9609 = vrot.slane %v9595, %v9608
    %v9610 = vcombine.high %v9602, %v9602
    %9611 = vrot.lane.b32.xlu0 %v9602, 17
    %v9612 = vpop.permute.xlu0 %9611
    %9613 = vrot.lane.b32.xlu0 %v9610, 17
    %v9614 = vpop.permute.xlu0 %9613
    %9615 = vrot.lane.b32.xlu0 %v9609, 17
    %v9616 = vpop.permute.xlu0 %9615
    %v9617 = vsel %vm8731, %v9612, %v9614
    %v9618 = vsel %vm8731, %v9614, %v9616
    %v9621 = vsel %vm956, %v9617, 0.0
    %v9622 = vsel %vm956, %v9618, 0.0
    %v9623 = vadd.f32 %v9621, %v9622
    %9624 = vadd.xlane.f32.xlu0 %v9623
    %v9625 = vpop.xlane.xlu0 %9624
    %v9626 = vrot.slane %v9625, 4
    %v9627 = vadd.f32 %v9625, %v9626
    %v9628 = vrot.slane %v9627, 2
    %v9629 = vadd.f32 %v9627, %v9628
    %v9630 = vrot.slane %v9629, 1
    %v9631 = vadd.f32 %v9629, %v9630
    %s9632 = vtos %v9631
    %s9633 = smul.f32 %s9632, 0.001953125
    %v9634 = vmul.f32 %v9032, %v9032
    %v9636 = vcombine.high %v9634, %v9634
    %v9638 = vunpack.c.l.s4 1983009808
    %v9639 = vunpack.c.0.s8 %v9638
    %v9640 = vlaneseq
    %v9641 = vshrl.u32 %v9640, 7
    %v9642 = vsub.s32 %v9639, %v9641
    %v9643 = vrot.slane %v9634, %v9642
    %v9645 = vunpack.c.l.s4 1983009808
    %v9646 = vunpack.c.0.s8 %v9645
    %v9647 = vlaneseq
    %v9648 = vshrl.u32 %v9647, 7
    %v9649 = vsub.s32 %v9646, %v9648
    %v9650 = vrot.slane %v9636, %v9649
    %v9651 = vcombine.high %v9643, %v9643
    %9652 = vrot.lane.b32.xlu0 %v9643, 17
    %v9653 = vpop.permute.xlu0 %9652
    %9654 = vrot.lane.b32.xlu0 %v9651, 17
    %v9655 = vpop.permute.xlu0 %9654
    %9656 = vrot.lane.b32.xlu0 %v9650, 17
    %v9657 = vpop.permute.xlu0 %9656
    %v9658 = vsel %vm8731, %v9653, %v9655
    %v9659 = vsel %vm8731, %v9655, %v9657
    %v9662 = vsel %vm956, %v9658, 0.0
    %v9663 = vsel %vm956, %v9659, 0.0
    %v9664 = vadd.f32 %v9662, %v9663
    %9665 = vadd.xlane.f32.xlu0 %v9664
    %v9666 = vpop.xlane.xlu0 %9665
    %v9667 = vrot.slane %v9666, 4
    %v9668 = vadd.f32 %v9666, %v9667
    %v9669 = vrot.slane %v9668, 2
    %v9670 = vadd.f32 %v9668, %v9669
    %v9671 = vrot.slane %v9670, 1
    %v9672 = vadd.f32 %v9670, %v9671
    %s9673 = vtos %v9672
    %s9674 = smul.f32 %s9673, 0.001953125
    %s9675 = smul.f32 %s9633, %s9633
    %s9676 = ssub.f32 %s9674, %s9675
    %s9677 = sld [smem:[#allocation13 + $0x1]]
    %s9678 = sadd.f32 %s9676, 1e-05
    %v9679 = vstv %s9678
    %v9680 = vrsqrt.pop %v9679
    %s9681 = vtos %v9680
    %s9682 = smul.f32 %s9677, %s9681
    %v9683 = vstv %s9633
    %v9684 = vsub.f32 %v9032, %v9683
    %v9685 = vstv %s9682
    %v9686 = vmul.f32 %v9684, %v9685
    %s9687 = sld [smem:[#allocation15 + $0x1]]
    %v9688 = vstv %s9687
    %v9689 = vadd.f32 %v9686, %v9688
    %v9690 = vmax.f32 %v9689, 0.0
    %9692 = vrot.lane.b32.xlu0 %v9690, 17
    %v9693 = vpop.permute.xlu0 %9692
    %v9694 = vrot.slane %v9693, 2
    %v9695 = vsel %vm8731, %v9693, %v9694
    %9697 = vst [vmem:[#allocation3 + $0x6] sm:$0xf] %v9695
    %v9699 = vcombine.high %v9259, %v9259
    %v9701 = vunpack.c.l.s4 1983009808
    %v9702 = vunpack.c.0.s8 %v9701
    %v9703 = vlaneseq
    %v9704 = vshrl.u32 %v9703, 7
    %v9705 = vsub.s32 %v9702, %v9704
    %v9706 = vrot.slane %v9259, %v9705
    %v9708 = vunpack.c.l.s4 1983009808
    %v9709 = vunpack.c.0.s8 %v9708
    %v9710 = vlaneseq
    %v9711 = vshrl.u32 %v9710, 7
    %v9712 = vsub.s32 %v9709, %v9711
    %v9713 = vrot.slane %v9699, %v9712
    %v9714 = vcombine.high %v9706, %v9706
    %9715 = vrot.lane.b32.xlu0 %v9706, 17
    %v9716 = vpop.permute.xlu0 %9715
    %9717 = vrot.lane.b32.xlu0 %v9714, 17
    %v9718 = vpop.permute.xlu0 %9717
    %9719 = vrot.lane.b32.xlu0 %v9713, 17
    %v9720 = vpop.permute.xlu0 %9719
    %v9721 = vsel %vm8731, %v9716, %v9718
    %v9722 = vsel %vm8731, %v9718, %v9720
    %v9725 = vsel %vm956, %v9721, 0.0
    %v9726 = vsel %vm956, %v9722, 0.0
    %v9727 = vadd.f32 %v9725, %v9726
    %9728 = vadd.xlane.f32.xlu0 %v9727
    %v9729 = vpop.xlane.xlu0 %9728
    %v9730 = vrot.slane %v9729, 4
    %v9731 = vadd.f32 %v9729, %v9730
    %v9732 = vrot.slane %v9731, 2
    %v9733 = vadd.f32 %v9731, %v9732
    %v9734 = vrot.slane %v9733, 1
    %v9735 = vadd.f32 %v9733, %v9734
    %s9736 = vtos %v9735
    %s9737 = smul.f32 %s9736, 0.001953125
    %v9738 = vmul.f32 %v9259, %v9259
    %v9740 = vcombine.high %v9738, %v9738
    %v9742 = vunpack.c.l.s4 1983009808
    %v9743 = vunpack.c.0.s8 %v9742
    %v9744 = vlaneseq
    %v9745 = vshrl.u32 %v9744, 7
    %v9746 = vsub.s32 %v9743, %v9745
    %v9747 = vrot.slane %v9738, %v9746
    %v9749 = vunpack.c.l.s4 1983009808
    %v9750 = vunpack.c.0.s8 %v9749
    %v9751 = vlaneseq
    %v9752 = vshrl.u32 %v9751, 7
    %v9753 = vsub.s32 %v9750, %v9752
    %v9754 = vrot.slane %v9740, %v9753
    %v9755 = vcombine.high %v9747, %v9747
    %9756 = vrot.lane.b32.xlu0 %v9747, 17
    %v9757 = vpop.permute.xlu0 %9756
    %9758 = vrot.lane.b32.xlu0 %v9755, 17
    %v9759 = vpop.permute.xlu0 %9758
    %9760 = vrot.lane.b32.xlu0 %v9754, 17
    %v9761 = vpop.permute.xlu0 %9760
    %v9762 = vsel %vm8731, %v9757, %v9759
    %v9763 = vsel %vm8731, %v9759, %v9761
    %v9766 = vsel %vm956, %v9762, 0.0
    %v9767 = vsel %vm956, %v9763, 0.0
    %v9768 = vadd.f32 %v9766, %v9767
    %9769 = vadd.xlane.f32.xlu0 %v9768
    %v9770 = vpop.xlane.xlu0 %9769
    %v9771 = vrot.slane %v9770, 4
    %v9772 = vadd.f32 %v9770, %v9771
    %v9773 = vrot.slane %v9772, 2
    %v9774 = vadd.f32 %v9772, %v9773
    %v9775 = vrot.slane %v9774, 1
    %v9776 = vadd.f32 %v9774, %v9775
    %s9777 = vtos %v9776
    %s9778 = smul.f32 %s9777, 0.001953125
    %s9779 = smul.f32 %s9737, %s9737
    %s9780 = ssub.f32 %s9778, %s9779
    %s9781 = sld [smem:[#allocation13 + $0x2]]
    %s9782 = sadd.f32 %s9780, 1e-05
    %v9783 = vstv %s9782
    %v9784 = vrsqrt.pop %v9783
    %s9785 = vtos %v9784
    %s9786 = smul.f32 %s9781, %s9785
    %v9787 = vstv %s9737
    %v9788 = vsub.f32 %v9259, %v9787
    %v9789 = vstv %s9786
    %v9790 = vmul.f32 %v9788, %v9789
    %s9791 = sld [smem:[#allocation15 + $0x2]]
    %v9792 = vstv %s9791
    %v9793 = vadd.f32 %v9790, %v9792
    %v9794 = vmax.f32 %v9793, 0.0
    %9796 = vrot.lane.b32.xlu0 %v9794, 17
    %v9797 = vpop.permute.xlu0 %9796
    %v9798 = vrot.slane %v9797, 2
    %v9799 = vsel %vm8731, %v9797, %v9798
    %9801 = vst [vmem:[#allocation3 + $0xa] sm:$0xf] %v9799
    %v9803 = vcombine.high %v9486, %v9486
    %v9805 = vunpack.c.l.s4 1983009808
    %v9806 = vunpack.c.0.s8 %v9805
    %v9807 = vlaneseq
    %v9808 = vshrl.u32 %v9807, 7
    %v9809 = vsub.s32 %v9806, %v9808
    %v9810 = vrot.slane %v9486, %v9809
    %v9812 = vunpack.c.l.s4 1983009808
    %v9813 = vunpack.c.0.s8 %v9812
    %v9814 = vlaneseq
    %v9815 = vshrl.u32 %v9814, 7
    %v9816 = vsub.s32 %v9813, %v9815
    %v9817 = vrot.slane %v9803, %v9816
    %v9818 = vcombine.high %v9810, %v9810
    %9819 = vrot.lane.b32.xlu0 %v9810, 17
    %v9820 = vpop.permute.xlu0 %9819
    %9821 = vrot.lane.b32.xlu0 %v9818, 17
    %v9822 = vpop.permute.xlu0 %9821
    %9823 = vrot.lane.b32.xlu0 %v9817, 17
    %v9824 = vpop.permute.xlu0 %9823
    %v9825 = vsel %vm8731, %v9820, %v9822
    %v9826 = vsel %vm8731, %v9822, %v9824
    %v9829 = vsel %vm956, %v9825, 0.0
    %v9830 = vsel %vm956, %v9826, 0.0
    %v9831 = vadd.f32 %v9829, %v9830
    %9832 = vadd.xlane.f32.xlu0 %v9831
    %v9833 = vpop.xlane.xlu0 %9832
    %v9834 = vrot.slane %v9833, 4
    %v9835 = vadd.f32 %v9833, %v9834
    %v9836 = vrot.slane %v9835, 2
    %v9837 = vadd.f32 %v9835, %v9836
    %v9838 = vrot.slane %v9837, 1
    %v9839 = vadd.f32 %v9837, %v9838
    %s9840 = vtos %v9839
    %s9841 = smul.f32 %s9840, 0.001953125
    %v9842 = vmul.f32 %v9486, %v9486
    %v9844 = vcombine.high %v9842, %v9842
    %v9846 = vunpack.c.l.s4 1983009808
    %v9847 = vunpack.c.0.s8 %v9846
    %v9848 = vlaneseq
    %v9849 = vshrl.u32 %v9848, 7
    %v9850 = vsub.s32 %v9847, %v9849
    %v9851 = vrot.slane %v9842, %v9850
    %v9853 = vunpack.c.l.s4 1983009808
    %v9854 = vunpack.c.0.s8 %v9853
    %v9855 = vlaneseq
    %v9856 = vshrl.u32 %v9855, 7
    %v9857 = vsub.s32 %v9854, %v9856
    %v9858 = vrot.slane %v9844, %v9857
    %v9859 = vcombine.high %v9851, %v9851
    %9860 = vrot.lane.b32.xlu0 %v9851, 17
    %v9861 = vpop.permute.xlu0 %9860
    %9862 = vrot.lane.b32.xlu0 %v9859, 17
    %v9863 = vpop.permute.xlu0 %9862
    %9864 = vrot.lane.b32.xlu0 %v9858, 17
    %v9865 = vpop.permute.xlu0 %9864
    %v9866 = vsel %vm8731, %v9861, %v9863
    %v9867 = vsel %vm8731, %v9863, %v9865
    %v9870 = vsel %vm956, %v9866, 0.0
    %v9871 = vsel %vm956, %v9867, 0.0
    %v9872 = vadd.f32 %v9870, %v9871
    %9873 = vadd.xlane.f32.xlu0 %v9872
    %v9874 = vpop.xlane.xlu0 %9873
    %v9875 = vrot.slane %v9874, 4
    %v9876 = vadd.f32 %v9874, %v9875
    %v9877 = vrot.slane %v9876, 2
    %v9878 = vadd.f32 %v9876, %v9877
    %v9879 = vrot.slane %v9878, 1
    %v9880 = vadd.f32 %v9878, %v9879
    %s9881 = vtos %v9880
    %s9882 = smul.f32 %s9881, 0.001953125
    %s9883 = smul.f32 %s9841, %s9841
    %s9884 = ssub.f32 %s9882, %s9883
    %s9885 = sld [smem:[#allocation13 + $0x3]]
    %s9886 = sadd.f32 %s9884, 1e-05
    %v9887 = vstv %s9886
    %v9888 = vrsqrt.pop %v9887
    %s9889 = vtos %v9888
    %s9890 = smul.f32 %s9885, %s9889
    %v9891 = vstv %s9841
    %v9892 = vsub.f32 %v9486, %v9891
    %v9893 = vstv %s9890
    %v9894 = vmul.f32 %v9892, %v9893
    %s9895 = sld [smem:[#allocation15 + $0x3]]
    %v9896 = vstv %s9895
    %v9897 = vadd.f32 %v9894, %v9896
    %v9898 = vmax.f32 %v9897, 0.0
    %9900 = vrot.lane.b32.xlu0 %v9898, 17
    %v9901 = vpop.permute.xlu0 %9900
    %v9902 = vrot.slane %v9901, 2
    %v9903 = vsel %vm8731, %v9901, %v9902
    %9905 = vst [vmem:[#allocation3 + $0xe] sm:$0xf] %v9903
    %v9906 = vld [vmem:[#allocation3] sm:$0xff]
    %v9907 = vld [vmem:[#allocation3 + $0x8] sm:$0xff]
    %v9908 = vld [vmem:[#allocation3 + $0x10] sm:$0x3]
    %v9909 = vld [vmem:[#allocation10] ss:$8 sm:$0xf]
    %v9910 = vld [vmem:[#allocation10] ss:$8 sm:$0xf0]
    %v9911 = vor.u32 %v9909, %v9910
    %v9913 = vlaneseq
    %v9914 = vshrl.u32 %v9913, 7
    %v9915 = vsub.s32 0, %v9914
    %v9916 = vrot.slane %v9911, %v9915
    %v9917 = vlaneseq
    %v9918 = vshrl.u32 %v9917, 7
    %v9919 = vsub.s32 1, %v9918
    %v9920 = vrot.slane %v9911, %v9919
    %v9921 = vlaneseq
    %v9922 = vshrl.u32 %v9921, 7
    %v9923 = vsub.s32 2, %v9922
    %v9924 = vrot.slane %v9911, %v9923
    %v9925 = vlaneseq
    %v9926 = vshrl.u32 %v9925, 7
    %v9927 = vsub.s32 3, %v9926
    %v9928 = vrot.slane %v9911, %v9927
    %v9929 = vlaneseq
    %v9930 = vshrl.u32 %v9929, 7
    %v9931 = vsub.s32 4, %v9930
    %v9932 = vrot.slane %v9911, %v9931
    %v9933 = vlaneseq
    %v9934 = vshrl.u32 %v9933, 7
    %v9935 = vsub.s32 5, %v9934
    %v9936 = vrot.slane %v9911, %v9935
    %v9937 = vlaneseq
    %v9938 = vshrl.u32 %v9937, 7
    %v9939 = vsub.s32 6, %v9938
    %v9940 = vrot.slane %v9911, %v9939
    %v9941 = vlaneseq
    %v9942 = vshrl.u32 %v9941, 7
    %v9943 = vsub.s32 7, %v9942
    %v9944 = vrot.slane %v9911, %v9943
    %v9945 = vcombine.low %v9916, %v9920
    %v9946 = vcombine.low %v9924, %v9928
    %v9948 = vunpack.c.l.s4 1983009808
    %v9949 = vunpack.c.0.s8 %v9948
    %v9950 = vlaneseq
    %v9951 = vshrl.u32 %v9950, 7
    %v9952 = vsub.s32 %v9949, %v9951
    %v9953 = vrot.slane %v9945, %v9952
    %v9955 = vunpack.c.l.s4 1983009808
    %v9956 = vunpack.c.0.s8 %v9955
    %v9957 = vlaneseq
    %v9958 = vshrl.u32 %v9957, 7
    %v9959 = vsub.s32 %v9956, %v9958
    %v9960 = vrot.slane %v9946, %v9959
    %v9961 = vcombine.low %v9953, %v9960
    %v9962 = vcombine.low %v9932, %v9936
    %v9963 = vcombine.low %v9940, %v9944
    %v9965 = vunpack.c.l.s4 1983009808
    %v9966 = vunpack.c.0.s8 %v9965
    %v9967 = vlaneseq
    %v9968 = vshrl.u32 %v9967, 7
    %v9969 = vsub.s32 %v9966, %v9968
    %v9970 = vrot.slane %v9962, %v9969
    %v9972 = vunpack.c.l.s4 1983009808
    %v9973 = vunpack.c.0.s8 %v9972
    %v9974 = vlaneseq
    %v9975 = vshrl.u32 %v9974, 7
    %v9976 = vsub.s32 %v9973, %v9975
    %v9977 = vrot.slane %v9963, %v9976
    %v9978 = vcombine.low %v9970, %v9977
    %9979 = vrot.lane.b32.xlu0 %v9961, 111
    %v9980 = vpop.permute.xlu0 %9979
    %9981 = vrot.lane.b32.xlu0 %v9978, 111
    %v9982 = vpop.permute.xlu0 %9981
    %v9983 = vrot.slane %v9980, 6
    %v9984 = vrot.slane %v9982, 6
    %v9985 = vsel %vm1622, %v9983, %v9980
    %v9986 = vsel %vm956, %v9983, %v9984
    %v9987 = vsel %vm1622, %v9986, %v9982
    %v9991 = vmul.f32 %v9906, %v9985
    %v9992 = vmul.f32 %v9907, %v9987
    %v9993 = vmul.f32 %v9908, %v9984
    %v9994 = vadd.f32 %v9991, 0.0
    %v9997 = vrot.slane %v9991, 4
    %v9998 = vrot.slane %v9992, 4
    %v9999 = vsel %vm1645, %v9997, %v9998
    %v10001 = vadd.f32 %v9994, %v9999
    %v10002 = vadd.f32 %v10001, %v9992
    %v10004 = vrot.slane %v9993, 4
    %v10005 = vsel %vm1645, %v9998, %v10004
    %v10007 = vadd.f32 %v10002, %v10005
    %s10008 = scalar_lea.vmem [#allocation10], 1
    %v10009 = vld [vmem:[%s10008] ss:$8 sm:$0xf]
    %v10010 = vld [vmem:[%s10008] ss:$8 sm:$0xf0]
    %v10011 = vor.u32 %v10009, %v10010
    %v10013 = vlaneseq
    %v10014 = vshrl.u32 %v10013, 7
    %v10015 = vsub.s32 0, %v10014
    %v10016 = vrot.slane %v10011, %v10015
    %v10017 = vlaneseq
    %v10018 = vshrl.u32 %v10017, 7
    %v10019 = vsub.s32 1, %v10018
    %v10020 = vrot.slane %v10011, %v10019
    %v10021 = vlaneseq
    %v10022 = vshrl.u32 %v10021, 7
    %v10023 = vsub.s32 2, %v10022
    %v10024 = vrot.slane %v10011, %v10023
    %v10025 = vlaneseq
    %v10026 = vshrl.u32 %v10025, 7
    %v10027 = vsub.s32 3, %v10026
    %v10028 = vrot.slane %v10011, %v10027
    %v10029 = vlaneseq
    %v10030 = vshrl.u32 %v10029, 7
    %v10031 = vsub.s32 4, %v10030
    %v10032 = vrot.slane %v10011, %v10031
    %v10033 = vlaneseq
    %v10034 = vshrl.u32 %v10033, 7
    %v10035 = vsub.s32 5, %v10034
    %v10036 = vrot.slane %v10011, %v10035
    %v10037 = vlaneseq
    %v10038 = vshrl.u32 %v10037, 7
    %v10039 = vsub.s32 6, %v10038
    %v10040 = vrot.slane %v10011, %v10039
    %v10041 = vlaneseq
    %v10042 = vshrl.u32 %v10041, 7
    %v10043 = vsub.s32 7, %v10042
    %v10044 = vrot.slane %v10011, %v10043
    %v10045 = vcombine.low %v10016, %v10020
    %v10046 = vcombine.low %v10024, %v10028
    %v10048 = vunpack.c.l.s4 1983009808
    %v10049 = vunpack.c.0.s8 %v10048
    %v10050 = vlaneseq
    %v10051 = vshrl.u32 %v10050, 7
    %v10052 = vsub.s32 %v10049, %v10051
    %v10053 = vrot.slane %v10045, %v10052
    %v10055 = vunpack.c.l.s4 1983009808
    %v10056 = vunpack.c.0.s8 %v10055
    %v10057 = vlaneseq
    %v10058 = vshrl.u32 %v10057, 7
    %v10059 = vsub.s32 %v10056, %v10058
    %v10060 = vrot.slane %v10046, %v10059
    %v10061 = vcombine.low %v10053, %v10060
    %v10062 = vcombine.low %v10032, %v10036
    %v10063 = vcombine.low %v10040, %v10044
    %v10065 = vunpack.c.l.s4 1983009808
    %v10066 = vunpack.c.0.s8 %v10065
    %v10067 = vlaneseq
    %v10068 = vshrl.u32 %v10067, 7
    %v10069 = vsub.s32 %v10066, %v10068
    %v10070 = vrot.slane %v10062, %v10069
    %v10072 = vunpack.c.l.s4 1983009808
    %v10073 = vunpack.c.0.s8 %v10072
    %v10074 = vlaneseq
    %v10075 = vshrl.u32 %v10074, 7
    %v10076 = vsub.s32 %v10073, %v10075
    %v10077 = vrot.slane %v10063, %v10076
    %v10078 = vcombine.low %v10070, %v10077
    %10079 = vrot.lane.b32.xlu0 %v10061, 112
    %v10080 = vpop.permute.xlu0 %10079
    %10081 = vrot.lane.b32.xlu0 %v10078, 112
    %v10082 = vpop.permute.xlu0 %10081
    %v10083 = vrot.slane %v10080, 6
    %v10084 = vrot.slane %v10082, 6
    %v10085 = vsel %vm2412, %v10083, %v10080
    %v10086 = vsel %vm956, %v10083, %v10084
    %v10087 = vsel %vm2412, %v10086, %v10082
    %v10091 = vmul.f32 %v9906, %v10085
    %v10092 = vmul.f32 %v9907, %v10087
    %v10093 = vmul.f32 %v9908, %v10084
    %10095 = vrot.lane.b32.xlu0 %v10091, 127
    %v10096 = vpop.permute.xlu0 %10095
    %v10097 = vrot.slane %v10096, 2
    %v10098 = vsel %vm2434, %v10096, %v10097
    %v10100 = vadd.f32 %v10007, %v10098
    %10102 = vrot.lane.b32.xlu0 %v10092, 127
    %v10103 = vpop.permute.xlu0 %10102
    %v10104 = vrot.slane %v10096, 4
    %v10105 = vrot.slane %v10103, 4
    %v10106 = vrot.slane %v10096, 6
    %v10107 = vrot.slane %v10103, 6
    %v10108 = vsel %vm1645, %v10104, %v10105
    %v10109 = vsel %vm956, %v10106, %v10107
    %v10110 = vsel %vm2434, %v10108, %v10109
    %v10112 = vadd.f32 %v10100, %v10110
    %v10113 = vrot.slane %v10103, 2
    %v10114 = vsel %vm2434, %v10103, %v10113
    %v10116 = vadd.f32 %v10112, %v10114
    %10118 = vrot.lane.b32.xlu0 %v10093, 127
    %v10119 = vpop.permute.xlu0 %10118
    %v10120 = vrot.slane %v10119, 4
    %v10121 = vrot.slane %v10119, 6
    %v10122 = vsel %vm1645, %v10105, %v10120
    %v10123 = vsel %vm956, %v10107, %v10121
    %v10124 = vsel %vm2434, %v10122, %v10123
    %v10126 = vadd.f32 %v10116, %v10124
    %s10127 = scalar_lea.vmem [#allocation10], 2
    %v10128 = vld [vmem:[%s10127] ss:$8 sm:$0xf]
    %v10129 = vld [vmem:[%s10127] ss:$8 sm:$0xf0]
    %v10130 = vor.u32 %v10128, %v10129
    %v10132 = vlaneseq
    %v10133 = vshrl.u32 %v10132, 7
    %v10134 = vsub.s32 0, %v10133
    %v10135 = vrot.slane %v10130, %v10134
    %v10136 = vlaneseq
    %v10137 = vshrl.u32 %v10136, 7
    %v10138 = vsub.s32 1, %v10137
    %v10139 = vrot.slane %v10130, %v10138
    %v10140 = vlaneseq
    %v10141 = vshrl.u32 %v10140, 7
    %v10142 = vsub.s32 2, %v10141
    %v10143 = vrot.slane %v10130, %v10142
    %v10144 = vlaneseq
    %v10145 = vshrl.u32 %v10144, 7
    %v10146 = vsub.s32 3, %v10145
    %v10147 = vrot.slane %v10130, %v10146
    %v10148 = vlaneseq
    %v10149 = vshrl.u32 %v10148, 7
    %v10150 = vsub.s32 4, %v10149
    %v10151 = vrot.slane %v10130, %v10150
    %v10152 = vlaneseq
    %v10153 = vshrl.u32 %v10152, 7
    %v10154 = vsub.s32 5, %v10153
    %v10155 = vrot.slane %v10130, %v10154
    %v10156 = vlaneseq
    %v10157 = vshrl.u32 %v10156, 7
    %v10158 = vsub.s32 6, %v10157
    %v10159 = vrot.slane %v10130, %v10158
    %v10160 = vlaneseq
    %v10161 = vshrl.u32 %v10160, 7
    %v10162 = vsub.s32 7, %v10161
    %v10163 = vrot.slane %v10130, %v10162
    %v10164 = vcombine.low %v10135, %v10139
    %v10165 = vcombine.low %v10143, %v10147
    %v10167 = vunpack.c.l.s4 1983009808
    %v10168 = vunpack.c.0.s8 %v10167
    %v10169 = vlaneseq
    %v10170 = vshrl.u32 %v10169, 7
    %v10171 = vsub.s32 %v10168, %v10170
    %v10172 = vrot.slane %v10164, %v10171
    %v10174 = vunpack.c.l.s4 1983009808
    %v10175 = vunpack.c.0.s8 %v10174
    %v10176 = vlaneseq
    %v10177 = vshrl.u32 %v10176, 7
    %v10178 = vsub.s32 %v10175, %v10177
    %v10179 = vrot.slane %v10165, %v10178
    %v10180 = vcombine.low %v10172, %v10179
    %v10181 = vcombine.low %v10151, %v10155
    %v10182 = vcombine.low %v10159, %v10163
    %v10184 = vunpack.c.l.s4 1983009808
    %v10185 = vunpack.c.0.s8 %v10184
    %v10186 = vlaneseq
    %v10187 = vshrl.u32 %v10186, 7
    %v10188 = vsub.s32 %v10185, %v10187
    %v10189 = vrot.slane %v10181, %v10188
    %v10191 = vunpack.c.l.s4 1983009808
    %v10192 = vunpack.c.0.s8 %v10191
    %v10193 = vlaneseq
    %v10194 = vshrl.u32 %v10193, 7
    %v10195 = vsub.s32 %v10192, %v10194
    %v10196 = vrot.slane %v10182, %v10195
    %v10197 = vcombine.low %v10189, %v10196
    %10198 = vrot.lane.b32.xlu0 %v10180, 113
    %v10199 = vpop.permute.xlu0 %10198
    %10200 = vrot.lane.b32.xlu0 %v10197, 113
    %v10201 = vpop.permute.xlu0 %10200
    %v10202 = vrot.slane %v10199, 6
    %v10203 = vrot.slane %v10201, 6
    %v10204 = vsel %vm3342, %v10202, %v10199
    %v10205 = vsel %vm956, %v10202, %v10203
    %v10206 = vsel %vm3342, %v10205, %v10201
    %v10210 = vmul.f32 %v9906, %v10204
    %v10211 = vmul.f32 %v9907, %v10206
    %v10212 = vmul.f32 %v9908, %v10203
    %10214 = vrot.lane.b32.xlu0 %v10210, 126
    %v10215 = vpop.permute.xlu0 %10214
    %v10216 = vrot.slane %v10215, 2
    %v10217 = vsel %vm3364, %v10215, %v10216
    %v10219 = vadd.f32 %v10126, %v10217
    %10221 = vrot.lane.b32.xlu0 %v10211, 126
    %v10222 = vpop.permute.xlu0 %10221
    %v10223 = vrot.slane %v10215, 4
    %v10224 = vrot.slane %v10222, 4
    %v10225 = vrot.slane %v10215, 6
    %v10226 = vrot.slane %v10222, 6
    %v10227 = vsel %vm1645, %v10223, %v10224
    %v10228 = vsel %vm956, %v10225, %v10226
    %v10229 = vsel %vm3364, %v10227, %v10228
    %v10231 = vadd.f32 %v10219, %v10229
    %v10232 = vrot.slane %v10222, 2
    %v10233 = vsel %vm3364, %v10222, %v10232
    %v10235 = vadd.f32 %v10231, %v10233
    %10237 = vrot.lane.b32.xlu0 %v10212, 126
    %v10238 = vpop.permute.xlu0 %10237
    %v10239 = vrot.slane %v10238, 4
    %v10240 = vrot.slane %v10238, 6
    %v10241 = vsel %vm1645, %v10224, %v10239
    %v10242 = vsel %vm956, %v10226, %v10240
    %v10243 = vsel %vm3364, %v10241, %v10242
    %v10245 = vadd.f32 %v10235, %v10243
    %s10246 = scalar_lea.vmem [#allocation10], 3
    %v10247 = vld [vmem:[%s10246] ss:$8 sm:$0xf]
    %v10248 = vld [vmem:[%s10246] ss:$8 sm:$0xf0]
    %v10249 = vor.u32 %v10247, %v10248
    %v10251 = vlaneseq
    %v10252 = vshrl.u32 %v10251, 7
    %v10253 = vsub.s32 0, %v10252
    %v10254 = vrot.slane %v10249, %v10253
    %v10255 = vlaneseq
    %v10256 = vshrl.u32 %v10255, 7
    %v10257 = vsub.s32 1, %v10256
    %v10258 = vrot.slane %v10249, %v10257
    %v10259 = vlaneseq
    %v10260 = vshrl.u32 %v10259, 7
    %v10261 = vsub.s32 2, %v10260
    %v10262 = vrot.slane %v10249, %v10261
    %v10263 = vlaneseq
    %v10264 = vshrl.u32 %v10263, 7
    %v10265 = vsub.s32 3, %v10264
    %v10266 = vrot.slane %v10249, %v10265
    %v10267 = vlaneseq
    %v10268 = vshrl.u32 %v10267, 7
    %v10269 = vsub.s32 4, %v10268
    %v10270 = vrot.slane %v10249, %v10269
    %v10271 = vlaneseq
    %v10272 = vshrl.u32 %v10271, 7
    %v10273 = vsub.s32 5, %v10272
    %v10274 = vrot.slane %v10249, %v10273
    %v10275 = vlaneseq
    %v10276 = vshrl.u32 %v10275, 7
    %v10277 = vsub.s32 6, %v10276
    %v10278 = vrot.slane %v10249, %v10277
    %v10279 = vlaneseq
    %v10280 = vshrl.u32 %v10279, 7
    %v10281 = vsub.s32 7, %v10280
    %v10282 = vrot.slane %v10249, %v10281
    %v10283 = vcombine.low %v10254, %v10258
    %v10284 = vcombine.low %v10262, %v10266
    %v10286 = vunpack.c.l.s4 1983009808
    %v10287 = vunpack.c.0.s8 %v10286
    %v10288 = vlaneseq
    %v10289 = vshrl.u32 %v10288, 7
    %v10290 = vsub.s32 %v10287, %v10289
    %v10291 = vrot.slane %v10283, %v10290
    %v10293 = vunpack.c.l.s4 1983009808
    %v10294 = vunpack.c.0.s8 %v10293
    %v10295 = vlaneseq
    %v10296 = vshrl.u32 %v10295, 7
    %v10297 = vsub.s32 %v10294, %v10296
    %v10298 = vrot.slane %v10284, %v10297
    %v10299 = vcombine.low %v10291, %v10298
    %v10300 = vcombine.low %v10270, %v10274
    %v10301 = vcombine.low %v10278, %v10282
    %v10303 = vunpack.c.l.s4 1983009808
    %v10304 = vunpack.c.0.s8 %v10303
    %v10305 = vlaneseq
    %v10306 = vshrl.u32 %v10305, 7
    %v10307 = vsub.s32 %v10304, %v10306
    %v10308 = vrot.slane %v10300, %v10307
    %v10310 = vunpack.c.l.s4 1983009808
    %v10311 = vunpack.c.0.s8 %v10310
    %v10312 = vlaneseq
    %v10313 = vshrl.u32 %v10312, 7
    %v10314 = vsub.s32 %v10311, %v10313
    %v10315 = vrot.slane %v10301, %v10314
    %v10316 = vcombine.low %v10308, %v10315
    %10317 = vrot.lane.b32.xlu0 %v10299, 127
    %v10318 = vpop.permute.xlu0 %10317
    %10319 = vrot.lane.b32.xlu0 %v10316, 127
    %v10320 = vpop.permute.xlu0 %10319
    %v10321 = vrot.slane %v10318, 6
    %v10322 = vrot.slane %v10320, 6
    %v10323 = vsel %vm2434, %v10321, %v10318
    %v10324 = vsel %vm956, %v10321, %v10322
    %v10325 = vsel %vm2434, %v10324, %v10320
    %v10329 = vmul.f32 %v9906, %v10323
    %v10330 = vmul.f32 %v9907, %v10325
    %v10331 = vmul.f32 %v9908, %v10322
    %10333 = vrot.lane.b32.xlu0 %v10329, 112
    %v10334 = vpop.permute.xlu0 %10333
    %v10335 = vrot.slane %v10334, 2
    %v10336 = vsel %vm2412, %v10334, %v10335
    %v10338 = vadd.f32 %v10245, %v10336
    %10340 = vrot.lane.b32.xlu0 %v10330, 112
    %v10341 = vpop.permute.xlu0 %10340
    %v10342 = vrot.slane %v10334, 4
    %v10343 = vrot.slane %v10341, 4
    %v10344 = vrot.slane %v10334, 6
    %v10345 = vrot.slane %v10341, 6
    %v10346 = vsel %vm1645, %v10342, %v10343
    %v10347 = vsel %vm956, %v10344, %v10345
    %v10348 = vsel %vm2412, %v10346, %v10347
    %v10350 = vadd.f32 %v10338, %v10348
    %v10351 = vrot.slane %v10341, 2
    %v10352 = vsel %vm2412, %v10341, %v10351
    %v10354 = vadd.f32 %v10350, %v10352
    %10356 = vrot.lane.b32.xlu0 %v10331, 112
    %v10357 = vpop.permute.xlu0 %10356
    %v10358 = vrot.slane %v10357, 4
    %v10359 = vrot.slane %v10357, 6
    %v10360 = vsel %vm1645, %v10343, %v10358
    %v10361 = vsel %vm956, %v10345, %v10359
    %v10362 = vsel %vm2412, %v10360, %v10361
    %v10364 = vadd.f32 %v10354, %v10362
    %v10365 = vld [vmem:[#allocation3 + $0x2] sm:$0xff]
    %v10366 = vld [vmem:[#allocation3 + $0xa] sm:$0xff]
    %s10367 = scalar_lea.vmem [#allocation10], 4
    %v10368 = vld [vmem:[%s10367] ss:$8 sm:$0xf]
    %v10369 = vld [vmem:[%s10367] ss:$8 sm:$0xf0]
    %v10370 = vor.u32 %v10368, %v10369
    %v10372 = vlaneseq
    %v10373 = vshrl.u32 %v10372, 7
    %v10374 = vsub.s32 0, %v10373
    %v10375 = vrot.slane %v10370, %v10374
    %v10376 = vlaneseq
    %v10377 = vshrl.u32 %v10376, 7
    %v10378 = vsub.s32 1, %v10377
    %v10379 = vrot.slane %v10370, %v10378
    %v10380 = vlaneseq
    %v10381 = vshrl.u32 %v10380, 7
    %v10382 = vsub.s32 2, %v10381
    %v10383 = vrot.slane %v10370, %v10382
    %v10384 = vlaneseq
    %v10385 = vshrl.u32 %v10384, 7
    %v10386 = vsub.s32 3, %v10385
    %v10387 = vrot.slane %v10370, %v10386
    %v10388 = vlaneseq
    %v10389 = vshrl.u32 %v10388, 7
    %v10390 = vsub.s32 4, %v10389
    %v10391 = vrot.slane %v10370, %v10390
    %v10392 = vlaneseq
    %v10393 = vshrl.u32 %v10392, 7
    %v10394 = vsub.s32 5, %v10393
    %v10395 = vrot.slane %v10370, %v10394
    %v10396 = vlaneseq
    %v10397 = vshrl.u32 %v10396, 7
    %v10398 = vsub.s32 6, %v10397
    %v10399 = vrot.slane %v10370, %v10398
    %v10400 = vlaneseq
    %v10401 = vshrl.u32 %v10400, 7
    %v10402 = vsub.s32 7, %v10401
    %v10403 = vrot.slane %v10370, %v10402
    %v10404 = vcombine.low %v10375, %v10379
    %v10405 = vcombine.low %v10383, %v10387
    %v10407 = vunpack.c.l.s4 1983009808
    %v10408 = vunpack.c.0.s8 %v10407
    %v10409 = vlaneseq
    %v10410 = vshrl.u32 %v10409, 7
    %v10411 = vsub.s32 %v10408, %v10410
    %v10412 = vrot.slane %v10404, %v10411
    %v10414 = vunpack.c.l.s4 1983009808
    %v10415 = vunpack.c.0.s8 %v10414
    %v10416 = vlaneseq
    %v10417 = vshrl.u32 %v10416, 7
    %v10418 = vsub.s32 %v10415, %v10417
    %v10419 = vrot.slane %v10405, %v10418
    %v10420 = vcombine.low %v10412, %v10419
    %v10421 = vcombine.low %v10391, %v10395
    %v10422 = vcombine.low %v10399, %v10403
    %v10424 = vunpack.c.l.s4 1983009808
    %v10425 = vunpack.c.0.s8 %v10424
    %v10426 = vlaneseq
    %v10427 = vshrl.u32 %v10426, 7
    %v10428 = vsub.s32 %v10425, %v10427
    %v10429 = vrot.slane %v10421, %v10428
    %v10431 = vunpack.c.l.s4 1983009808
    %v10432 = vunpack.c.0.s8 %v10431
    %v10433 = vlaneseq
    %v10434 = vshrl.u32 %v10433, 7
    %v10435 = vsub.s32 %v10432, %v10434
    %v10436 = vrot.slane %v10422, %v10435
    %v10437 = vcombine.low %v10429, %v10436
    %v10440 = vmul.f32 %v10365, %v10420
    %v10441 = vmul.f32 %v10366, %v10437
    %10443 = vrot.lane.b32.xlu0 %v10440, 111
    %v10444 = vpop.permute.xlu0 %10443
    %v10445 = vrot.slane %v10444, 6
    %v10446 = vsel %vm1622, %v10445, %v10444
    %v10448 = vadd.f32 %v10364, %v10446
    %v10449 = vrot.slane %v10444, 2
    %v10450 = vrot.slane %v10444, 4
    %v10451 = vsel %vm1622, %v10449, %v10450
    %v10453 = vadd.f32 %v10448, %v10451
    %10455 = vrot.lane.b32.xlu0 %v10441, 111
    %v10456 = vpop.permute.xlu0 %10455
    %v10457 = vrot.slane %v10456, 6
    %v10458 = vsel %vm1622, %v10457, %v10456
    %v10460 = vadd.f32 %v10453, %v10458
    %v10461 = vrot.slane %v10456, 2
    %v10462 = vrot.slane %v10456, 4
    %v10463 = vsel %vm1622, %v10461, %v10462
    %v10465 = vadd.f32 %v10460, %v10463
    %v10466 = vld [vmem:[#allocation3 + $0x2] sm:$0xff]
    %v10467 = vld [vmem:[#allocation3 + $0xa] sm:$0xff]
    %v10468 = vld [vmem:[#allocation3 + $0x12] sm:$0x3]
    %s10469 = scalar_lea.vmem [#allocation10], 5
    %v10470 = vld [vmem:[%s10469] ss:$8 sm:$0xf]
    %v10471 = vld [vmem:[%s10469] ss:$8 sm:$0xf0]
    %v10472 = vor.u32 %v10470, %v10471
    %v10474 = vlaneseq
    %v10475 = vshrl.u32 %v10474, 7
    %v10476 = vsub.s32 0, %v10475
    %v10477 = vrot.slane %v10472, %v10476
    %v10478 = vlaneseq
    %v10479 = vshrl.u32 %v10478, 7
    %v10480 = vsub.s32 1, %v10479
    %v10481 = vrot.slane %v10472, %v10480
    %v10482 = vlaneseq
    %v10483 = vshrl.u32 %v10482, 7
    %v10484 = vsub.s32 2, %v10483
    %v10485 = vrot.slane %v10472, %v10484
    %v10486 = vlaneseq
    %v10487 = vshrl.u32 %v10486, 7
    %v10488 = vsub.s32 3, %v10487
    %v10489 = vrot.slane %v10472, %v10488
    %v10490 = vlaneseq
    %v10491 = vshrl.u32 %v10490, 7
    %v10492 = vsub.s32 4, %v10491
    %v10493 = vrot.slane %v10472, %v10492
    %v10494 = vlaneseq
    %v10495 = vshrl.u32 %v10494, 7
    %v10496 = vsub.s32 5, %v10495
    %v10497 = vrot.slane %v10472, %v10496
    %v10498 = vlaneseq
    %v10499 = vshrl.u32 %v10498, 7
    %v10500 = vsub.s32 6, %v10499
    %v10501 = vrot.slane %v10472, %v10500
    %v10502 = vlaneseq
    %v10503 = vshrl.u32 %v10502, 7
    %v10504 = vsub.s32 7, %v10503
    %v10505 = vrot.slane %v10472, %v10504
    %v10506 = vcombine.low %v10477, %v10481
    %v10507 = vcombine.low %v10485, %v10489
    %v10509 = vunpack.c.l.s4 1983009808
    %v10510 = vunpack.c.0.s8 %v10509
    %v10511 = vlaneseq
    %v10512 = vshrl.u32 %v10511, 7
    %v10513 = vsub.s32 %v10510, %v10512
    %v10514 = vrot.slane %v10506, %v10513
    %v10516 = vunpack.c.l.s4 1983009808
    %v10517 = vunpack.c.0.s8 %v10516
    %v10518 = vlaneseq
    %v10519 = vshrl.u32 %v10518, 7
    %v10520 = vsub.s32 %v10517, %v10519
    %v10521 = vrot.slane %v10507, %v10520
    %v10522 = vcombine.low %v10514, %v10521
    %v10523 = vcombine.low %v10493, %v10497
    %v10524 = vcombine.low %v10501, %v10505
    %v10526 = vunpack.c.l.s4 1983009808
    %v10527 = vunpack.c.0.s8 %v10526
    %v10528 = vlaneseq
    %v10529 = vshrl.u32 %v10528, 7
    %v10530 = vsub.s32 %v10527, %v10529
    %v10531 = vrot.slane %v10523, %v10530
    %v10533 = vunpack.c.l.s4 1983009808
    %v10534 = vunpack.c.0.s8 %v10533
    %v10535 = vlaneseq
    %v10536 = vshrl.u32 %v10535, 7
    %v10537 = vsub.s32 %v10534, %v10536
    %v10538 = vrot.slane %v10524, %v10537
    %v10539 = vcombine.low %v10531, %v10538
    %10540 = vrot.lane.b32.xlu0 %v10522, 1
    %v10541 = vpop.permute.xlu0 %10540
    %10542 = vrot.lane.b32.xlu0 %v10539, 1
    %v10543 = vpop.permute.xlu0 %10542
    %v10544 = vrot.slane %v10541, 6
    %v10545 = vrot.slane %v10543, 6
    %v10546 = vsel %vm6001, %v10544, %v10541
    %v10547 = vsel %vm956, %v10544, %v10545
    %v10548 = vsel %vm6001, %v10547, %v10543
    %v10552 = vmul.f32 %v10466, %v10546
    %v10553 = vmul.f32 %v10467, %v10548
    %v10554 = vmul.f32 %v10468, %v10545
    %10556 = vrot.lane.b32.xlu0 %v10552, 110
    %v10557 = vpop.permute.xlu0 %10556
    %v10558 = vrot.slane %v10557, 6
    %v10559 = vsel %vm6023, %v10558, %v10557
    %v10561 = vadd.f32 %v10465, %v10559
    %10563 = vrot.lane.b32.xlu0 %v10553, 110
    %v10564 = vpop.permute.xlu0 %10563
    %v10565 = vrot.slane %v10557, 2
    %v10566 = vrot.slane %v10557, 4
    %v10567 = vrot.slane %v10564, 4
    %v10568 = vsel %vm1645, %v10566, %v10567
    %v10569 = vsel %vm6023, %v10565, %v10568
    %v10571 = vadd.f32 %v10561, %v10569
    %v10572 = vrot.slane %v10564, 6
    %v10573 = vsel %vm6023, %v10572, %v10564
    %v10575 = vadd.f32 %v10571, %v10573
    %10577 = vrot.lane.b32.xlu0 %v10554, 110
    %v10578 = vpop.permute.xlu0 %10577
    %v10579 = vrot.slane %v10564, 2
    %v10580 = vrot.slane %v10578, 4
    %v10581 = vsel %vm1645, %v10567, %v10580
    %v10582 = vsel %vm6023, %v10579, %v10581
    %v10584 = vadd.f32 %v10575, %v10582
    %s10585 = scalar_lea.vmem [#allocation10], 6
    %v10586 = vld [vmem:[%s10585] ss:$8 sm:$0xf]
    %v10587 = vld [vmem:[%s10585] ss:$8 sm:$0xf0]
    %v10588 = vor.u32 %v10586, %v10587
    %v10590 = vlaneseq
    %v10591 = vshrl.u32 %v10590, 7
    %v10592 = vsub.s32 0, %v10591
    %v10593 = vrot.slane %v10588, %v10592
    %v10594 = vlaneseq
    %v10595 = vshrl.u32 %v10594, 7
    %v10596 = vsub.s32 1, %v10595
    %v10597 = vrot.slane %v10588, %v10596
    %v10598 = vlaneseq
    %v10599 = vshrl.u32 %v10598, 7
    %v10600 = vsub.s32 2, %v10599
    %v10601 = vrot.slane %v10588, %v10600
    %v10602 = vlaneseq
    %v10603 = vshrl.u32 %v10602, 7
    %v10604 = vsub.s32 3, %v10603
    %v10605 = vrot.slane %v10588, %v10604
    %v10606 = vlaneseq
    %v10607 = vshrl.u32 %v10606, 7
    %v10608 = vsub.s32 4, %v10607
    %v10609 = vrot.slane %v10588, %v10608
    %v10610 = vlaneseq
    %v10611 = vshrl.u32 %v10610, 7
    %v10612 = vsub.s32 5, %v10611
    %v10613 = vrot.slane %v10588, %v10612
    %v10614 = vlaneseq
    %v10615 = vshrl.u32 %v10614, 7
    %v10616 = vsub.s32 6, %v10615
    %v10617 = vrot.slane %v10588, %v10616
    %v10618 = vlaneseq
    %v10619 = vshrl.u32 %v10618, 7
    %v10620 = vsub.s32 7, %v10619
    %v10621 = vrot.slane %v10588, %v10620
    %v10622 = vcombine.low %v10593, %v10597
    %v10623 = vcombine.low %v10601, %v10605
    %v10625 = vunpack.c.l.s4 1983009808
    %v10626 = vunpack.c.0.s8 %v10625
    %v10627 = vlaneseq
    %v10628 = vshrl.u32 %v10627, 7
    %v10629 = vsub.s32 %v10626, %v10628
    %v10630 = vrot.slane %v10622, %v10629
    %v10632 = vunpack.c.l.s4 1983009808
    %v10633 = vunpack.c.0.s8 %v10632
    %v10634 = vlaneseq
    %v10635 = vshrl.u32 %v10634, 7
    %v10636 = vsub.s32 %v10633, %v10635
    %v10637 = vrot.slane %v10623, %v10636
    %v10638 = vcombine.low %v10630, %v10637
    %v10639 = vcombine.low %v10609, %v10613
    %v10640 = vcombine.low %v10617, %v10621
    %v10642 = vunpack.c.l.s4 1983009808
    %v10643 = vunpack.c.0.s8 %v10642
    %v10644 = vlaneseq
    %v10645 = vshrl.u32 %v10644, 7
    %v10646 = vsub.s32 %v10643, %v10645
    %v10647 = vrot.slane %v10639, %v10646
    %v10649 = vunpack.c.l.s4 1983009808
    %v10650 = vunpack.c.0.s8 %v10649
    %v10651 = vlaneseq
    %v10652 = vshrl.u32 %v10651, 7
    %v10653 = vsub.s32 %v10650, %v10652
    %v10654 = vrot.slane %v10640, %v10653
    %v10655 = vcombine.low %v10647, %v10654
    %10656 = vrot.lane.b32.xlu0 %v10638, 15
    %v10657 = vpop.permute.xlu0 %10656
    %10658 = vrot.lane.b32.xlu0 %v10655, 15
    %v10659 = vpop.permute.xlu0 %10658
    %v10660 = vrot.slane %v10657, 6
    %v10661 = vrot.slane %v10659, 6
    %v10662 = vsel %vm6911, %v10660, %v10657
    %v10663 = vsel %vm956, %v10660, %v10661
    %v10664 = vsel %vm6911, %v10663, %v10659
    %v10668 = vmul.f32 %v10466, %v10662
    %v10669 = vmul.f32 %v10467, %v10664
    %v10670 = vmul.f32 %v10468, %v10661
    %10672 = vrot.lane.b32.xlu0 %v10668, 96
    %v10673 = vpop.permute.xlu0 %10672
    %v10674 = vrot.slane %v10673, 6
    %v10675 = vsel %vm6933, %v10674, %v10673
    %v10677 = vadd.f32 %v10584, %v10675
    %10679 = vrot.lane.b32.xlu0 %v10669, 96
    %v10680 = vpop.permute.xlu0 %10679
    %v10681 = vrot.slane %v10673, 2
    %v10682 = vrot.slane %v10673, 4
    %v10683 = vrot.slane %v10680, 4
    %v10684 = vsel %vm1645, %v10682, %v10683
    %v10685 = vsel %vm6933, %v10681, %v10684
    %v10687 = vadd.f32 %v10677, %v10685
    %v10688 = vrot.slane %v10680, 6
    %v10689 = vsel %vm6933, %v10688, %v10680
    %v10691 = vadd.f32 %v10687, %v10689
    %10693 = vrot.lane.b32.xlu0 %v10670, 96
    %v10694 = vpop.permute.xlu0 %10693
    %v10695 = vrot.slane %v10680, 2
    %v10696 = vrot.slane %v10694, 4
    %v10697 = vsel %vm1645, %v10683, %v10696
    %v10698 = vsel %vm6933, %v10695, %v10697
    %v10700 = vadd.f32 %v10691, %v10698
    %s10701 = scalar_lea.vmem [#allocation10], 7
    %v10702 = vld [vmem:[%s10701] ss:$8 sm:$0xf]
    %v10703 = vld [vmem:[%s10701] ss:$8 sm:$0xf0]
    %v10704 = vor.u32 %v10702, %v10703
    %v10706 = vlaneseq
    %v10707 = vshrl.u32 %v10706, 7
    %v10708 = vsub.s32 0, %v10707
    %v10709 = vrot.slane %v10704, %v10708
    %v10710 = vlaneseq
    %v10711 = vshrl.u32 %v10710, 7
    %v10712 = vsub.s32 1, %v10711
    %v10713 = vrot.slane %v10704, %v10712
    %v10714 = vlaneseq
    %v10715 = vshrl.u32 %v10714, 7
    %v10716 = vsub.s32 2, %v10715
    %v10717 = vrot.slane %v10704, %v10716
    %v10718 = vlaneseq
    %v10719 = vshrl.u32 %v10718, 7
    %v10720 = vsub.s32 3, %v10719
    %v10721 = vrot.slane %v10704, %v10720
    %v10722 = vlaneseq
    %v10723 = vshrl.u32 %v10722, 7
    %v10724 = vsub.s32 4, %v10723
    %v10725 = vrot.slane %v10704, %v10724
    %v10726 = vlaneseq
    %v10727 = vshrl.u32 %v10726, 7
    %v10728 = vsub.s32 5, %v10727
    %v10729 = vrot.slane %v10704, %v10728
    %v10730 = vlaneseq
    %v10731 = vshrl.u32 %v10730, 7
    %v10732 = vsub.s32 6, %v10731
    %v10733 = vrot.slane %v10704, %v10732
    %v10734 = vlaneseq
    %v10735 = vshrl.u32 %v10734, 7
    %v10736 = vsub.s32 7, %v10735
    %v10737 = vrot.slane %v10704, %v10736
    %v10738 = vcombine.low %v10709, %v10713
    %v10739 = vcombine.low %v10717, %v10721
    %v10741 = vunpack.c.l.s4 1983009808
    %v10742 = vunpack.c.0.s8 %v10741
    %v10743 = vlaneseq
    %v10744 = vshrl.u32 %v10743, 7
    %v10745 = vsub.s32 %v10742, %v10744
    %v10746 = vrot.slane %v10738, %v10745
    %v10748 = vunpack.c.l.s4 1983009808
    %v10749 = vunpack.c.0.s8 %v10748
    %v10750 = vlaneseq
    %v10751 = vshrl.u32 %v10750, 7
    %v10752 = vsub.s32 %v10749, %v10751
    %v10753 = vrot.slane %v10739, %v10752
    %v10754 = vcombine.low %v10746, %v10753
    %v10755 = vcombine.low %v10725, %v10729
    %v10756 = vcombine.low %v10733, %v10737
    %v10758 = vunpack.c.l.s4 1983009808
    %v10759 = vunpack.c.0.s8 %v10758
    %v10760 = vlaneseq
    %v10761 = vshrl.u32 %v10760, 7
    %v10762 = vsub.s32 %v10759, %v10761
    %v10763 = vrot.slane %v10755, %v10762
    %v10765 = vunpack.c.l.s4 1983009808
    %v10766 = vunpack.c.0.s8 %v10765
    %v10767 = vlaneseq
    %v10768 = vshrl.u32 %v10767, 7
    %v10769 = vsub.s32 %v10766, %v10768
    %v10770 = vrot.slane %v10756, %v10769
    %v10771 = vcombine.low %v10763, %v10770
    %10772 = vrot.lane.b32.xlu0 %v10754, 16
    %v10773 = vpop.permute.xlu0 %10772
    %10774 = vrot.lane.b32.xlu0 %v10771, 16
    %v10775 = vpop.permute.xlu0 %10774
    %v10776 = vrot.slane %v10773, 6
    %v10777 = vrot.slane %v10775, 6
    %v10778 = vsel %vm7821, %v10776, %v10773
    %v10779 = vsel %vm956, %v10776, %v10777
    %v10780 = vsel %vm7821, %v10779, %v10775
    %v10784 = vmul.f32 %v10466, %v10778
    %v10785 = vmul.f32 %v10467, %v10780
    %v10786 = vmul.f32 %v10468, %v10777
    %10788 = vrot.lane.b32.xlu0 %v10784, 95
    %v10789 = vpop.permute.xlu0 %10788
    %v10790 = vrot.slane %v10789, 6
    %v10791 = vsel %vm7843, %v10790, %v10789
    %v10793 = vadd.f32 %v10700, %v10791
    %10795 = vrot.lane.b32.xlu0 %v10785, 95
    %v10796 = vpop.permute.xlu0 %10795
    %v10797 = vrot.slane %v10789, 2
    %v10798 = vrot.slane %v10789, 4
    %v10799 = vrot.slane %v10796, 4
    %v10800 = vsel %vm1645, %v10798, %v10799
    %v10801 = vsel %vm7843, %v10797, %v10800
    %v10803 = vadd.f32 %v10793, %v10801
    %v10804 = vrot.slane %v10796, 6
    %v10805 = vsel %vm7843, %v10804, %v10796
    %v10807 = vadd.f32 %v10803, %v10805
    %10809 = vrot.lane.b32.xlu0 %v10786, 95
    %v10810 = vpop.permute.xlu0 %10809
    %v10811 = vrot.slane %v10796, 2
    %v10812 = vrot.slane %v10810, 4
    %v10813 = vsel %vm1645, %v10799, %v10812
    %v10814 = vsel %vm7843, %v10811, %v10813
    %v10816 = vadd.f32 %v10807, %v10814
    %s10817 = scalar_lea.vmem [#allocation10], 64
    %v10818 = vld [vmem:[%s10817] ss:$8 sm:$0xf]
    %v10819 = vld [vmem:[%s10817] ss:$8 sm:$0xf0]
    %v10820 = vor.u32 %v10818, %v10819
    %v10822 = vlaneseq
    %v10823 = vshrl.u32 %v10822, 7
    %v10824 = vsub.s32 0, %v10823
    %v10825 = vrot.slane %v10820, %v10824
    %v10826 = vlaneseq
    %v10827 = vshrl.u32 %v10826, 7
    %v10828 = vsub.s32 1, %v10827
    %v10829 = vrot.slane %v10820, %v10828
    %v10830 = vlaneseq
    %v10831 = vshrl.u32 %v10830, 7
    %v10832 = vsub.s32 2, %v10831
    %v10833 = vrot.slane %v10820, %v10832
    %v10834 = vlaneseq
    %v10835 = vshrl.u32 %v10834, 7
    %v10836 = vsub.s32 3, %v10835
    %v10837 = vrot.slane %v10820, %v10836
    %v10838 = vlaneseq
    %v10839 = vshrl.u32 %v10838, 7
    %v10840 = vsub.s32 4, %v10839
    %v10841 = vrot.slane %v10820, %v10840
    %v10842 = vlaneseq
    %v10843 = vshrl.u32 %v10842, 7
    %v10844 = vsub.s32 5, %v10843
    %v10845 = vrot.slane %v10820, %v10844
    %v10846 = vlaneseq
    %v10847 = vshrl.u32 %v10846, 7
    %v10848 = vsub.s32 6, %v10847
    %v10849 = vrot.slane %v10820, %v10848
    %v10850 = vlaneseq
    %v10851 = vshrl.u32 %v10850, 7
    %v10852 = vsub.s32 7, %v10851
    %v10853 = vrot.slane %v10820, %v10852
    %v10854 = vcombine.low %v10825, %v10829
    %v10855 = vcombine.low %v10833, %v10837
    %v10857 = vunpack.c.l.s4 1983009808
    %v10858 = vunpack.c.0.s8 %v10857
    %v10859 = vlaneseq
    %v10860 = vshrl.u32 %v10859, 7
    %v10861 = vsub.s32 %v10858, %v10860
    %v10862 = vrot.slane %v10854, %v10861
    %v10864 = vunpack.c.l.s4 1983009808
    %v10865 = vunpack.c.0.s8 %v10864
    %v10866 = vlaneseq
    %v10867 = vshrl.u32 %v10866, 7
    %v10868 = vsub.s32 %v10865, %v10867
    %v10869 = vrot.slane %v10855, %v10868
    %v10870 = vcombine.low %v10862, %v10869
    %v10871 = vcombine.low %v10841, %v10845
    %v10872 = vcombine.low %v10849, %v10853
    %v10874 = vunpack.c.l.s4 1983009808
    %v10875 = vunpack.c.0.s8 %v10874
    %v10876 = vlaneseq
    %v10877 = vshrl.u32 %v10876, 7
    %v10878 = vsub.s32 %v10875, %v10877
    %v10879 = vrot.slane %v10871, %v10878
    %v10881 = vunpack.c.l.s4 1983009808
    %v10882 = vunpack.c.0.s8 %v10881
    %v10883 = vlaneseq
    %v10884 = vshrl.u32 %v10883, 7
    %v10885 = vsub.s32 %v10882, %v10884
    %v10886 = vrot.slane %v10872, %v10885
    %v10887 = vcombine.low %v10879, %v10886
    %10888 = vrot.lane.b32.xlu0 %v10870, 17
    %v10889 = vpop.permute.xlu0 %10888
    %10890 = vrot.lane.b32.xlu0 %v10887, 17
    %v10891 = vpop.permute.xlu0 %10890
    %v10892 = vrot.slane %v10889, 6
    %v10893 = vrot.slane %v10891, 6
    %v10894 = vsel %vm8731, %v10892, %v10889
    %v10895 = vsel %vm956, %v10892, %v10893
    %v10896 = vsel %vm8731, %v10895, %v10891
    %v10900 = vmul.f32 %v10466, %v10894
    %v10901 = vmul.f32 %v10467, %v10896
    %v10902 = vmul.f32 %v10468, %v10893
    %10904 = vrot.lane.b32.xlu0 %v10900, 94
    %v10905 = vpop.permute.xlu0 %10904
    %v10906 = vrot.slane %v10905, 6
    %v10907 = vsel %vm8753, %v10906, %v10905
    %v10909 = vadd.f32 %v10816, %v10907
    %10911 = vrot.lane.b32.xlu0 %v10901, 94
    %v10912 = vpop.permute.xlu0 %10911
    %v10913 = vrot.slane %v10905, 2
    %v10914 = vrot.slane %v10905, 4
    %v10915 = vrot.slane %v10912, 4
    %v10916 = vsel %vm1645, %v10914, %v10915
    %v10917 = vsel %vm8753, %v10913, %v10916
    %v10919 = vadd.f32 %v10909, %v10917
    %v10920 = vrot.slane %v10912, 6
    %v10921 = vsel %vm8753, %v10920, %v10912
    %v10923 = vadd.f32 %v10919, %v10921
    %10925 = vrot.lane.b32.xlu0 %v10902, 94
    %v10926 = vpop.permute.xlu0 %10925
    %v10927 = vrot.slane %v10912, 2
    %v10928 = vrot.slane %v10926, 4
    %v10929 = vsel %vm1645, %v10915, %v10928
    %v10930 = vsel %vm8753, %v10927, %v10929
    %v10932 = vadd.f32 %v10923, %v10930
    %v10933 = vld [vmem:[%s8] sm:$0x3]
    %v10935 = vlaneseq
    %v10936 = vshrl.u32 %v10935, 7
    %v10937 = vsub.s32 0, %v10936
    %v10938 = vrot.slane %v10933, %v10937
    %v10939 = vlaneseq
    %v10940 = vshrl.u32 %v10939, 7
    %v10941 = vsub.s32 1, %v10940
    %v10942 = vrot.slane %v10933, %v10941
    %v10943 = vcombine.low %v10938, %v10942
    %v10945 = vunpack.c.l.s4 1983009808
    %v10946 = vunpack.c.0.s8 %v10945
    %v10947 = vlaneseq
    %v10948 = vshrl.u32 %v10947, 7
    %v10949 = vsub.s32 %v10946, %v10948
    %v10950 = vrot.slane %v10943, %v10949
    %10951 = vrot.lane.b32.xlu0 %v10950, 111
    %v10952 = vpop.permute.xlu0 %10951
    %v10953 = vrot.slane %v10952, 6
    %v10954 = vsel %vm1622, %v10953, %v10952
    %v10956 = vadd.f32 %v10932, %v10954
    %10958 = vrot.lane.b32.xlu0 %v10956, 17
    %v10959 = vpop.permute.xlu0 %10958
    %v10960 = vrot.slane %v10959, 2
    %v10961 = vsel %vm8731, %v10959, %v10960
    %10963 = vst [vmem:[%s13] sm:$0xf] %v10961
    // Predicated region
    $region82: #{_decoder_forward.1} parent=1 // pred_check
      _
    $region83: #{_decoder_forward.1} parent=1 // pred_check_branch
      %10965 = sbr.rel (0) target = $region85
    $region84: #{_decoder_forward.1} parent=1 // pred_region
      _
    $region85: #{_decoder_forward.1} parent=1 // pred_fallthru
      _
    // Predicated region
    $region86: #{_decoder_forward.1} parent=1 // pred_check
      _
    $region87: #{_decoder_forward.1} parent=1 // pred_check_branch
      %10967 = sbr.rel (0) target = $region89
    $region88: #{_decoder_forward.1} parent=1 // pred_region
      _
    $region89: #{_decoder_forward.1} parent=1 // pred_fallthru
      _
    %10968 = vsyncpa [#allocation5], 1
    %10969 = vsyncpa [#allocation9], 1
    %10970 = vsyncpa [#allocation6], 1
    %10971 = vsyncpa [#allocation16], 1
    %10972 = vsyncpa [#allocation7], 1
    %10973 = vsyncpa [#allocation14], 1

</llo_original>
